<compile_context>
chip_gen: v5e
topology: v5e:2x2
jax: 0.10.0
libtpu: 0.0.40
codegen_flags: <defaults>
</compile_context>

<pallas_src>
import jax
import jax.numpy as jnp
from jax.experimental import pallas as pl
from jax.experimental.pallas import tpu as pltpu

DIM = 384                     # dim_inet (DIM in the reference)
P = 3                         # patch size
CORR_DIM = 2 * 49 * P * P     # 882 — input width of Update.corr MLP
HEAD_PAD = 128                # lane-dense width of the fused d/w head (lanes 0..3 real)
LN_EPS = 1e-3                 # nn.LayerNorm(dim, eps=0.001)


# ----------------------------- helpers ---------------------------------------

def _round_up(x, m):
    return (x + m - 1) // m * m


def _pick_edge_tile(e):
    # >=128 rows always (fills the MXU pass); bigger tiles for big edge sets,
    # while keeping >=2 grid steps for E>=512 so v7x can shard across both TCs.
    if e >= 2048:
        return 512
    if e >= 512:
        return 256
    return 128


def _vmem_limit_bytes():
    # Generation-aware scoped-VMEM limit (v7x has only 64 MiB per TensorCore).
    try:
        cap = int(pltpu.get_tpu_info().vmem_capacity_bytes)
    except Exception:
        cap = 64 * 1024 * 1024
    return max(32 * 1024 * 1024, min(int(cap * 0.8), 96 * 1024 * 1024))


_CPARAMS = pltpu.CompilerParams(dimension_semantics=("parallel",),
                                vmem_limit_bytes=_vmem_limit_bytes())


# ----------------------------- kernels ---------------------------------------

def _layernorm(x, g, b):
    # two-pass variance (matches PyTorch LayerNorm numerics)
    mu = jnp.mean(x, axis=-1, keepdims=True)
    xc = x - mu
    var = jnp.mean(xc * xc, axis=-1, keepdims=True)
    return xc * jax.lax.rsqrt(var + LN_EPS) * g + b


def _mlp2(x_bf16, w0, b0, w1, b1):
    """Linear -> ReLU -> Linear, bf16 MXU operands with f32 accumulation."""
    h = jnp.dot(x_bf16, w0, preferred_element_type=jnp.float32) + b0
    h = jnp.maximum(h, 0.0)
    return jnp.dot(h.astype(jnp.bfloat16), w1,
                   preferred_element_type=jnp.float32) + b1


def stage1_kernel(net_ref, inp_ref, corr_ref,
                  wc0_ref, bc0_ref, wc1_ref, bc1_ref, gc_ref, bec_ref,
                  wc2_ref, bc2_ref, gn_ref, bn_ref, out_ref):
    """out = LayerNorm(net + inp + corr_mlp(corr))   (Update.corr + Update.norm)."""
    h = jnp.dot(corr_ref[...], wc0_ref[...],
                preferred_element_type=jnp.float32) + bc0_ref[...]
    h = jnp.maximum(h, 0.0)
    h = jnp.dot(h.astype(jnp.bfloat16), wc1_ref[...],
                preferred_element_type=jnp.float32) + bc1_ref[...]
    h = _layernorm(h, gc_ref[...], bec_ref[...])
    h = jnp.maximum(h, 0.0)
    h = jnp.dot(h.astype(jnp.bfloat16), wc2_ref[...],
                preferred_element_type=jnp.float32) + bc2_ref[...]
    x = net_ref[...] + inp_ref[...] + h
    out_ref[...] = _layernorm(x, gn_ref[...], bn_ref[...])


def cblock_kernel(net_ref, gat_ref, w0_ref, b0_ref, w1_ref, b1_ref, out_ref):
    """out = net + Linear(ReLU(Linear(mask * net[ix])))   (Update.c1).

    The masked neighbor gather (gat) is produced by a cheap XLA take/mask in the
    wrapper (already bf16), so no full-array VMEM residency is needed here."""
    out_ref[...] = net_ref[...] + _mlp2(gat_ref[...], w0_ref[...], b0_ref[...],
                                        w1_ref[...], b1_ref[...])


def cblock_heads_kernel(net_ref, gat_ref, w0_ref, b0_ref, w1_ref, b1_ref,
                        wdw_ref, bdw_ref, out_ref, dw_ref):
    """Fused Update.c2 + Update.d / Update.w heads (GradientClip = identity fwd)."""
    net_new = net_ref[...] + _mlp2(gat_ref[...], w0_ref[...], b0_ref[...],
                                   w1_ref[...], b1_ref[...])
    out_ref[...] = net_new
    x = jnp.maximum(net_new, 0.0).astype(jnp.bfloat16)
    h = jnp.dot(x, wdw_ref[...], preferred_element_type=jnp.float32) + bdw_ref[...]
    lane = jax.lax.broadcasted_iota(jnp.int32, h.shape, 1)
    # lanes 0..1 = delta (identity), lanes >=2 = sigmoid(w); lanes >=4 are padding.
    dw_ref[...] = jnp.where(lane < 2, h, jax.nn.sigmoid(h))


# --------------------------- pallas_call wrappers -----------------------------

def _edge_spec(e_tile, d):
    return pl.BlockSpec((e_tile, d), lambda i: (i, 0))


def _const_spec(arr):
    return pl.BlockSpec(arr.shape, lambda i: (0, 0))


def stage1_call(p, net, inp, corr, e_tile):
    e_pad, d = net.shape
    ws = [p["corr_w0"], p["corr_b0"], p["corr_w1"], p["corr_b1"],
          p["corr_ln_g"], p["corr_ln_b"], p["corr_w2"], p["corr_b2"],
          p["norm_g"], p["norm_b"]]
    return pl.pallas_call(
        stage1_kernel,
        out_shape=jax.ShapeDtypeStruct((e_pad, d), jnp.float32),
        grid=(pl.cdiv(e_pad, e_tile),),
        in_specs=[_edge_spec(e_tile, d), _edge_spec(e_tile, d),
                  _edge_spec(e_tile, CORR_DIM)] + [_const_spec(w) for w in ws],
        out_specs=_edge_spec(e_tile, d),
        compiler_params=_CPARAMS,
    )(net, inp, corr, *ws)


def cblock_call(net, gat, w0, b0, w1, b1, e_tile):
    e_pad, d = net.shape
    ws = [w0, b0, w1, b1]
    return pl.pallas_call(
        cblock_kernel,
        out_shape=jax.ShapeDtypeStruct((e_pad, d), jnp.float32),
        grid=(pl.cdiv(e_pad, e_tile),),
        in_specs=[_edge_spec(e_tile, d), _edge_spec(e_tile, d)]
                 + [_const_spec(w) for w in ws],
        out_specs=_edge_spec(e_tile, d),
        compiler_params=_CPARAMS,
    )(net, gat, *ws)


def cblock_heads_call(net, gat, w0, b0, w1, b1, wdw, bdw, e_tile):
    e_pad, d = net.shape
    ws = [w0, b0, w1, b1, wdw, bdw]
    return pl.pallas_call(
        cblock_heads_kernel,
        out_shape=(jax.ShapeDtypeStruct((e_pad, d), jnp.float32),
                   jax.ShapeDtypeStruct((e_pad, HEAD_PAD), jnp.float32)),
        grid=(pl.cdiv(e_pad, e_tile),),
        in_specs=[_edge_spec(e_tile, d), _edge_spec(e_tile, d)]
                 + [_const_spec(w) for w in ws],
        out_specs=[_edge_spec(e_tile, d), _edge_spec(e_tile, HEAD_PAD)],
        compiler_params=_CPARAMS,
    )(net, gat, *ws)


# ------------------------------- JAX glue -------------------------------------

def neighbors(kk, jj):
    """For each edge e, find e' with kk[e']==kk[e] and jj[e']==jj[e]-1 (ix) / +1 (jx);
    -1 if none.  O(E log E) sort + searchsorted.
    TODO(synk): fastba.neighbors is a CUDA extension; DPVO semantics reimplemented here."""
    kk = kk.astype(jnp.int32)
    jj = jj.astype(jnp.int32)
    span = jnp.max(jj) + 2                     # valid jj in [0, span-2] -> no key collisions
    key = kk * span + jj
    order = jnp.argsort(key)
    skey = key[order]
    n = key.shape[0]

    def find(target):
        pos = jnp.clip(jnp.searchsorted(skey, target), 0, n - 1)
        return jnp.where(skey[pos] == target, order[pos], -1)

    return find(key - 1).astype(jnp.int32), find(key + 1).astype(jnp.int32)


def _masked_gather(net_f32, idx):
    """mask * net[ix] as an XLA gather; bf16 result feeds the MXU directly."""
    safe = jnp.maximum(idx, 0)
    g = jnp.take(net_f32, safe, axis=0)
    return jnp.where((idx >= 0)[:, None], g, 0.0).astype(jnp.bfloat16)


@jax.jit
def update_forward(params, net, inp, corr, ii, jj, kk):
    """Update.forward(net, inp, corr, flow=None, ii, jj, kk) → (net, (delta, weight, None))."""
    b, E, D = net.shape                         # b == 1 in eVONet
    e_tile = _pick_edge_tile(E)
    e_pad = _round_up(E, e_tile)

    def pad_rows(x, width):
        return jnp.pad(x.reshape(E, width), ((0, e_pad - E), (0, 0)))

    net2 = pad_rows(net, D)
    inp2 = pad_rows(inp, D)
    corr2 = pad_rows(corr, CORR_DIM).astype(jnp.bfloat16)   # natural 882 lanes, bf16 in HBM

    # net = self.norm(net + inp + self.corr(corr))
    net2 = stage1_call(params, net2, inp2, corr2, e_tile)

    # ix, jx = fastba.neighbors(kk, jj); masked gathers done as XLA take between kernels
    ixn, jxn = neighbors(kk, jj)
    ixp = jnp.pad(ixn, (0, e_pad - E), constant_values=-1)
    jxp = jnp.pad(jxn, (0, e_pad - E), constant_values=-1)

    # net = net + self.c1(mask_ix * net[:, ix])
    gat1 = _masked_gather(net2, ixp)
    net2 = cblock_call(net2, gat1, params["c1_w0"], params["c1_b0"],
                       params["c1_w1"], params["c1_b1"], e_tile)

    # net = net + self.c2(mask_jx * net[:, jx]);  fused d / w heads
    gat2 = _masked_gather(net2, jxp)
    net2, dw = cblock_heads_call(net2, gat2, params["c2_w0"], params["c2_b0"],
                                 params["c2_w1"], params["c2_b1"],
                                 params["dw_w"], params["dw_b"], e_tile)

    # TODO(synk): SoftAgg (agg_kk / agg_ij) and the GatedResidual GRU definitions are not
    # provided in the reference source; their contributions are omitted here.

    net_out = net2[:E].reshape(b, E, D)
    delta = dw[:E, :2].reshape(b, E, 2)
    weight = dw[:E, 2:4].reshape(b, E, 2)
    return net_out, (delta, weight, None)


# --------------------------- deterministic params -----------------------------

def init_params(key):
    ks = jax.random.split(key, 12)

    def lin(k, din, dout, scale=0.02):
        # nn.Linear weight stored transposed ([in, out]); bf16 for the MXU.
        return (jax.random.normal(k, (din, dout), jnp.float32) * scale).astype(jnp.bfloat16)

    zeros = lambda d: jnp.zeros((1, d), jnp.float32)
    ones = lambda d: jnp.ones((1, d), jnp.float32)

    d_w = lin(ks[7], DIM, 2)
    w_w = lin(ks[8], DIM, 2)
    dw_w = jnp.pad(jnp.concatenate([d_w, w_w], axis=1),
                   ((0, 0), (0, HEAD_PAD - 4)))             # lane-dense head weight

    return {
        # Update.corr : Linear(882,384), ReLU, Linear(384,384), LayerNorm, ReLU, Linear(384,384)
        "corr_w0": lin(ks[0], CORR_DIM, DIM), "corr_b0": zeros(DIM),
        "corr_w1": lin(ks[1], DIM, DIM),      "corr_b1": zeros(DIM),
        "corr_ln_g": ones(DIM),               "corr_ln_b": zeros(DIM),
        "corr_w2": lin(ks[2], DIM, DIM),      "corr_b2": zeros(DIM),
        # Update.norm : LayerNorm(384)
        "norm_g": ones(DIM),                  "norm_b": zeros(DIM),
        # Update.c1 / c2 : Linear(384,384), ReLU, Linear(384,384)
        "c1_w0": lin(ks[3], DIM, DIM), "c1_b0": zeros(DIM),
        "c1_w1": lin(ks[4], DIM, DIM), "c1_b1": zeros(DIM),
        "c2_w0": lin(ks[5], DIM, DIM), "c2_b0": zeros(DIM),
        "c2_w1": lin(ks[6], DIM, DIM), "c2_b1": zeros(DIM),
        # Update.d / Update.w heads concatenated + lane-padded: [delta | w | zeros...]
        "dw_w": dw_w,
        "dw_b": jnp.zeros((1, HEAD_PAD), jnp.float32),
    }


# ---------------------------------- main --------------------------------------

if __name__ == "__main__":
    # TODO(synk): Patchifier (conv encoders / Scorer), CorrBlock (altcorr.corr), pops.transform,
    # BA, SE3 and the std/rescale normalization are external CUDA/closed modules; the demo feeds
    # the Update operator directly with the tensors those stages would produce.
    key = jax.random.PRNGKey(0)
    kp, k_inp, k_corr = jax.random.split(key, 3)
    params = init_params(kp)

    # Small edge graph consistent with eVONet's first iteration:
    #   n=4 frames, 8 patches/frame -> 32 patches, each connected to all 4 frames -> 128 edges.
    n_frames, patches_per_image = 4, 8
    n_patches = n_frames * patches_per_image
    frame_of_patch = jnp.repeat(jnp.arange(n_frames, dtype=jnp.int32), patches_per_image)
    kk, jj = jnp.meshgrid(jnp.arange(n_patches, dtype=jnp.int32),
                          jnp.arange(n_frames, dtype=jnp.int32), indexing="ij")
    kk = kk.reshape(-1)
    jj = jj.reshape(-1)
    ii = frame_of_patch[kk]
    E = int(kk.shape[0])  # 128

    net = jnp.zeros((1, E, DIM), jnp.float32)                                  # net starts at zero
    inp = jax.random.normal(k_inp, (1, E, DIM), jnp.float32) * 0.25            # imap[:, kk] / 4
    corr = jax.random.normal(k_corr, (1, E, CORR_DIM), jnp.float32)            # CorrBlock output

    net_out, (delta, weight, _) = update_forward(params, net, inp, corr, ii, jj, kk)
    jax.block_until_ready((net_out, delta, weight))

    assert net_out.shape == (1, E, DIM)
    assert delta.shape == (1, E, 2) and weight.shape == (1, E, 2)
    assert bool(jnp.all(jnp.isfinite(net_out)))
    assert bool(jnp.all((weight >= 0.0) & (weight <= 1.0)))
    print("KERNEL_OK")
</pallas_src>

<mosaic_0001>
module attributes {stable_mosaic.version = 11 : i64} {
  func.func @stage1_kernel(%arg0: i32, %arg1: memref<128x384xf32, #tpu.memory_space<vmem>>, %arg2: memref<128x384xf32, #tpu.memory_space<vmem>>, %arg3: memref<128x882xbf16, #tpu.memory_space<vmem>>, %arg4: memref<882x384xbf16, #tpu.memory_space<vmem>>, %arg5: memref<1x384xf32, #tpu.memory_space<vmem>>, %arg6: memref<384x384xbf16, #tpu.memory_space<vmem>>, %arg7: memref<1x384xf32, #tpu.memory_space<vmem>>, %arg8: memref<1x384xf32, #tpu.memory_space<vmem>>, %arg9: memref<1x384xf32, #tpu.memory_space<vmem>>, %arg10: memref<384x384xbf16, #tpu.memory_space<vmem>>, %arg11: memref<1x384xf32, #tpu.memory_space<vmem>>, %arg12: memref<1x384xf32, #tpu.memory_space<vmem>>, %arg13: memref<1x384xf32, #tpu.memory_space<vmem>>, %arg14: memref<128x384xf32, #tpu.memory_space<vmem>>) attributes {dimension_semantics = [#tpu.dimension_semantics<parallel>], iteration_bounds = array<i64: 1>, scalar_prefetch = 0 : i64, scratch_operands = 0 : i64, tpu.core_type = #tpu.core_type<tc>, window_params = [{transform_indices = @transform_0, window_bounds = array<i64: 128, 384>}, {transform_indices = @transform_1, window_bounds = array<i64: 128, 384>}, {transform_indices = @transform_2, window_bounds = array<i64: 128, 882>}, {pipeline_mode = #tpu.pipeline_mode<synchronous>, transform_indices = @transform_3, window_bounds = array<i64: 882, 384>}, {pipeline_mode = #tpu.pipeline_mode<synchronous>, transform_indices = @transform_4, window_bounds = array<i64: 1, 384>}, {pipeline_mode = #tpu.pipeline_mode<synchronous>, transform_indices = @transform_5, window_bounds = array<i64: 384, 384>}, {pipeline_mode = #tpu.pipeline_mode<synchronous>, transform_indices = @transform_6, window_bounds = array<i64: 1, 384>}, {pipeline_mode = #tpu.pipeline_mode<synchronous>, transform_indices = @transform_7, window_bounds = array<i64: 1, 384>}, {pipeline_mode = #tpu.pipeline_mode<synchronous>, transform_indices = @transform_8, window_bounds = array<i64: 1, 384>}, {pipeline_mode = #tpu.pipeline_mode<synchronous>, transform_indices = @transform_9, window_bounds = array<i64: 384, 384>}, {pipeline_mode = #tpu.pipeline_mode<synchronous>, transform_indices = @transform_10, window_bounds = array<i64: 1, 384>}, {pipeline_mode = #tpu.pipeline_mode<synchronous>, transform_indices = @transform_11, window_bounds = array<i64: 1, 384>}, {pipeline_mode = #tpu.pipeline_mode<synchronous>, transform_indices = @transform_12, window_bounds = array<i64: 1, 384>}, {transform_indices = @transform_13, window_bounds = array<i64: 128, 384>}]} {
    %c0 = arith.constant 0 : index
    %c0_0 = arith.constant 0 : index
    %0 = vector.load %arg3[%c0, %c0_0] : memref<128x882xbf16, #tpu.memory_space<vmem>>, vector<128x882xbf16>
    %c0_1 = arith.constant 0 : index
    %c0_2 = arith.constant 0 : index
    %1 = vector.load %arg4[%c0_1, %c0_2] : memref<882x384xbf16, #tpu.memory_space<vmem>>, vector<882x384xbf16>
    %cst = arith.constant dense<0.000000e+00> : vector<128x384xf32>
    %2 = tpu.matmul %0, %1, %cst {dimension_numbers = #tpu.dot_dimension_numbers<[1], [0], [0], [1], [0, 0, 1, 1], [], []>} : vector<128x882xbf16>, vector<882x384xbf16>, vector<128x384xf32> -> vector<128x384xf32>
    %c0_3 = arith.constant 0 : index
    %c0_4 = arith.constant 0 : index
    %3 = vector.load %arg5[%c0_3, %c0_4] : memref<1x384xf32, #tpu.memory_space<vmem>>, vector<1x384xf32>
    %4 = vector.broadcast %3 : vector<1x384xf32> to vector<128x384xf32>
    %5 = arith.addf %2, %4 : vector<128x384xf32>
    %cst_5 = arith.constant 0.000000e+00 : f32
    %6 = vector.broadcast %cst_5 : f32 to vector<128x384xf32>
    %7 = arith.maximumf %5, %6 : vector<128x384xf32>
    %8 = arith.truncf %7 : vector<128x384xf32> to vector<128x384xbf16>
    %c0_6 = arith.constant 0 : index
    %c0_7 = arith.constant 0 : index
    %9 = vector.load %arg6[%c0_6, %c0_7] : memref<384x384xbf16, #tpu.memory_space<vmem>>, vector<384x384xbf16>
    %cst_8 = arith.constant dense<0.000000e+00> : vector<128x384xf32>
    %10 = tpu.matmul %8, %9, %cst_8 {dimension_numbers = #tpu.dot_dimension_numbers<[1], [0], [0], [1], [0, 0, 1, 1], [], []>} : vector<128x384xbf16>, vector<384x384xbf16>, vector<128x384xf32> -> vector<128x384xf32>
    %c0_9 = arith.constant 0 : index
    %c0_10 = arith.constant 0 : index
    %11 = vector.load %arg7[%c0_9, %c0_10] : memref<1x384xf32, #tpu.memory_space<vmem>>, vector<1x384xf32>
    %12 = vector.broadcast %11 : vector<1x384xf32> to vector<128x384xf32>
    %13 = arith.addf %10, %12 : vector<128x384xf32>
    %c0_11 = arith.constant 0 : index
    %c0_12 = arith.constant 0 : index
    %14 = vector.load %arg8[%c0_11, %c0_12] : memref<1x384xf32, #tpu.memory_space<vmem>>, vector<1x384xf32>
    %c0_13 = arith.constant 0 : index
    %c0_14 = arith.constant 0 : index
    %15 = vector.load %arg9[%c0_13, %c0_14] : memref<1x384xf32, #tpu.memory_space<vmem>>, vector<1x384xf32>
    %cst_15 = arith.constant dense<0.000000e+00> : vector<128xf32>
    %16 = vector.multi_reduction <add>, %13, %cst_15 [1] : vector<128x384xf32> to vector<128xf32>
    %17 = vector.shape_cast %16 : vector<128xf32> to vector<128x1xf32>
    %cst_16 = arith.constant 3.840000e+02 : f32
    %18 = vector.broadcast %cst_16 : f32 to vector<128x1xf32>
    %19 = arith.divf %17, %18 : vector<128x1xf32>
    %20 = vector.broadcast %19 : vector<128x1xf32> to vector<128x384xf32>
    %21 = arith.subf %13, %20 : vector<128x384xf32>
    %22 = arith.mulf %21, %21 : vector<128x384xf32>
    %cst_17 = arith.constant dense<0.000000e+00> : vector<128xf32>
    %23 = vector.multi_reduction <add>, %22, %cst_17 [1] : vector<128x384xf32> to vector<128xf32>
    %24 = vector.shape_cast %23 : vector<128xf32> to vector<128x1xf32>
    %cst_18 = arith.constant 3.840000e+02 : f32
    %25 = vector.broadcast %cst_18 : f32 to vector<128x1xf32>
    %26 = arith.divf %24, %25 : vector<128x1xf32>
    %cst_19 = arith.constant 1.000000e-03 : f32
    %27 = vector.broadcast %cst_19 : f32 to vector<128x1xf32>
    %28 = arith.addf %26, %27 : vector<128x1xf32>
    %29 = math.rsqrt %28 : vector<128x1xf32>
    %30 = vector.broadcast %29 : vector<128x1xf32> to vector<128x384xf32>
    %31 = arith.mulf %21, %30 : vector<128x384xf32>
    %32 = vector.broadcast %14 : vector<1x384xf32> to vector<128x384xf32>
    %33 = arith.mulf %31, %32 : vector<128x384xf32>
    %34 = vector.broadcast %15 : vector<1x384xf32> to vector<128x384xf32>
    %35 = arith.addf %33, %34 : vector<128x384xf32>
    %cst_20 = arith.constant 0.000000e+00 : f32
    %36 = vector.broadcast %cst_20 : f32 to vector<128x384xf32>
    %37 = arith.maximumf %35, %36 : vector<128x384xf32>
    %38 = arith.truncf %37 : vector<128x384xf32> to vector<128x384xbf16>
    %c0_21 = arith.constant 0 : index
    %c0_22 = arith.constant 0 : index
    %39 = vector.load %arg10[%c0_21, %c0_22] : memref<384x384xbf16, #tpu.memory_space<vmem>>, vector<384x384xbf16>
    %cst_23 = arith.constant dense<0.000000e+00> : vector<128x384xf32>
    %40 = tpu.matmul %38, %39, %cst_23 {dimension_numbers = #tpu.dot_dimension_numbers<[1], [0], [0], [1], [0, 0, 1, 1], [], []>} : vector<128x384xbf16>, vector<384x384xbf16>, vector<128x384xf32> -> vector<128x384xf32>
    %c0_24 = arith.constant 0 : index
    %c0_25 = arith.constant 0 : index
    %41 = vector.load %arg11[%c0_24, %c0_25] : memref<1x384xf32, #tpu.memory_space<vmem>>, vector<1x384xf32>
    %42 = vector.broadcast %41 : vector<1x384xf32> to vector<128x384xf32>
    %43 = arith.addf %40, %42 : vector<128x384xf32>
    %c0_26 = arith.constant 0 : index
    %c0_27 = arith.constant 0 : index
    %44 = vector.load %arg1[%c0_26, %c0_27] : memref<128x384xf32, #tpu.memory_space<vmem>>, vector<128x384xf32>
    %c0_28 = arith.constant 0 : index
    %c0_29 = arith.constant 0 : index
    %45 = vector.load %arg2[%c0_28, %c0_29] : memref<128x384xf32, #tpu.memory_space<vmem>>, vector<128x384xf32>
    %46 = arith.addf %44, %45 : vector<128x384xf32>
    %47 = arith.addf %46, %43 : vector<128x384xf32>
    %c0_30 = arith.constant 0 : index
    %c0_31 = arith.constant 0 : index
    %48 = vector.load %arg12[%c0_30, %c0_31] : memref<1x384xf32, #tpu.memory_space<vmem>>, vector<1x384xf32>
    %c0_32 = arith.constant 0 : index
    %c0_33 = arith.constant 0 : index
    %49 = vector.load %arg13[%c0_32, %c0_33] : memref<1x384xf32, #tpu.memory_space<vmem>>, vector<1x384xf32>
    %cst_34 = arith.constant dense<0.000000e+00> : vector<128xf32>
    %50 = vector.multi_reduction <add>, %47, %cst_34 [1] : vector<128x384xf32> to vector<128xf32>
    %51 = vector.shape_cast %50 : vector<128xf32> to vector<128x1xf32>
    %cst_35 = arith.constant 3.840000e+02 : f32
    %52 = vector.broadcast %cst_35 : f32 to vector<128x1xf32>
    %53 = arith.divf %51, %52 : vector<128x1xf32>
    %54 = vector.broadcast %53 : vector<128x1xf32> to vector<128x384xf32>
    %55 = arith.subf %47, %54 : vector<128x384xf32>
    %56 = arith.mulf %55, %55 : vector<128x384xf32>
    %cst_36 = arith.constant dense<0.000000e+00> : vector<128xf32>
    %57 = vector.multi_reduction <add>, %56, %cst_36 [1] : vector<128x384xf32> to vector<128xf32>
    %58 = vector.shape_cast %57 : vector<128xf32> to vector<128x1xf32>
    %cst_37 = arith.constant 3.840000e+02 : f32
    %59 = vector.broadcast %cst_37 : f32 to vector<128x1xf32>
    %60 = arith.divf %58, %59 : vector<128x1xf32>
    %cst_38 = arith.constant 1.000000e-03 : f32
    %61 = vector.broadcast %cst_38 : f32 to vector<128x1xf32>
    %62 = arith.addf %60, %61 : vector<128x1xf32>
    %63 = math.rsqrt %62 : vector<128x1xf32>
    %64 = vector.broadcast %63 : vector<128x1xf32> to vector<128x384xf32>
    %65 = arith.mulf %55, %64 : vector<128x384xf32>
    %66 = vector.broadcast %48 : vector<1x384xf32> to vector<128x384xf32>
    %67 = arith.mulf %65, %66 : vector<128x384xf32>
    %68 = vector.broadcast %49 : vector<1x384xf32> to vector<128x384xf32>
    %69 = arith.addf %67, %68 : vector<128x384xf32>
    %c0_39 = arith.constant 0 : index
    %c0_40 = arith.constant 0 : index
    %70 = vector.load %arg14[%c0_39, %c0_40] : memref<128x384xf32, #tpu.memory_space<vmem>>, vector<128x384xf32>
    tpu.vector_store %arg14[%c0_39, %c0_40], %69 {strides = array<i32>} : memref<128x384xf32, #tpu.memory_space<vmem>>, vector<128x384xf32>,
    return
  }
  func.func @transform_0(%arg0: i32) -> (i32, i32) {
    %c0_i32 = arith.constant 0 : i32
    %c0_i32_0 = arith.constant 0 : i32
    return %arg0, %c0_i32 : i32, i32
  }
  func.func @transform_1(%arg0: i32) -> (i32, i32) {
    %c0_i32 = arith.constant 0 : i32
    %c0_i32_0 = arith.constant 0 : i32
    return %arg0, %c0_i32 : i32, i32
  }
  func.func @transform_2(%arg0: i32) -> (i32, i32) {
    %c0_i32 = arith.constant 0 : i32
    %c0_i32_0 = arith.constant 0 : i32
    return %arg0, %c0_i32 : i32, i32
  }
  func.func @transform_3(%arg0: i32) -> (i32, i32) {
    %c0_i32 = arith.constant 0 : i32
    %c0_i32_0 = arith.constant 0 : i32
    %c0_i32_1 = arith.constant 0 : i32
    return %c0_i32, %c0_i32_0 : i32, i32
  }
  func.func @transform_4(%arg0: i32) -> (i32, i32) {
    %c0_i32 = arith.constant 0 : i32
    %c0_i32_0 = arith.constant 0 : i32
    %c0_i32_1 = arith.constant 0 : i32
    return %c0_i32, %c0_i32_0 : i32, i32
  }
  func.func @transform_5(%arg0: i32) -> (i32, i32) {
    %c0_i32 = arith.constant 0 : i32
    %c0_i32_0 = arith.constant 0 : i32
    %c0_i32_1 = arith.constant 0 : i32
    return %c0_i32, %c0_i32_0 : i32, i32
  }
  func.func @transform_6(%arg0: i32) -> (i32, i32) {
    %c0_i32 = arith.constant 0 : i32
    %c0_i32_0 = arith.constant 0 : i32
    %c0_i32_1 = arith.constant 0 : i32
    return %c0_i32, %c0_i32_0 : i32, i32
  }
  func.func @transform_7(%arg0: i32) -> (i32, i32) {
    %c0_i32 = arith.constant 0 : i32
    %c0_i32_0 = arith.constant 0 : i32
    %c0_i32_1 = arith.constant 0 : i32
    return %c0_i32, %c0_i32_0 : i32, i32
  }
  func.func @transform_8(%arg0: i32) -> (i32, i32) {
    %c0_i32 = arith.constant 0 : i32
    %c0_i32_0 = arith.constant 0 : i32
    %c0_i32_1 = arith.constant 0 : i32
    return %c0_i32, %c0_i32_0 : i32, i32
  }
  func.func @transform_9(%arg0: i32) -> (i32, i32) {
    %c0_i32 = arith.constant 0 : i32
    %c0_i32_0 = arith.constant 0 : i32
    %c0_i32_1 = arith.constant 0 : i32
    return %c0_i32, %c0_i32_0 : i32, i32
  }
  func.func @transform_10(%arg0: i32) -> (i32, i32) {
    %c0_i32 = arith.constant 0 : i32
    %c0_i32_0 = arith.constant 0 : i32
    %c0_i32_1 = arith.constant 0 : i32
    return %c0_i32, %c0_i32_0 : i32, i32
  }
  func.func @transform_11(%arg0: i32) -> (i32, i32) {
    %c0_i32 = arith.constant 0 : i32
    %c0_i32_0 = arith.constant 0 : i32
    %c0_i32_1 = arith.constant 0 : i32
    return %c0_i32, %c0_i32_0 : i32, i32
  }
  func.func @transform_12(%arg0: i32) -> (i32, i32) {
    %c0_i32 = arith.constant 0 : i32
    %c0_i32_0 = arith.constant 0 : i32
    %c0_i32_1 = arith.constant 0 : i32
    return %c0_i32, %c0_i32_0 : i32, i32
  }
  func.func @transform_13(%arg0: i32) -> (i32, i32) {
    %c0_i32 = arith.constant 0 : i32
    %c0_i32_0 = arith.constant 0 : i32
    return %arg0, %c0_i32 : i32, i32
  }
}

module attributes {stable_mosaic.version = 11 : i64} {
  func.func @cblock_kernel(%arg0: i32, %arg1: memref<128x384xf32, #tpu.memory_space<vmem>>, %arg2: memref<128x384xbf16, #tpu.memory_space<vmem>>, %arg3: memref<384x384xbf16, #tpu.memory_space<vmem>>, %arg4: memref<1x384xf32, #tpu.memory_space<vmem>>, %arg5: memref<384x384xbf16, #tpu.memory_space<vmem>>, %arg6: memref<1x384xf32, #tpu.memory_space<vmem>>, %arg7: memref<128x384xf32, #tpu.memory_space<vmem>>) attributes {dimension_semantics = [#tpu.dimension_semantics<parallel>], iteration_bounds = array<i64: 1>, scalar_prefetch = 0 : i64, scratch_operands = 0 : i64, tpu.core_type = #tpu.core_type<tc>, window_params = [{transform_indices = @transform_0, window_bounds = array<i64: 128, 384>}, {transform_indices = @transform_1, window_bounds = array<i64: 128, 384>}, {pipeline_mode = #tpu.pipeline_mode<synchronous>, transform_indices = @transform_2, window_bounds = array<i64: 384, 384>}, {pipeline_mode = #tpu.pipeline_mode<synchronous>, transform_indices = @transform_3, window_bounds = array<i64: 1, 384>}, {pipeline_mode = #tpu.pipeline_mode<synchronous>, transform_indices = @transform_4, window_bounds = array<i64: 384, 384>}, {pipeline_mode = #tpu.pipeline_mode<synchronous>, transform_indices = @transform_5, window_bounds = array<i64: 1, 384>}, {transform_indices = @transform_6, window_bounds = array<i64: 128, 384>}]} {
    %c0 = arith.constant 0 : index
    %c0_0 = arith.constant 0 : index
    %0 = vector.load %arg1[%c0, %c0_0] : memref<128x384xf32, #tpu.memory_space<vmem>>, vector<128x384xf32>
    %c0_1 = arith.constant 0 : index
    %c0_2 = arith.constant 0 : index
    %1 = vector.load %arg2[%c0_1, %c0_2] : memref<128x384xbf16, #tpu.memory_space<vmem>>, vector<128x384xbf16>
    %c0_3 = arith.constant 0 : index
    %c0_4 = arith.constant 0 : index
    %2 = vector.load %arg3[%c0_3, %c0_4] : memref<384x384xbf16, #tpu.memory_space<vmem>>, vector<384x384xbf16>
    %c0_5 = arith.constant 0 : index
    %c0_6 = arith.constant 0 : index
    %3 = vector.load %arg4[%c0_5, %c0_6] : memref<1x384xf32, #tpu.memory_space<vmem>>, vector<1x384xf32>
    %c0_7 = arith.constant 0 : index
    %c0_8 = arith.constant 0 : index
    %4 = vector.load %arg5[%c0_7, %c0_8] : memref<384x384xbf16, #tpu.memory_space<vmem>>, vector<384x384xbf16>
    %c0_9 = arith.constant 0 : index
    %c0_10 = arith.constant 0 : index
    %5 = vector.load %arg6[%c0_9, %c0_10] : memref<1x384xf32, #tpu.memory_space<vmem>>, vector<1x384xf32>
    %cst = arith.constant dense<0.000000e+00> : vector<128x384xf32>
    %6 = tpu.matmul %1, %2, %cst {dimension_numbers = #tpu.dot_dimension_numbers<[1], [0], [0], [1], [0, 0, 1, 1], [], []>} : vector<128x384xbf16>, vector<384x384xbf16>, vector<128x384xf32> -> vector<128x384xf32>
    %7 = vector.broadcast %3 : vector<1x384xf32> to vector<128x384xf32>
    %8 = arith.addf %6, %7 : vector<128x384xf32>
    %cst_11 = arith.constant 0.000000e+00 : f32
    %9 = vector.broadcast %cst_11 : f32 to vector<128x384xf32>
    %10 = arith.maximumf %8, %9 : vector<128x384xf32>
    %11 = arith.truncf %10 : vector<128x384xf32> to vector<128x384xbf16>
    %cst_12 = arith.constant dense<0.000000e+00> : vector<128x384xf32>
    %12 = tpu.matmul %11, %4, %cst_12 {dimension_numbers = #tpu.dot_dimension_numbers<[1], [0], [0], [1], [0, 0, 1, 1], [], []>} : vector<128x384xbf16>, vector<384x384xbf16>, vector<128x384xf32> -> vector<128x384xf32>
    %13 = vector.broadcast %5 : vector<1x384xf32> to vector<128x384xf32>
    %14 = arith.addf %12, %13 : vector<128x384xf32>
    %15 = arith.addf %0, %14 : vector<128x384xf32>
    %c0_13 = arith.constant 0 : index
    %c0_14 = arith.constant 0 : index
    %16 = vector.load %arg7[%c0_13, %c0_14] : memref<128x384xf32, #tpu.memory_space<vmem>>, vector<128x384xf32>
    tpu.vector_store %arg7[%c0_13, %c0_14], %15 {strides = array<i32>} : memref<128x384xf32, #tpu.memory_space<vmem>>, vector<128x384xf32>,
    return
  }
  func.func @transform_0(%arg0: i32) -> (i32, i32) {
    %c0_i32 = arith.constant 0 : i32
    %c0_i32_0 = arith.constant 0 : i32
    return %arg0, %c0_i32 : i32, i32
  }
  func.func @transform_1(%arg0: i32) -> (i32, i32) {
    %c0_i32 = arith.constant 0 : i32
    %c0_i32_0 = arith.constant 0 : i32
    return %arg0, %c0_i32 : i32, i32
  }
  func.func @transform_2(%arg0: i32) -> (i32, i32) {
    %c0_i32 = arith.constant 0 : i32
    %c0_i32_0 = arith.constant 0 : i32
    %c0_i32_1 = arith.constant 0 : i32
    return %c0_i32, %c0_i32_0 : i32, i32
  }
  func.func @transform_3(%arg0: i32) -> (i32, i32) {
    %c0_i32 = arith.constant 0 : i32
    %c0_i32_0 = arith.constant 0 : i32
    %c0_i32_1 = arith.constant 0 : i32
    return %c0_i32, %c0_i32_0 : i32, i32
  }
  func.func @transform_4(%arg0: i32) -> (i32, i32) {
    %c0_i32 = arith.constant 0 : i32
    %c0_i32_0 = arith.constant 0 : i32
    %c0_i32_1 = arith.constant 0 : i32
    return %c0_i32, %c0_i32_0 : i32, i32
  }
  func.func @transform_5(%arg0: i32) -> (i32, i32) {
    %c0_i32 = arith.constant 0 : i32
    %c0_i32_0 = arith.constant 0 : i32
    %c0_i32_1 = arith.constant 0 : i32
    return %c0_i32, %c0_i32_0 : i32, i32
  }
  func.func @transform_6(%arg0: i32) -> (i32, i32) {
    %c0_i32 = arith.constant 0 : i32
    %c0_i32_0 = arith.constant 0 : i32
    return %arg0, %c0_i32 : i32, i32
  }
}

module attributes {stable_mosaic.version = 11 : i64} {
  func.func @cblock_heads_kernel(%arg0: i32, %arg1: memref<128x384xf32, #tpu.memory_space<vmem>>, %arg2: memref<128x384xbf16, #tpu.memory_space<vmem>>, %arg3: memref<384x384xbf16, #tpu.memory_space<vmem>>, %arg4: memref<1x384xf32, #tpu.memory_space<vmem>>, %arg5: memref<384x384xbf16, #tpu.memory_space<vmem>>, %arg6: memref<1x384xf32, #tpu.memory_space<vmem>>, %arg7: memref<384x128xbf16, #tpu.memory_space<vmem>>, %arg8: memref<1x128xf32, #tpu.memory_space<vmem>>, %arg9: memref<128x384xf32, #tpu.memory_space<vmem>>, %arg10: memref<128x128xf32, #tpu.memory_space<vmem>>) attributes {dimension_semantics = [#tpu.dimension_semantics<parallel>], iteration_bounds = array<i64: 1>, scalar_prefetch = 0 : i64, scratch_operands = 0 : i64, tpu.core_type = #tpu.core_type<tc>, window_params = [{transform_indices = @transform_0, window_bounds = array<i64: 128, 384>}, {transform_indices = @transform_1, window_bounds = array<i64: 128, 384>}, {pipeline_mode = #tpu.pipeline_mode<synchronous>, transform_indices = @transform_2, window_bounds = array<i64: 384, 384>}, {pipeline_mode = #tpu.pipeline_mode<synchronous>, transform_indices = @transform_3, window_bounds = array<i64: 1, 384>}, {pipeline_mode = #tpu.pipeline_mode<synchronous>, transform_indices = @transform_4, window_bounds = array<i64: 384, 384>}, {pipeline_mode = #tpu.pipeline_mode<synchronous>, transform_indices = @transform_5, window_bounds = array<i64: 1, 384>}, {pipeline_mode = #tpu.pipeline_mode<synchronous>, transform_indices = @transform_6, window_bounds = array<i64: 384, 128>}, {pipeline_mode = #tpu.pipeline_mode<synchronous>, transform_indices = @transform_7, window_bounds = array<i64: 1, 128>}, {transform_indices = @transform_8, window_bounds = array<i64: 128, 384>}, {transform_indices = @transform_9, window_bounds = array<i64: 128, 128>}]} {
    %c0 = arith.constant 0 : index
    %c0_0 = arith.constant 0 : index
    %0 = vector.load %arg1[%c0, %c0_0] : memref<128x384xf32, #tpu.memory_space<vmem>>, vector<128x384xf32>
    %c0_1 = arith.constant 0 : index
    %c0_2 = arith.constant 0 : index
    %1 = vector.load %arg2[%c0_1, %c0_2] : memref<128x384xbf16, #tpu.memory_space<vmem>>, vector<128x384xbf16>
    %c0_3 = arith.constant 0 : index
    %c0_4 = arith.constant 0 : index
    %2 = vector.load %arg3[%c0_3, %c0_4] : memref<384x384xbf16, #tpu.memory_space<vmem>>, vector<384x384xbf16>
    %c0_5 = arith.constant 0 : index
    %c0_6 = arith.constant 0 : index
    %3 = vector.load %arg4[%c0_5, %c0_6] : memref<1x384xf32, #tpu.memory_space<vmem>>, vector<1x384xf32>
    %c0_7 = arith.constant 0 : index
    %c0_8 = arith.constant 0 : index
    %4 = vector.load %arg5[%c0_7, %c0_8] : memref<384x384xbf16, #tpu.memory_space<vmem>>, vector<384x384xbf16>
    %c0_9 = arith.constant 0 : index
    %c0_10 = arith.constant 0 : index
    %5 = vector.load %arg6[%c0_9, %c0_10] : memref<1x384xf32, #tpu.memory_space<vmem>>, vector<1x384xf32>
    %cst = arith.constant dense<0.000000e+00> : vector<128x384xf32>
    %6 = tpu.matmul %1, %2, %cst {dimension_numbers = #tpu.dot_dimension_numbers<[1], [0], [0], [1], [0, 0, 1, 1], [], []>} : vector<128x384xbf16>, vector<384x384xbf16>, vector<128x384xf32> -> vector<128x384xf32>
    %7 = vector.broadcast %3 : vector<1x384xf32> to vector<128x384xf32>
    %8 = arith.addf %6, %7 : vector<128x384xf32>
    %cst_11 = arith.constant 0.000000e+00 : f32
    %9 = vector.broadcast %cst_11 : f32 to vector<128x384xf32>
    %10 = arith.maximumf %8, %9 : vector<128x384xf32>
    %11 = arith.truncf %10 : vector<128x384xf32> to vector<128x384xbf16>
    %cst_12 = arith.constant dense<0.000000e+00> : vector<128x384xf32>
    %12 = tpu.matmul %11, %4, %cst_12 {dimension_numbers = #tpu.dot_dimension_numbers<[1], [0], [0], [1], [0, 0, 1, 1], [], []>} : vector<128x384xbf16>, vector<384x384xbf16>, vector<128x384xf32> -> vector<128x384xf32>
    %13 = vector.broadcast %5 : vector<1x384xf32> to vector<128x384xf32>
    %14 = arith.addf %12, %13 : vector<128x384xf32>
    %15 = arith.addf %0, %14 : vector<128x384xf32>
    %c0_13 = arith.constant 0 : index
    %c0_14 = arith.constant 0 : index
    %16 = vector.load %arg9[%c0_13, %c0_14] : memref<128x384xf32, #tpu.memory_space<vmem>>, vector<128x384xf32>
    tpu.vector_store %arg9[%c0_13, %c0_14], %15 {strides = array<i32>} : memref<128x384xf32, #tpu.memory_space<vmem>>, vector<128x384xf32>,
    %cst_15 = arith.constant 0.000000e+00 : f32
    %17 = vector.broadcast %cst_15 : f32 to vector<128x384xf32>
    %18 = arith.maximumf %15, %17 : vector<128x384xf32>
    %19 = arith.truncf %18 : vector<128x384xf32> to vector<128x384xbf16>
    %c0_16 = arith.constant 0 : index
    %c0_17 = arith.constant 0 : index
    %20 = vector.load %arg7[%c0_16, %c0_17] : memref<384x128xbf16, #tpu.memory_space<vmem>>, vector<384x128xbf16>
    %cst_18 = arith.constant dense<0.000000e+00> : vector<128x128xf32>
    %21 = tpu.matmul %19, %20, %cst_18 {dimension_numbers = #tpu.dot_dimension_numbers<[1], [0], [0], [1], [0, 0, 1, 1], [], []>} : vector<128x384xbf16>, vector<384x128xbf16>, vector<128x128xf32> -> vector<128x128xf32>
    %c0_19 = arith.constant 0 : index
    %c0_20 = arith.constant 0 : index
    %22 = vector.load %arg8[%c0_19, %c0_20] : memref<1x128xf32, #tpu.memory_space<vmem>>, vector<1x128xf32>
    %23 = vector.broadcast %22 : vector<1x128xf32> to vector<128x128xf32>
    %24 = arith.addf %21, %23 : vector<128x128xf32>
    %25 = tpu.iota {dimensions = array<i32: 1>} : vector<128x128xi32>
    %c2_i32 = arith.constant 2 : i32
    %26 = vector.broadcast %c2_i32 : i32 to vector<128x128xi32>
    %27 = arith.cmpi slt, %25, %26 : vector<128x128xi32>
    %28 = arith.negf %24 : vector<128x128xf32>
    %29 = math.exp %28 : vector<128x128xf32>
    %cst_21 = arith.constant 1.000000e+00 : f32
    %30 = vector.broadcast %cst_21 : f32 to vector<128x128xf32>
    %31 = arith.addf %30, %29 : vector<128x128xf32>
    %32 = arith.divf %30, %31 : vector<128x128xf32>
    %33 = arith.select %27, %24, %32 : vector<128x128xi1>, vector<128x128xf32>
    %c0_22 = arith.constant 0 : index
    %c0_23 = arith.constant 0 : index
    %34 = vector.load %arg10[%c0_22, %c0_23] : memref<128x128xf32, #tpu.memory_space<vmem>>, vector<128x128xf32>
    tpu.vector_store %arg10[%c0_22, %c0_23], %33 {strides = array<i32>} : memref<128x128xf32, #tpu.memory_space<vmem>>, vector<128x128xf32>,
    return
  }
  func.func @transform_0(%arg0: i32) -> (i32, i32) {
    %c0_i32 = arith.constant 0 : i32
    %c0_i32_0 = arith.constant 0 : i32
    return %arg0, %c0_i32 : i32, i32
  }
  func.func @transform_1(%arg0: i32) -> (i32, i32) {
    %c0_i32 = arith.constant 0 : i32
    %c0_i32_0 = arith.constant 0 : i32
    return %arg0, %c0_i32 : i32, i32
  }
  func.func @transform_2(%arg0: i32) -> (i32, i32) {
    %c0_i32 = arith.constant 0 : i32
    %c0_i32_0 = arith.constant 0 : i32
    %c0_i32_1 = arith.constant 0 : i32
    return %c0_i32, %c0_i32_0 : i32, i32
  }
  func.func @transform_3(%arg0: i32) -> (i32, i32) {
    %c0_i32 = arith.constant 0 : i32
    %c0_i32_0 = arith.constant 0 : i32
    %c0_i32_1 = arith.constant 0 : i32
    return %c0_i32, %c0_i32_0 : i32, i32
  }
  func.func @transform_4(%arg0: i32) -> (i32, i32) {
    %c0_i32 = arith.constant 0 : i32
    %c0_i32_0 = arith.constant 0 : i32
    %c0_i32_1 = arith.constant 0 : i32
    return %c0_i32, %c0_i32_0 : i32, i32
  }
  func.func @transform_5(%arg0: i32) -> (i32, i32) {
    %c0_i32 = arith.constant 0 : i32
    %c0_i32_0 = arith.constant 0 : i32
    %c0_i32_1 = arith.constant 0 : i32
    return %c0_i32, %c0_i32_0 : i32, i32
  }
  func.func @transform_6(%arg0: i32) -> (i32, i32) {
    %c0_i32 = arith.constant 0 : i32
    %c0_i32_0 = arith.constant 0 : i32
    %c0_i32_1 = arith.constant 0 : i32
    return %c0_i32, %c0_i32_0 : i32, i32
  }
  func.func @transform_7(%arg0: i32) -> (i32, i32) {
    %c0_i32 = arith.constant 0 : i32
    %c0_i32_0 = arith.constant 0 : i32
    %c0_i32_1 = arith.constant 0 : i32
    return %c0_i32, %c0_i32_0 : i32, i32
  }
  func.func @transform_8(%arg0: i32) -> (i32, i32) {
    %c0_i32 = arith.constant 0 : i32
    %c0_i32_0 = arith.constant 0 : i32
    return %arg0, %c0_i32 : i32, i32
  }
  func.func @transform_9(%arg0: i32) -> (i32, i32) {
    %c0_i32 = arith.constant 0 : i32
    %c0_i32_0 = arith.constant 0 : i32
    return %arg0, %c0_i32 : i32, i32
  }
}

</mosaic_0001>

<llo_original>
// kernel: custom-call.3
$region0: #{custom-call.3}
  %s0 = inlined_call_operand.vmem [shape: u32[128], index: 0, kind: output, shape index: {}]

// kernel: update_forward.4
$region0: #{update_forward.4}
  #allocation0 [shape = 'u32[]', space=smem, size = 0x4, offset = 0x4, fixed_abs, tag = 'smem constant byte address 0x4 - core index']
  #allocation1 [shape = 'u32[72,128]{1,0:T(1,128)}', space=vmem, size = 0x9000, scoped, tag = 'internal scratch']
  %s0 = inlined_call_operand.vmem [shape: f32[128,384], index: 0, kind: input, shape index: {}]
  %s1 = inlined_call_operand.vmem [shape: bf16[128,384], index: 1, kind: input, shape index: {}]
  %s2 = inlined_call_operand.vmem [shape: bf16[384,384], index: 2, kind: input, shape index: {}]
  %s3 = inlined_call_operand.vmem [shape: f32[1,384], index: 3, kind: input, shape index: {}]
  %s4 = inlined_call_operand.vmem [shape: bf16[384,384], index: 4, kind: input, shape index: {}]
  %s5 = inlined_call_operand.vmem [shape: f32[1,384], index: 5, kind: input, shape index: {}]
  %s6 = inlined_call_operand.vmem [shape: f32[128,384], index: 6, kind: output, shape index: {}]
  %s7 = sld [smem:[#allocation0]]
  $region34: #{update_forward.4} parent=0
    _
  %s9 = ssub.s32 1, %s7
  %s10 = scalar_select 0, %s9, %s7
  // Predicated region
  $region2: #{update_forward.4} parent=0 // pred_check
    _
  $region3: #{update_forward.4} parent=0 // pred_check_branch
    %12 = sbr.rel (0) target = $region5
  $region4: #{update_forward.4} parent=0 // pred_region
    _
  $region5: #{update_forward.4} parent=0 // pred_fallthru
    _
  // Predicated region
  $region6: #{update_forward.4} parent=0 // pred_check
    _
  $region7: #{update_forward.4} parent=0 // pred_check_branch
    %14 = sbr.rel (0) target = $region9
  $region8: #{update_forward.4} parent=0 // pred_region
    _
  $region9: #{update_forward.4} parent=0 // pred_fallthru
    _
  // Predicated region
  $region10: #{update_forward.4} parent=0 // pred_check
    _
  $region11: #{update_forward.4} parent=0 // pred_check_branch
    %16 = sbr.rel (0) target = $region13
  $region12: #{update_forward.4} parent=0 // pred_region
    _
  $region13: #{update_forward.4} parent=0 // pred_fallthru
    _
  // Predicated region
  $region14: #{update_forward.4} parent=0 // pred_check
    _
  $region15: #{update_forward.4} parent=0 // pred_check_branch
    %18 = sbr.rel (0) target = $region17
  $region16: #{update_forward.4} parent=0 // pred_region
    _
  $region17: #{update_forward.4} parent=0 // pred_fallthru
    _
  // Predicated region
  $region18: #{update_forward.4} parent=0 // pred_check
    _
  $region19: #{update_forward.4} parent=0 // pred_check_branch
    %20 = sbr.rel (0) target = $region21
  $region20: #{update_forward.4} parent=0 // pred_region
    _
  $region21: #{update_forward.4} parent=0 // pred_fallthru
    _
  // Predicated region
  $region22: #{update_forward.4} parent=0 // pred_check
    _
  $region23: #{update_forward.4} parent=0 // pred_check_branch
    %22 = sbr.rel (0) target = $region25
  $region24: #{update_forward.4} parent=0 // pred_region
    _
  $region25: #{update_forward.4} parent=0 // pred_fallthru
    _
  %v23 = vld [vmem:[%s0] sm:$0xff]
  %v24 = vld [vmem:[%s0 + $0x8] sm:$0xff]
  %v25 = vld [vmem:[%s0 + $0x10] sm:$0xff]
  %v26 = vld [vmem:[%s0 + $0x18] sm:$0xff]
  %v27 = vld [vmem:[%s0 + $0x20] sm:$0xff]
  %v28 = vld [vmem:[%s0 + $0x28] sm:$0xff]
  %v29 = vld [vmem:[%s0 + $0x30] sm:$0xff]
  %v30 = vld [vmem:[%s0 + $0x38] sm:$0xff]
  %v31 = vld [vmem:[%s0 + $0x40] sm:$0xff]
  %v32 = vld [vmem:[%s0 + $0x48] sm:$0xff]
  %v33 = vld [vmem:[%s0 + $0x50] sm:$0xff]
  %v34 = vld [vmem:[%s0 + $0x58] sm:$0xff]
  %v35 = vld [vmem:[%s0 + $0x60] sm:$0xff]
  %v36 = vld [vmem:[%s0 + $0x68] sm:$0xff]
  %v37 = vld [vmem:[%s0 + $0x70] sm:$0xff]
  %v38 = vld [vmem:[%s0 + $0x78] sm:$0xff]
  %v39 = vld [vmem:[%s0 + $0x80] sm:$0xff]
  %v40 = vld [vmem:[%s0 + $0x88] sm:$0xff]
  %v41 = vld [vmem:[%s0 + $0x90] sm:$0xff]
  %v42 = vld [vmem:[%s0 + $0x98] sm:$0xff]
  %v43 = vld [vmem:[%s0 + $0xa0] sm:$0xff]
  %v44 = vld [vmem:[%s0 + $0xa8] sm:$0xff]
  %v45 = vld [vmem:[%s0 + $0xb0] sm:$0xff]
  %v46 = vld [vmem:[%s0 + $0xb8] sm:$0xff]
  %v47 = vld [vmem:[%s0 + $0xc0] sm:$0xff]
  %v48 = vld [vmem:[%s0 + $0xc8] sm:$0xff]
  %v49 = vld [vmem:[%s0 + $0xd0] sm:$0xff]
  %v50 = vld [vmem:[%s0 + $0xd8] sm:$0xff]
  %v51 = vld [vmem:[%s0 + $0xe0] sm:$0xff]
  %v52 = vld [vmem:[%s0 + $0xe8] sm:$0xff]
  %v53 = vld [vmem:[%s0 + $0xf0] sm:$0xff]
  %v54 = vld [vmem:[%s0 + $0xf8] sm:$0xff]
  %v55 = vld [vmem:[%s0 + $0x100] sm:$0xff]
  %v56 = vld [vmem:[%s0 + $0x108] sm:$0xff]
  %v57 = vld [vmem:[%s0 + $0x110] sm:$0xff]
  %v58 = vld [vmem:[%s0 + $0x118] sm:$0xff]
  %v59 = vld [vmem:[%s0 + $0x120] sm:$0xff]
  %v60 = vld [vmem:[%s0 + $0x128] sm:$0xff]
  %v61 = vld [vmem:[%s0 + $0x130] sm:$0xff]
  %v62 = vld [vmem:[%s0 + $0x138] sm:$0xff]
  %v63 = vld [vmem:[%s0 + $0x140] sm:$0xff]
  %v64 = vld [vmem:[%s0 + $0x148] sm:$0xff]
  %v65 = vld [vmem:[%s0 + $0x150] sm:$0xff]
  %v66 = vld [vmem:[%s0 + $0x158] sm:$0xff]
  %v67 = vld [vmem:[%s0 + $0x160] sm:$0xff]
  %v68 = vld [vmem:[%s0 + $0x168] sm:$0xff]
  %v69 = vld [vmem:[%s0 + $0x170] sm:$0xff]
  %v70 = vld [vmem:[%s0 + $0x178] sm:$0xff]
  %v71 = vld [vmem:[%s1] sm:$0xff]
  %v72 = vld [vmem:[%s1 + $0x8] sm:$0xf]
  %v73 = vld [vmem:[%s1 + $0xc] sm:$0xff]
  %v74 = vld [vmem:[%s1 + $0x14] sm:$0xf]
  %v75 = vld [vmem:[%s1 + $0x18] sm:$0xff]
  %v76 = vld [vmem:[%s1 + $0x20] sm:$0xf]
  %v77 = vld [vmem:[%s1 + $0x24] sm:$0xff]
  %v78 = vld [vmem:[%s1 + $0x2c] sm:$0xf]
  %v79 = vld [vmem:[%s1 + $0x30] sm:$0xff]
  %v80 = vld [vmem:[%s1 + $0x38] sm:$0xf]
  %v81 = vld [vmem:[%s1 + $0x3c] sm:$0xff]
  %v82 = vld [vmem:[%s1 + $0x44] sm:$0xf]
  %v83 = vld [vmem:[%s1 + $0x48] sm:$0xff]
  %v84 = vld [vmem:[%s1 + $0x50] sm:$0xf]
  %v85 = vld [vmem:[%s1 + $0x54] sm:$0xff]
  %v86 = vld [vmem:[%s1 + $0x5c] sm:$0xf]
  %v87 = vld [vmem:[%s1 + $0x60] sm:$0xff]
  %v88 = vld [vmem:[%s1 + $0x68] sm:$0xf]
  %v89 = vld [vmem:[%s1 + $0x6c] sm:$0xff]
  %v90 = vld [vmem:[%s1 + $0x74] sm:$0xf]
  %v91 = vld [vmem:[%s1 + $0x78] sm:$0xff]
  %v92 = vld [vmem:[%s1 + $0x80] sm:$0xf]
  %v93 = vld [vmem:[%s1 + $0x84] sm:$0xff]
  %v94 = vld [vmem:[%s1 + $0x8c] sm:$0xf]
  %v95 = vld [vmem:[%s1 + $0x90] sm:$0xff]
  %v96 = vld [vmem:[%s1 + $0x98] sm:$0xf]
  %v97 = vld [vmem:[%s1 + $0x9c] sm:$0xff]
  %v98 = vld [vmem:[%s1 + $0xa4] sm:$0xf]
  %v99 = vld [vmem:[%s1 + $0xa8] sm:$0xff]
  %v100 = vld [vmem:[%s1 + $0xb0] sm:$0xf]
  %v101 = vld [vmem:[%s1 + $0xb4] sm:$0xff]
  %v102 = vld [vmem:[%s1 + $0xbc] sm:$0xf]
  %v103 = vld [vmem:[%s2] sm:$0xff]
  %v104 = vld [vmem:[%s2 + $0x8] sm:$0xf]
  %v105 = vld [vmem:[%s2 + $0xc] sm:$0xff]
  %v106 = vld [vmem:[%s2 + $0x14] sm:$0xf]
  %v107 = vld [vmem:[%s2 + $0x18] sm:$0xff]
  %v108 = vld [vmem:[%s2 + $0x20] sm:$0xf]
  %v109 = vld [vmem:[%s2 + $0x24] sm:$0xff]
  %v110 = vld [vmem:[%s2 + $0x2c] sm:$0xf]
  %v111 = vld [vmem:[%s2 + $0x30] sm:$0xff]
  %v112 = vld [vmem:[%s2 + $0x38] sm:$0xf]
  %v113 = vld [vmem:[%s2 + $0x3c] sm:$0xff]
  %v114 = vld [vmem:[%s2 + $0x44] sm:$0xf]
  %v115 = vld [vmem:[%s2 + $0x48] sm:$0xff]
  %v116 = vld [vmem:[%s2 + $0x50] sm:$0xf]
  %v117 = vld [vmem:[%s2 + $0x54] sm:$0xff]
  %v118 = vld [vmem:[%s2 + $0x5c] sm:$0xf]
  %v119 = vld [vmem:[%s2 + $0x60] sm:$0xff]
  %v120 = vld [vmem:[%s2 + $0x68] sm:$0xf]
  %v121 = vld [vmem:[%s2 + $0x6c] sm:$0xff]
  %v122 = vld [vmem:[%s2 + $0x74] sm:$0xf]
  %v123 = vld [vmem:[%s2 + $0x78] sm:$0xff]
  %v124 = vld [vmem:[%s2 + $0x80] sm:$0xf]
  %v125 = vld [vmem:[%s2 + $0x84] sm:$0xff]
  %v126 = vld [vmem:[%s2 + $0x8c] sm:$0xf]
  %v127 = vld [vmem:[%s2 + $0x90] sm:$0xff]
  %v128 = vld [vmem:[%s2 + $0x98] sm:$0xf]
  %v129 = vld [vmem:[%s2 + $0x9c] sm:$0xff]
  %v130 = vld [vmem:[%s2 + $0xa4] sm:$0xf]
  %v131 = vld [vmem:[%s2 + $0xa8] sm:$0xff]
  %v132 = vld [vmem:[%s2 + $0xb0] sm:$0xf]
  %v133 = vld [vmem:[%s2 + $0xb4] sm:$0xff]
  %v134 = vld [vmem:[%s2 + $0xbc] sm:$0xf]
  %v135 = vld [vmem:[%s2 + $0xc0] sm:$0xff]
  %v136 = vld [vmem:[%s2 + $0xc8] sm:$0xf]
  %v137 = vld [vmem:[%s2 + $0xcc] sm:$0xff]
  %v138 = vld [vmem:[%s2 + $0xd4] sm:$0xf]
  %v139 = vld [vmem:[%s2 + $0xd8] sm:$0xff]
  %v140 = vld [vmem:[%s2 + $0xe0] sm:$0xf]
  %v141 = vld [vmem:[%s2 + $0xe4] sm:$0xff]
  %v142 = vld [vmem:[%s2 + $0xec] sm:$0xf]
  %v143 = vld [vmem:[%s2 + $0xf0] sm:$0xff]
  %v144 = vld [vmem:[%s2 + $0xf8] sm:$0xf]
  %v145 = vld [vmem:[%s2 + $0xfc] sm:$0xff]
  %v146 = vld [vmem:[%s2 + $0x104] sm:$0xf]
  %v147 = vld [vmem:[%s2 + $0x108] sm:$0xff]
  %v148 = vld [vmem:[%s2 + $0x110] sm:$0xf]
  %v149 = vld [vmem:[%s2 + $0x114] sm:$0xff]
  %v150 = vld [vmem:[%s2 + $0x11c] sm:$0xf]
  %v151 = vld [vmem:[%s2 + $0x120] sm:$0xff]
  %v152 = vld [vmem:[%s2 + $0x128] sm:$0xf]
  %v153 = vld [vmem:[%s2 + $0x12c] sm:$0xff]
  %v154 = vld [vmem:[%s2 + $0x134] sm:$0xf]
  %v155 = vld [vmem:[%s2 + $0x138] sm:$0xff]
  %v156 = vld [vmem:[%s2 + $0x140] sm:$0xf]
  %v157 = vld [vmem:[%s2 + $0x144] sm:$0xff]
  %v158 = vld [vmem:[%s2 + $0x14c] sm:$0xf]
  %v159 = vld [vmem:[%s2 + $0x150] sm:$0xff]
  %v160 = vld [vmem:[%s2 + $0x158] sm:$0xf]
  %v161 = vld [vmem:[%s2 + $0x15c] sm:$0xff]
  %v162 = vld [vmem:[%s2 + $0x164] sm:$0xf]
  %v163 = vld [vmem:[%s2 + $0x168] sm:$0xff]
  %v164 = vld [vmem:[%s2 + $0x170] sm:$0xf]
  %v165 = vld [vmem:[%s2 + $0x174] sm:$0xff]
  %v166 = vld [vmem:[%s2 + $0x17c] sm:$0xf]
  %v167 = vld [vmem:[%s2 + $0x180] sm:$0xff]
  %v168 = vld [vmem:[%s2 + $0x188] sm:$0xf]
  %v169 = vld [vmem:[%s2 + $0x18c] sm:$0xff]
  %v170 = vld [vmem:[%s2 + $0x194] sm:$0xf]
  %v171 = vld [vmem:[%s2 + $0x198] sm:$0xff]
  %v172 = vld [vmem:[%s2 + $0x1a0] sm:$0xf]
  %v173 = vld [vmem:[%s2 + $0x1a4] sm:$0xff]
  %v174 = vld [vmem:[%s2 + $0x1ac] sm:$0xf]
  %v175 = vld [vmem:[%s2 + $0x1b0] sm:$0xff]
  %v176 = vld [vmem:[%s2 + $0x1b8] sm:$0xf]
  %v177 = vld [vmem:[%s2 + $0x1bc] sm:$0xff]
  %v178 = vld [vmem:[%s2 + $0x1c4] sm:$0xf]
  %v179 = vld [vmem:[%s2 + $0x1c8] sm:$0xff]
  %v180 = vld [vmem:[%s2 + $0x1d0] sm:$0xf]
  %v181 = vld [vmem:[%s2 + $0x1d4] sm:$0xff]
  %v182 = vld [vmem:[%s2 + $0x1dc] sm:$0xf]
  %v183 = vld [vmem:[%s2 + $0x1e0] sm:$0xff]
  %v184 = vld [vmem:[%s2 + $0x1e8] sm:$0xf]
  %v185 = vld [vmem:[%s2 + $0x1ec] sm:$0xff]
  %v186 = vld [vmem:[%s2 + $0x1f4] sm:$0xf]
  %v187 = vld [vmem:[%s2 + $0x1f8] sm:$0xff]
  %v188 = vld [vmem:[%s2 + $0x200] sm:$0xf]
  %v189 = vld [vmem:[%s2 + $0x204] sm:$0xff]
  %v190 = vld [vmem:[%s2 + $0x20c] sm:$0xf]
  %v191 = vld [vmem:[%s2 + $0x210] sm:$0xff]
  %v192 = vld [vmem:[%s2 + $0x218] sm:$0xf]
  %v193 = vld [vmem:[%s2 + $0x21c] sm:$0xff]
  %v194 = vld [vmem:[%s2 + $0x224] sm:$0xf]
  %v195 = vld [vmem:[%s2 + $0x228] sm:$0xff]
  %v196 = vld [vmem:[%s2 + $0x230] sm:$0xf]
  %v197 = vld [vmem:[%s2 + $0x234] sm:$0xff]
  %v198 = vld [vmem:[%s2 + $0x23c] sm:$0xf]
  %v199 = vld [vmem:[%s3] sm:$0x7]
  %v200 = vld [vmem:[%s4] sm:$0xff]
  %v201 = vld [vmem:[%s4 + $0x8] sm:$0xf]
  %v202 = vld [vmem:[%s4 + $0xc] sm:$0xff]
  %v203 = vld [vmem:[%s4 + $0x14] sm:$0xf]
  %v204 = vld [vmem:[%s4 + $0x18] sm:$0xff]
  %v205 = vld [vmem:[%s4 + $0x20] sm:$0xf]
  %v206 = vld [vmem:[%s4 + $0x24] sm:$0xff]
  %v207 = vld [vmem:[%s4 + $0x2c] sm:$0xf]
  %v208 = vld [vmem:[%s4 + $0x30] sm:$0xff]
  %v209 = vld [vmem:[%s4 + $0x38] sm:$0xf]
  %v210 = vld [vmem:[%s4 + $0x3c] sm:$0xff]
  %v211 = vld [vmem:[%s4 + $0x44] sm:$0xf]
  %v212 = vld [vmem:[%s4 + $0x48] sm:$0xff]
  %v213 = vld [vmem:[%s4 + $0x50] sm:$0xf]
  %v214 = vld [vmem:[%s4 + $0x54] sm:$0xff]
  %v215 = vld [vmem:[%s4 + $0x5c] sm:$0xf]
  %v216 = vld [vmem:[%s4 + $0x60] sm:$0xff]
  %v217 = vld [vmem:[%s4 + $0x68] sm:$0xf]
  %v218 = vld [vmem:[%s4 + $0x6c] sm:$0xff]
  %v219 = vld [vmem:[%s4 + $0x74] sm:$0xf]
  %v220 = vld [vmem:[%s4 + $0x78] sm:$0xff]
  %v221 = vld [vmem:[%s4 + $0x80] sm:$0xf]
  %v222 = vld [vmem:[%s4 + $0x84] sm:$0xff]
  %v223 = vld [vmem:[%s4 + $0x8c] sm:$0xf]
  %v224 = vld [vmem:[%s4 + $0x90] sm:$0xff]
  %v225 = vld [vmem:[%s4 + $0x98] sm:$0xf]
  %v226 = vld [vmem:[%s4 + $0x9c] sm:$0xff]
  %v227 = vld [vmem:[%s4 + $0xa4] sm:$0xf]
  %v228 = vld [vmem:[%s4 + $0xa8] sm:$0xff]
  %v229 = vld [vmem:[%s4 + $0xb0] sm:$0xf]
  %v230 = vld [vmem:[%s4 + $0xb4] sm:$0xff]
  %v231 = vld [vmem:[%s4 + $0xbc] sm:$0xf]
  %v232 = vld [vmem:[%s4 + $0xc0] sm:$0xff]
  %v233 = vld [vmem:[%s4 + $0xc8] sm:$0xf]
  %v234 = vld [vmem:[%s4 + $0xcc] sm:$0xff]
  %v235 = vld [vmem:[%s4 + $0xd4] sm:$0xf]
  %v236 = vld [vmem:[%s4 + $0xd8] sm:$0xff]
  %v237 = vld [vmem:[%s4 + $0xe0] sm:$0xf]
  %v238 = vld [vmem:[%s4 + $0xe4] sm:$0xff]
  %v239 = vld [vmem:[%s4 + $0xec] sm:$0xf]
  %v240 = vld [vmem:[%s4 + $0xf0] sm:$0xff]
  %v241 = vld [vmem:[%s4 + $0xf8] sm:$0xf]
  %v242 = vld [vmem:[%s4 + $0xfc] sm:$0xff]
  %v243 = vld [vmem:[%s4 + $0x104] sm:$0xf]
  %v244 = vld [vmem:[%s4 + $0x108] sm:$0xff]
  %v245 = vld [vmem:[%s4 + $0x110] sm:$0xf]
  %v246 = vld [vmem:[%s4 + $0x114] sm:$0xff]
  %v247 = vld [vmem:[%s4 + $0x11c] sm:$0xf]
  %v248 = vld [vmem:[%s4 + $0x120] sm:$0xff]
  %v249 = vld [vmem:[%s4 + $0x128] sm:$0xf]
  %v250 = vld [vmem:[%s4 + $0x12c] sm:$0xff]
  %v251 = vld [vmem:[%s4 + $0x134] sm:$0xf]
  %v252 = vld [vmem:[%s4 + $0x138] sm:$0xff]
  %v253 = vld [vmem:[%s4 + $0x140] sm:$0xf]
  %v254 = vld [vmem:[%s4 + $0x144] sm:$0xff]
  %v255 = vld [vmem:[%s4 + $0x14c] sm:$0xf]
  %v256 = vld [vmem:[%s4 + $0x150] sm:$0xff]
  %v257 = vld [vmem:[%s4 + $0x158] sm:$0xf]
  %v258 = vld [vmem:[%s4 + $0x15c] sm:$0xff]
  %v259 = vld [vmem:[%s4 + $0x164] sm:$0xf]
  %v260 = vld [vmem:[%s4 + $0x168] sm:$0xff]
  %v261 = vld [vmem:[%s4 + $0x170] sm:$0xf]
  %v262 = vld [vmem:[%s4 + $0x174] sm:$0xff]
  %v263 = vld [vmem:[%s4 + $0x17c] sm:$0xf]
  %v264 = vld [vmem:[%s4 + $0x180] sm:$0xff]
  %v265 = vld [vmem:[%s4 + $0x188] sm:$0xf]
  %v266 = vld [vmem:[%s4 + $0x18c] sm:$0xff]
  %v267 = vld [vmem:[%s4 + $0x194] sm:$0xf]
  %v268 = vld [vmem:[%s4 + $0x198] sm:$0xff]
  %v269 = vld [vmem:[%s4 + $0x1a0] sm:$0xf]
  %v270 = vld [vmem:[%s4 + $0x1a4] sm:$0xff]
  %v271 = vld [vmem:[%s4 + $0x1ac] sm:$0xf]
  %v272 = vld [vmem:[%s4 + $0x1b0] sm:$0xff]
  %v273 = vld [vmem:[%s4 + $0x1b8] sm:$0xf]
  %v274 = vld [vmem:[%s4 + $0x1bc] sm:$0xff]
  %v275 = vld [vmem:[%s4 + $0x1c4] sm:$0xf]
  %v276 = vld [vmem:[%s4 + $0x1c8] sm:$0xff]
  %v277 = vld [vmem:[%s4 + $0x1d0] sm:$0xf]
  %v278 = vld [vmem:[%s4 + $0x1d4] sm:$0xff]
  %v279 = vld [vmem:[%s4 + $0x1dc] sm:$0xf]
  %v280 = vld [vmem:[%s4 + $0x1e0] sm:$0xff]
  %v281 = vld [vmem:[%s4 + $0x1e8] sm:$0xf]
  %v282 = vld [vmem:[%s4 + $0x1ec] sm:$0xff]
  %v283 = vld [vmem:[%s4 + $0x1f4] sm:$0xf]
  %v284 = vld [vmem:[%s4 + $0x1f8] sm:$0xff]
  %v285 = vld [vmem:[%s4 + $0x200] sm:$0xf]
  %v286 = vld [vmem:[%s4 + $0x204] sm:$0xff]
  %v287 = vld [vmem:[%s4 + $0x20c] sm:$0xf]
  %v288 = vld [vmem:[%s4 + $0x210] sm:$0xff]
  %v289 = vld [vmem:[%s4 + $0x218] sm:$0xf]
  %v290 = vld [vmem:[%s4 + $0x21c] sm:$0xff]
  %v291 = vld [vmem:[%s4 + $0x224] sm:$0xf]
  %v292 = vld [vmem:[%s4 + $0x228] sm:$0xff]
  %v293 = vld [vmem:[%s4 + $0x230] sm:$0xf]
  %v294 = vld [vmem:[%s4 + $0x234] sm:$0xff]
  %v295 = vld [vmem:[%s4 + $0x23c] sm:$0xf]
  %v296 = vld [vmem:[%s5] sm:$0x7]
  %v298 = vperm.slane %v199, 0
  %v299 = vperm.slane %v199, 1
  %v300 = vperm.slane %v199, 2
  %v336 = vunpack.c.l.b16 %v71
  %v337 = vunpack.c.h.b16 %v71
  %v338 = vunpack.c.l.b16 %v72
  %v339 = vunpack.c.l.b16 %v73
  %v340 = vunpack.c.h.b16 %v73
  %v341 = vunpack.c.l.b16 %v74
  %v342 = vunpack.c.l.b16 %v75
  %v343 = vunpack.c.h.b16 %v75
  %v344 = vunpack.c.l.b16 %v76
  %v345 = vunpack.c.l.b16 %v77
  %v346 = vunpack.c.h.b16 %v77
  %v347 = vunpack.c.l.b16 %v78
  %v348 = vunpack.c.l.b16 %v79
  %v349 = vunpack.c.h.b16 %v79
  %v350 = vunpack.c.l.b16 %v80
  %v351 = vunpack.c.l.b16 %v81
  %v352 = vunpack.c.h.b16 %v81
  %v353 = vunpack.c.l.b16 %v82
  %v354 = vunpack.c.l.b16 %v83
  %v355 = vunpack.c.h.b16 %v83
  %v356 = vunpack.c.l.b16 %v84
  %v357 = vunpack.c.l.b16 %v85
  %v358 = vunpack.c.h.b16 %v85
  %v359 = vunpack.c.l.b16 %v86
  %v360 = vunpack.c.l.b16 %v87
  %v361 = vunpack.c.h.b16 %v87
  %v362 = vunpack.c.l.b16 %v88
  %v363 = vunpack.c.l.b16 %v89
  %v364 = vunpack.c.h.b16 %v89
  %v365 = vunpack.c.l.b16 %v90
  %v366 = vunpack.c.l.b16 %v91
  %v367 = vunpack.c.h.b16 %v91
  %v368 = vunpack.c.l.b16 %v92
  %v369 = vunpack.c.l.b16 %v93
  %v370 = vunpack.c.h.b16 %v93
  %v371 = vunpack.c.l.b16 %v94
  %v372 = vunpack.c.l.b16 %v95
  %v373 = vunpack.c.h.b16 %v95
  %v374 = vunpack.c.l.b16 %v96
  %v375 = vunpack.c.l.b16 %v97
  %v376 = vunpack.c.h.b16 %v97
  %v377 = vunpack.c.l.b16 %v98
  %v378 = vunpack.c.l.b16 %v99
  %v379 = vunpack.c.h.b16 %v99
  %v380 = vunpack.c.l.b16 %v100
  %v381 = vunpack.c.l.b16 %v101
  %v382 = vunpack.c.h.b16 %v101
  %v383 = vunpack.c.l.b16 %v102
  %v384 = vpack.c.b16 %v339, %v336
  %v385 = vpack.c.b16 %v340, %v337
  %v386 = vpack.c.b16 %v341, %v338
  %v387 = vpack.c.b16 %v345, %v342
  %v388 = vpack.c.b16 %v346, %v343
  %v389 = vpack.c.b16 %v347, %v344
  %v390 = vpack.c.b16 %v351, %v348
  %v391 = vpack.c.b16 %v352, %v349
  %v392 = vpack.c.b16 %v353, %v350
  %v393 = vpack.c.b16 %v357, %v354
  %v394 = vpack.c.b16 %v358, %v355
  %v395 = vpack.c.b16 %v359, %v356
  %v396 = vpack.c.b16 %v363, %v360
  %v397 = vpack.c.b16 %v364, %v361
  %v398 = vpack.c.b16 %v365, %v362
  %v399 = vpack.c.b16 %v369, %v366
  %v400 = vpack.c.b16 %v370, %v367
  %v401 = vpack.c.b16 %v371, %v368
  %v402 = vpack.c.b16 %v375, %v372
  %v403 = vpack.c.b16 %v376, %v373
  %v404 = vpack.c.b16 %v377, %v374
  %v405 = vpack.c.b16 %v381, %v378
  %v406 = vpack.c.b16 %v382, %v379
  %v407 = vpack.c.b16 %v383, %v380
  %v528 = vunpack.c.l.b16 %v103
  %v529 = vunpack.c.h.b16 %v103
  %v530 = vunpack.c.l.b16 %v104
  %v531 = vunpack.c.l.b16 %v105
  %v532 = vunpack.c.h.b16 %v105
  %v533 = vunpack.c.l.b16 %v106
  %v534 = vunpack.c.l.b16 %v107
  %v535 = vunpack.c.h.b16 %v107
  %v536 = vunpack.c.l.b16 %v108
  %v537 = vunpack.c.l.b16 %v109
  %v538 = vunpack.c.h.b16 %v109
  %v539 = vunpack.c.l.b16 %v110
  %v540 = vunpack.c.l.b16 %v111
  %v541 = vunpack.c.h.b16 %v111
  %v542 = vunpack.c.l.b16 %v112
  %v543 = vunpack.c.l.b16 %v113
  %v544 = vunpack.c.h.b16 %v113
  %v545 = vunpack.c.l.b16 %v114
  %v546 = vunpack.c.l.b16 %v115
  %v547 = vunpack.c.h.b16 %v115
  %v548 = vunpack.c.l.b16 %v116
  %v549 = vunpack.c.l.b16 %v117
  %v550 = vunpack.c.h.b16 %v117
  %v551 = vunpack.c.l.b16 %v118
  %v552 = vunpack.c.l.b16 %v119
  %v553 = vunpack.c.h.b16 %v119
  %v554 = vunpack.c.l.b16 %v120
  %v555 = vunpack.c.l.b16 %v121
  %v556 = vunpack.c.h.b16 %v121
  %v557 = vunpack.c.l.b16 %v122
  %v558 = vunpack.c.l.b16 %v123
  %v559 = vunpack.c.h.b16 %v123
  %v560 = vunpack.c.l.b16 %v124
  %v561 = vunpack.c.l.b16 %v125
  %v562 = vunpack.c.h.b16 %v125
  %v563 = vunpack.c.l.b16 %v126
  %v564 = vunpack.c.l.b16 %v127
  %v565 = vunpack.c.h.b16 %v127
  %v566 = vunpack.c.l.b16 %v128
  %v567 = vunpack.c.l.b16 %v129
  %v568 = vunpack.c.h.b16 %v129
  %v569 = vunpack.c.l.b16 %v130
  %v570 = vunpack.c.l.b16 %v131
  %v571 = vunpack.c.h.b16 %v131
  %v572 = vunpack.c.l.b16 %v132
  %v573 = vunpack.c.l.b16 %v133
  %v574 = vunpack.c.h.b16 %v133
  %v575 = vunpack.c.l.b16 %v134
  %v576 = vunpack.c.l.b16 %v135
  %v577 = vunpack.c.h.b16 %v135
  %v578 = vunpack.c.l.b16 %v136
  %v579 = vunpack.c.l.b16 %v137
  %v580 = vunpack.c.h.b16 %v137
  %v581 = vunpack.c.l.b16 %v138
  %v582 = vunpack.c.l.b16 %v139
  %v583 = vunpack.c.h.b16 %v139
  %v584 = vunpack.c.l.b16 %v140
  %v585 = vunpack.c.l.b16 %v141
  %v586 = vunpack.c.h.b16 %v141
  %v587 = vunpack.c.l.b16 %v142
  %v588 = vunpack.c.l.b16 %v143
  %v589 = vunpack.c.h.b16 %v143
  %v590 = vunpack.c.l.b16 %v144
  %v591 = vunpack.c.l.b16 %v145
  %v592 = vunpack.c.h.b16 %v145
  %v593 = vunpack.c.l.b16 %v146
  %v594 = vunpack.c.l.b16 %v147
  %v595 = vunpack.c.h.b16 %v147
  %v596 = vunpack.c.l.b16 %v148
  %v597 = vunpack.c.l.b16 %v149
  %v598 = vunpack.c.h.b16 %v149
  %v599 = vunpack.c.l.b16 %v150
  %v600 = vunpack.c.l.b16 %v151
  %v601 = vunpack.c.h.b16 %v151
  %v602 = vunpack.c.l.b16 %v152
  %v603 = vunpack.c.l.b16 %v153
  %v604 = vunpack.c.h.b16 %v153
  %v605 = vunpack.c.l.b16 %v154
  %v606 = vunpack.c.l.b16 %v155
  %v607 = vunpack.c.h.b16 %v155
  %v608 = vunpack.c.l.b16 %v156
  %v609 = vunpack.c.l.b16 %v157
  %v610 = vunpack.c.h.b16 %v157
  %v611 = vunpack.c.l.b16 %v158
  %v612 = vunpack.c.l.b16 %v159
  %v613 = vunpack.c.h.b16 %v159
  %v614 = vunpack.c.l.b16 %v160
  %v615 = vunpack.c.l.b16 %v161
  %v616 = vunpack.c.h.b16 %v161
  %v617 = vunpack.c.l.b16 %v162
  %v618 = vunpack.c.l.b16 %v163
  %v619 = vunpack.c.h.b16 %v163
  %v620 = vunpack.c.l.b16 %v164
  %v621 = vunpack.c.l.b16 %v165
  %v622 = vunpack.c.h.b16 %v165
  %v623 = vunpack.c.l.b16 %v166
  %v624 = vunpack.c.l.b16 %v167
  %v625 = vunpack.c.h.b16 %v167
  %v626 = vunpack.c.l.b16 %v168
  %v627 = vunpack.c.l.b16 %v169
  %v628 = vunpack.c.h.b16 %v169
  %v629 = vunpack.c.l.b16 %v170
  %v630 = vunpack.c.l.b16 %v171
  %v631 = vunpack.c.h.b16 %v171
  %v632 = vunpack.c.l.b16 %v172
  %v633 = vunpack.c.l.b16 %v173
  %v634 = vunpack.c.h.b16 %v173
  %v635 = vunpack.c.l.b16 %v174
  %v636 = vunpack.c.l.b16 %v175
  %v637 = vunpack.c.h.b16 %v175
  %v638 = vunpack.c.l.b16 %v176
  %v639 = vunpack.c.l.b16 %v177
  %v640 = vunpack.c.h.b16 %v177
  %v641 = vunpack.c.l.b16 %v178
  %v642 = vunpack.c.l.b16 %v179
  %v643 = vunpack.c.h.b16 %v179
  %v644 = vunpack.c.l.b16 %v180
  %v645 = vunpack.c.l.b16 %v181
  %v646 = vunpack.c.h.b16 %v181
  %v647 = vunpack.c.l.b16 %v182
  %v648 = vunpack.c.l.b16 %v183
  %v649 = vunpack.c.h.b16 %v183
  %v650 = vunpack.c.l.b16 %v184
  %v651 = vunpack.c.l.b16 %v185
  %v652 = vunpack.c.h.b16 %v185
  %v653 = vunpack.c.l.b16 %v186
  %v654 = vunpack.c.l.b16 %v187
  %v655 = vunpack.c.h.b16 %v187
  %v656 = vunpack.c.l.b16 %v188
  %v657 = vunpack.c.l.b16 %v189
  %v658 = vunpack.c.h.b16 %v189
  %v659 = vunpack.c.l.b16 %v190
  %v660 = vunpack.c.l.b16 %v191
  %v661 = vunpack.c.h.b16 %v191
  %v662 = vunpack.c.l.b16 %v192
  %v663 = vunpack.c.l.b16 %v193
  %v664 = vunpack.c.h.b16 %v193
  %v665 = vunpack.c.l.b16 %v194
  %v666 = vunpack.c.l.b16 %v195
  %v667 = vunpack.c.h.b16 %v195
  %v668 = vunpack.c.l.b16 %v196
  %v669 = vunpack.c.l.b16 %v197
  %v670 = vunpack.c.h.b16 %v197
  %v671 = vunpack.c.l.b16 %v198
  %v672 = vpack.c.b16 %v531, %v528
  %v673 = vpack.c.b16 %v532, %v529
  %v674 = vpack.c.b16 %v533, %v530
  %v675 = vpack.c.b16 %v537, %v534
  %v676 = vpack.c.b16 %v538, %v535
  %v677 = vpack.c.b16 %v539, %v536
  %v678 = vpack.c.b16 %v543, %v540
  %v679 = vpack.c.b16 %v544, %v541
  %v680 = vpack.c.b16 %v545, %v542
  %v681 = vpack.c.b16 %v549, %v546
  %v682 = vpack.c.b16 %v550, %v547
  %v683 = vpack.c.b16 %v551, %v548
  %v684 = vpack.c.b16 %v555, %v552
  %v685 = vpack.c.b16 %v556, %v553
  %v686 = vpack.c.b16 %v557, %v554
  %v687 = vpack.c.b16 %v561, %v558
  %v688 = vpack.c.b16 %v562, %v559
  %v689 = vpack.c.b16 %v563, %v560
  %v690 = vpack.c.b16 %v567, %v564
  %v691 = vpack.c.b16 %v568, %v565
  %v692 = vpack.c.b16 %v569, %v566
  %v693 = vpack.c.b16 %v573, %v570
  %v694 = vpack.c.b16 %v574, %v571
  %v695 = vpack.c.b16 %v575, %v572
  %v696 = vpack.c.b16 %v579, %v576
  %v697 = vpack.c.b16 %v580, %v577
  %v698 = vpack.c.b16 %v581, %v578
  %v699 = vpack.c.b16 %v585, %v582
  %v700 = vpack.c.b16 %v586, %v583
  %v701 = vpack.c.b16 %v587, %v584
  %v702 = vpack.c.b16 %v591, %v588
  %v703 = vpack.c.b16 %v592, %v589
  %v704 = vpack.c.b16 %v593, %v590
  %v705 = vpack.c.b16 %v597, %v594
  %v706 = vpack.c.b16 %v598, %v595
  %v707 = vpack.c.b16 %v599, %v596
  %v708 = vpack.c.b16 %v603, %v600
  %v709 = vpack.c.b16 %v604, %v601
  %v710 = vpack.c.b16 %v605, %v602
  %v711 = vpack.c.b16 %v609, %v606
  %v712 = vpack.c.b16 %v610, %v607
  %v713 = vpack.c.b16 %v611, %v608
  %v714 = vpack.c.b16 %v615, %v612
  %v715 = vpack.c.b16 %v616, %v613
  %v716 = vpack.c.b16 %v617, %v614
  %v717 = vpack.c.b16 %v621, %v618
  %v718 = vpack.c.b16 %v622, %v619
  %v719 = vpack.c.b16 %v623, %v620
  %v720 = vpack.c.b16 %v627, %v624
  %v721 = vpack.c.b16 %v628, %v625
  %v722 = vpack.c.b16 %v629, %v626
  %v723 = vpack.c.b16 %v633, %v630
  %v724 = vpack.c.b16 %v634, %v631
  %v725 = vpack.c.b16 %v635, %v632
  %v726 = vpack.c.b16 %v639, %v636
  %v727 = vpack.c.b16 %v640, %v637
  %v728 = vpack.c.b16 %v641, %v638
  %v729 = vpack.c.b16 %v645, %v642
  %v730 = vpack.c.b16 %v646, %v643
  %v731 = vpack.c.b16 %v647, %v644
  %v732 = vpack.c.b16 %v651, %v648
  %v733 = vpack.c.b16 %v652, %v649
  %v734 = vpack.c.b16 %v653, %v650
  %v735 = vpack.c.b16 %v657, %v654
  %v736 = vpack.c.b16 %v658, %v655
  %v737 = vpack.c.b16 %v659, %v656
  %v738 = vpack.c.b16 %v663, %v660
  %v739 = vpack.c.b16 %v664, %v661
  %v740 = vpack.c.b16 %v665, %v662
  %v741 = vpack.c.b16 %v669, %v666
  %v742 = vpack.c.b16 %v670, %v667
  %v743 = vpack.c.b16 %v671, %v668
  %816 = vmatpush.bf16.msra.mxu0 %v693
  %817 = vmatpush.bf16.msra.mxu0 %v690
  %818 = vmatpush.bf16.msra.mxu0 %v687
  %819 = vmatpush.bf16.msra.mxu0 %v684
  %820 = vmatpush.bf16.msra.mxu0 %v681
  %821 = vmatpush.bf16.msra.mxu0 %v678
  %822 = vmatpush.bf16.msra.mxu0 %v675
  %823 = vmatpush.bf16.msra.mxu0 %v672
  %824 = vmatmul.bf16.gmra.mxu0 %v384
  %v825 = vpop.f32.mrf.mxu0
  %v826 = vadd.f32 %v298, %v825
  %v827 = vpop.f32.mrf.mxu0
  %v828 = vadd.f32 %v298, %v827
  %829 = vmatmul.bf16.gmra.mxu0 %v387
  %v830 = vpop.f32.mrf.mxu0
  %v831 = vadd.f32 %v298, %v830
  %v832 = vpop.f32.mrf.mxu0
  %v833 = vadd.f32 %v298, %v832
  %834 = vmatmul.bf16.gmra.mxu0 %v390
  %v835 = vpop.f32.mrf.mxu0
  %v836 = vadd.f32 %v298, %v835
  %v837 = vpop.f32.mrf.mxu0
  %v838 = vadd.f32 %v298, %v837
  %839 = vmatmul.bf16.gmra.mxu0 %v393
  %v840 = vpop.f32.mrf.mxu0
  %v841 = vadd.f32 %v298, %v840
  %v842 = vpop.f32.mrf.mxu0
  %v843 = vadd.f32 %v298, %v842
  %844 = vmatmul.bf16.gmra.mxu0 %v396
  %v845 = vpop.f32.mrf.mxu0
  %v846 = vadd.f32 %v298, %v845
  %v847 = vpop.f32.mrf.mxu0
  %v848 = vadd.f32 %v298, %v847
  %849 = vmatmul.bf16.gmra.mxu0 %v399
  %v850 = vpop.f32.mrf.mxu0
  %v851 = vadd.f32 %v298, %v850
  %v852 = vpop.f32.mrf.mxu0
  %v853 = vadd.f32 %v298, %v852
  %854 = vmatmul.bf16.gmra.mxu0 %v402
  %v855 = vpop.f32.mrf.mxu0
  %v856 = vadd.f32 %v298, %v855
  %v857 = vpop.f32.mrf.mxu0
  %v858 = vadd.f32 %v298, %v857
  %859 = vmatmul.bf16.gmra.mxu0 %v405
  %v860 = vpop.f32.mrf.mxu0
  %v861 = vadd.f32 %v298, %v860
  %v862 = vpop.f32.mrf.mxu0
  %v863 = vadd.f32 %v298, %v862
  %864 = vdwg.mxu0
  %865 = vmatpush.bf16.msra.mxu0 %v717
  %866 = vmatpush.bf16.msra.mxu0 %v714
  %867 = vmatpush.bf16.msra.mxu0 %v711
  %868 = vmatpush.bf16.msra.mxu0 %v708
  %869 = vmatpush.bf16.msra.mxu0 %v705
  %870 = vmatpush.bf16.msra.mxu0 %v702
  %871 = vmatpush.bf16.msra.mxu0 %v699
  %872 = vmatpush.bf16.msra.mxu0 %v696
  %873 = vmatmul.bf16.gmra.mxu0 %v385
  %v874 = vpop.f32.mrf.mxu0
  %v875 = vadd.f32 %v826, %v874
  %v876 = vpop.f32.mrf.mxu0
  %v877 = vadd.f32 %v828, %v876
  %878 = vmatmul.bf16.gmra.mxu0 %v388
  %v879 = vpop.f32.mrf.mxu0
  %v880 = vadd.f32 %v831, %v879
  %v881 = vpop.f32.mrf.mxu0
  %v882 = vadd.f32 %v833, %v881
  %883 = vmatmul.bf16.gmra.mxu0 %v391
  %v884 = vpop.f32.mrf.mxu0
  %v885 = vadd.f32 %v836, %v884
  %v886 = vpop.f32.mrf.mxu0
  %v887 = vadd.f32 %v838, %v886
  %888 = vmatmul.bf16.gmra.mxu0 %v394
  %v889 = vpop.f32.mrf.mxu0
  %v890 = vadd.f32 %v841, %v889
  %v891 = vpop.f32.mrf.mxu0
  %v892 = vadd.f32 %v843, %v891
  %893 = vmatmul.bf16.gmra.mxu0 %v397
  %v894 = vpop.f32.mrf.mxu0
  %v895 = vadd.f32 %v846, %v894
  %v896 = vpop.f32.mrf.mxu0
  %v897 = vadd.f32 %v848, %v896
  %898 = vmatmul.bf16.gmra.mxu0 %v400
  %v899 = vpop.f32.mrf.mxu0
  %v900 = vadd.f32 %v851, %v899
  %v901 = vpop.f32.mrf.mxu0
  %v902 = vadd.f32 %v853, %v901
  %903 = vmatmul.bf16.gmra.mxu0 %v403
  %v904 = vpop.f32.mrf.mxu0
  %v905 = vadd.f32 %v856, %v904
  %v906 = vpop.f32.mrf.mxu0
  %v907 = vadd.f32 %v858, %v906
  %908 = vmatmul.bf16.gmra.mxu0 %v406
  %v909 = vpop.f32.mrf.mxu0
  %v910 = vadd.f32 %v861, %v909
  %v911 = vpop.f32.mrf.mxu0
  %v912 = vadd.f32 %v863, %v911
  %913 = vdwg.mxu0
  %914 = vmatpush.bf16.msra.mxu0 %v741
  %915 = vmatpush.bf16.msra.mxu0 %v738
  %916 = vmatpush.bf16.msra.mxu0 %v735
  %917 = vmatpush.bf16.msra.mxu0 %v732
  %918 = vmatpush.bf16.msra.mxu0 %v729
  %919 = vmatpush.bf16.msra.mxu0 %v726
  %920 = vmatpush.bf16.msra.mxu0 %v723
  %921 = vmatpush.bf16.msra.mxu0 %v720
  %922 = vmatmul.bf16.gmra.mxu0 %v386
  %v923 = vpop.f32.mrf.mxu0
  %v924 = vadd.f32 %v875, %v923
  %v925 = vpop.f32.mrf.mxu0
  %v926 = vadd.f32 %v877, %v925
  %927 = vmatmul.bf16.gmra.mxu0 %v389
  %v928 = vpop.f32.mrf.mxu0
  %v929 = vadd.f32 %v880, %v928
  %v930 = vpop.f32.mrf.mxu0
  %v931 = vadd.f32 %v882, %v930
  %932 = vmatmul.bf16.gmra.mxu0 %v392
  %v933 = vpop.f32.mrf.mxu0
  %v934 = vadd.f32 %v885, %v933
  %v935 = vpop.f32.mrf.mxu0
  %v936 = vadd.f32 %v887, %v935
  %937 = vmatmul.bf16.gmra.mxu0 %v395
  %v938 = vpop.f32.mrf.mxu0
  %v939 = vadd.f32 %v890, %v938
  %v940 = vpop.f32.mrf.mxu0
  %v941 = vadd.f32 %v892, %v940
  %942 = vmatmul.bf16.gmra.mxu0 %v398
  %v943 = vpop.f32.mrf.mxu0
  %v944 = vadd.f32 %v895, %v943
  %v945 = vpop.f32.mrf.mxu0
  %v946 = vadd.f32 %v897, %v945
  %947 = vmatmul.bf16.gmra.mxu0 %v401
  %v948 = vpop.f32.mrf.mxu0
  %v949 = vadd.f32 %v900, %v948
  %v950 = vpop.f32.mrf.mxu0
  %v951 = vadd.f32 %v902, %v950
  %952 = vmatmul.bf16.gmra.mxu0 %v404
  %v953 = vpop.f32.mrf.mxu0
  %v954 = vadd.f32 %v905, %v953
  %v955 = vpop.f32.mrf.mxu0
  %v956 = vadd.f32 %v907, %v955
  %957 = vmatmul.bf16.gmra.mxu0 %v407
  %v958 = vpop.f32.mrf.mxu0
  %v959 = vadd.f32 %v910, %v958
  %v960 = vpop.f32.mrf.mxu0
  %v961 = vadd.f32 %v912, %v960
  %962 = vdwg.mxu0
  %963 = vmatpush.bf16.msra.mxu0 %v694
  %964 = vmatpush.bf16.msra.mxu0 %v691
  %965 = vmatpush.bf16.msra.mxu0 %v688
  %966 = vmatpush.bf16.msra.mxu0 %v685
  %967 = vmatpush.bf16.msra.mxu0 %v682
  %968 = vmatpush.bf16.msra.mxu0 %v679
  %969 = vmatpush.bf16.msra.mxu0 %v676
  %970 = vmatpush.bf16.msra.mxu0 %v673
  %971 = vmatmul.bf16.gmra.mxu0 %v384
  %v972 = vpop.f32.mrf.mxu0
  %v973 = vadd.f32 %v299, %v972
  %v974 = vpop.f32.mrf.mxu0
  %v975 = vadd.f32 %v299, %v974
  %976 = vmatmul.bf16.gmra.mxu0 %v387
  %v977 = vpop.f32.mrf.mxu0
  %v978 = vadd.f32 %v299, %v977
  %v979 = vpop.f32.mrf.mxu0
  %v980 = vadd.f32 %v299, %v979
  %981 = vmatmul.bf16.gmra.mxu0 %v390
  %v982 = vpop.f32.mrf.mxu0
  %v983 = vadd.f32 %v299, %v982
  %v984 = vpop.f32.mrf.mxu0
  %v985 = vadd.f32 %v299, %v984
  %986 = vmatmul.bf16.gmra.mxu0 %v393
  %v987 = vpop.f32.mrf.mxu0
  %v988 = vadd.f32 %v299, %v987
  %v989 = vpop.f32.mrf.mxu0
  %v990 = vadd.f32 %v299, %v989
  %991 = vmatmul.bf16.gmra.mxu0 %v396
  %v992 = vpop.f32.mrf.mxu0
  %v993 = vadd.f32 %v299, %v992
  %v994 = vpop.f32.mrf.mxu0
  %v995 = vadd.f32 %v299, %v994
  %996 = vmatmul.bf16.gmra.mxu0 %v399
  %v997 = vpop.f32.mrf.mxu0
  %v998 = vadd.f32 %v299, %v997
  %v999 = vpop.f32.mrf.mxu0
  %v1000 = vadd.f32 %v299, %v999
  %1001 = vmatmul.bf16.gmra.mxu0 %v402
  %v1002 = vpop.f32.mrf.mxu0
  %v1003 = vadd.f32 %v299, %v1002
  %v1004 = vpop.f32.mrf.mxu0
  %v1005 = vadd.f32 %v299, %v1004
  %1006 = vmatmul.bf16.gmra.mxu0 %v405
  %v1007 = vpop.f32.mrf.mxu0
  %v1008 = vadd.f32 %v299, %v1007
  %v1009 = vpop.f32.mrf.mxu0
  %v1010 = vadd.f32 %v299, %v1009
  %1011 = vdwg.mxu0
  %1012 = vmatpush.bf16.msra.mxu0 %v718
  %1013 = vmatpush.bf16.msra.mxu0 %v715
  %1014 = vmatpush.bf16.msra.mxu0 %v712
  %1015 = vmatpush.bf16.msra.mxu0 %v709
  %1016 = vmatpush.bf16.msra.mxu0 %v706
  %1017 = vmatpush.bf16.msra.mxu0 %v703
  %1018 = vmatpush.bf16.msra.mxu0 %v700
  %1019 = vmatpush.bf16.msra.mxu0 %v697
  %1020 = vmatmul.bf16.gmra.mxu0 %v385
  %v1021 = vpop.f32.mrf.mxu0
  %v1022 = vadd.f32 %v973, %v1021
  %v1023 = vpop.f32.mrf.mxu0
  %v1024 = vadd.f32 %v975, %v1023
  %1025 = vmatmul.bf16.gmra.mxu0 %v388
  %v1026 = vpop.f32.mrf.mxu0
  %v1027 = vadd.f32 %v978, %v1026
  %v1028 = vpop.f32.mrf.mxu0
  %v1029 = vadd.f32 %v980, %v1028
  %1030 = vmatmul.bf16.gmra.mxu0 %v391
  %v1031 = vpop.f32.mrf.mxu0
  %v1032 = vadd.f32 %v983, %v1031
  %v1033 = vpop.f32.mrf.mxu0
  %v1034 = vadd.f32 %v985, %v1033
  %1035 = vmatmul.bf16.gmra.mxu0 %v394
  %v1036 = vpop.f32.mrf.mxu0
  %v1037 = vadd.f32 %v988, %v1036
  %v1038 = vpop.f32.mrf.mxu0
  %v1039 = vadd.f32 %v990, %v1038
  %1040 = vmatmul.bf16.gmra.mxu0 %v397
  %v1041 = vpop.f32.mrf.mxu0
  %v1042 = vadd.f32 %v993, %v1041
  %v1043 = vpop.f32.mrf.mxu0
  %v1044 = vadd.f32 %v995, %v1043
  %1045 = vmatmul.bf16.gmra.mxu0 %v400
  %v1046 = vpop.f32.mrf.mxu0
  %v1047 = vadd.f32 %v998, %v1046
  %v1048 = vpop.f32.mrf.mxu0
  %v1049 = vadd.f32 %v1000, %v1048
  %1050 = vmatmul.bf16.gmra.mxu0 %v403
  %v1051 = vpop.f32.mrf.mxu0
  %v1052 = vadd.f32 %v1003, %v1051
  %v1053 = vpop.f32.mrf.mxu0
  %v1054 = vadd.f32 %v1005, %v1053
  %1055 = vmatmul.bf16.gmra.mxu0 %v406
  %v1056 = vpop.f32.mrf.mxu0
  %v1057 = vadd.f32 %v1008, %v1056
  %v1058 = vpop.f32.mrf.mxu0
  %v1059 = vadd.f32 %v1010, %v1058
  %1060 = vdwg.mxu0
  %1061 = vmatpush.bf16.msra.mxu0 %v742
  %1062 = vmatpush.bf16.msra.mxu0 %v739
  %1063 = vmatpush.bf16.msra.mxu0 %v736
  %1064 = vmatpush.bf16.msra.mxu0 %v733
  %1065 = vmatpush.bf16.msra.mxu0 %v730
  %1066 = vmatpush.bf16.msra.mxu0 %v727
  %1067 = vmatpush.bf16.msra.mxu0 %v724
  %1068 = vmatpush.bf16.msra.mxu0 %v721
  %1069 = vmatmul.bf16.gmra.mxu0 %v386
  %v1070 = vpop.f32.mrf.mxu0
  %v1071 = vadd.f32 %v1022, %v1070
  %v1072 = vpop.f32.mrf.mxu0
  %v1073 = vadd.f32 %v1024, %v1072
  %1074 = vmatmul.bf16.gmra.mxu0 %v389
  %v1075 = vpop.f32.mrf.mxu0
  %v1076 = vadd.f32 %v1027, %v1075
  %v1077 = vpop.f32.mrf.mxu0
  %v1078 = vadd.f32 %v1029, %v1077
  %1079 = vmatmul.bf16.gmra.mxu0 %v392
  %v1080 = vpop.f32.mrf.mxu0
  %v1081 = vadd.f32 %v1032, %v1080
  %v1082 = vpop.f32.mrf.mxu0
  %v1083 = vadd.f32 %v1034, %v1082
  %1084 = vmatmul.bf16.gmra.mxu0 %v395
  %v1085 = vpop.f32.mrf.mxu0
  %v1086 = vadd.f32 %v1037, %v1085
  %v1087 = vpop.f32.mrf.mxu0
  %v1088 = vadd.f32 %v1039, %v1087
  %1089 = vmatmul.bf16.gmra.mxu0 %v398
  %v1090 = vpop.f32.mrf.mxu0
  %v1091 = vadd.f32 %v1042, %v1090
  %v1092 = vpop.f32.mrf.mxu0
  %v1093 = vadd.f32 %v1044, %v1092
  %1094 = vmatmul.bf16.gmra.mxu0 %v401
  %v1095 = vpop.f32.mrf.mxu0
  %v1096 = vadd.f32 %v1047, %v1095
  %v1097 = vpop.f32.mrf.mxu0
  %v1098 = vadd.f32 %v1049, %v1097
  %1099 = vmatmul.bf16.gmra.mxu0 %v404
  %v1100 = vpop.f32.mrf.mxu0
  %v1101 = vadd.f32 %v1052, %v1100
  %v1102 = vpop.f32.mrf.mxu0
  %v1103 = vadd.f32 %v1054, %v1102
  %1104 = vmatmul.bf16.gmra.mxu0 %v407
  %v1105 = vpop.f32.mrf.mxu0
  %v1106 = vadd.f32 %v1057, %v1105
  %v1107 = vpop.f32.mrf.mxu0
  %v1108 = vadd.f32 %v1059, %v1107
  %1109 = vdwg.mxu0
  %1110 = vmatpush.bf16.msra.mxu0 %v695
  %1111 = vmatpush.bf16.msra.mxu0 %v692
  %1112 = vmatpush.bf16.msra.mxu0 %v689
  %1113 = vmatpush.bf16.msra.mxu0 %v686
  %1114 = vmatpush.bf16.msra.mxu0 %v683
  %1115 = vmatpush.bf16.msra.mxu0 %v680
  %1116 = vmatpush.bf16.msra.mxu0 %v677
  %1117 = vmatpush.bf16.msra.mxu0 %v674
  %1118 = vmatmul.bf16.gmra.mxu0 %v384
  %v1119 = vpop.f32.mrf.mxu0
  %v1120 = vadd.f32 %v300, %v1119
  %v1121 = vpop.f32.mrf.mxu0
  %v1122 = vadd.f32 %v300, %v1121
  %1123 = vmatmul.bf16.gmra.mxu0 %v387
  %v1124 = vpop.f32.mrf.mxu0
  %v1125 = vadd.f32 %v300, %v1124
  %v1126 = vpop.f32.mrf.mxu0
  %v1127 = vadd.f32 %v300, %v1126
  %1128 = vmatmul.bf16.gmra.mxu0 %v390
  %v1129 = vpop.f32.mrf.mxu0
  %v1130 = vadd.f32 %v300, %v1129
  %v1131 = vpop.f32.mrf.mxu0
  %v1132 = vadd.f32 %v300, %v1131
  %1133 = vmatmul.bf16.gmra.mxu0 %v393
  %v1134 = vpop.f32.mrf.mxu0
  %v1135 = vadd.f32 %v300, %v1134
  %v1136 = vpop.f32.mrf.mxu0
  %v1137 = vadd.f32 %v300, %v1136
  %1138 = vmatmul.bf16.gmra.mxu0 %v396
  %v1139 = vpop.f32.mrf.mxu0
  %v1140 = vadd.f32 %v300, %v1139
  %v1141 = vpop.f32.mrf.mxu0
  %v1142 = vadd.f32 %v300, %v1141
  %1143 = vmatmul.bf16.gmra.mxu0 %v399
  %v1144 = vpop.f32.mrf.mxu0
  %v1145 = vadd.f32 %v300, %v1144
  %v1146 = vpop.f32.mrf.mxu0
  %v1147 = vadd.f32 %v300, %v1146
  %1148 = vmatmul.bf16.gmra.mxu0 %v402
  %v1149 = vpop.f32.mrf.mxu0
  %v1150 = vadd.f32 %v300, %v1149
  %v1151 = vpop.f32.mrf.mxu0
  %v1152 = vadd.f32 %v300, %v1151
  %1153 = vmatmul.bf16.gmra.mxu0 %v405
  %v1154 = vpop.f32.mrf.mxu0
  %v1155 = vadd.f32 %v300, %v1154
  %v1156 = vpop.f32.mrf.mxu0
  %v1157 = vadd.f32 %v300, %v1156
  %1158 = vdwg.mxu0
  %1159 = vmatpush.bf16.msra.mxu0 %v719
  %1160 = vmatpush.bf16.msra.mxu0 %v716
  %1161 = vmatpush.bf16.msra.mxu0 %v713
  %1162 = vmatpush.bf16.msra.mxu0 %v710
  %1163 = vmatpush.bf16.msra.mxu0 %v707
  %1164 = vmatpush.bf16.msra.mxu0 %v704
  %1165 = vmatpush.bf16.msra.mxu0 %v701
  %1166 = vmatpush.bf16.msra.mxu0 %v698
  %1167 = vmatmul.bf16.gmra.mxu0 %v385
  %v1168 = vpop.f32.mrf.mxu0
  %v1169 = vadd.f32 %v1120, %v1168
  %v1170 = vpop.f32.mrf.mxu0
  %v1171 = vadd.f32 %v1122, %v1170
  %1172 = vmatmul.bf16.gmra.mxu0 %v388
  %v1173 = vpop.f32.mrf.mxu0
  %v1174 = vadd.f32 %v1125, %v1173
  %v1175 = vpop.f32.mrf.mxu0
  %v1176 = vadd.f32 %v1127, %v1175
  %1177 = vmatmul.bf16.gmra.mxu0 %v391
  %v1178 = vpop.f32.mrf.mxu0
  %v1179 = vadd.f32 %v1130, %v1178
  %v1180 = vpop.f32.mrf.mxu0
  %v1181 = vadd.f32 %v1132, %v1180
  %1182 = vmatmul.bf16.gmra.mxu0 %v394
  %v1183 = vpop.f32.mrf.mxu0
  %v1184 = vadd.f32 %v1135, %v1183
  %v1185 = vpop.f32.mrf.mxu0
  %v1186 = vadd.f32 %v1137, %v1185
  %1187 = vmatmul.bf16.gmra.mxu0 %v397
  %v1188 = vpop.f32.mrf.mxu0
  %v1189 = vadd.f32 %v1140, %v1188
  %v1190 = vpop.f32.mrf.mxu0
  %v1191 = vadd.f32 %v1142, %v1190
  %1192 = vmatmul.bf16.gmra.mxu0 %v400
  %v1193 = vpop.f32.mrf.mxu0
  %v1194 = vadd.f32 %v1145, %v1193
  %v1195 = vpop.f32.mrf.mxu0
  %v1196 = vadd.f32 %v1147, %v1195
  %1197 = vmatmul.bf16.gmra.mxu0 %v403
  %v1198 = vpop.f32.mrf.mxu0
  %v1199 = vadd.f32 %v1150, %v1198
  %v1200 = vpop.f32.mrf.mxu0
  %v1201 = vadd.f32 %v1152, %v1200
  %1202 = vmatmul.bf16.gmra.mxu0 %v406
  %v1203 = vpop.f32.mrf.mxu0
  %v1204 = vadd.f32 %v1155, %v1203
  %v1205 = vpop.f32.mrf.mxu0
  %v1206 = vadd.f32 %v1157, %v1205
  %1207 = vdwg.mxu0
  %1208 = vmatpush.bf16.msra.mxu0 %v743
  %1209 = vmatpush.bf16.msra.mxu0 %v740
  %1210 = vmatpush.bf16.msra.mxu0 %v737
  %1211 = vmatpush.bf16.msra.mxu0 %v734
  %1212 = vmatpush.bf16.msra.mxu0 %v731
  %1213 = vmatpush.bf16.msra.mxu0 %v728
  %1214 = vmatpush.bf16.msra.mxu0 %v725
  %1215 = vmatpush.bf16.msra.mxu0 %v722
  %1216 = vmatmul.bf16.gmra.mxu0 %v386
  %v1217 = vpop.f32.mrf.mxu0
  %v1218 = vadd.f32 %v1169, %v1217
  %v1219 = vpop.f32.mrf.mxu0
  %v1220 = vadd.f32 %v1171, %v1219
  %1221 = vmatmul.bf16.gmra.mxu0 %v389
  %v1222 = vpop.f32.mrf.mxu0
  %v1223 = vadd.f32 %v1174, %v1222
  %v1224 = vpop.f32.mrf.mxu0
  %v1225 = vadd.f32 %v1176, %v1224
  %1226 = vmatmul.bf16.gmra.mxu0 %v392
  %v1227 = vpop.f32.mrf.mxu0
  %v1228 = vadd.f32 %v1179, %v1227
  %v1229 = vpop.f32.mrf.mxu0
  %v1230 = vadd.f32 %v1181, %v1229
  %1231 = vmatmul.bf16.gmra.mxu0 %v395
  %v1232 = vpop.f32.mrf.mxu0
  %v1233 = vadd.f32 %v1184, %v1232
  %v1234 = vpop.f32.mrf.mxu0
  %v1235 = vadd.f32 %v1186, %v1234
  %1236 = vmatmul.bf16.gmra.mxu0 %v398
  %v1237 = vpop.f32.mrf.mxu0
  %v1238 = vadd.f32 %v1189, %v1237
  %v1239 = vpop.f32.mrf.mxu0
  %v1240 = vadd.f32 %v1191, %v1239
  %1241 = vmatmul.bf16.gmra.mxu0 %v401
  %v1242 = vpop.f32.mrf.mxu0
  %v1243 = vadd.f32 %v1194, %v1242
  %v1244 = vpop.f32.mrf.mxu0
  %v1245 = vadd.f32 %v1196, %v1244
  %1246 = vmatmul.bf16.gmra.mxu0 %v404
  %v1247 = vpop.f32.mrf.mxu0
  %v1248 = vadd.f32 %v1199, %v1247
  %v1249 = vpop.f32.mrf.mxu0
  %v1250 = vadd.f32 %v1201, %v1249
  %1251 = vmatmul.bf16.gmra.mxu0 %v407
  %v1252 = vpop.f32.mrf.mxu0
  %v1253 = vadd.f32 %v1204, %v1252
  %v1254 = vpop.f32.mrf.mxu0
  %v1255 = vadd.f32 %v1206, %v1254
  %1256 = vdwg.mxu0
  %v1257 = vmax.f32 %v924, 0.0
  %v1258 = vmax.f32 %v1071, 0.0
  %v1259 = vmax.f32 %v1218, 0.0
  %v1260 = vmax.f32 %v926, 0.0
  %v1261 = vmax.f32 %v1073, 0.0
  %v1262 = vmax.f32 %v1220, 0.0
  %v1263 = vmax.f32 %v929, 0.0
  %v1264 = vmax.f32 %v1076, 0.0
  %v1265 = vmax.f32 %v1223, 0.0
  %v1266 = vmax.f32 %v931, 0.0
  %v1267 = vmax.f32 %v1078, 0.0
  %v1268 = vmax.f32 %v1225, 0.0
  %v1269 = vmax.f32 %v934, 0.0
  %v1270 = vmax.f32 %v1081, 0.0
  %v1271 = vmax.f32 %v1228, 0.0
  %v1272 = vmax.f32 %v936, 0.0
  %v1273 = vmax.f32 %v1083, 0.0
  %v1274 = vmax.f32 %v1230, 0.0
  %v1275 = vmax.f32 %v939, 0.0
  %v1276 = vmax.f32 %v1086, 0.0
  %v1277 = vmax.f32 %v1233, 0.0
  %v1278 = vmax.f32 %v941, 0.0
  %v1279 = vmax.f32 %v1088, 0.0
  %v1280 = vmax.f32 %v1235, 0.0
  %v1281 = vmax.f32 %v944, 0.0
  %v1282 = vmax.f32 %v1091, 0.0
  %v1283 = vmax.f32 %v1238, 0.0
  %v1284 = vmax.f32 %v946, 0.0
  %v1285 = vmax.f32 %v1093, 0.0
  %v1286 = vmax.f32 %v1240, 0.0
  %v1287 = vmax.f32 %v949, 0.0
  %v1288 = vmax.f32 %v1096, 0.0
  %v1289 = vmax.f32 %v1243, 0.0
  %v1290 = vmax.f32 %v951, 0.0
  %v1291 = vmax.f32 %v1098, 0.0
  %v1292 = vmax.f32 %v1245, 0.0
  %v1293 = vmax.f32 %v954, 0.0
  %v1294 = vmax.f32 %v1101, 0.0
  %v1295 = vmax.f32 %v1248, 0.0
  %v1296 = vmax.f32 %v956, 0.0
  %v1297 = vmax.f32 %v1103, 0.0
  %v1298 = vmax.f32 %v1250, 0.0
  %v1299 = vmax.f32 %v959, 0.0
  %v1300 = vmax.f32 %v1106, 0.0
  %v1301 = vmax.f32 %v1253, 0.0
  %v1302 = vmax.f32 %v961, 0.0
  %v1303 = vmax.f32 %v1108, 0.0
  %v1304 = vmax.f32 %v1255, 0.0
  %v1305 = vpack.c.bf16 %v1260, %v1257
  %v1306 = vpack.c.bf16 %v1261, %v1258
  %v1307 = vpack.c.bf16 %v1262, %v1259
  %v1308 = vpack.c.bf16 %v1266, %v1263
  %v1309 = vpack.c.bf16 %v1267, %v1264
  %v1310 = vpack.c.bf16 %v1268, %v1265
  %v1311 = vpack.c.bf16 %v1272, %v1269
  %v1312 = vpack.c.bf16 %v1273, %v1270
  %v1313 = vpack.c.bf16 %v1274, %v1271
  %v1314 = vpack.c.bf16 %v1278, %v1275
  %v1315 = vpack.c.bf16 %v1279, %v1276
  %v1316 = vpack.c.bf16 %v1280, %v1277
  %v1317 = vpack.c.bf16 %v1284, %v1281
  %v1318 = vpack.c.bf16 %v1285, %v1282
  %v1319 = vpack.c.bf16 %v1286, %v1283
  %v1320 = vpack.c.bf16 %v1290, %v1287
  %v1321 = vpack.c.bf16 %v1291, %v1288
  %v1322 = vpack.c.bf16 %v1292, %v1289
  %v1323 = vpack.c.bf16 %v1296, %v1293
  %v1324 = vpack.c.bf16 %v1297, %v1294
  %v1325 = vpack.c.bf16 %v1298, %v1295
  %v1326 = vpack.c.bf16 %v1302, %v1299
  %v1327 = vpack.c.bf16 %v1303, %v1300
  %v1328 = vpack.c.bf16 %v1304, %v1301
  %v1330 = vperm.slane %v296, 0
  %v1331 = vperm.slane %v296, 1
  %v1332 = vperm.slane %v296, 2
  %v1432 = vunpack.c.l.b16 %v200
  %v1433 = vunpack.c.h.b16 %v200
  %v1434 = vunpack.c.l.b16 %v201
  %v1435 = vunpack.c.l.b16 %v202
  %v1436 = vunpack.c.h.b16 %v202
  %v1437 = vunpack.c.l.b16 %v203
  %v1438 = vunpack.c.l.b16 %v204
  %v1439 = vunpack.c.h.b16 %v204
  %v1440 = vunpack.c.l.b16 %v205
  %v1441 = vunpack.c.l.b16 %v206
  %v1442 = vunpack.c.h.b16 %v206
  %v1443 = vunpack.c.l.b16 %v207
  %v1444 = vunpack.c.l.b16 %v208
  %v1445 = vunpack.c.h.b16 %v208
  %v1446 = vunpack.c.l.b16 %v209
  %v1447 = vunpack.c.l.b16 %v210
  %v1448 = vunpack.c.h.b16 %v210
  %v1449 = vunpack.c.l.b16 %v211
  %v1450 = vunpack.c.l.b16 %v212
  %v1451 = vunpack.c.h.b16 %v212
  %v1452 = vunpack.c.l.b16 %v213
  %v1453 = vunpack.c.l.b16 %v214
  %v1454 = vunpack.c.h.b16 %v214
  %v1455 = vunpack.c.l.b16 %v215
  %v1456 = vunpack.c.l.b16 %v216
  %v1457 = vunpack.c.h.b16 %v216
  %v1458 = vunpack.c.l.b16 %v217
  %v1459 = vunpack.c.l.b16 %v218
  %v1460 = vunpack.c.h.b16 %v218
  %v1461 = vunpack.c.l.b16 %v219
  %v1462 = vunpack.c.l.b16 %v220
  %v1463 = vunpack.c.h.b16 %v220
  %v1464 = vunpack.c.l.b16 %v221
  %v1465 = vunpack.c.l.b16 %v222
  %v1466 = vunpack.c.h.b16 %v222
  %v1467 = vunpack.c.l.b16 %v223
  %v1468 = vunpack.c.l.b16 %v224
  %v1469 = vunpack.c.h.b16 %v224
  %v1470 = vunpack.c.l.b16 %v225
  %v1471 = vunpack.c.l.b16 %v226
  %v1472 = vunpack.c.h.b16 %v226
  %v1473 = vunpack.c.l.b16 %v227
  %v1474 = vunpack.c.l.b16 %v228
  %v1475 = vunpack.c.h.b16 %v228
  %v1476 = vunpack.c.l.b16 %v229
  %v1477 = vunpack.c.l.b16 %v230
  %v1478 = vunpack.c.h.b16 %v230
  %v1479 = vunpack.c.l.b16 %v231
  %v1480 = vunpack.c.l.b16 %v232
  %v1481 = vunpack.c.h.b16 %v232
  %v1482 = vunpack.c.l.b16 %v233
  %v1483 = vunpack.c.l.b16 %v234
  %v1484 = vunpack.c.h.b16 %v234
  %v1485 = vunpack.c.l.b16 %v235
  %v1486 = vunpack.c.l.b16 %v236
  %v1487 = vunpack.c.h.b16 %v236
  %v1488 = vunpack.c.l.b16 %v237
  %v1489 = vunpack.c.l.b16 %v238
  %v1490 = vunpack.c.h.b16 %v238
  %v1491 = vunpack.c.l.b16 %v239
  %v1492 = vunpack.c.l.b16 %v240
  %v1493 = vunpack.c.h.b16 %v240
  %v1494 = vunpack.c.l.b16 %v241
  %v1495 = vunpack.c.l.b16 %v242
  %v1496 = vunpack.c.h.b16 %v242
  %v1497 = vunpack.c.l.b16 %v243
  %v1498 = vunpack.c.l.b16 %v244
  %v1499 = vunpack.c.h.b16 %v244
  %v1500 = vunpack.c.l.b16 %v245
  %v1501 = vunpack.c.l.b16 %v246
  %v1502 = vunpack.c.h.b16 %v246
  %v1503 = vunpack.c.l.b16 %v247
  %v1504 = vunpack.c.l.b16 %v248
  %v1505 = vunpack.c.h.b16 %v248
  %v1506 = vunpack.c.l.b16 %v249
  %v1507 = vunpack.c.l.b16 %v250
  %v1508 = vunpack.c.h.b16 %v250
  %v1509 = vunpack.c.l.b16 %v251
  %v1510 = vunpack.c.l.b16 %v252
  %v1511 = vunpack.c.h.b16 %v252
  %v1512 = vunpack.c.l.b16 %v253
  %v1513 = vunpack.c.l.b16 %v254
  %v1514 = vunpack.c.h.b16 %v254
  %v1515 = vunpack.c.l.b16 %v255
  %v1516 = vunpack.c.l.b16 %v256
  %v1517 = vunpack.c.h.b16 %v256
  %v1518 = vunpack.c.l.b16 %v257
  %v1519 = vunpack.c.l.b16 %v258
  %v1520 = vunpack.c.h.b16 %v258
  %v1521 = vunpack.c.l.b16 %v259
  %v1522 = vunpack.c.l.b16 %v260
  %v1523 = vunpack.c.h.b16 %v260
  %v1524 = vunpack.c.l.b16 %v261
  %v1525 = vunpack.c.l.b16 %v262
  %v1526 = vunpack.c.h.b16 %v262
  %v1527 = vunpack.c.l.b16 %v263
  %v1528 = vunpack.c.l.b16 %v264
  %v1529 = vunpack.c.h.b16 %v264
  %v1530 = vunpack.c.l.b16 %v265
  %v1531 = vunpack.c.l.b16 %v266
  %v1532 = vunpack.c.h.b16 %v266
  %v1533 = vunpack.c.l.b16 %v267
  %v1534 = vunpack.c.l.b16 %v268
  %v1535 = vunpack.c.h.b16 %v268
  %v1536 = vunpack.c.l.b16 %v269
  %v1537 = vunpack.c.l.b16 %v270
  %v1538 = vunpack.c.h.b16 %v270
  %v1539 = vunpack.c.l.b16 %v271
  %v1540 = vunpack.c.l.b16 %v272
  %v1541 = vunpack.c.h.b16 %v272
  %v1542 = vunpack.c.l.b16 %v273
  %v1543 = vunpack.c.l.b16 %v274
  %v1544 = vunpack.c.h.b16 %v274
  %v1545 = vunpack.c.l.b16 %v275
  %v1546 = vunpack.c.l.b16 %v276
  %v1547 = vunpack.c.h.b16 %v276
  %v1548 = vunpack.c.l.b16 %v277
  %v1549 = vunpack.c.l.b16 %v278
  %v1550 = vunpack.c.h.b16 %v278
  %v1551 = vunpack.c.l.b16 %v279
  %v1552 = vunpack.c.l.b16 %v280
  %v1553 = vunpack.c.h.b16 %v280
  %v1554 = vunpack.c.l.b16 %v281
  %v1555 = vunpack.c.l.b16 %v282
  %v1556 = vunpack.c.h.b16 %v282
  %v1557 = vunpack.c.l.b16 %v283
  %v1558 = vunpack.c.l.b16 %v284
  %v1559 = vunpack.c.h.b16 %v284
  %v1560 = vunpack.c.l.b16 %v285
  %v1561 = vunpack.c.l.b16 %v286
  %v1562 = vunpack.c.h.b16 %v286
  %v1563 = vunpack.c.l.b16 %v287
  %v1564 = vunpack.c.l.b16 %v288
  %v1565 = vunpack.c.h.b16 %v288
  %v1566 = vunpack.c.l.b16 %v289
  %v1567 = vunpack.c.l.b16 %v290
  %v1568 = vunpack.c.h.b16 %v290
  %v1569 = vunpack.c.l.b16 %v291
  %v1570 = vunpack.c.l.b16 %v292
  %v1571 = vunpack.c.h.b16 %v292
  %v1572 = vunpack.c.l.b16 %v293
  %v1573 = vunpack.c.l.b16 %v294
  %v1574 = vunpack.c.h.b16 %v294
  %v1575 = vunpack.c.l.b16 %v295
  %v1576 = vpack.c.b16 %v1435, %v1432
  %v1577 = vpack.c.b16 %v1436, %v1433
  %v1578 = vpack.c.b16 %v1437, %v1434
  %v1579 = vpack.c.b16 %v1441, %v1438
  %v1580 = vpack.c.b16 %v1442, %v1439
  %v1581 = vpack.c.b16 %v1443, %v1440
  %v1582 = vpack.c.b16 %v1447, %v1444
  %v1583 = vpack.c.b16 %v1448, %v1445
  %v1584 = vpack.c.b16 %v1449, %v1446
  %v1585 = vpack.c.b16 %v1453, %v1450
  %v1586 = vpack.c.b16 %v1454, %v1451
  %v1587 = vpack.c.b16 %v1455, %v1452
  %v1588 = vpack.c.b16 %v1459, %v1456
  %v1589 = vpack.c.b16 %v1460, %v1457
  %v1590 = vpack.c.b16 %v1461, %v1458
  %v1591 = vpack.c.b16 %v1465, %v1462
  %v1592 = vpack.c.b16 %v1466, %v1463
  %v1593 = vpack.c.b16 %v1467, %v1464
  %v1594 = vpack.c.b16 %v1471, %v1468
  %v1595 = vpack.c.b16 %v1472, %v1469
  %v1596 = vpack.c.b16 %v1473, %v1470
  %v1597 = vpack.c.b16 %v1477, %v1474
  %v1598 = vpack.c.b16 %v1478, %v1475
  %v1599 = vpack.c.b16 %v1479, %v1476
  %v1600 = vpack.c.b16 %v1483, %v1480
  %v1601 = vpack.c.b16 %v1484, %v1481
  %v1602 = vpack.c.b16 %v1485, %v1482
  %v1603 = vpack.c.b16 %v1489, %v1486
  %v1604 = vpack.c.b16 %v1490, %v1487
  %v1605 = vpack.c.b16 %v1491, %v1488
  %v1606 = vpack.c.b16 %v1495, %v1492
  %v1607 = vpack.c.b16 %v1496, %v1493
  %v1608 = vpack.c.b16 %v1497, %v1494
  %v1609 = vpack.c.b16 %v1501, %v1498
  %v1610 = vpack.c.b16 %v1502, %v1499
  %v1611 = vpack.c.b16 %v1503, %v1500
  %v1612 = vpack.c.b16 %v1507, %v1504
  %v1613 = vpack.c.b16 %v1508, %v1505
  %v1614 = vpack.c.b16 %v1509, %v1506
  %v1615 = vpack.c.b16 %v1513, %v1510
  %v1616 = vpack.c.b16 %v1514, %v1511
  %v1617 = vpack.c.b16 %v1515, %v1512
  %v1618 = vpack.c.b16 %v1519, %v1516
  %v1619 = vpack.c.b16 %v1520, %v1517
  %v1620 = vpack.c.b16 %v1521, %v1518
  %v1621 = vpack.c.b16 %v1525, %v1522
  %v1622 = vpack.c.b16 %v1526, %v1523
  %v1623 = vpack.c.b16 %v1527, %v1524
  %v1624 = vpack.c.b16 %v1531, %v1528
  %v1625 = vpack.c.b16 %v1532, %v1529
  %v1626 = vpack.c.b16 %v1533, %v1530
  %v1627 = vpack.c.b16 %v1537, %v1534
  %v1628 = vpack.c.b16 %v1538, %v1535
  %v1629 = vpack.c.b16 %v1539, %v1536
  %v1630 = vpack.c.b16 %v1543, %v1540
  %v1631 = vpack.c.b16 %v1544, %v1541
  %v1632 = vpack.c.b16 %v1545, %v1542
  %v1633 = vpack.c.b16 %v1549, %v1546
  %v1634 = vpack.c.b16 %v1550, %v1547
  %v1635 = vpack.c.b16 %v1551, %v1548
  %v1636 = vpack.c.b16 %v1555, %v1552
  %v1637 = vpack.c.b16 %v1556, %v1553
  %v1638 = vpack.c.b16 %v1557, %v1554
  %v1639 = vpack.c.b16 %v1561, %v1558
  %v1640 = vpack.c.b16 %v1562, %v1559
  %v1641 = vpack.c.b16 %v1563, %v1560
  %v1642 = vpack.c.b16 %v1567, %v1564
  %v1643 = vpack.c.b16 %v1568, %v1565
  %v1644 = vpack.c.b16 %v1569, %v1566
  %v1645 = vpack.c.b16 %v1573, %v1570
  %v1646 = vpack.c.b16 %v1574, %v1571
  %v1647 = vpack.c.b16 %v1575, %v1572
  %1720 = vmatpush.bf16.msra.mxu0 %v1597
  %1721 = vmatpush.bf16.msra.mxu0 %v1594
  %1722 = vmatpush.bf16.msra.mxu0 %v1591
  %1723 = vmatpush.bf16.msra.mxu0 %v1588
  %1724 = vmatpush.bf16.msra.mxu0 %v1585
  %1725 = vmatpush.bf16.msra.mxu0 %v1582
  %1726 = vmatpush.bf16.msra.mxu0 %v1579
  %1727 = vmatpush.bf16.msra.mxu0 %v1576
  %1728 = vmatmul.bf16.gmra.mxu0 %v1305
  %v1729 = vpop.f32.mrf.mxu0
  %v1730 = vadd.f32 %v1330, %v1729
  %v1731 = vpop.f32.mrf.mxu0
  %v1732 = vadd.f32 %v1330, %v1731
  %1733 = vmatmul.bf16.gmra.mxu0 %v1308
  %v1734 = vpop.f32.mrf.mxu0
  %v1735 = vadd.f32 %v1330, %v1734
  %v1736 = vpop.f32.mrf.mxu0
  %v1737 = vadd.f32 %v1330, %v1736
  %1738 = vmatmul.bf16.gmra.mxu0 %v1311
  %v1739 = vpop.f32.mrf.mxu0
  %v1740 = vadd.f32 %v1330, %v1739
  %v1741 = vpop.f32.mrf.mxu0
  %v1742 = vadd.f32 %v1330, %v1741
  %1743 = vmatmul.bf16.gmra.mxu0 %v1314
  %v1744 = vpop.f32.mrf.mxu0
  %v1745 = vadd.f32 %v1330, %v1744
  %v1746 = vpop.f32.mrf.mxu0
  %v1747 = vadd.f32 %v1330, %v1746
  %1748 = vmatmul.bf16.gmra.mxu0 %v1317
  %v1749 = vpop.f32.mrf.mxu0
  %v1750 = vadd.f32 %v1330, %v1749
  %v1751 = vpop.f32.mrf.mxu0
  %v1752 = vadd.f32 %v1330, %v1751
  %1753 = vmatmul.bf16.gmra.mxu0 %v1320
  %v1754 = vpop.f32.mrf.mxu0
  %v1755 = vadd.f32 %v1330, %v1754
  %v1756 = vpop.f32.mrf.mxu0
  %v1757 = vadd.f32 %v1330, %v1756
  %1758 = vmatmul.bf16.gmra.mxu0 %v1323
  %v1759 = vpop.f32.mrf.mxu0
  %v1760 = vadd.f32 %v1330, %v1759
  %v1761 = vpop.f32.mrf.mxu0
  %v1762 = vadd.f32 %v1330, %v1761
  %1763 = vmatmul.bf16.gmra.mxu0 %v1326
  %v1764 = vpop.f32.mrf.mxu0
  %v1765 = vadd.f32 %v1330, %v1764
  %v1766 = vpop.f32.mrf.mxu0
  %v1767 = vadd.f32 %v1330, %v1766
  %1768 = vdwg.mxu0
  %1769 = vmatpush.bf16.msra.mxu0 %v1621
  %1770 = vmatpush.bf16.msra.mxu0 %v1618
  %1771 = vmatpush.bf16.msra.mxu0 %v1615
  %1772 = vmatpush.bf16.msra.mxu0 %v1612
  %1773 = vmatpush.bf16.msra.mxu0 %v1609
  %1774 = vmatpush.bf16.msra.mxu0 %v1606
  %1775 = vmatpush.bf16.msra.mxu0 %v1603
  %1776 = vmatpush.bf16.msra.mxu0 %v1600
  %1777 = vmatmul.bf16.gmra.mxu0 %v1306
  %v1778 = vpop.f32.mrf.mxu0
  %v1779 = vadd.f32 %v1730, %v1778
  %v1780 = vpop.f32.mrf.mxu0
  %v1781 = vadd.f32 %v1732, %v1780
  %1782 = vmatmul.bf16.gmra.mxu0 %v1309
  %v1783 = vpop.f32.mrf.mxu0
  %v1784 = vadd.f32 %v1735, %v1783
  %v1785 = vpop.f32.mrf.mxu0
  %v1786 = vadd.f32 %v1737, %v1785
  %1787 = vmatmul.bf16.gmra.mxu0 %v1312
  %v1788 = vpop.f32.mrf.mxu0
  %v1789 = vadd.f32 %v1740, %v1788
  %v1790 = vpop.f32.mrf.mxu0
  %v1791 = vadd.f32 %v1742, %v1790
  %1792 = vmatmul.bf16.gmra.mxu0 %v1315
  %v1793 = vpop.f32.mrf.mxu0
  %v1794 = vadd.f32 %v1745, %v1793
  %v1795 = vpop.f32.mrf.mxu0
  %v1796 = vadd.f32 %v1747, %v1795
  %1797 = vmatmul.bf16.gmra.mxu0 %v1318
  %v1798 = vpop.f32.mrf.mxu0
  %v1799 = vadd.f32 %v1750, %v1798
  %v1800 = vpop.f32.mrf.mxu0
  %v1801 = vadd.f32 %v1752, %v1800
  %1802 = vmatmul.bf16.gmra.mxu0 %v1321
  %v1803 = vpop.f32.mrf.mxu0
  %v1804 = vadd.f32 %v1755, %v1803
  %v1805 = vpop.f32.mrf.mxu0
  %v1806 = vadd.f32 %v1757, %v1805
  %1807 = vmatmul.bf16.gmra.mxu0 %v1324
  %v1808 = vpop.f32.mrf.mxu0
  %v1809 = vadd.f32 %v1760, %v1808
  %v1810 = vpop.f32.mrf.mxu0
  %v1811 = vadd.f32 %v1762, %v1810
  %1812 = vmatmul.bf16.gmra.mxu0 %v1327
  %v1813 = vpop.f32.mrf.mxu0
  %v1814 = vadd.f32 %v1765, %v1813
  %v1815 = vpop.f32.mrf.mxu0
  %v1816 = vadd.f32 %v1767, %v1815
  %1817 = vdwg.mxu0
  %1818 = vmatpush.bf16.msra.mxu0 %v1645
  %1819 = vmatpush.bf16.msra.mxu0 %v1642
  %1820 = vmatpush.bf16.msra.mxu0 %v1639
  %1821 = vmatpush.bf16.msra.mxu0 %v1636
  %1822 = vmatpush.bf16.msra.mxu0 %v1633
  %1823 = vmatpush.bf16.msra.mxu0 %v1630
  %1824 = vmatpush.bf16.msra.mxu0 %v1627
  %1825 = vmatpush.bf16.msra.mxu0 %v1624
  %1826 = vmatmul.bf16.gmra.mxu0 %v1307
  %v1827 = vpop.f32.mrf.mxu0
  %v1828 = vadd.f32 %v1779, %v1827
  %v1829 = vpop.f32.mrf.mxu0
  %v1830 = vadd.f32 %v1781, %v1829
  %1831 = vmatmul.bf16.gmra.mxu0 %v1310
  %v1832 = vpop.f32.mrf.mxu0
  %v1833 = vadd.f32 %v1784, %v1832
  %v1834 = vpop.f32.mrf.mxu0
  %v1835 = vadd.f32 %v1786, %v1834
  %1836 = vmatmul.bf16.gmra.mxu0 %v1313
  %v1837 = vpop.f32.mrf.mxu0
  %v1838 = vadd.f32 %v1789, %v1837
  %v1839 = vpop.f32.mrf.mxu0
  %v1840 = vadd.f32 %v1791, %v1839
  %1841 = vmatmul.bf16.gmra.mxu0 %v1316
  %v1842 = vpop.f32.mrf.mxu0
  %v1843 = vadd.f32 %v1794, %v1842
  %v1844 = vpop.f32.mrf.mxu0
  %v1845 = vadd.f32 %v1796, %v1844
  %1846 = vmatmul.bf16.gmra.mxu0 %v1319
  %v1847 = vpop.f32.mrf.mxu0
  %v1848 = vadd.f32 %v1799, %v1847
  %v1849 = vpop.f32.mrf.mxu0
  %v1850 = vadd.f32 %v1801, %v1849
  %1851 = vmatmul.bf16.gmra.mxu0 %v1322
  %v1852 = vpop.f32.mrf.mxu0
  %v1853 = vadd.f32 %v1804, %v1852
  %v1854 = vpop.f32.mrf.mxu0
  %v1855 = vadd.f32 %v1806, %v1854
  %1856 = vmatmul.bf16.gmra.mxu0 %v1325
  %v1857 = vpop.f32.mrf.mxu0
  %v1858 = vadd.f32 %v1809, %v1857
  %v1859 = vpop.f32.mrf.mxu0
  %v1860 = vadd.f32 %v1811, %v1859
  %1861 = vmatmul.bf16.gmra.mxu0 %v1328
  %v1862 = vpop.f32.mrf.mxu0
  %v1863 = vadd.f32 %v1814, %v1862
  %v1864 = vpop.f32.mrf.mxu0
  %v1865 = vadd.f32 %v1816, %v1864
  %1866 = vdwg.mxu0
  %1867 = vmatpush.bf16.msra.mxu0 %v1598
  %1868 = vmatpush.bf16.msra.mxu0 %v1595
  %1869 = vmatpush.bf16.msra.mxu0 %v1592
  %1870 = vmatpush.bf16.msra.mxu0 %v1589
  %1871 = vmatpush.bf16.msra.mxu0 %v1586
  %1872 = vmatpush.bf16.msra.mxu0 %v1583
  %1873 = vmatpush.bf16.msra.mxu0 %v1580
  %1874 = vmatpush.bf16.msra.mxu0 %v1577
  %1875 = vmatmul.bf16.gmra.mxu0 %v1305
  %v1876 = vpop.f32.mrf.mxu0
  %v1877 = vadd.f32 %v1331, %v1876
  %v1878 = vpop.f32.mrf.mxu0
  %v1879 = vadd.f32 %v1331, %v1878
  %1880 = vmatmul.bf16.gmra.mxu0 %v1308
  %v1881 = vpop.f32.mrf.mxu0
  %v1882 = vadd.f32 %v1331, %v1881
  %v1883 = vpop.f32.mrf.mxu0
  %v1884 = vadd.f32 %v1331, %v1883
  %1885 = vmatmul.bf16.gmra.mxu0 %v1311
  %v1886 = vpop.f32.mrf.mxu0
  %v1887 = vadd.f32 %v1331, %v1886
  %v1888 = vpop.f32.mrf.mxu0
  %v1889 = vadd.f32 %v1331, %v1888
  %1890 = vmatmul.bf16.gmra.mxu0 %v1314
  %v1891 = vpop.f32.mrf.mxu0
  %v1892 = vadd.f32 %v1331, %v1891
  %v1893 = vpop.f32.mrf.mxu0
  %v1894 = vadd.f32 %v1331, %v1893
  %1895 = vmatmul.bf16.gmra.mxu0 %v1317
  %v1896 = vpop.f32.mrf.mxu0
  %v1897 = vadd.f32 %v1331, %v1896
  %v1898 = vpop.f32.mrf.mxu0
  %v1899 = vadd.f32 %v1331, %v1898
  %1900 = vmatmul.bf16.gmra.mxu0 %v1320
  %v1901 = vpop.f32.mrf.mxu0
  %v1902 = vadd.f32 %v1331, %v1901
  %v1903 = vpop.f32.mrf.mxu0
  %v1904 = vadd.f32 %v1331, %v1903
  %1905 = vmatmul.bf16.gmra.mxu0 %v1323
  %v1906 = vpop.f32.mrf.mxu0
  %v1907 = vadd.f32 %v1331, %v1906
  %v1908 = vpop.f32.mrf.mxu0
  %v1909 = vadd.f32 %v1331, %v1908
  %1910 = vmatmul.bf16.gmra.mxu0 %v1326
  %v1911 = vpop.f32.mrf.mxu0
  %v1912 = vadd.f32 %v1331, %v1911
  %v1913 = vpop.f32.mrf.mxu0
  %v1914 = vadd.f32 %v1331, %v1913
  %1915 = vdwg.mxu0
  %1916 = vmatpush.bf16.msra.mxu0 %v1622
  %1917 = vmatpush.bf16.msra.mxu0 %v1619
  %1918 = vmatpush.bf16.msra.mxu0 %v1616
  %1919 = vmatpush.bf16.msra.mxu0 %v1613
  %1920 = vmatpush.bf16.msra.mxu0 %v1610
  %1921 = vmatpush.bf16.msra.mxu0 %v1607
  %1922 = vmatpush.bf16.msra.mxu0 %v1604
  %1923 = vmatpush.bf16.msra.mxu0 %v1601
  %1924 = vmatmul.bf16.gmra.mxu0 %v1306
  %v1925 = vpop.f32.mrf.mxu0
  %v1926 = vadd.f32 %v1877, %v1925
  %v1927 = vpop.f32.mrf.mxu0
  %v1928 = vadd.f32 %v1879, %v1927
  %1929 = vmatmul.bf16.gmra.mxu0 %v1309
  %v1930 = vpop.f32.mrf.mxu0
  %v1931 = vadd.f32 %v1882, %v1930
  %v1932 = vpop.f32.mrf.mxu0
  %v1933 = vadd.f32 %v1884, %v1932
  %1934 = vmatmul.bf16.gmra.mxu0 %v1312
  %v1935 = vpop.f32.mrf.mxu0
  %v1936 = vadd.f32 %v1887, %v1935
  %v1937 = vpop.f32.mrf.mxu0
  %v1938 = vadd.f32 %v1889, %v1937
  %1939 = vmatmul.bf16.gmra.mxu0 %v1315
  %v1940 = vpop.f32.mrf.mxu0
  %v1941 = vadd.f32 %v1892, %v1940
  %v1942 = vpop.f32.mrf.mxu0
  %v1943 = vadd.f32 %v1894, %v1942
  %1944 = vmatmul.bf16.gmra.mxu0 %v1318
  %v1945 = vpop.f32.mrf.mxu0
  %v1946 = vadd.f32 %v1897, %v1945
  %v1947 = vpop.f32.mrf.mxu0
  %v1948 = vadd.f32 %v1899, %v1947
  %1949 = vmatmul.bf16.gmra.mxu0 %v1321
  %v1950 = vpop.f32.mrf.mxu0
  %v1951 = vadd.f32 %v1902, %v1950
  %v1952 = vpop.f32.mrf.mxu0
  %v1953 = vadd.f32 %v1904, %v1952
  %1954 = vmatmul.bf16.gmra.mxu0 %v1324
  %v1955 = vpop.f32.mrf.mxu0
  %v1956 = vadd.f32 %v1907, %v1955
  %v1957 = vpop.f32.mrf.mxu0
  %v1958 = vadd.f32 %v1909, %v1957
  %1959 = vmatmul.bf16.gmra.mxu0 %v1327
  %v1960 = vpop.f32.mrf.mxu0
  %v1961 = vadd.f32 %v1912, %v1960
  %v1962 = vpop.f32.mrf.mxu0
  %v1963 = vadd.f32 %v1914, %v1962
  %1964 = vdwg.mxu0
  %1965 = vmatpush.bf16.msra.mxu0 %v1646
  %1966 = vmatpush.bf16.msra.mxu0 %v1643
  %1967 = vmatpush.bf16.msra.mxu0 %v1640
  %1968 = vmatpush.bf16.msra.mxu0 %v1637
  %1969 = vmatpush.bf16.msra.mxu0 %v1634
  %1970 = vmatpush.bf16.msra.mxu0 %v1631
  %1971 = vmatpush.bf16.msra.mxu0 %v1628
  %1972 = vmatpush.bf16.msra.mxu0 %v1625
  %1973 = vmatmul.bf16.gmra.mxu0 %v1307
  %v1974 = vpop.f32.mrf.mxu0
  %v1975 = vadd.f32 %v1926, %v1974
  %v1976 = vpop.f32.mrf.mxu0
  %v1977 = vadd.f32 %v1928, %v1976
  %1978 = vmatmul.bf16.gmra.mxu0 %v1310
  %v1979 = vpop.f32.mrf.mxu0
  %v1980 = vadd.f32 %v1931, %v1979
  %v1981 = vpop.f32.mrf.mxu0
  %v1982 = vadd.f32 %v1933, %v1981
  %1983 = vmatmul.bf16.gmra.mxu0 %v1313
  %v1984 = vpop.f32.mrf.mxu0
  %v1985 = vadd.f32 %v1936, %v1984
  %v1986 = vpop.f32.mrf.mxu0
  %v1987 = vadd.f32 %v1938, %v1986
  %1988 = vmatmul.bf16.gmra.mxu0 %v1316
  %v1989 = vpop.f32.mrf.mxu0
  %v1990 = vadd.f32 %v1941, %v1989
  %v1991 = vpop.f32.mrf.mxu0
  %v1992 = vadd.f32 %v1943, %v1991
  %1993 = vmatmul.bf16.gmra.mxu0 %v1319
  %v1994 = vpop.f32.mrf.mxu0
  %v1995 = vadd.f32 %v1946, %v1994
  %v1996 = vpop.f32.mrf.mxu0
  %v1997 = vadd.f32 %v1948, %v1996
  %1998 = vmatmul.bf16.gmra.mxu0 %v1322
  %v1999 = vpop.f32.mrf.mxu0
  %v2000 = vadd.f32 %v1951, %v1999
  %v2001 = vpop.f32.mrf.mxu0
  %v2002 = vadd.f32 %v1953, %v2001
  %2003 = vmatmul.bf16.gmra.mxu0 %v1325
  %v2004 = vpop.f32.mrf.mxu0
  %v2005 = vadd.f32 %v1956, %v2004
  %v2006 = vpop.f32.mrf.mxu0
  %v2007 = vadd.f32 %v1958, %v2006
  %2008 = vmatmul.bf16.gmra.mxu0 %v1328
  %v2009 = vpop.f32.mrf.mxu0
  %v2010 = vadd.f32 %v1961, %v2009
  %v2011 = vpop.f32.mrf.mxu0
  %v2012 = vadd.f32 %v1963, %v2011
  %2013 = vdwg.mxu0
  %2014 = vmatpush.bf16.msra.mxu0 %v1599
  %2015 = vmatpush.bf16.msra.mxu0 %v1596
  %2016 = vmatpush.bf16.msra.mxu0 %v1593
  %2017 = vmatpush.bf16.msra.mxu0 %v1590
  %2018 = vmatpush.bf16.msra.mxu0 %v1587
  %2019 = vmatpush.bf16.msra.mxu0 %v1584
  %2020 = vmatpush.bf16.msra.mxu0 %v1581
  %2021 = vmatpush.bf16.msra.mxu0 %v1578
  %2022 = vmatmul.bf16.gmra.mxu0 %v1305
  %v2023 = vpop.f32.mrf.mxu0
  %v2024 = vadd.f32 %v1332, %v2023
  %v2025 = vpop.f32.mrf.mxu0
  %v2026 = vadd.f32 %v1332, %v2025
  %2027 = vmatmul.bf16.gmra.mxu0 %v1308
  %v2028 = vpop.f32.mrf.mxu0
  %v2029 = vadd.f32 %v1332, %v2028
  %v2030 = vpop.f32.mrf.mxu0
  %v2031 = vadd.f32 %v1332, %v2030
  %2032 = vmatmul.bf16.gmra.mxu0 %v1311
  %v2033 = vpop.f32.mrf.mxu0
  %v2034 = vadd.f32 %v1332, %v2033
  %v2035 = vpop.f32.mrf.mxu0
  %v2036 = vadd.f32 %v1332, %v2035
  %2037 = vmatmul.bf16.gmra.mxu0 %v1314
  %v2038 = vpop.f32.mrf.mxu0
  %v2039 = vadd.f32 %v1332, %v2038
  %v2040 = vpop.f32.mrf.mxu0
  %v2041 = vadd.f32 %v1332, %v2040
  %2042 = vmatmul.bf16.gmra.mxu0 %v1317
  %v2043 = vpop.f32.mrf.mxu0
  %v2044 = vadd.f32 %v1332, %v2043
  %v2045 = vpop.f32.mrf.mxu0
  %v2046 = vadd.f32 %v1332, %v2045
  %2047 = vmatmul.bf16.gmra.mxu0 %v1320
  %v2048 = vpop.f32.mrf.mxu0
  %v2049 = vadd.f32 %v1332, %v2048
  %v2050 = vpop.f32.mrf.mxu0
  %v2051 = vadd.f32 %v1332, %v2050
  %2052 = vmatmul.bf16.gmra.mxu0 %v1323
  %v2053 = vpop.f32.mrf.mxu0
  %v2054 = vadd.f32 %v1332, %v2053
  %v2055 = vpop.f32.mrf.mxu0
  %v2056 = vadd.f32 %v1332, %v2055
  %2057 = vmatmul.bf16.gmra.mxu0 %v1326
  %v2058 = vpop.f32.mrf.mxu0
  %v2059 = vadd.f32 %v1332, %v2058
  %v2060 = vpop.f32.mrf.mxu0
  %v2061 = vadd.f32 %v1332, %v2060
  %2062 = vdwg.mxu0
  %2063 = vmatpush.bf16.msra.mxu0 %v1623
  %2064 = vmatpush.bf16.msra.mxu0 %v1620
  %2065 = vmatpush.bf16.msra.mxu0 %v1617
  %2066 = vmatpush.bf16.msra.mxu0 %v1614
  %2067 = vmatpush.bf16.msra.mxu0 %v1611
  %2068 = vmatpush.bf16.msra.mxu0 %v1608
  %2069 = vmatpush.bf16.msra.mxu0 %v1605
  %2070 = vmatpush.bf16.msra.mxu0 %v1602
  %2071 = vmatmul.bf16.gmra.mxu0 %v1306
  %v2072 = vpop.f32.mrf.mxu0
  %v2073 = vadd.f32 %v2024, %v2072
  %v2074 = vpop.f32.mrf.mxu0
  %v2075 = vadd.f32 %v2026, %v2074
  %2076 = vmatmul.bf16.gmra.mxu0 %v1309
  %v2077 = vpop.f32.mrf.mxu0
  %v2078 = vadd.f32 %v2029, %v2077
  %v2079 = vpop.f32.mrf.mxu0
  %v2080 = vadd.f32 %v2031, %v2079
  %2081 = vmatmul.bf16.gmra.mxu0 %v1312
  %v2082 = vpop.f32.mrf.mxu0
  %v2083 = vadd.f32 %v2034, %v2082
  %v2084 = vpop.f32.mrf.mxu0
  %v2085 = vadd.f32 %v2036, %v2084
  %2086 = vmatmul.bf16.gmra.mxu0 %v1315
  %v2087 = vpop.f32.mrf.mxu0
  %v2088 = vadd.f32 %v2039, %v2087
  %v2089 = vpop.f32.mrf.mxu0
  %v2090 = vadd.f32 %v2041, %v2089
  %2091 = vmatmul.bf16.gmra.mxu0 %v1318
  %v2092 = vpop.f32.mrf.mxu0
  %v2093 = vadd.f32 %v2044, %v2092
  %v2094 = vpop.f32.mrf.mxu0
  %v2095 = vadd.f32 %v2046, %v2094
  %2096 = vmatmul.bf16.gmra.mxu0 %v1321
  %v2097 = vpop.f32.mrf.mxu0
  %v2098 = vadd.f32 %v2049, %v2097
  %v2099 = vpop.f32.mrf.mxu0
  %v2100 = vadd.f32 %v2051, %v2099
  %2101 = vmatmul.bf16.gmra.mxu0 %v1324
  %v2102 = vpop.f32.mrf.mxu0
  %v2103 = vadd.f32 %v2054, %v2102
  %v2104 = vpop.f32.mrf.mxu0
  %v2105 = vadd.f32 %v2056, %v2104
  %2106 = vmatmul.bf16.gmra.mxu0 %v1327
  %v2107 = vpop.f32.mrf.mxu0
  %v2108 = vadd.f32 %v2059, %v2107
  %v2109 = vpop.f32.mrf.mxu0
  %v2110 = vadd.f32 %v2061, %v2109
  %2111 = vdwg.mxu0
  %2112 = vmatpush.bf16.msra.mxu0 %v1647
  %2113 = vmatpush.bf16.msra.mxu0 %v1644
  %2114 = vmatpush.bf16.msra.mxu0 %v1641
  %2115 = vmatpush.bf16.msra.mxu0 %v1638
  %2116 = vmatpush.bf16.msra.mxu0 %v1635
  %2117 = vmatpush.bf16.msra.mxu0 %v1632
  %2118 = vmatpush.bf16.msra.mxu0 %v1629
  %2119 = vmatpush.bf16.msra.mxu0 %v1626
  %2120 = vmatmul.bf16.gmra.mxu0 %v1307
  %v2121 = vpop.f32.mrf.mxu0
  %v2122 = vadd.f32 %v2073, %v2121
  %v2123 = vpop.f32.mrf.mxu0
  %v2124 = vadd.f32 %v2075, %v2123
  %2125 = vmatmul.bf16.gmra.mxu0 %v1310
  %v2126 = vpop.f32.mrf.mxu0
  %v2127 = vadd.f32 %v2078, %v2126
  %v2128 = vpop.f32.mrf.mxu0
  %v2129 = vadd.f32 %v2080, %v2128
  %2130 = vmatmul.bf16.gmra.mxu0 %v1313
  %v2131 = vpop.f32.mrf.mxu0
  %v2132 = vadd.f32 %v2083, %v2131
  %v2133 = vpop.f32.mrf.mxu0
  %v2134 = vadd.f32 %v2085, %v2133
  %2135 = vmatmul.bf16.gmra.mxu0 %v1316
  %v2136 = vpop.f32.mrf.mxu0
  %v2137 = vadd.f32 %v2088, %v2136
  %v2138 = vpop.f32.mrf.mxu0
  %v2139 = vadd.f32 %v2090, %v2138
  %2140 = vmatmul.bf16.gmra.mxu0 %v1319
  %v2141 = vpop.f32.mrf.mxu0
  %v2142 = vadd.f32 %v2093, %v2141
  %v2143 = vpop.f32.mrf.mxu0
  %v2144 = vadd.f32 %v2095, %v2143
  %2145 = vmatmul.bf16.gmra.mxu0 %v1322
  %v2146 = vpop.f32.mrf.mxu0
  %v2147 = vadd.f32 %v2098, %v2146
  %v2148 = vpop.f32.mrf.mxu0
  %v2149 = vadd.f32 %v2100, %v2148
  %2150 = vmatmul.bf16.gmra.mxu0 %v1325
  %v2151 = vpop.f32.mrf.mxu0
  %v2152 = vadd.f32 %v2103, %v2151
  %v2153 = vpop.f32.mrf.mxu0
  %v2154 = vadd.f32 %v2105, %v2153
  %2155 = vmatmul.bf16.gmra.mxu0 %v1328
  %v2156 = vpop.f32.mrf.mxu0
  %v2157 = vadd.f32 %v2108, %v2156
  %v2158 = vpop.f32.mrf.mxu0
  %v2159 = vadd.f32 %v2110, %v2158
  %2160 = vdwg.mxu0
  %v2161 = vadd.f32 %v23, %v1828
  %v2162 = vadd.f32 %v24, %v1975
  %v2163 = vadd.f32 %v25, %v2122
  %v2164 = vadd.f32 %v26, %v1830
  %v2165 = vadd.f32 %v27, %v1977
  %v2166 = vadd.f32 %v28, %v2124
  %v2167 = vadd.f32 %v29, %v1833
  %v2168 = vadd.f32 %v30, %v1980
  %v2169 = vadd.f32 %v31, %v2127
  %v2170 = vadd.f32 %v32, %v1835
  %v2171 = vadd.f32 %v33, %v1982
  %v2172 = vadd.f32 %v34, %v2129
  %v2173 = vadd.f32 %v35, %v1838
  %v2174 = vadd.f32 %v36, %v1985
  %v2175 = vadd.f32 %v37, %v2132
  %v2176 = vadd.f32 %v38, %v1840
  %v2177 = vadd.f32 %v39, %v1987
  %v2178 = vadd.f32 %v40, %v2134
  %v2179 = vadd.f32 %v41, %v1843
  %v2180 = vadd.f32 %v42, %v1990
  %v2181 = vadd.f32 %v43, %v2137
  %v2182 = vadd.f32 %v44, %v1845
  %v2183 = vadd.f32 %v45, %v1992
  %v2184 = vadd.f32 %v46, %v2139
  %v2185 = vadd.f32 %v47, %v1848
  %v2186 = vadd.f32 %v48, %v1995
  %v2187 = vadd.f32 %v49, %v2142
  %v2188 = vadd.f32 %v50, %v1850
  %v2189 = vadd.f32 %v51, %v1997
  %v2190 = vadd.f32 %v52, %v2144
  %v2191 = vadd.f32 %v53, %v1853
  %v2192 = vadd.f32 %v54, %v2000
  %v2193 = vadd.f32 %v55, %v2147
  %v2194 = vadd.f32 %v56, %v1855
  %v2195 = vadd.f32 %v57, %v2002
  %v2196 = vadd.f32 %v58, %v2149
  %v2197 = vadd.f32 %v59, %v1858
  %v2198 = vadd.f32 %v60, %v2005
  %v2199 = vadd.f32 %v61, %v2152
  %v2200 = vadd.f32 %v62, %v1860
  %v2201 = vadd.f32 %v63, %v2007
  %v2202 = vadd.f32 %v64, %v2154
  %v2203 = vadd.f32 %v65, %v1863
  %v2204 = vadd.f32 %v66, %v2010
  %v2205 = vadd.f32 %v67, %v2157
  %v2206 = vadd.f32 %v68, %v1865
  %v2207 = vadd.f32 %v69, %v2012
  %v2208 = vadd.f32 %v70, %v2159
  %2209 = vst [vmem:[%s6] sm:$0xff] %v2161
  %2210 = vst [vmem:[%s6 + $0x8] sm:$0xff] %v2162
  %2211 = vst [vmem:[%s6 + $0x10] sm:$0xff] %v2163
  %2212 = vst [vmem:[%s6 + $0x18] sm:$0xff] %v2164
  %2213 = vst [vmem:[%s6 + $0x20] sm:$0xff] %v2165
  %2214 = vst [vmem:[%s6 + $0x28] sm:$0xff] %v2166
  %2215 = vst [vmem:[%s6 + $0x30] sm:$0xff] %v2167
  %2216 = vst [vmem:[%s6 + $0x38] sm:$0xff] %v2168
  %2217 = vst [vmem:[%s6 + $0x40] sm:$0xff] %v2169
  %2218 = vst [vmem:[%s6 + $0x48] sm:$0xff] %v2170
  %2219 = vst [vmem:[%s6 + $0x50] sm:$0xff] %v2171
  %2220 = vst [vmem:[%s6 + $0x58] sm:$0xff] %v2172
  %2221 = vst [vmem:[%s6 + $0x60] sm:$0xff] %v2173
  %2222 = vst [vmem:[%s6 + $0x68] sm:$0xff] %v2174
  %2223 = vst [vmem:[%s6 + $0x70] sm:$0xff] %v2175
  %2224 = vst [vmem:[%s6 + $0x78] sm:$0xff] %v2176
  %2225 = vst [vmem:[%s6 + $0x80] sm:$0xff] %v2177
  %2226 = vst [vmem:[%s6 + $0x88] sm:$0xff] %v2178
  %2227 = vst [vmem:[%s6 + $0x90] sm:$0xff] %v2179
  %2228 = vst [vmem:[%s6 + $0x98] sm:$0xff] %v2180
  %2229 = vst [vmem:[%s6 + $0xa0] sm:$0xff] %v2181
  %2230 = vst [vmem:[%s6 + $0xa8] sm:$0xff] %v2182
  %2231 = vst [vmem:[%s6 + $0xb0] sm:$0xff] %v2183
  %2232 = vst [vmem:[%s6 + $0xb8] sm:$0xff] %v2184
  %2233 = vst [vmem:[%s6 + $0xc0] sm:$0xff] %v2185
  %2234 = vst [vmem:[%s6 + $0xc8] sm:$0xff] %v2186
  %2235 = vst [vmem:[%s6 + $0xd0] sm:$0xff] %v2187
  %2236 = vst [vmem:[%s6 + $0xd8] sm:$0xff] %v2188
  %2237 = vst [vmem:[%s6 + $0xe0] sm:$0xff] %v2189
  %2238 = vst [vmem:[%s6 + $0xe8] sm:$0xff] %v2190
  %2239 = vst [vmem:[%s6 + $0xf0] sm:$0xff] %v2191
  %2240 = vst [vmem:[%s6 + $0xf8] sm:$0xff] %v2192
  %2241 = vst [vmem:[%s6 + $0x100] sm:$0xff] %v2193
  %2242 = vst [vmem:[%s6 + $0x108] sm:$0xff] %v2194
  %2243 = vst [vmem:[%s6 + $0x110] sm:$0xff] %v2195
  %2244 = vst [vmem:[%s6 + $0x118] sm:$0xff] %v2196
  %2245 = vst [vmem:[%s6 + $0x120] sm:$0xff] %v2197
  %2246 = vst [vmem:[%s6 + $0x128] sm:$0xff] %v2198
  %2247 = vst [vmem:[%s6 + $0x130] sm:$0xff] %v2199
  %2248 = vst [vmem:[%s6 + $0x138] sm:$0xff] %v2200
  %2249 = vst [vmem:[%s6 + $0x140] sm:$0xff] %v2201
  %2250 = vst [vmem:[%s6 + $0x148] sm:$0xff] %v2202
  %2251 = vst [vmem:[%s6 + $0x150] sm:$0xff] %v2203
  %2252 = vst [vmem:[%s6 + $0x158] sm:$0xff] %v2204
  %2253 = vst [vmem:[%s6 + $0x160] sm:$0xff] %v2205
  %2254 = vst [vmem:[%s6 + $0x168] sm:$0xff] %v2206
  %2255 = vst [vmem:[%s6 + $0x170] sm:$0xff] %v2207
  %2256 = vst [vmem:[%s6 + $0x178] sm:$0xff] %v2208
  // Predicated region
  $region26: #{update_forward.4} parent=0 // pred_check
    _
  $region27: #{update_forward.4} parent=0 // pred_check_branch
    %2258 = sbr.rel (0) target = $region29
  $region28: #{update_forward.4} parent=0 // pred_region
    _
  $region29: #{update_forward.4} parent=0 // pred_fallthru
    _
  // Predicated region
  $region30: #{update_forward.4} parent=0 // pred_check
    _
  $region31: #{update_forward.4} parent=0 // pred_check_branch
    %2260 = sbr.rel (0) target = $region33
  $region32: #{update_forward.4} parent=0 // pred_region
    _
  $region33: #{update_forward.4} parent=0 // pred_fallthru
    _

// kernel: update_forward.5
$region0: #{update_forward.5}
  #allocation0 [shape = 'u32[]', space=smem, size = 0x4, offset = 0x4, fixed_abs, tag = 'smem constant byte address 0x4 - core index']
  #allocation1 [shape = 'u32[72,128]{1,0:T(1,128)}', space=vmem, size = 0x9000, scoped, tag = 'internal scratch']
  %s0 = inlined_call_operand.vmem [shape: f32[128,384], index: 0, kind: input, shape index: {}]
  %s1 = inlined_call_operand.vmem [shape: bf16[128,384], index: 1, kind: input, shape index: {}]
  %s2 = inlined_call_operand.vmem [shape: bf16[384,384], index: 2, kind: input, shape index: {}]
  %s3 = inlined_call_operand.vmem [shape: f32[1,384], index: 3, kind: input, shape index: {}]
  %s4 = inlined_call_operand.vmem [shape: bf16[384,384], index: 4, kind: input, shape index: {}]
  %s5 = inlined_call_operand.vmem [shape: f32[1,384], index: 5, kind: input, shape index: {}]
  %s6 = inlined_call_operand.vmem [shape: bf16[384,128], index: 6, kind: input, shape index: {}]
  %s7 = inlined_call_operand.vmem [shape: f32[1,128], index: 7, kind: input, shape index: {}]
  %s8 = inlined_call_operand.hbm [shape: f32[128,384], index: 8, kind: output, shape index: {0}]
  %s9 = inlined_call_operand.vmem [shape: f32[128,128], index: 9, kind: output, shape index: {1}]
  %10 = xla_tuple %s8, %s9
  %s11 = sld [smem:[#allocation0]]
  $region50: #{update_forward.5} parent=0
    _
  %s13 = ssub.s32 1, %s11
  %s14 = scalar_select 0, %s13, %s11
  $region1: #{update_forward.5} parent=0
    #allocation2 [shape = 'u8[196608]{0}', space=vmem, size = 0x30000, scoped, tag = 'output window, operand 0, single buffered']
    #allocation3 [shape = 's32[1]{0}', space=sflag, size = 0x4, scoped, tag = 'scoped memory for update_forward.5']
    %15 = vsyncpa [#allocation3], 0
    // Predicated region
    $region2: #{update_forward.5} parent=1 // pred_check
      _
    $region3: #{update_forward.5} parent=1 // pred_check_branch
      %17 = sbr.rel (0) target = $region5
    $region4: #{update_forward.5} parent=1 // pred_region
      _
    $region5: #{update_forward.5} parent=1 // pred_fallthru
      _
    // Predicated region
    $region6: #{update_forward.5} parent=1 // pred_check
      _
    $region7: #{update_forward.5} parent=1 // pred_check_branch
      %19 = sbr.rel (0) target = $region9
    $region8: #{update_forward.5} parent=1 // pred_region
      _
    $region9: #{update_forward.5} parent=1 // pred_fallthru
      _
    // Predicated region
    $region10: #{update_forward.5} parent=1 // pred_check
      _
    $region11: #{update_forward.5} parent=1 // pred_check_branch
      %21 = sbr.rel (0) target = $region13
    $region12: #{update_forward.5} parent=1 // pred_region
      _
    $region13: #{update_forward.5} parent=1 // pred_fallthru
      _
    // Predicated region
    $region14: #{update_forward.5} parent=1 // pred_check
      _
    $region15: #{update_forward.5} parent=1 // pred_check_branch
      %23 = sbr.rel (0) target = $region17
    $region16: #{update_forward.5} parent=1 // pred_region
      _
    $region17: #{update_forward.5} parent=1 // pred_fallthru
      _
    // Predicated region
    $region18: #{update_forward.5} parent=1 // pred_check
      _
    $region19: #{update_forward.5} parent=1 // pred_check_branch
      %25 = sbr.rel (0) target = $region21
    $region20: #{update_forward.5} parent=1 // pred_region
      _
    $region21: #{update_forward.5} parent=1 // pred_fallthru
      _
    // Predicated region
    $region22: #{update_forward.5} parent=1 // pred_check
      _
    $region23: #{update_forward.5} parent=1 // pred_check_branch
      %27 = sbr.rel (0) target = $region25
    $region24: #{update_forward.5} parent=1 // pred_region
      _
    $region25: #{update_forward.5} parent=1 // pred_fallthru
      _
    // Predicated region
    $region26: #{update_forward.5} parent=1 // pred_check
      _
    $region27: #{update_forward.5} parent=1 // pred_check_branch
      %29 = sbr.rel (0) target = $region29
    $region28: #{update_forward.5} parent=1 // pred_region
      _
    $region29: #{update_forward.5} parent=1 // pred_fallthru
      _
    // Predicated region
    $region30: #{update_forward.5} parent=1 // pred_check
      _
    $region31: #{update_forward.5} parent=1 // pred_check_branch
      %31 = sbr.rel (0) target = $region33
    $region32: #{update_forward.5} parent=1 // pred_region
      _
    $region33: #{update_forward.5} parent=1 // pred_fallthru
      _
    %v32 = vld [vmem:[%s0] sm:$0xff]
    %v33 = vld [vmem:[%s0 + $0x8] sm:$0xff]
    %v34 = vld [vmem:[%s0 + $0x10] sm:$0xff]
    %v35 = vld [vmem:[%s0 + $0x18] sm:$0xff]
    %v36 = vld [vmem:[%s0 + $0x20] sm:$0xff]
    %v37 = vld [vmem:[%s0 + $0x28] sm:$0xff]
    %v38 = vld [vmem:[%s0 + $0x30] sm:$0xff]
    %v39 = vld [vmem:[%s0 + $0x38] sm:$0xff]
    %v40 = vld [vmem:[%s0 + $0x40] sm:$0xff]
    %v41 = vld [vmem:[%s0 + $0x48] sm:$0xff]
    %v42 = vld [vmem:[%s0 + $0x50] sm:$0xff]
    %v43 = vld [vmem:[%s0 + $0x58] sm:$0xff]
    %v44 = vld [vmem:[%s0 + $0x60] sm:$0xff]
    %v45 = vld [vmem:[%s0 + $0x68] sm:$0xff]
    %v46 = vld [vmem:[%s0 + $0x70] sm:$0xff]
    %v47 = vld [vmem:[%s0 + $0x78] sm:$0xff]
    %v48 = vld [vmem:[%s0 + $0x80] sm:$0xff]
    %v49 = vld [vmem:[%s0 + $0x88] sm:$0xff]
    %v50 = vld [vmem:[%s0 + $0x90] sm:$0xff]
    %v51 = vld [vmem:[%s0 + $0x98] sm:$0xff]
    %v52 = vld [vmem:[%s0 + $0xa0] sm:$0xff]
    %v53 = vld [vmem:[%s0 + $0xa8] sm:$0xff]
    %v54 = vld [vmem:[%s0 + $0xb0] sm:$0xff]
    %v55 = vld [vmem:[%s0 + $0xb8] sm:$0xff]
    %v56 = vld [vmem:[%s0 + $0xc0] sm:$0xff]
    %v57 = vld [vmem:[%s0 + $0xc8] sm:$0xff]
    %v58 = vld [vmem:[%s0 + $0xd0] sm:$0xff]
    %v59 = vld [vmem:[%s0 + $0xd8] sm:$0xff]
    %v60 = vld [vmem:[%s0 + $0xe0] sm:$0xff]
    %v61 = vld [vmem:[%s0 + $0xe8] sm:$0xff]
    %v62 = vld [vmem:[%s0 + $0xf0] sm:$0xff]
    %v63 = vld [vmem:[%s0 + $0xf8] sm:$0xff]
    %v64 = vld [vmem:[%s0 + $0x100] sm:$0xff]
    %v65 = vld [vmem:[%s0 + $0x108] sm:$0xff]
    %v66 = vld [vmem:[%s0 + $0x110] sm:$0xff]
    %v67 = vld [vmem:[%s0 + $0x118] sm:$0xff]
    %v68 = vld [vmem:[%s0 + $0x120] sm:$0xff]
    %v69 = vld [vmem:[%s0 + $0x128] sm:$0xff]
    %v70 = vld [vmem:[%s0 + $0x130] sm:$0xff]
    %v71 = vld [vmem:[%s0 + $0x138] sm:$0xff]
    %v72 = vld [vmem:[%s0 + $0x140] sm:$0xff]
    %v73 = vld [vmem:[%s0 + $0x148] sm:$0xff]
    %v74 = vld [vmem:[%s0 + $0x150] sm:$0xff]
    %v75 = vld [vmem:[%s0 + $0x158] sm:$0xff]
    %v76 = vld [vmem:[%s0 + $0x160] sm:$0xff]
    %v77 = vld [vmem:[%s0 + $0x168] sm:$0xff]
    %v78 = vld [vmem:[%s0 + $0x170] sm:$0xff]
    %v79 = vld [vmem:[%s0 + $0x178] sm:$0xff]
    %v80 = vld [vmem:[%s1] sm:$0xff]
    %v81 = vld [vmem:[%s1 + $0x8] sm:$0xf]
    %v82 = vld [vmem:[%s1 + $0xc] sm:$0xff]
    %v83 = vld [vmem:[%s1 + $0x14] sm:$0xf]
    %v84 = vld [vmem:[%s1 + $0x18] sm:$0xff]
    %v85 = vld [vmem:[%s1 + $0x20] sm:$0xf]
    %v86 = vld [vmem:[%s1 + $0x24] sm:$0xff]
    %v87 = vld [vmem:[%s1 + $0x2c] sm:$0xf]
    %v88 = vld [vmem:[%s1 + $0x30] sm:$0xff]
    %v89 = vld [vmem:[%s1 + $0x38] sm:$0xf]
    %v90 = vld [vmem:[%s1 + $0x3c] sm:$0xff]
    %v91 = vld [vmem:[%s1 + $0x44] sm:$0xf]
    %v92 = vld [vmem:[%s1 + $0x48] sm:$0xff]
    %v93 = vld [vmem:[%s1 + $0x50] sm:$0xf]
    %v94 = vld [vmem:[%s1 + $0x54] sm:$0xff]
    %v95 = vld [vmem:[%s1 + $0x5c] sm:$0xf]
    %v96 = vld [vmem:[%s1 + $0x60] sm:$0xff]
    %v97 = vld [vmem:[%s1 + $0x68] sm:$0xf]
    %v98 = vld [vmem:[%s1 + $0x6c] sm:$0xff]
    %v99 = vld [vmem:[%s1 + $0x74] sm:$0xf]
    %v100 = vld [vmem:[%s1 + $0x78] sm:$0xff]
    %v101 = vld [vmem:[%s1 + $0x80] sm:$0xf]
    %v102 = vld [vmem:[%s1 + $0x84] sm:$0xff]
    %v103 = vld [vmem:[%s1 + $0x8c] sm:$0xf]
    %v104 = vld [vmem:[%s1 + $0x90] sm:$0xff]
    %v105 = vld [vmem:[%s1 + $0x98] sm:$0xf]
    %v106 = vld [vmem:[%s1 + $0x9c] sm:$0xff]
    %v107 = vld [vmem:[%s1 + $0xa4] sm:$0xf]
    %v108 = vld [vmem:[%s1 + $0xa8] sm:$0xff]
    %v109 = vld [vmem:[%s1 + $0xb0] sm:$0xf]
    %v110 = vld [vmem:[%s1 + $0xb4] sm:$0xff]
    %v111 = vld [vmem:[%s1 + $0xbc] sm:$0xf]
    %v112 = vld [vmem:[%s2] sm:$0xff]
    %v113 = vld [vmem:[%s2 + $0x8] sm:$0xf]
    %v114 = vld [vmem:[%s2 + $0xc] sm:$0xff]
    %v115 = vld [vmem:[%s2 + $0x14] sm:$0xf]
    %v116 = vld [vmem:[%s2 + $0x18] sm:$0xff]
    %v117 = vld [vmem:[%s2 + $0x20] sm:$0xf]
    %v118 = vld [vmem:[%s2 + $0x24] sm:$0xff]
    %v119 = vld [vmem:[%s2 + $0x2c] sm:$0xf]
    %v120 = vld [vmem:[%s2 + $0x30] sm:$0xff]
    %v121 = vld [vmem:[%s2 + $0x38] sm:$0xf]
    %v122 = vld [vmem:[%s2 + $0x3c] sm:$0xff]
    %v123 = vld [vmem:[%s2 + $0x44] sm:$0xf]
    %v124 = vld [vmem:[%s2 + $0x48] sm:$0xff]
    %v125 = vld [vmem:[%s2 + $0x50] sm:$0xf]
    %v126 = vld [vmem:[%s2 + $0x54] sm:$0xff]
    %v127 = vld [vmem:[%s2 + $0x5c] sm:$0xf]
    %v128 = vld [vmem:[%s2 + $0x60] sm:$0xff]
    %v129 = vld [vmem:[%s2 + $0x68] sm:$0xf]
    %v130 = vld [vmem:[%s2 + $0x6c] sm:$0xff]
    %v131 = vld [vmem:[%s2 + $0x74] sm:$0xf]
    %v132 = vld [vmem:[%s2 + $0x78] sm:$0xff]
    %v133 = vld [vmem:[%s2 + $0x80] sm:$0xf]
    %v134 = vld [vmem:[%s2 + $0x84] sm:$0xff]
    %v135 = vld [vmem:[%s2 + $0x8c] sm:$0xf]
    %v136 = vld [vmem:[%s2 + $0x90] sm:$0xff]
    %v137 = vld [vmem:[%s2 + $0x98] sm:$0xf]
    %v138 = vld [vmem:[%s2 + $0x9c] sm:$0xff]
    %v139 = vld [vmem:[%s2 + $0xa4] sm:$0xf]
    %v140 = vld [vmem:[%s2 + $0xa8] sm:$0xff]
    %v141 = vld [vmem:[%s2 + $0xb0] sm:$0xf]
    %v142 = vld [vmem:[%s2 + $0xb4] sm:$0xff]
    %v143 = vld [vmem:[%s2 + $0xbc] sm:$0xf]
    %v144 = vld [vmem:[%s2 + $0xc0] sm:$0xff]
    %v145 = vld [vmem:[%s2 + $0xc8] sm:$0xf]
    %v146 = vld [vmem:[%s2 + $0xcc] sm:$0xff]
    %v147 = vld [vmem:[%s2 + $0xd4] sm:$0xf]
    %v148 = vld [vmem:[%s2 + $0xd8] sm:$0xff]
    %v149 = vld [vmem:[%s2 + $0xe0] sm:$0xf]
    %v150 = vld [vmem:[%s2 + $0xe4] sm:$0xff]
    %v151 = vld [vmem:[%s2 + $0xec] sm:$0xf]
    %v152 = vld [vmem:[%s2 + $0xf0] sm:$0xff]
    %v153 = vld [vmem:[%s2 + $0xf8] sm:$0xf]
    %v154 = vld [vmem:[%s2 + $0xfc] sm:$0xff]
    %v155 = vld [vmem:[%s2 + $0x104] sm:$0xf]
    %v156 = vld [vmem:[%s2 + $0x108] sm:$0xff]
    %v157 = vld [vmem:[%s2 + $0x110] sm:$0xf]
    %v158 = vld [vmem:[%s2 + $0x114] sm:$0xff]
    %v159 = vld [vmem:[%s2 + $0x11c] sm:$0xf]
    %v160 = vld [vmem:[%s2 + $0x120] sm:$0xff]
    %v161 = vld [vmem:[%s2 + $0x128] sm:$0xf]
    %v162 = vld [vmem:[%s2 + $0x12c] sm:$0xff]
    %v163 = vld [vmem:[%s2 + $0x134] sm:$0xf]
    %v164 = vld [vmem:[%s2 + $0x138] sm:$0xff]
    %v165 = vld [vmem:[%s2 + $0x140] sm:$0xf]
    %v166 = vld [vmem:[%s2 + $0x144] sm:$0xff]
    %v167 = vld [vmem:[%s2 + $0x14c] sm:$0xf]
    %v168 = vld [vmem:[%s2 + $0x150] sm:$0xff]
    %v169 = vld [vmem:[%s2 + $0x158] sm:$0xf]
    %v170 = vld [vmem:[%s2 + $0x15c] sm:$0xff]
    %v171 = vld [vmem:[%s2 + $0x164] sm:$0xf]
    %v172 = vld [vmem:[%s2 + $0x168] sm:$0xff]
    %v173 = vld [vmem:[%s2 + $0x170] sm:$0xf]
    %v174 = vld [vmem:[%s2 + $0x174] sm:$0xff]
    %v175 = vld [vmem:[%s2 + $0x17c] sm:$0xf]
    %v176 = vld [vmem:[%s2 + $0x180] sm:$0xff]
    %v177 = vld [vmem:[%s2 + $0x188] sm:$0xf]
    %v178 = vld [vmem:[%s2 + $0x18c] sm:$0xff]
    %v179 = vld [vmem:[%s2 + $0x194] sm:$0xf]
    %v180 = vld [vmem:[%s2 + $0x198] sm:$0xff]
    %v181 = vld [vmem:[%s2 + $0x1a0] sm:$0xf]
    %v182 = vld [vmem:[%s2 + $0x1a4] sm:$0xff]
    %v183 = vld [vmem:[%s2 + $0x1ac] sm:$0xf]
    %v184 = vld [vmem:[%s2 + $0x1b0] sm:$0xff]
    %v185 = vld [vmem:[%s2 + $0x1b8] sm:$0xf]
    %v186 = vld [vmem:[%s2 + $0x1bc] sm:$0xff]
    %v187 = vld [vmem:[%s2 + $0x1c4] sm:$0xf]
    %v188 = vld [vmem:[%s2 + $0x1c8] sm:$0xff]
    %v189 = vld [vmem:[%s2 + $0x1d0] sm:$0xf]
    %v190 = vld [vmem:[%s2 + $0x1d4] sm:$0xff]
    %v191 = vld [vmem:[%s2 + $0x1dc] sm:$0xf]
    %v192 = vld [vmem:[%s2 + $0x1e0] sm:$0xff]
    %v193 = vld [vmem:[%s2 + $0x1e8] sm:$0xf]
    %v194 = vld [vmem:[%s2 + $0x1ec] sm:$0xff]
    %v195 = vld [vmem:[%s2 + $0x1f4] sm:$0xf]
    %v196 = vld [vmem:[%s2 + $0x1f8] sm:$0xff]
    %v197 = vld [vmem:[%s2 + $0x200] sm:$0xf]
    %v198 = vld [vmem:[%s2 + $0x204] sm:$0xff]
    %v199 = vld [vmem:[%s2 + $0x20c] sm:$0xf]
    %v200 = vld [vmem:[%s2 + $0x210] sm:$0xff]
    %v201 = vld [vmem:[%s2 + $0x218] sm:$0xf]
    %v202 = vld [vmem:[%s2 + $0x21c] sm:$0xff]
    %v203 = vld [vmem:[%s2 + $0x224] sm:$0xf]
    %v204 = vld [vmem:[%s2 + $0x228] sm:$0xff]
    %v205 = vld [vmem:[%s2 + $0x230] sm:$0xf]
    %v206 = vld [vmem:[%s2 + $0x234] sm:$0xff]
    %v207 = vld [vmem:[%s2 + $0x23c] sm:$0xf]
    %v208 = vld [vmem:[%s3] sm:$0x7]
    %v209 = vld [vmem:[%s4] sm:$0xff]
    %v210 = vld [vmem:[%s4 + $0x8] sm:$0xf]
    %v211 = vld [vmem:[%s4 + $0xc] sm:$0xff]
    %v212 = vld [vmem:[%s4 + $0x14] sm:$0xf]
    %v213 = vld [vmem:[%s4 + $0x18] sm:$0xff]
    %v214 = vld [vmem:[%s4 + $0x20] sm:$0xf]
    %v215 = vld [vmem:[%s4 + $0x24] sm:$0xff]
    %v216 = vld [vmem:[%s4 + $0x2c] sm:$0xf]
    %v217 = vld [vmem:[%s4 + $0x30] sm:$0xff]
    %v218 = vld [vmem:[%s4 + $0x38] sm:$0xf]
    %v219 = vld [vmem:[%s4 + $0x3c] sm:$0xff]
    %v220 = vld [vmem:[%s4 + $0x44] sm:$0xf]
    %v221 = vld [vmem:[%s4 + $0x48] sm:$0xff]
    %v222 = vld [vmem:[%s4 + $0x50] sm:$0xf]
    %v223 = vld [vmem:[%s4 + $0x54] sm:$0xff]
    %v224 = vld [vmem:[%s4 + $0x5c] sm:$0xf]
    %v225 = vld [vmem:[%s4 + $0x60] sm:$0xff]
    %v226 = vld [vmem:[%s4 + $0x68] sm:$0xf]
    %v227 = vld [vmem:[%s4 + $0x6c] sm:$0xff]
    %v228 = vld [vmem:[%s4 + $0x74] sm:$0xf]
    %v229 = vld [vmem:[%s4 + $0x78] sm:$0xff]
    %v230 = vld [vmem:[%s4 + $0x80] sm:$0xf]
    %v231 = vld [vmem:[%s4 + $0x84] sm:$0xff]
    %v232 = vld [vmem:[%s4 + $0x8c] sm:$0xf]
    %v233 = vld [vmem:[%s4 + $0x90] sm:$0xff]
    %v234 = vld [vmem:[%s4 + $0x98] sm:$0xf]
    %v235 = vld [vmem:[%s4 + $0x9c] sm:$0xff]
    %v236 = vld [vmem:[%s4 + $0xa4] sm:$0xf]
    %v237 = vld [vmem:[%s4 + $0xa8] sm:$0xff]
    %v238 = vld [vmem:[%s4 + $0xb0] sm:$0xf]
    %v239 = vld [vmem:[%s4 + $0xb4] sm:$0xff]
    %v240 = vld [vmem:[%s4 + $0xbc] sm:$0xf]
    %v241 = vld [vmem:[%s4 + $0xc0] sm:$0xff]
    %v242 = vld [vmem:[%s4 + $0xc8] sm:$0xf]
    %v243 = vld [vmem:[%s4 + $0xcc] sm:$0xff]
    %v244 = vld [vmem:[%s4 + $0xd4] sm:$0xf]
    %v245 = vld [vmem:[%s4 + $0xd8] sm:$0xff]
    %v246 = vld [vmem:[%s4 + $0xe0] sm:$0xf]
    %v247 = vld [vmem:[%s4 + $0xe4] sm:$0xff]
    %v248 = vld [vmem:[%s4 + $0xec] sm:$0xf]
    %v249 = vld [vmem:[%s4 + $0xf0] sm:$0xff]
    %v250 = vld [vmem:[%s4 + $0xf8] sm:$0xf]
    %v251 = vld [vmem:[%s4 + $0xfc] sm:$0xff]
    %v252 = vld [vmem:[%s4 + $0x104] sm:$0xf]
    %v253 = vld [vmem:[%s4 + $0x108] sm:$0xff]
    %v254 = vld [vmem:[%s4 + $0x110] sm:$0xf]
    %v255 = vld [vmem:[%s4 + $0x114] sm:$0xff]
    %v256 = vld [vmem:[%s4 + $0x11c] sm:$0xf]
    %v257 = vld [vmem:[%s4 + $0x120] sm:$0xff]
    %v258 = vld [vmem:[%s4 + $0x128] sm:$0xf]
    %v259 = vld [vmem:[%s4 + $0x12c] sm:$0xff]
    %v260 = vld [vmem:[%s4 + $0x134] sm:$0xf]
    %v261 = vld [vmem:[%s4 + $0x138] sm:$0xff]
    %v262 = vld [vmem:[%s4 + $0x140] sm:$0xf]
    %v263 = vld [vmem:[%s4 + $0x144] sm:$0xff]
    %v264 = vld [vmem:[%s4 + $0x14c] sm:$0xf]
    %v265 = vld [vmem:[%s4 + $0x150] sm:$0xff]
    %v266 = vld [vmem:[%s4 + $0x158] sm:$0xf]
    %v267 = vld [vmem:[%s4 + $0x15c] sm:$0xff]
    %v268 = vld [vmem:[%s4 + $0x164] sm:$0xf]
    %v269 = vld [vmem:[%s4 + $0x168] sm:$0xff]
    %v270 = vld [vmem:[%s4 + $0x170] sm:$0xf]
    %v271 = vld [vmem:[%s4 + $0x174] sm:$0xff]
    %v272 = vld [vmem:[%s4 + $0x17c] sm:$0xf]
    %v273 = vld [vmem:[%s4 + $0x180] sm:$0xff]
    %v274 = vld [vmem:[%s4 + $0x188] sm:$0xf]
    %v275 = vld [vmem:[%s4 + $0x18c] sm:$0xff]
    %v276 = vld [vmem:[%s4 + $0x194] sm:$0xf]
    %v277 = vld [vmem:[%s4 + $0x198] sm:$0xff]
    %v278 = vld [vmem:[%s4 + $0x1a0] sm:$0xf]
    %v279 = vld [vmem:[%s4 + $0x1a4] sm:$0xff]
    %v280 = vld [vmem:[%s4 + $0x1ac] sm:$0xf]
    %v281 = vld [vmem:[%s4 + $0x1b0] sm:$0xff]
    %v282 = vld [vmem:[%s4 + $0x1b8] sm:$0xf]
    %v283 = vld [vmem:[%s4 + $0x1bc] sm:$0xff]
    %v284 = vld [vmem:[%s4 + $0x1c4] sm:$0xf]
    %v285 = vld [vmem:[%s4 + $0x1c8] sm:$0xff]
    %v286 = vld [vmem:[%s4 + $0x1d0] sm:$0xf]
    %v287 = vld [vmem:[%s4 + $0x1d4] sm:$0xff]
    %v288 = vld [vmem:[%s4 + $0x1dc] sm:$0xf]
    %v289 = vld [vmem:[%s4 + $0x1e0] sm:$0xff]
    %v290 = vld [vmem:[%s4 + $0x1e8] sm:$0xf]
    %v291 = vld [vmem:[%s4 + $0x1ec] sm:$0xff]
    %v292 = vld [vmem:[%s4 + $0x1f4] sm:$0xf]
    %v293 = vld [vmem:[%s4 + $0x1f8] sm:$0xff]
    %v294 = vld [vmem:[%s4 + $0x200] sm:$0xf]
    %v295 = vld [vmem:[%s4 + $0x204] sm:$0xff]
    %v296 = vld [vmem:[%s4 + $0x20c] sm:$0xf]
    %v297 = vld [vmem:[%s4 + $0x210] sm:$0xff]
    %v298 = vld [vmem:[%s4 + $0x218] sm:$0xf]
    %v299 = vld [vmem:[%s4 + $0x21c] sm:$0xff]
    %v300 = vld [vmem:[%s4 + $0x224] sm:$0xf]
    %v301 = vld [vmem:[%s4 + $0x228] sm:$0xff]
    %v302 = vld [vmem:[%s4 + $0x230] sm:$0xf]
    %v303 = vld [vmem:[%s4 + $0x234] sm:$0xff]
    %v304 = vld [vmem:[%s4 + $0x23c] sm:$0xf]
    %v305 = vld [vmem:[%s5] sm:$0x7]
    %v307 = vperm.slane %v208, 0
    %v308 = vperm.slane %v208, 1
    %v309 = vperm.slane %v208, 2
    %v345 = vunpack.c.l.b16 %v80
    %v346 = vunpack.c.h.b16 %v80
    %v347 = vunpack.c.l.b16 %v81
    %v348 = vunpack.c.l.b16 %v82
    %v349 = vunpack.c.h.b16 %v82
    %v350 = vunpack.c.l.b16 %v83
    %v351 = vunpack.c.l.b16 %v84
    %v352 = vunpack.c.h.b16 %v84
    %v353 = vunpack.c.l.b16 %v85
    %v354 = vunpack.c.l.b16 %v86
    %v355 = vunpack.c.h.b16 %v86
    %v356 = vunpack.c.l.b16 %v87
    %v357 = vunpack.c.l.b16 %v88
    %v358 = vunpack.c.h.b16 %v88
    %v359 = vunpack.c.l.b16 %v89
    %v360 = vunpack.c.l.b16 %v90
    %v361 = vunpack.c.h.b16 %v90
    %v362 = vunpack.c.l.b16 %v91
    %v363 = vunpack.c.l.b16 %v92
    %v364 = vunpack.c.h.b16 %v92
    %v365 = vunpack.c.l.b16 %v93
    %v366 = vunpack.c.l.b16 %v94
    %v367 = vunpack.c.h.b16 %v94
    %v368 = vunpack.c.l.b16 %v95
    %v369 = vunpack.c.l.b16 %v96
    %v370 = vunpack.c.h.b16 %v96
    %v371 = vunpack.c.l.b16 %v97
    %v372 = vunpack.c.l.b16 %v98
    %v373 = vunpack.c.h.b16 %v98
    %v374 = vunpack.c.l.b16 %v99
    %v375 = vunpack.c.l.b16 %v100
    %v376 = vunpack.c.h.b16 %v100
    %v377 = vunpack.c.l.b16 %v101
    %v378 = vunpack.c.l.b16 %v102
    %v379 = vunpack.c.h.b16 %v102
    %v380 = vunpack.c.l.b16 %v103
    %v381 = vunpack.c.l.b16 %v104
    %v382 = vunpack.c.h.b16 %v104
    %v383 = vunpack.c.l.b16 %v105
    %v384 = vunpack.c.l.b16 %v106
    %v385 = vunpack.c.h.b16 %v106
    %v386 = vunpack.c.l.b16 %v107
    %v387 = vunpack.c.l.b16 %v108
    %v388 = vunpack.c.h.b16 %v108
    %v389 = vunpack.c.l.b16 %v109
    %v390 = vunpack.c.l.b16 %v110
    %v391 = vunpack.c.h.b16 %v110
    %v392 = vunpack.c.l.b16 %v111
    %v393 = vpack.c.b16 %v348, %v345
    %v394 = vpack.c.b16 %v349, %v346
    %v395 = vpack.c.b16 %v350, %v347
    %v396 = vpack.c.b16 %v354, %v351
    %v397 = vpack.c.b16 %v355, %v352
    %v398 = vpack.c.b16 %v356, %v353
    %v399 = vpack.c.b16 %v360, %v357
    %v400 = vpack.c.b16 %v361, %v358
    %v401 = vpack.c.b16 %v362, %v359
    %v402 = vpack.c.b16 %v366, %v363
    %v403 = vpack.c.b16 %v367, %v364
    %v404 = vpack.c.b16 %v368, %v365
    %v405 = vpack.c.b16 %v372, %v369
    %v406 = vpack.c.b16 %v373, %v370
    %v407 = vpack.c.b16 %v374, %v371
    %v408 = vpack.c.b16 %v378, %v375
    %v409 = vpack.c.b16 %v379, %v376
    %v410 = vpack.c.b16 %v380, %v377
    %v411 = vpack.c.b16 %v384, %v381
    %v412 = vpack.c.b16 %v385, %v382
    %v413 = vpack.c.b16 %v386, %v383
    %v414 = vpack.c.b16 %v390, %v387
    %v415 = vpack.c.b16 %v391, %v388
    %v416 = vpack.c.b16 %v392, %v389
    %v537 = vunpack.c.l.b16 %v112
    %v538 = vunpack.c.h.b16 %v112
    %v539 = vunpack.c.l.b16 %v113
    %v540 = vunpack.c.l.b16 %v114
    %v541 = vunpack.c.h.b16 %v114
    %v542 = vunpack.c.l.b16 %v115
    %v543 = vunpack.c.l.b16 %v116
    %v544 = vunpack.c.h.b16 %v116
    %v545 = vunpack.c.l.b16 %v117
    %v546 = vunpack.c.l.b16 %v118
    %v547 = vunpack.c.h.b16 %v118
    %v548 = vunpack.c.l.b16 %v119
    %v549 = vunpack.c.l.b16 %v120
    %v550 = vunpack.c.h.b16 %v120
    %v551 = vunpack.c.l.b16 %v121
    %v552 = vunpack.c.l.b16 %v122
    %v553 = vunpack.c.h.b16 %v122
    %v554 = vunpack.c.l.b16 %v123
    %v555 = vunpack.c.l.b16 %v124
    %v556 = vunpack.c.h.b16 %v124
    %v557 = vunpack.c.l.b16 %v125
    %v558 = vunpack.c.l.b16 %v126
    %v559 = vunpack.c.h.b16 %v126
    %v560 = vunpack.c.l.b16 %v127
    %v561 = vunpack.c.l.b16 %v128
    %v562 = vunpack.c.h.b16 %v128
    %v563 = vunpack.c.l.b16 %v129
    %v564 = vunpack.c.l.b16 %v130
    %v565 = vunpack.c.h.b16 %v130
    %v566 = vunpack.c.l.b16 %v131
    %v567 = vunpack.c.l.b16 %v132
    %v568 = vunpack.c.h.b16 %v132
    %v569 = vunpack.c.l.b16 %v133
    %v570 = vunpack.c.l.b16 %v134
    %v571 = vunpack.c.h.b16 %v134
    %v572 = vunpack.c.l.b16 %v135
    %v573 = vunpack.c.l.b16 %v136
    %v574 = vunpack.c.h.b16 %v136
    %v575 = vunpack.c.l.b16 %v137
    %v576 = vunpack.c.l.b16 %v138
    %v577 = vunpack.c.h.b16 %v138
    %v578 = vunpack.c.l.b16 %v139
    %v579 = vunpack.c.l.b16 %v140
    %v580 = vunpack.c.h.b16 %v140
    %v581 = vunpack.c.l.b16 %v141
    %v582 = vunpack.c.l.b16 %v142
    %v583 = vunpack.c.h.b16 %v142
    %v584 = vunpack.c.l.b16 %v143
    %v585 = vunpack.c.l.b16 %v144
    %v586 = vunpack.c.h.b16 %v144
    %v587 = vunpack.c.l.b16 %v145
    %v588 = vunpack.c.l.b16 %v146
    %v589 = vunpack.c.h.b16 %v146
    %v590 = vunpack.c.l.b16 %v147
    %v591 = vunpack.c.l.b16 %v148
    %v592 = vunpack.c.h.b16 %v148
    %v593 = vunpack.c.l.b16 %v149
    %v594 = vunpack.c.l.b16 %v150
    %v595 = vunpack.c.h.b16 %v150
    %v596 = vunpack.c.l.b16 %v151
    %v597 = vunpack.c.l.b16 %v152
    %v598 = vunpack.c.h.b16 %v152
    %v599 = vunpack.c.l.b16 %v153
    %v600 = vunpack.c.l.b16 %v154
    %v601 = vunpack.c.h.b16 %v154
    %v602 = vunpack.c.l.b16 %v155
    %v603 = vunpack.c.l.b16 %v156
    %v604 = vunpack.c.h.b16 %v156
    %v605 = vunpack.c.l.b16 %v157
    %v606 = vunpack.c.l.b16 %v158
    %v607 = vunpack.c.h.b16 %v158
    %v608 = vunpack.c.l.b16 %v159
    %v609 = vunpack.c.l.b16 %v160
    %v610 = vunpack.c.h.b16 %v160
    %v611 = vunpack.c.l.b16 %v161
    %v612 = vunpack.c.l.b16 %v162
    %v613 = vunpack.c.h.b16 %v162
    %v614 = vunpack.c.l.b16 %v163
    %v615 = vunpack.c.l.b16 %v164
    %v616 = vunpack.c.h.b16 %v164
    %v617 = vunpack.c.l.b16 %v165
    %v618 = vunpack.c.l.b16 %v166
    %v619 = vunpack.c.h.b16 %v166
    %v620 = vunpack.c.l.b16 %v167
    %v621 = vunpack.c.l.b16 %v168
    %v622 = vunpack.c.h.b16 %v168
    %v623 = vunpack.c.l.b16 %v169
    %v624 = vunpack.c.l.b16 %v170
    %v625 = vunpack.c.h.b16 %v170
    %v626 = vunpack.c.l.b16 %v171
    %v627 = vunpack.c.l.b16 %v172
    %v628 = vunpack.c.h.b16 %v172
    %v629 = vunpack.c.l.b16 %v173
    %v630 = vunpack.c.l.b16 %v174
    %v631 = vunpack.c.h.b16 %v174
    %v632 = vunpack.c.l.b16 %v175
    %v633 = vunpack.c.l.b16 %v176
    %v634 = vunpack.c.h.b16 %v176
    %v635 = vunpack.c.l.b16 %v177
    %v636 = vunpack.c.l.b16 %v178
    %v637 = vunpack.c.h.b16 %v178
    %v638 = vunpack.c.l.b16 %v179
    %v639 = vunpack.c.l.b16 %v180
    %v640 = vunpack.c.h.b16 %v180
    %v641 = vunpack.c.l.b16 %v181
    %v642 = vunpack.c.l.b16 %v182
    %v643 = vunpack.c.h.b16 %v182
    %v644 = vunpack.c.l.b16 %v183
    %v645 = vunpack.c.l.b16 %v184
    %v646 = vunpack.c.h.b16 %v184
    %v647 = vunpack.c.l.b16 %v185
    %v648 = vunpack.c.l.b16 %v186
    %v649 = vunpack.c.h.b16 %v186
    %v650 = vunpack.c.l.b16 %v187
    %v651 = vunpack.c.l.b16 %v188
    %v652 = vunpack.c.h.b16 %v188
    %v653 = vunpack.c.l.b16 %v189
    %v654 = vunpack.c.l.b16 %v190
    %v655 = vunpack.c.h.b16 %v190
    %v656 = vunpack.c.l.b16 %v191
    %v657 = vunpack.c.l.b16 %v192
    %v658 = vunpack.c.h.b16 %v192
    %v659 = vunpack.c.l.b16 %v193
    %v660 = vunpack.c.l.b16 %v194
    %v661 = vunpack.c.h.b16 %v194
    %v662 = vunpack.c.l.b16 %v195
    %v663 = vunpack.c.l.b16 %v196
    %v664 = vunpack.c.h.b16 %v196
    %v665 = vunpack.c.l.b16 %v197
    %v666 = vunpack.c.l.b16 %v198
    %v667 = vunpack.c.h.b16 %v198
    %v668 = vunpack.c.l.b16 %v199
    %v669 = vunpack.c.l.b16 %v200
    %v670 = vunpack.c.h.b16 %v200
    %v671 = vunpack.c.l.b16 %v201
    %v672 = vunpack.c.l.b16 %v202
    %v673 = vunpack.c.h.b16 %v202
    %v674 = vunpack.c.l.b16 %v203
    %v675 = vunpack.c.l.b16 %v204
    %v676 = vunpack.c.h.b16 %v204
    %v677 = vunpack.c.l.b16 %v205
    %v678 = vunpack.c.l.b16 %v206
    %v679 = vunpack.c.h.b16 %v206
    %v680 = vunpack.c.l.b16 %v207
    %v681 = vpack.c.b16 %v540, %v537
    %v682 = vpack.c.b16 %v541, %v538
    %v683 = vpack.c.b16 %v542, %v539
    %v684 = vpack.c.b16 %v546, %v543
    %v685 = vpack.c.b16 %v547, %v544
    %v686 = vpack.c.b16 %v548, %v545
    %v687 = vpack.c.b16 %v552, %v549
    %v688 = vpack.c.b16 %v553, %v550
    %v689 = vpack.c.b16 %v554, %v551
    %v690 = vpack.c.b16 %v558, %v555
    %v691 = vpack.c.b16 %v559, %v556
    %v692 = vpack.c.b16 %v560, %v557
    %v693 = vpack.c.b16 %v564, %v561
    %v694 = vpack.c.b16 %v565, %v562
    %v695 = vpack.c.b16 %v566, %v563
    %v696 = vpack.c.b16 %v570, %v567
    %v697 = vpack.c.b16 %v571, %v568
    %v698 = vpack.c.b16 %v572, %v569
    %v699 = vpack.c.b16 %v576, %v573
    %v700 = vpack.c.b16 %v577, %v574
    %v701 = vpack.c.b16 %v578, %v575
    %v702 = vpack.c.b16 %v582, %v579
    %v703 = vpack.c.b16 %v583, %v580
    %v704 = vpack.c.b16 %v584, %v581
    %v705 = vpack.c.b16 %v588, %v585
    %v706 = vpack.c.b16 %v589, %v586
    %v707 = vpack.c.b16 %v590, %v587
    %v708 = vpack.c.b16 %v594, %v591
    %v709 = vpack.c.b16 %v595, %v592
    %v710 = vpack.c.b16 %v596, %v593
    %v711 = vpack.c.b16 %v600, %v597
    %v712 = vpack.c.b16 %v601, %v598
    %v713 = vpack.c.b16 %v602, %v599
    %v714 = vpack.c.b16 %v606, %v603
    %v715 = vpack.c.b16 %v607, %v604
    %v716 = vpack.c.b16 %v608, %v605
    %v717 = vpack.c.b16 %v612, %v609
    %v718 = vpack.c.b16 %v613, %v610
    %v719 = vpack.c.b16 %v614, %v611
    %v720 = vpack.c.b16 %v618, %v615
    %v721 = vpack.c.b16 %v619, %v616
    %v722 = vpack.c.b16 %v620, %v617
    %v723 = vpack.c.b16 %v624, %v621
    %v724 = vpack.c.b16 %v625, %v622
    %v725 = vpack.c.b16 %v626, %v623
    %v726 = vpack.c.b16 %v630, %v627
    %v727 = vpack.c.b16 %v631, %v628
    %v728 = vpack.c.b16 %v632, %v629
    %v729 = vpack.c.b16 %v636, %v633
    %v730 = vpack.c.b16 %v637, %v634
    %v731 = vpack.c.b16 %v638, %v635
    %v732 = vpack.c.b16 %v642, %v639
    %v733 = vpack.c.b16 %v643, %v640
    %v734 = vpack.c.b16 %v644, %v641
    %v735 = vpack.c.b16 %v648, %v645
    %v736 = vpack.c.b16 %v649, %v646
    %v737 = vpack.c.b16 %v650, %v647
    %v738 = vpack.c.b16 %v654, %v651
    %v739 = vpack.c.b16 %v655, %v652
    %v740 = vpack.c.b16 %v656, %v653
    %v741 = vpack.c.b16 %v660, %v657
    %v742 = vpack.c.b16 %v661, %v658
    %v743 = vpack.c.b16 %v662, %v659
    %v744 = vpack.c.b16 %v666, %v663
    %v745 = vpack.c.b16 %v667, %v664
    %v746 = vpack.c.b16 %v668, %v665
    %v747 = vpack.c.b16 %v672, %v669
    %v748 = vpack.c.b16 %v673, %v670
    %v749 = vpack.c.b16 %v674, %v671
    %v750 = vpack.c.b16 %v678, %v675
    %v751 = vpack.c.b16 %v679, %v676
    %v752 = vpack.c.b16 %v680, %v677
    %825 = vmatpush.bf16.msra.mxu0 %v702
    %826 = vmatpush.bf16.msra.mxu0 %v699
    %827 = vmatpush.bf16.msra.mxu0 %v696
    %828 = vmatpush.bf16.msra.mxu0 %v693
    %829 = vmatpush.bf16.msra.mxu0 %v690
    %830 = vmatpush.bf16.msra.mxu0 %v687
    %831 = vmatpush.bf16.msra.mxu0 %v684
    %832 = vmatpush.bf16.msra.mxu0 %v681
    %833 = vmatmul.bf16.gmra.mxu0 %v393
    %v834 = vpop.f32.mrf.mxu0
    %v835 = vadd.f32 %v307, %v834
    %v836 = vpop.f32.mrf.mxu0
    %v837 = vadd.f32 %v307, %v836
    %838 = vmatmul.bf16.gmra.mxu0 %v396
    %v839 = vpop.f32.mrf.mxu0
    %v840 = vadd.f32 %v307, %v839
    %v841 = vpop.f32.mrf.mxu0
    %v842 = vadd.f32 %v307, %v841
    %843 = vmatmul.bf16.gmra.mxu0 %v399
    %v844 = vpop.f32.mrf.mxu0
    %v845 = vadd.f32 %v307, %v844
    %v846 = vpop.f32.mrf.mxu0
    %v847 = vadd.f32 %v307, %v846
    %848 = vmatmul.bf16.gmra.mxu0 %v402
    %v849 = vpop.f32.mrf.mxu0
    %v850 = vadd.f32 %v307, %v849
    %v851 = vpop.f32.mrf.mxu0
    %v852 = vadd.f32 %v307, %v851
    %853 = vmatmul.bf16.gmra.mxu0 %v405
    %v854 = vpop.f32.mrf.mxu0
    %v855 = vadd.f32 %v307, %v854
    %v856 = vpop.f32.mrf.mxu0
    %v857 = vadd.f32 %v307, %v856
    %858 = vmatmul.bf16.gmra.mxu0 %v408
    %v859 = vpop.f32.mrf.mxu0
    %v860 = vadd.f32 %v307, %v859
    %v861 = vpop.f32.mrf.mxu0
    %v862 = vadd.f32 %v307, %v861
    %863 = vmatmul.bf16.gmra.mxu0 %v411
    %v864 = vpop.f32.mrf.mxu0
    %v865 = vadd.f32 %v307, %v864
    %v866 = vpop.f32.mrf.mxu0
    %v867 = vadd.f32 %v307, %v866
    %868 = vmatmul.bf16.gmra.mxu0 %v414
    %v869 = vpop.f32.mrf.mxu0
    %v870 = vadd.f32 %v307, %v869
    %v871 = vpop.f32.mrf.mxu0
    %v872 = vadd.f32 %v307, %v871
    %873 = vdwg.mxu0
    %874 = vmatpush.bf16.msra.mxu0 %v726
    %875 = vmatpush.bf16.msra.mxu0 %v723
    %876 = vmatpush.bf16.msra.mxu0 %v720
    %877 = vmatpush.bf16.msra.mxu0 %v717
    %878 = vmatpush.bf16.msra.mxu0 %v714
    %879 = vmatpush.bf16.msra.mxu0 %v711
    %880 = vmatpush.bf16.msra.mxu0 %v708
    %881 = vmatpush.bf16.msra.mxu0 %v705
    %882 = vmatmul.bf16.gmra.mxu0 %v394
    %v883 = vpop.f32.mrf.mxu0
    %v884 = vadd.f32 %v835, %v883
    %v885 = vpop.f32.mrf.mxu0
    %v886 = vadd.f32 %v837, %v885
    %887 = vmatmul.bf16.gmra.mxu0 %v397
    %v888 = vpop.f32.mrf.mxu0
    %v889 = vadd.f32 %v840, %v888
    %v890 = vpop.f32.mrf.mxu0
    %v891 = vadd.f32 %v842, %v890
    %892 = vmatmul.bf16.gmra.mxu0 %v400
    %v893 = vpop.f32.mrf.mxu0
    %v894 = vadd.f32 %v845, %v893
    %v895 = vpop.f32.mrf.mxu0
    %v896 = vadd.f32 %v847, %v895
    %897 = vmatmul.bf16.gmra.mxu0 %v403
    %v898 = vpop.f32.mrf.mxu0
    %v899 = vadd.f32 %v850, %v898
    %v900 = vpop.f32.mrf.mxu0
    %v901 = vadd.f32 %v852, %v900
    %902 = vmatmul.bf16.gmra.mxu0 %v406
    %v903 = vpop.f32.mrf.mxu0
    %v904 = vadd.f32 %v855, %v903
    %v905 = vpop.f32.mrf.mxu0
    %v906 = vadd.f32 %v857, %v905
    %907 = vmatmul.bf16.gmra.mxu0 %v409
    %v908 = vpop.f32.mrf.mxu0
    %v909 = vadd.f32 %v860, %v908
    %v910 = vpop.f32.mrf.mxu0
    %v911 = vadd.f32 %v862, %v910
    %912 = vmatmul.bf16.gmra.mxu0 %v412
    %v913 = vpop.f32.mrf.mxu0
    %v914 = vadd.f32 %v865, %v913
    %v915 = vpop.f32.mrf.mxu0
    %v916 = vadd.f32 %v867, %v915
    %917 = vmatmul.bf16.gmra.mxu0 %v415
    %v918 = vpop.f32.mrf.mxu0
    %v919 = vadd.f32 %v870, %v918
    %v920 = vpop.f32.mrf.mxu0
    %v921 = vadd.f32 %v872, %v920
    %922 = vdwg.mxu0
    %923 = vmatpush.bf16.msra.mxu0 %v750
    %924 = vmatpush.bf16.msra.mxu0 %v747
    %925 = vmatpush.bf16.msra.mxu0 %v744
    %926 = vmatpush.bf16.msra.mxu0 %v741
    %927 = vmatpush.bf16.msra.mxu0 %v738
    %928 = vmatpush.bf16.msra.mxu0 %v735
    %929 = vmatpush.bf16.msra.mxu0 %v732
    %930 = vmatpush.bf16.msra.mxu0 %v729
    %931 = vmatmul.bf16.gmra.mxu0 %v395
    %v932 = vpop.f32.mrf.mxu0
    %v933 = vadd.f32 %v884, %v932
    %v934 = vpop.f32.mrf.mxu0
    %v935 = vadd.f32 %v886, %v934
    %936 = vmatmul.bf16.gmra.mxu0 %v398
    %v937 = vpop.f32.mrf.mxu0
    %v938 = vadd.f32 %v889, %v937
    %v939 = vpop.f32.mrf.mxu0
    %v940 = vadd.f32 %v891, %v939
    %941 = vmatmul.bf16.gmra.mxu0 %v401
    %v942 = vpop.f32.mrf.mxu0
    %v943 = vadd.f32 %v894, %v942
    %v944 = vpop.f32.mrf.mxu0
    %v945 = vadd.f32 %v896, %v944
    %946 = vmatmul.bf16.gmra.mxu0 %v404
    %v947 = vpop.f32.mrf.mxu0
    %v948 = vadd.f32 %v899, %v947
    %v949 = vpop.f32.mrf.mxu0
    %v950 = vadd.f32 %v901, %v949
    %951 = vmatmul.bf16.gmra.mxu0 %v407
    %v952 = vpop.f32.mrf.mxu0
    %v953 = vadd.f32 %v904, %v952
    %v954 = vpop.f32.mrf.mxu0
    %v955 = vadd.f32 %v906, %v954
    %956 = vmatmul.bf16.gmra.mxu0 %v410
    %v957 = vpop.f32.mrf.mxu0
    %v958 = vadd.f32 %v909, %v957
    %v959 = vpop.f32.mrf.mxu0
    %v960 = vadd.f32 %v911, %v959
    %961 = vmatmul.bf16.gmra.mxu0 %v413
    %v962 = vpop.f32.mrf.mxu0
    %v963 = vadd.f32 %v914, %v962
    %v964 = vpop.f32.mrf.mxu0
    %v965 = vadd.f32 %v916, %v964
    %966 = vmatmul.bf16.gmra.mxu0 %v416
    %v967 = vpop.f32.mrf.mxu0
    %v968 = vadd.f32 %v919, %v967
    %v969 = vpop.f32.mrf.mxu0
    %v970 = vadd.f32 %v921, %v969
    %971 = vdwg.mxu0
    %972 = vmatpush.bf16.msra.mxu0 %v703
    %973 = vmatpush.bf16.msra.mxu0 %v700
    %974 = vmatpush.bf16.msra.mxu0 %v697
    %975 = vmatpush.bf16.msra.mxu0 %v694
    %976 = vmatpush.bf16.msra.mxu0 %v691
    %977 = vmatpush.bf16.msra.mxu0 %v688
    %978 = vmatpush.bf16.msra.mxu0 %v685
    %979 = vmatpush.bf16.msra.mxu0 %v682
    %980 = vmatmul.bf16.gmra.mxu0 %v393
    %v981 = vpop.f32.mrf.mxu0
    %v982 = vadd.f32 %v308, %v981
    %v983 = vpop.f32.mrf.mxu0
    %v984 = vadd.f32 %v308, %v983
    %985 = vmatmul.bf16.gmra.mxu0 %v396
    %v986 = vpop.f32.mrf.mxu0
    %v987 = vadd.f32 %v308, %v986
    %v988 = vpop.f32.mrf.mxu0
    %v989 = vadd.f32 %v308, %v988
    %990 = vmatmul.bf16.gmra.mxu0 %v399
    %v991 = vpop.f32.mrf.mxu0
    %v992 = vadd.f32 %v308, %v991
    %v993 = vpop.f32.mrf.mxu0
    %v994 = vadd.f32 %v308, %v993
    %995 = vmatmul.bf16.gmra.mxu0 %v402
    %v996 = vpop.f32.mrf.mxu0
    %v997 = vadd.f32 %v308, %v996
    %v998 = vpop.f32.mrf.mxu0
    %v999 = vadd.f32 %v308, %v998
    %1000 = vmatmul.bf16.gmra.mxu0 %v405
    %v1001 = vpop.f32.mrf.mxu0
    %v1002 = vadd.f32 %v308, %v1001
    %v1003 = vpop.f32.mrf.mxu0
    %v1004 = vadd.f32 %v308, %v1003
    %1005 = vmatmul.bf16.gmra.mxu0 %v408
    %v1006 = vpop.f32.mrf.mxu0
    %v1007 = vadd.f32 %v308, %v1006
    %v1008 = vpop.f32.mrf.mxu0
    %v1009 = vadd.f32 %v308, %v1008
    %1010 = vmatmul.bf16.gmra.mxu0 %v411
    %v1011 = vpop.f32.mrf.mxu0
    %v1012 = vadd.f32 %v308, %v1011
    %v1013 = vpop.f32.mrf.mxu0
    %v1014 = vadd.f32 %v308, %v1013
    %1015 = vmatmul.bf16.gmra.mxu0 %v414
    %v1016 = vpop.f32.mrf.mxu0
    %v1017 = vadd.f32 %v308, %v1016
    %v1018 = vpop.f32.mrf.mxu0
    %v1019 = vadd.f32 %v308, %v1018
    %1020 = vdwg.mxu0
    %1021 = vmatpush.bf16.msra.mxu0 %v727
    %1022 = vmatpush.bf16.msra.mxu0 %v724
    %1023 = vmatpush.bf16.msra.mxu0 %v721
    %1024 = vmatpush.bf16.msra.mxu0 %v718
    %1025 = vmatpush.bf16.msra.mxu0 %v715
    %1026 = vmatpush.bf16.msra.mxu0 %v712
    %1027 = vmatpush.bf16.msra.mxu0 %v709
    %1028 = vmatpush.bf16.msra.mxu0 %v706
    %1029 = vmatmul.bf16.gmra.mxu0 %v394
    %v1030 = vpop.f32.mrf.mxu0
    %v1031 = vadd.f32 %v982, %v1030
    %v1032 = vpop.f32.mrf.mxu0
    %v1033 = vadd.f32 %v984, %v1032
    %1034 = vmatmul.bf16.gmra.mxu0 %v397
    %v1035 = vpop.f32.mrf.mxu0
    %v1036 = vadd.f32 %v987, %v1035
    %v1037 = vpop.f32.mrf.mxu0
    %v1038 = vadd.f32 %v989, %v1037
    %1039 = vmatmul.bf16.gmra.mxu0 %v400
    %v1040 = vpop.f32.mrf.mxu0
    %v1041 = vadd.f32 %v992, %v1040
    %v1042 = vpop.f32.mrf.mxu0
    %v1043 = vadd.f32 %v994, %v1042
    %1044 = vmatmul.bf16.gmra.mxu0 %v403
    %v1045 = vpop.f32.mrf.mxu0
    %v1046 = vadd.f32 %v997, %v1045
    %v1047 = vpop.f32.mrf.mxu0
    %v1048 = vadd.f32 %v999, %v1047
    %1049 = vmatmul.bf16.gmra.mxu0 %v406
    %v1050 = vpop.f32.mrf.mxu0
    %v1051 = vadd.f32 %v1002, %v1050
    %v1052 = vpop.f32.mrf.mxu0
    %v1053 = vadd.f32 %v1004, %v1052
    %1054 = vmatmul.bf16.gmra.mxu0 %v409
    %v1055 = vpop.f32.mrf.mxu0
    %v1056 = vadd.f32 %v1007, %v1055
    %v1057 = vpop.f32.mrf.mxu0
    %v1058 = vadd.f32 %v1009, %v1057
    %1059 = vmatmul.bf16.gmra.mxu0 %v412
    %v1060 = vpop.f32.mrf.mxu0
    %v1061 = vadd.f32 %v1012, %v1060
    %v1062 = vpop.f32.mrf.mxu0
    %v1063 = vadd.f32 %v1014, %v1062
    %1064 = vmatmul.bf16.gmra.mxu0 %v415
    %v1065 = vpop.f32.mrf.mxu0
    %v1066 = vadd.f32 %v1017, %v1065
    %v1067 = vpop.f32.mrf.mxu0
    %v1068 = vadd.f32 %v1019, %v1067
    %1069 = vdwg.mxu0
    %1070 = vmatpush.bf16.msra.mxu0 %v751
    %1071 = vmatpush.bf16.msra.mxu0 %v748
    %1072 = vmatpush.bf16.msra.mxu0 %v745
    %1073 = vmatpush.bf16.msra.mxu0 %v742
    %1074 = vmatpush.bf16.msra.mxu0 %v739
    %1075 = vmatpush.bf16.msra.mxu0 %v736
    %1076 = vmatpush.bf16.msra.mxu0 %v733
    %1077 = vmatpush.bf16.msra.mxu0 %v730
    %1078 = vmatmul.bf16.gmra.mxu0 %v395
    %v1079 = vpop.f32.mrf.mxu0
    %v1080 = vadd.f32 %v1031, %v1079
    %v1081 = vpop.f32.mrf.mxu0
    %v1082 = vadd.f32 %v1033, %v1081
    %1083 = vmatmul.bf16.gmra.mxu0 %v398
    %v1084 = vpop.f32.mrf.mxu0
    %v1085 = vadd.f32 %v1036, %v1084
    %v1086 = vpop.f32.mrf.mxu0
    %v1087 = vadd.f32 %v1038, %v1086
    %1088 = vmatmul.bf16.gmra.mxu0 %v401
    %v1089 = vpop.f32.mrf.mxu0
    %v1090 = vadd.f32 %v1041, %v1089
    %v1091 = vpop.f32.mrf.mxu0
    %v1092 = vadd.f32 %v1043, %v1091
    %1093 = vmatmul.bf16.gmra.mxu0 %v404
    %v1094 = vpop.f32.mrf.mxu0
    %v1095 = vadd.f32 %v1046, %v1094
    %v1096 = vpop.f32.mrf.mxu0
    %v1097 = vadd.f32 %v1048, %v1096
    %1098 = vmatmul.bf16.gmra.mxu0 %v407
    %v1099 = vpop.f32.mrf.mxu0
    %v1100 = vadd.f32 %v1051, %v1099
    %v1101 = vpop.f32.mrf.mxu0
    %v1102 = vadd.f32 %v1053, %v1101
    %1103 = vmatmul.bf16.gmra.mxu0 %v410
    %v1104 = vpop.f32.mrf.mxu0
    %v1105 = vadd.f32 %v1056, %v1104
    %v1106 = vpop.f32.mrf.mxu0
    %v1107 = vadd.f32 %v1058, %v1106
    %1108 = vmatmul.bf16.gmra.mxu0 %v413
    %v1109 = vpop.f32.mrf.mxu0
    %v1110 = vadd.f32 %v1061, %v1109
    %v1111 = vpop.f32.mrf.mxu0
    %v1112 = vadd.f32 %v1063, %v1111
    %1113 = vmatmul.bf16.gmra.mxu0 %v416
    %v1114 = vpop.f32.mrf.mxu0
    %v1115 = vadd.f32 %v1066, %v1114
    %v1116 = vpop.f32.mrf.mxu0
    %v1117 = vadd.f32 %v1068, %v1116
    %1118 = vdwg.mxu0
    %1119 = vmatpush.bf16.msra.mxu0 %v704
    %1120 = vmatpush.bf16.msra.mxu0 %v701
    %1121 = vmatpush.bf16.msra.mxu0 %v698
    %1122 = vmatpush.bf16.msra.mxu0 %v695
    %1123 = vmatpush.bf16.msra.mxu0 %v692
    %1124 = vmatpush.bf16.msra.mxu0 %v689
    %1125 = vmatpush.bf16.msra.mxu0 %v686
    %1126 = vmatpush.bf16.msra.mxu0 %v683
    %1127 = vmatmul.bf16.gmra.mxu0 %v393
    %v1128 = vpop.f32.mrf.mxu0
    %v1129 = vadd.f32 %v309, %v1128
    %v1130 = vpop.f32.mrf.mxu0
    %v1131 = vadd.f32 %v309, %v1130
    %1132 = vmatmul.bf16.gmra.mxu0 %v396
    %v1133 = vpop.f32.mrf.mxu0
    %v1134 = vadd.f32 %v309, %v1133
    %v1135 = vpop.f32.mrf.mxu0
    %v1136 = vadd.f32 %v309, %v1135
    %1137 = vmatmul.bf16.gmra.mxu0 %v399
    %v1138 = vpop.f32.mrf.mxu0
    %v1139 = vadd.f32 %v309, %v1138
    %v1140 = vpop.f32.mrf.mxu0
    %v1141 = vadd.f32 %v309, %v1140
    %1142 = vmatmul.bf16.gmra.mxu0 %v402
    %v1143 = vpop.f32.mrf.mxu0
    %v1144 = vadd.f32 %v309, %v1143
    %v1145 = vpop.f32.mrf.mxu0
    %v1146 = vadd.f32 %v309, %v1145
    %1147 = vmatmul.bf16.gmra.mxu0 %v405
    %v1148 = vpop.f32.mrf.mxu0
    %v1149 = vadd.f32 %v309, %v1148
    %v1150 = vpop.f32.mrf.mxu0
    %v1151 = vadd.f32 %v309, %v1150
    %1152 = vmatmul.bf16.gmra.mxu0 %v408
    %v1153 = vpop.f32.mrf.mxu0
    %v1154 = vadd.f32 %v309, %v1153
    %v1155 = vpop.f32.mrf.mxu0
    %v1156 = vadd.f32 %v309, %v1155
    %1157 = vmatmul.bf16.gmra.mxu0 %v411
    %v1158 = vpop.f32.mrf.mxu0
    %v1159 = vadd.f32 %v309, %v1158
    %v1160 = vpop.f32.mrf.mxu0
    %v1161 = vadd.f32 %v309, %v1160
    %1162 = vmatmul.bf16.gmra.mxu0 %v414
    %v1163 = vpop.f32.mrf.mxu0
    %v1164 = vadd.f32 %v309, %v1163
    %v1165 = vpop.f32.mrf.mxu0
    %v1166 = vadd.f32 %v309, %v1165
    %1167 = vdwg.mxu0
    %1168 = vmatpush.bf16.msra.mxu0 %v728
    %1169 = vmatpush.bf16.msra.mxu0 %v725
    %1170 = vmatpush.bf16.msra.mxu0 %v722
    %1171 = vmatpush.bf16.msra.mxu0 %v719
    %1172 = vmatpush.bf16.msra.mxu0 %v716
    %1173 = vmatpush.bf16.msra.mxu0 %v713
    %1174 = vmatpush.bf16.msra.mxu0 %v710
    %1175 = vmatpush.bf16.msra.mxu0 %v707
    %1176 = vmatmul.bf16.gmra.mxu0 %v394
    %v1177 = vpop.f32.mrf.mxu0
    %v1178 = vadd.f32 %v1129, %v1177
    %v1179 = vpop.f32.mrf.mxu0
    %v1180 = vadd.f32 %v1131, %v1179
    %1181 = vmatmul.bf16.gmra.mxu0 %v397
    %v1182 = vpop.f32.mrf.mxu0
    %v1183 = vadd.f32 %v1134, %v1182
    %v1184 = vpop.f32.mrf.mxu0
    %v1185 = vadd.f32 %v1136, %v1184
    %1186 = vmatmul.bf16.gmra.mxu0 %v400
    %v1187 = vpop.f32.mrf.mxu0
    %v1188 = vadd.f32 %v1139, %v1187
    %v1189 = vpop.f32.mrf.mxu0
    %v1190 = vadd.f32 %v1141, %v1189
    %1191 = vmatmul.bf16.gmra.mxu0 %v403
    %v1192 = vpop.f32.mrf.mxu0
    %v1193 = vadd.f32 %v1144, %v1192
    %v1194 = vpop.f32.mrf.mxu0
    %v1195 = vadd.f32 %v1146, %v1194
    %1196 = vmatmul.bf16.gmra.mxu0 %v406
    %v1197 = vpop.f32.mrf.mxu0
    %v1198 = vadd.f32 %v1149, %v1197
    %v1199 = vpop.f32.mrf.mxu0
    %v1200 = vadd.f32 %v1151, %v1199
    %1201 = vmatmul.bf16.gmra.mxu0 %v409
    %v1202 = vpop.f32.mrf.mxu0
    %v1203 = vadd.f32 %v1154, %v1202
    %v1204 = vpop.f32.mrf.mxu0
    %v1205 = vadd.f32 %v1156, %v1204
    %1206 = vmatmul.bf16.gmra.mxu0 %v412
    %v1207 = vpop.f32.mrf.mxu0
    %v1208 = vadd.f32 %v1159, %v1207
    %v1209 = vpop.f32.mrf.mxu0
    %v1210 = vadd.f32 %v1161, %v1209
    %1211 = vmatmul.bf16.gmra.mxu0 %v415
    %v1212 = vpop.f32.mrf.mxu0
    %v1213 = vadd.f32 %v1164, %v1212
    %v1214 = vpop.f32.mrf.mxu0
    %v1215 = vadd.f32 %v1166, %v1214
    %1216 = vdwg.mxu0
    %1217 = vmatpush.bf16.msra.mxu0 %v752
    %1218 = vmatpush.bf16.msra.mxu0 %v749
    %1219 = vmatpush.bf16.msra.mxu0 %v746
    %1220 = vmatpush.bf16.msra.mxu0 %v743
    %1221 = vmatpush.bf16.msra.mxu0 %v740
    %1222 = vmatpush.bf16.msra.mxu0 %v737
    %1223 = vmatpush.bf16.msra.mxu0 %v734
    %1224 = vmatpush.bf16.msra.mxu0 %v731
    %1225 = vmatmul.bf16.gmra.mxu0 %v395
    %v1226 = vpop.f32.mrf.mxu0
    %v1227 = vadd.f32 %v1178, %v1226
    %v1228 = vpop.f32.mrf.mxu0
    %v1229 = vadd.f32 %v1180, %v1228
    %1230 = vmatmul.bf16.gmra.mxu0 %v398
    %v1231 = vpop.f32.mrf.mxu0
    %v1232 = vadd.f32 %v1183, %v1231
    %v1233 = vpop.f32.mrf.mxu0
    %v1234 = vadd.f32 %v1185, %v1233
    %1235 = vmatmul.bf16.gmra.mxu0 %v401
    %v1236 = vpop.f32.mrf.mxu0
    %v1237 = vadd.f32 %v1188, %v1236
    %v1238 = vpop.f32.mrf.mxu0
    %v1239 = vadd.f32 %v1190, %v1238
    %1240 = vmatmul.bf16.gmra.mxu0 %v404
    %v1241 = vpop.f32.mrf.mxu0
    %v1242 = vadd.f32 %v1193, %v1241
    %v1243 = vpop.f32.mrf.mxu0
    %v1244 = vadd.f32 %v1195, %v1243
    %1245 = vmatmul.bf16.gmra.mxu0 %v407
    %v1246 = vpop.f32.mrf.mxu0
    %v1247 = vadd.f32 %v1198, %v1246
    %v1248 = vpop.f32.mrf.mxu0
    %v1249 = vadd.f32 %v1200, %v1248
    %1250 = vmatmul.bf16.gmra.mxu0 %v410
    %v1251 = vpop.f32.mrf.mxu0
    %v1252 = vadd.f32 %v1203, %v1251
    %v1253 = vpop.f32.mrf.mxu0
    %v1254 = vadd.f32 %v1205, %v1253
    %1255 = vmatmul.bf16.gmra.mxu0 %v413
    %v1256 = vpop.f32.mrf.mxu0
    %v1257 = vadd.f32 %v1208, %v1256
    %v1258 = vpop.f32.mrf.mxu0
    %v1259 = vadd.f32 %v1210, %v1258
    %1260 = vmatmul.bf16.gmra.mxu0 %v416
    %v1261 = vpop.f32.mrf.mxu0
    %v1262 = vadd.f32 %v1213, %v1261
    %v1263 = vpop.f32.mrf.mxu0
    %v1264 = vadd.f32 %v1215, %v1263
    %1265 = vdwg.mxu0
    %v1266 = vmax.f32 %v933, 0.0
    %v1267 = vmax.f32 %v1080, 0.0
    %v1268 = vmax.f32 %v1227, 0.0
    %v1269 = vmax.f32 %v935, 0.0
    %v1270 = vmax.f32 %v1082, 0.0
    %v1271 = vmax.f32 %v1229, 0.0
    %v1272 = vmax.f32 %v938, 0.0
    %v1273 = vmax.f32 %v1085, 0.0
    %v1274 = vmax.f32 %v1232, 0.0
    %v1275 = vmax.f32 %v940, 0.0
    %v1276 = vmax.f32 %v1087, 0.0
    %v1277 = vmax.f32 %v1234, 0.0
    %v1278 = vmax.f32 %v943, 0.0
    %v1279 = vmax.f32 %v1090, 0.0
    %v1280 = vmax.f32 %v1237, 0.0
    %v1281 = vmax.f32 %v945, 0.0
    %v1282 = vmax.f32 %v1092, 0.0
    %v1283 = vmax.f32 %v1239, 0.0
    %v1284 = vmax.f32 %v948, 0.0
    %v1285 = vmax.f32 %v1095, 0.0
    %v1286 = vmax.f32 %v1242, 0.0
    %v1287 = vmax.f32 %v950, 0.0
    %v1288 = vmax.f32 %v1097, 0.0
    %v1289 = vmax.f32 %v1244, 0.0
    %v1290 = vmax.f32 %v953, 0.0
    %v1291 = vmax.f32 %v1100, 0.0
    %v1292 = vmax.f32 %v1247, 0.0
    %v1293 = vmax.f32 %v955, 0.0
    %v1294 = vmax.f32 %v1102, 0.0
    %v1295 = vmax.f32 %v1249, 0.0
    %v1296 = vmax.f32 %v958, 0.0
    %v1297 = vmax.f32 %v1105, 0.0
    %v1298 = vmax.f32 %v1252, 0.0
    %v1299 = vmax.f32 %v960, 0.0
    %v1300 = vmax.f32 %v1107, 0.0
    %v1301 = vmax.f32 %v1254, 0.0
    %v1302 = vmax.f32 %v963, 0.0
    %v1303 = vmax.f32 %v1110, 0.0
    %v1304 = vmax.f32 %v1257, 0.0
    %v1305 = vmax.f32 %v965, 0.0
    %v1306 = vmax.f32 %v1112, 0.0
    %v1307 = vmax.f32 %v1259, 0.0
    %v1308 = vmax.f32 %v968, 0.0
    %v1309 = vmax.f32 %v1115, 0.0
    %v1310 = vmax.f32 %v1262, 0.0
    %v1311 = vmax.f32 %v970, 0.0
    %v1312 = vmax.f32 %v1117, 0.0
    %v1313 = vmax.f32 %v1264, 0.0
    %v1314 = vpack.c.bf16 %v1269, %v1266
    %v1315 = vpack.c.bf16 %v1270, %v1267
    %v1316 = vpack.c.bf16 %v1271, %v1268
    %v1317 = vpack.c.bf16 %v1275, %v1272
    %v1318 = vpack.c.bf16 %v1276, %v1273
    %v1319 = vpack.c.bf16 %v1277, %v1274
    %v1320 = vpack.c.bf16 %v1281, %v1278
    %v1321 = vpack.c.bf16 %v1282, %v1279
    %v1322 = vpack.c.bf16 %v1283, %v1280
    %v1323 = vpack.c.bf16 %v1287, %v1284
    %v1324 = vpack.c.bf16 %v1288, %v1285
    %v1325 = vpack.c.bf16 %v1289, %v1286
    %v1326 = vpack.c.bf16 %v1293, %v1290
    %v1327 = vpack.c.bf16 %v1294, %v1291
    %v1328 = vpack.c.bf16 %v1295, %v1292
    %v1329 = vpack.c.bf16 %v1299, %v1296
    %v1330 = vpack.c.bf16 %v1300, %v1297
    %v1331 = vpack.c.bf16 %v1301, %v1298
    %v1332 = vpack.c.bf16 %v1305, %v1302
    %v1333 = vpack.c.bf16 %v1306, %v1303
    %v1334 = vpack.c.bf16 %v1307, %v1304
    %v1335 = vpack.c.bf16 %v1311, %v1308
    %v1336 = vpack.c.bf16 %v1312, %v1309
    %v1337 = vpack.c.bf16 %v1313, %v1310
    %v1339 = vperm.slane %v305, 0
    %v1340 = vperm.slane %v305, 1
    %v1341 = vperm.slane %v305, 2
    %v1441 = vunpack.c.l.b16 %v209
    %v1442 = vunpack.c.h.b16 %v209
    %v1443 = vunpack.c.l.b16 %v210
    %v1444 = vunpack.c.l.b16 %v211
    %v1445 = vunpack.c.h.b16 %v211
    %v1446 = vunpack.c.l.b16 %v212
    %v1447 = vunpack.c.l.b16 %v213
    %v1448 = vunpack.c.h.b16 %v213
    %v1449 = vunpack.c.l.b16 %v214
    %v1450 = vunpack.c.l.b16 %v215
    %v1451 = vunpack.c.h.b16 %v215
    %v1452 = vunpack.c.l.b16 %v216
    %v1453 = vunpack.c.l.b16 %v217
    %v1454 = vunpack.c.h.b16 %v217
    %v1455 = vunpack.c.l.b16 %v218
    %v1456 = vunpack.c.l.b16 %v219
    %v1457 = vunpack.c.h.b16 %v219
    %v1458 = vunpack.c.l.b16 %v220
    %v1459 = vunpack.c.l.b16 %v221
    %v1460 = vunpack.c.h.b16 %v221
    %v1461 = vunpack.c.l.b16 %v222
    %v1462 = vunpack.c.l.b16 %v223
    %v1463 = vunpack.c.h.b16 %v223
    %v1464 = vunpack.c.l.b16 %v224
    %v1465 = vunpack.c.l.b16 %v225
    %v1466 = vunpack.c.h.b16 %v225
    %v1467 = vunpack.c.l.b16 %v226
    %v1468 = vunpack.c.l.b16 %v227
    %v1469 = vunpack.c.h.b16 %v227
    %v1470 = vunpack.c.l.b16 %v228
    %v1471 = vunpack.c.l.b16 %v229
    %v1472 = vunpack.c.h.b16 %v229
    %v1473 = vunpack.c.l.b16 %v230
    %v1474 = vunpack.c.l.b16 %v231
    %v1475 = vunpack.c.h.b16 %v231
    %v1476 = vunpack.c.l.b16 %v232
    %v1477 = vunpack.c.l.b16 %v233
    %v1478 = vunpack.c.h.b16 %v233
    %v1479 = vunpack.c.l.b16 %v234
    %v1480 = vunpack.c.l.b16 %v235
    %v1481 = vunpack.c.h.b16 %v235
    %v1482 = vunpack.c.l.b16 %v236
    %v1483 = vunpack.c.l.b16 %v237
    %v1484 = vunpack.c.h.b16 %v237
    %v1485 = vunpack.c.l.b16 %v238
    %v1486 = vunpack.c.l.b16 %v239
    %v1487 = vunpack.c.h.b16 %v239
    %v1488 = vunpack.c.l.b16 %v240
    %v1489 = vunpack.c.l.b16 %v241
    %v1490 = vunpack.c.h.b16 %v241
    %v1491 = vunpack.c.l.b16 %v242
    %v1492 = vunpack.c.l.b16 %v243
    %v1493 = vunpack.c.h.b16 %v243
    %v1494 = vunpack.c.l.b16 %v244
    %v1495 = vunpack.c.l.b16 %v245
    %v1496 = vunpack.c.h.b16 %v245
    %v1497 = vunpack.c.l.b16 %v246
    %v1498 = vunpack.c.l.b16 %v247
    %v1499 = vunpack.c.h.b16 %v247
    %v1500 = vunpack.c.l.b16 %v248
    %v1501 = vunpack.c.l.b16 %v249
    %v1502 = vunpack.c.h.b16 %v249
    %v1503 = vunpack.c.l.b16 %v250
    %v1504 = vunpack.c.l.b16 %v251
    %v1505 = vunpack.c.h.b16 %v251
    %v1506 = vunpack.c.l.b16 %v252
    %v1507 = vunpack.c.l.b16 %v253
    %v1508 = vunpack.c.h.b16 %v253
    %v1509 = vunpack.c.l.b16 %v254
    %v1510 = vunpack.c.l.b16 %v255
    %v1511 = vunpack.c.h.b16 %v255
    %v1512 = vunpack.c.l.b16 %v256
    %v1513 = vunpack.c.l.b16 %v257
    %v1514 = vunpack.c.h.b16 %v257
    %v1515 = vunpack.c.l.b16 %v258
    %v1516 = vunpack.c.l.b16 %v259
    %v1517 = vunpack.c.h.b16 %v259
    %v1518 = vunpack.c.l.b16 %v260
    %v1519 = vunpack.c.l.b16 %v261
    %v1520 = vunpack.c.h.b16 %v261
    %v1521 = vunpack.c.l.b16 %v262
    %v1522 = vunpack.c.l.b16 %v263
    %v1523 = vunpack.c.h.b16 %v263
    %v1524 = vunpack.c.l.b16 %v264
    %v1525 = vunpack.c.l.b16 %v265
    %v1526 = vunpack.c.h.b16 %v265
    %v1527 = vunpack.c.l.b16 %v266
    %v1528 = vunpack.c.l.b16 %v267
    %v1529 = vunpack.c.h.b16 %v267
    %v1530 = vunpack.c.l.b16 %v268
    %v1531 = vunpack.c.l.b16 %v269
    %v1532 = vunpack.c.h.b16 %v269
    %v1533 = vunpack.c.l.b16 %v270
    %v1534 = vunpack.c.l.b16 %v271
    %v1535 = vunpack.c.h.b16 %v271
    %v1536 = vunpack.c.l.b16 %v272
    %v1537 = vunpack.c.l.b16 %v273
    %v1538 = vunpack.c.h.b16 %v273
    %v1539 = vunpack.c.l.b16 %v274
    %v1540 = vunpack.c.l.b16 %v275
    %v1541 = vunpack.c.h.b16 %v275
    %v1542 = vunpack.c.l.b16 %v276
    %v1543 = vunpack.c.l.b16 %v277
    %v1544 = vunpack.c.h.b16 %v277
    %v1545 = vunpack.c.l.b16 %v278
    %v1546 = vunpack.c.l.b16 %v279
    %v1547 = vunpack.c.h.b16 %v279
    %v1548 = vunpack.c.l.b16 %v280
    %v1549 = vunpack.c.l.b16 %v281
    %v1550 = vunpack.c.h.b16 %v281
    %v1551 = vunpack.c.l.b16 %v282
    %v1552 = vunpack.c.l.b16 %v283
    %v1553 = vunpack.c.h.b16 %v283
    %v1554 = vunpack.c.l.b16 %v284
    %v1555 = vunpack.c.l.b16 %v285
    %v1556 = vunpack.c.h.b16 %v285
    %v1557 = vunpack.c.l.b16 %v286
    %v1558 = vunpack.c.l.b16 %v287
    %v1559 = vunpack.c.h.b16 %v287
    %v1560 = vunpack.c.l.b16 %v288
    %v1561 = vunpack.c.l.b16 %v289
    %v1562 = vunpack.c.h.b16 %v289
    %v1563 = vunpack.c.l.b16 %v290
    %v1564 = vunpack.c.l.b16 %v291
    %v1565 = vunpack.c.h.b16 %v291
    %v1566 = vunpack.c.l.b16 %v292
    %v1567 = vunpack.c.l.b16 %v293
    %v1568 = vunpack.c.h.b16 %v293
    %v1569 = vunpack.c.l.b16 %v294
    %v1570 = vunpack.c.l.b16 %v295
    %v1571 = vunpack.c.h.b16 %v295
    %v1572 = vunpack.c.l.b16 %v296
    %v1573 = vunpack.c.l.b16 %v297
    %v1574 = vunpack.c.h.b16 %v297
    %v1575 = vunpack.c.l.b16 %v298
    %v1576 = vunpack.c.l.b16 %v299
    %v1577 = vunpack.c.h.b16 %v299
    %v1578 = vunpack.c.l.b16 %v300
    %v1579 = vunpack.c.l.b16 %v301
    %v1580 = vunpack.c.h.b16 %v301
    %v1581 = vunpack.c.l.b16 %v302
    %v1582 = vunpack.c.l.b16 %v303
    %v1583 = vunpack.c.h.b16 %v303
    %v1584 = vunpack.c.l.b16 %v304
    %v1585 = vpack.c.b16 %v1444, %v1441
    %v1586 = vpack.c.b16 %v1445, %v1442
    %v1587 = vpack.c.b16 %v1446, %v1443
    %v1588 = vpack.c.b16 %v1450, %v1447
    %v1589 = vpack.c.b16 %v1451, %v1448
    %v1590 = vpack.c.b16 %v1452, %v1449
    %v1591 = vpack.c.b16 %v1456, %v1453
    %v1592 = vpack.c.b16 %v1457, %v1454
    %v1593 = vpack.c.b16 %v1458, %v1455
    %v1594 = vpack.c.b16 %v1462, %v1459
    %v1595 = vpack.c.b16 %v1463, %v1460
    %v1596 = vpack.c.b16 %v1464, %v1461
    %v1597 = vpack.c.b16 %v1468, %v1465
    %v1598 = vpack.c.b16 %v1469, %v1466
    %v1599 = vpack.c.b16 %v1470, %v1467
    %v1600 = vpack.c.b16 %v1474, %v1471
    %v1601 = vpack.c.b16 %v1475, %v1472
    %v1602 = vpack.c.b16 %v1476, %v1473
    %v1603 = vpack.c.b16 %v1480, %v1477
    %v1604 = vpack.c.b16 %v1481, %v1478
    %v1605 = vpack.c.b16 %v1482, %v1479
    %v1606 = vpack.c.b16 %v1486, %v1483
    %v1607 = vpack.c.b16 %v1487, %v1484
    %v1608 = vpack.c.b16 %v1488, %v1485
    %v1609 = vpack.c.b16 %v1492, %v1489
    %v1610 = vpack.c.b16 %v1493, %v1490
    %v1611 = vpack.c.b16 %v1494, %v1491
    %v1612 = vpack.c.b16 %v1498, %v1495
    %v1613 = vpack.c.b16 %v1499, %v1496
    %v1614 = vpack.c.b16 %v1500, %v1497
    %v1615 = vpack.c.b16 %v1504, %v1501
    %v1616 = vpack.c.b16 %v1505, %v1502
    %v1617 = vpack.c.b16 %v1506, %v1503
    %v1618 = vpack.c.b16 %v1510, %v1507
    %v1619 = vpack.c.b16 %v1511, %v1508
    %v1620 = vpack.c.b16 %v1512, %v1509
    %v1621 = vpack.c.b16 %v1516, %v1513
    %v1622 = vpack.c.b16 %v1517, %v1514
    %v1623 = vpack.c.b16 %v1518, %v1515
    %v1624 = vpack.c.b16 %v1522, %v1519
    %v1625 = vpack.c.b16 %v1523, %v1520
    %v1626 = vpack.c.b16 %v1524, %v1521
    %v1627 = vpack.c.b16 %v1528, %v1525
    %v1628 = vpack.c.b16 %v1529, %v1526
    %v1629 = vpack.c.b16 %v1530, %v1527
    %v1630 = vpack.c.b16 %v1534, %v1531
    %v1631 = vpack.c.b16 %v1535, %v1532
    %v1632 = vpack.c.b16 %v1536, %v1533
    %v1633 = vpack.c.b16 %v1540, %v1537
    %v1634 = vpack.c.b16 %v1541, %v1538
    %v1635 = vpack.c.b16 %v1542, %v1539
    %v1636 = vpack.c.b16 %v1546, %v1543
    %v1637 = vpack.c.b16 %v1547, %v1544
    %v1638 = vpack.c.b16 %v1548, %v1545
    %v1639 = vpack.c.b16 %v1552, %v1549
    %v1640 = vpack.c.b16 %v1553, %v1550
    %v1641 = vpack.c.b16 %v1554, %v1551
    %v1642 = vpack.c.b16 %v1558, %v1555
    %v1643 = vpack.c.b16 %v1559, %v1556
    %v1644 = vpack.c.b16 %v1560, %v1557
    %v1645 = vpack.c.b16 %v1564, %v1561
    %v1646 = vpack.c.b16 %v1565, %v1562
    %v1647 = vpack.c.b16 %v1566, %v1563
    %v1648 = vpack.c.b16 %v1570, %v1567
    %v1649 = vpack.c.b16 %v1571, %v1568
    %v1650 = vpack.c.b16 %v1572, %v1569
    %v1651 = vpack.c.b16 %v1576, %v1573
    %v1652 = vpack.c.b16 %v1577, %v1574
    %v1653 = vpack.c.b16 %v1578, %v1575
    %v1654 = vpack.c.b16 %v1582, %v1579
    %v1655 = vpack.c.b16 %v1583, %v1580
    %v1656 = vpack.c.b16 %v1584, %v1581
    %1729 = vmatpush.bf16.msra.mxu0 %v1606
    %1730 = vmatpush.bf16.msra.mxu0 %v1603
    %1731 = vmatpush.bf16.msra.mxu0 %v1600
    %1732 = vmatpush.bf16.msra.mxu0 %v1597
    %1733 = vmatpush.bf16.msra.mxu0 %v1594
    %1734 = vmatpush.bf16.msra.mxu0 %v1591
    %1735 = vmatpush.bf16.msra.mxu0 %v1588
    %1736 = vmatpush.bf16.msra.mxu0 %v1585
    %1737 = vmatmul.bf16.gmra.mxu0 %v1314
    %v1738 = vpop.f32.mrf.mxu0
    %v1739 = vadd.f32 %v1339, %v1738
    %v1740 = vpop.f32.mrf.mxu0
    %v1741 = vadd.f32 %v1339, %v1740
    %1742 = vmatmul.bf16.gmra.mxu0 %v1317
    %v1743 = vpop.f32.mrf.mxu0
    %v1744 = vadd.f32 %v1339, %v1743
    %v1745 = vpop.f32.mrf.mxu0
    %v1746 = vadd.f32 %v1339, %v1745
    %1747 = vmatmul.bf16.gmra.mxu0 %v1320
    %v1748 = vpop.f32.mrf.mxu0
    %v1749 = vadd.f32 %v1339, %v1748
    %v1750 = vpop.f32.mrf.mxu0
    %v1751 = vadd.f32 %v1339, %v1750
    %1752 = vmatmul.bf16.gmra.mxu0 %v1323
    %v1753 = vpop.f32.mrf.mxu0
    %v1754 = vadd.f32 %v1339, %v1753
    %v1755 = vpop.f32.mrf.mxu0
    %v1756 = vadd.f32 %v1339, %v1755
    %1757 = vmatmul.bf16.gmra.mxu0 %v1326
    %v1758 = vpop.f32.mrf.mxu0
    %v1759 = vadd.f32 %v1339, %v1758
    %v1760 = vpop.f32.mrf.mxu0
    %v1761 = vadd.f32 %v1339, %v1760
    %1762 = vmatmul.bf16.gmra.mxu0 %v1329
    %v1763 = vpop.f32.mrf.mxu0
    %v1764 = vadd.f32 %v1339, %v1763
    %v1765 = vpop.f32.mrf.mxu0
    %v1766 = vadd.f32 %v1339, %v1765
    %1767 = vmatmul.bf16.gmra.mxu0 %v1332
    %v1768 = vpop.f32.mrf.mxu0
    %v1769 = vadd.f32 %v1339, %v1768
    %v1770 = vpop.f32.mrf.mxu0
    %v1771 = vadd.f32 %v1339, %v1770
    %1772 = vmatmul.bf16.gmra.mxu0 %v1335
    %v1773 = vpop.f32.mrf.mxu0
    %v1774 = vadd.f32 %v1339, %v1773
    %v1775 = vpop.f32.mrf.mxu0
    %v1776 = vadd.f32 %v1339, %v1775
    %1777 = vdwg.mxu0
    %1778 = vmatpush.bf16.msra.mxu0 %v1630
    %1779 = vmatpush.bf16.msra.mxu0 %v1627
    %1780 = vmatpush.bf16.msra.mxu0 %v1624
    %1781 = vmatpush.bf16.msra.mxu0 %v1621
    %1782 = vmatpush.bf16.msra.mxu0 %v1618
    %1783 = vmatpush.bf16.msra.mxu0 %v1615
    %1784 = vmatpush.bf16.msra.mxu0 %v1612
    %1785 = vmatpush.bf16.msra.mxu0 %v1609
    %1786 = vmatmul.bf16.gmra.mxu0 %v1315
    %v1787 = vpop.f32.mrf.mxu0
    %v1788 = vadd.f32 %v1739, %v1787
    %v1789 = vpop.f32.mrf.mxu0
    %v1790 = vadd.f32 %v1741, %v1789
    %1791 = vmatmul.bf16.gmra.mxu0 %v1318
    %v1792 = vpop.f32.mrf.mxu0
    %v1793 = vadd.f32 %v1744, %v1792
    %v1794 = vpop.f32.mrf.mxu0
    %v1795 = vadd.f32 %v1746, %v1794
    %1796 = vmatmul.bf16.gmra.mxu0 %v1321
    %v1797 = vpop.f32.mrf.mxu0
    %v1798 = vadd.f32 %v1749, %v1797
    %v1799 = vpop.f32.mrf.mxu0
    %v1800 = vadd.f32 %v1751, %v1799
    %1801 = vmatmul.bf16.gmra.mxu0 %v1324
    %v1802 = vpop.f32.mrf.mxu0
    %v1803 = vadd.f32 %v1754, %v1802
    %v1804 = vpop.f32.mrf.mxu0
    %v1805 = vadd.f32 %v1756, %v1804
    %1806 = vmatmul.bf16.gmra.mxu0 %v1327
    %v1807 = vpop.f32.mrf.mxu0
    %v1808 = vadd.f32 %v1759, %v1807
    %v1809 = vpop.f32.mrf.mxu0
    %v1810 = vadd.f32 %v1761, %v1809
    %1811 = vmatmul.bf16.gmra.mxu0 %v1330
    %v1812 = vpop.f32.mrf.mxu0
    %v1813 = vadd.f32 %v1764, %v1812
    %v1814 = vpop.f32.mrf.mxu0
    %v1815 = vadd.f32 %v1766, %v1814
    %1816 = vmatmul.bf16.gmra.mxu0 %v1333
    %v1817 = vpop.f32.mrf.mxu0
    %v1818 = vadd.f32 %v1769, %v1817
    %v1819 = vpop.f32.mrf.mxu0
    %v1820 = vadd.f32 %v1771, %v1819
    %1821 = vmatmul.bf16.gmra.mxu0 %v1336
    %v1822 = vpop.f32.mrf.mxu0
    %v1823 = vadd.f32 %v1774, %v1822
    %v1824 = vpop.f32.mrf.mxu0
    %v1825 = vadd.f32 %v1776, %v1824
    %1826 = vdwg.mxu0
    %1827 = vmatpush.bf16.msra.mxu0 %v1654
    %1828 = vmatpush.bf16.msra.mxu0 %v1651
    %1829 = vmatpush.bf16.msra.mxu0 %v1648
    %1830 = vmatpush.bf16.msra.mxu0 %v1645
    %1831 = vmatpush.bf16.msra.mxu0 %v1642
    %1832 = vmatpush.bf16.msra.mxu0 %v1639
    %1833 = vmatpush.bf16.msra.mxu0 %v1636
    %1834 = vmatpush.bf16.msra.mxu0 %v1633
    %1835 = vmatmul.bf16.gmra.mxu0 %v1316
    %v1836 = vpop.f32.mrf.mxu0
    %v1837 = vadd.f32 %v1788, %v1836
    %v1838 = vpop.f32.mrf.mxu0
    %v1839 = vadd.f32 %v1790, %v1838
    %1840 = vmatmul.bf16.gmra.mxu0 %v1319
    %v1841 = vpop.f32.mrf.mxu0
    %v1842 = vadd.f32 %v1793, %v1841
    %v1843 = vpop.f32.mrf.mxu0
    %v1844 = vadd.f32 %v1795, %v1843
    %1845 = vmatmul.bf16.gmra.mxu0 %v1322
    %v1846 = vpop.f32.mrf.mxu0
    %v1847 = vadd.f32 %v1798, %v1846
    %v1848 = vpop.f32.mrf.mxu0
    %v1849 = vadd.f32 %v1800, %v1848
    %1850 = vmatmul.bf16.gmra.mxu0 %v1325
    %v1851 = vpop.f32.mrf.mxu0
    %v1852 = vadd.f32 %v1803, %v1851
    %v1853 = vpop.f32.mrf.mxu0
    %v1854 = vadd.f32 %v1805, %v1853
    %1855 = vmatmul.bf16.gmra.mxu0 %v1328
    %v1856 = vpop.f32.mrf.mxu0
    %v1857 = vadd.f32 %v1808, %v1856
    %v1858 = vpop.f32.mrf.mxu0
    %v1859 = vadd.f32 %v1810, %v1858
    %1860 = vmatmul.bf16.gmra.mxu0 %v1331
    %v1861 = vpop.f32.mrf.mxu0
    %v1862 = vadd.f32 %v1813, %v1861
    %v1863 = vpop.f32.mrf.mxu0
    %v1864 = vadd.f32 %v1815, %v1863
    %1865 = vmatmul.bf16.gmra.mxu0 %v1334
    %v1866 = vpop.f32.mrf.mxu0
    %v1867 = vadd.f32 %v1818, %v1866
    %v1868 = vpop.f32.mrf.mxu0
    %v1869 = vadd.f32 %v1820, %v1868
    %1870 = vmatmul.bf16.gmra.mxu0 %v1337
    %v1871 = vpop.f32.mrf.mxu0
    %v1872 = vadd.f32 %v1823, %v1871
    %v1873 = vpop.f32.mrf.mxu0
    %v1874 = vadd.f32 %v1825, %v1873
    %1875 = vdwg.mxu0
    %1876 = vmatpush.bf16.msra.mxu0 %v1607
    %1877 = vmatpush.bf16.msra.mxu0 %v1604
    %1878 = vmatpush.bf16.msra.mxu0 %v1601
    %1879 = vmatpush.bf16.msra.mxu0 %v1598
    %1880 = vmatpush.bf16.msra.mxu0 %v1595
    %1881 = vmatpush.bf16.msra.mxu0 %v1592
    %1882 = vmatpush.bf16.msra.mxu0 %v1589
    %1883 = vmatpush.bf16.msra.mxu0 %v1586
    %1884 = vmatmul.bf16.gmra.mxu0 %v1314
    %v1885 = vpop.f32.mrf.mxu0
    %v1886 = vadd.f32 %v1340, %v1885
    %v1887 = vpop.f32.mrf.mxu0
    %v1888 = vadd.f32 %v1340, %v1887
    %1889 = vmatmul.bf16.gmra.mxu0 %v1317
    %v1890 = vpop.f32.mrf.mxu0
    %v1891 = vadd.f32 %v1340, %v1890
    %v1892 = vpop.f32.mrf.mxu0
    %v1893 = vadd.f32 %v1340, %v1892
    %1894 = vmatmul.bf16.gmra.mxu0 %v1320
    %v1895 = vpop.f32.mrf.mxu0
    %v1896 = vadd.f32 %v1340, %v1895
    %v1897 = vpop.f32.mrf.mxu0
    %v1898 = vadd.f32 %v1340, %v1897
    %1899 = vmatmul.bf16.gmra.mxu0 %v1323
    %v1900 = vpop.f32.mrf.mxu0
    %v1901 = vadd.f32 %v1340, %v1900
    %v1902 = vpop.f32.mrf.mxu0
    %v1903 = vadd.f32 %v1340, %v1902
    %1904 = vmatmul.bf16.gmra.mxu0 %v1326
    %v1905 = vpop.f32.mrf.mxu0
    %v1906 = vadd.f32 %v1340, %v1905
    %v1907 = vpop.f32.mrf.mxu0
    %v1908 = vadd.f32 %v1340, %v1907
    %1909 = vmatmul.bf16.gmra.mxu0 %v1329
    %v1910 = vpop.f32.mrf.mxu0
    %v1911 = vadd.f32 %v1340, %v1910
    %v1912 = vpop.f32.mrf.mxu0
    %v1913 = vadd.f32 %v1340, %v1912
    %1914 = vmatmul.bf16.gmra.mxu0 %v1332
    %v1915 = vpop.f32.mrf.mxu0
    %v1916 = vadd.f32 %v1340, %v1915
    %v1917 = vpop.f32.mrf.mxu0
    %v1918 = vadd.f32 %v1340, %v1917
    %1919 = vmatmul.bf16.gmra.mxu0 %v1335
    %v1920 = vpop.f32.mrf.mxu0
    %v1921 = vadd.f32 %v1340, %v1920
    %v1922 = vpop.f32.mrf.mxu0
    %v1923 = vadd.f32 %v1340, %v1922
    %1924 = vdwg.mxu0
    %1925 = vmatpush.bf16.msra.mxu0 %v1631
    %1926 = vmatpush.bf16.msra.mxu0 %v1628
    %1927 = vmatpush.bf16.msra.mxu0 %v1625
    %1928 = vmatpush.bf16.msra.mxu0 %v1622
    %1929 = vmatpush.bf16.msra.mxu0 %v1619
    %1930 = vmatpush.bf16.msra.mxu0 %v1616
    %1931 = vmatpush.bf16.msra.mxu0 %v1613
    %1932 = vmatpush.bf16.msra.mxu0 %v1610
    %1933 = vmatmul.bf16.gmra.mxu0 %v1315
    %v1934 = vpop.f32.mrf.mxu0
    %v1935 = vadd.f32 %v1886, %v1934
    %v1936 = vpop.f32.mrf.mxu0
    %v1937 = vadd.f32 %v1888, %v1936
    %1938 = vmatmul.bf16.gmra.mxu0 %v1318
    %v1939 = vpop.f32.mrf.mxu0
    %v1940 = vadd.f32 %v1891, %v1939
    %v1941 = vpop.f32.mrf.mxu0
    %v1942 = vadd.f32 %v1893, %v1941
    %1943 = vmatmul.bf16.gmra.mxu0 %v1321
    %v1944 = vpop.f32.mrf.mxu0
    %v1945 = vadd.f32 %v1896, %v1944
    %v1946 = vpop.f32.mrf.mxu0
    %v1947 = vadd.f32 %v1898, %v1946
    %1948 = vmatmul.bf16.gmra.mxu0 %v1324
    %v1949 = vpop.f32.mrf.mxu0
    %v1950 = vadd.f32 %v1901, %v1949
    %v1951 = vpop.f32.mrf.mxu0
    %v1952 = vadd.f32 %v1903, %v1951
    %1953 = vmatmul.bf16.gmra.mxu0 %v1327
    %v1954 = vpop.f32.mrf.mxu0
    %v1955 = vadd.f32 %v1906, %v1954
    %v1956 = vpop.f32.mrf.mxu0
    %v1957 = vadd.f32 %v1908, %v1956
    %1958 = vmatmul.bf16.gmra.mxu0 %v1330
    %v1959 = vpop.f32.mrf.mxu0
    %v1960 = vadd.f32 %v1911, %v1959
    %v1961 = vpop.f32.mrf.mxu0
    %v1962 = vadd.f32 %v1913, %v1961
    %1963 = vmatmul.bf16.gmra.mxu0 %v1333
    %v1964 = vpop.f32.mrf.mxu0
    %v1965 = vadd.f32 %v1916, %v1964
    %v1966 = vpop.f32.mrf.mxu0
    %v1967 = vadd.f32 %v1918, %v1966
    %1968 = vmatmul.bf16.gmra.mxu0 %v1336
    %v1969 = vpop.f32.mrf.mxu0
    %v1970 = vadd.f32 %v1921, %v1969
    %v1971 = vpop.f32.mrf.mxu0
    %v1972 = vadd.f32 %v1923, %v1971
    %1973 = vdwg.mxu0
    %1974 = vmatpush.bf16.msra.mxu0 %v1655
    %1975 = vmatpush.bf16.msra.mxu0 %v1652
    %1976 = vmatpush.bf16.msra.mxu0 %v1649
    %1977 = vmatpush.bf16.msra.mxu0 %v1646
    %1978 = vmatpush.bf16.msra.mxu0 %v1643
    %1979 = vmatpush.bf16.msra.mxu0 %v1640
    %1980 = vmatpush.bf16.msra.mxu0 %v1637
    %1981 = vmatpush.bf16.msra.mxu0 %v1634
    %1982 = vmatmul.bf16.gmra.mxu0 %v1316
    %v1983 = vpop.f32.mrf.mxu0
    %v1984 = vadd.f32 %v1935, %v1983
    %v1985 = vpop.f32.mrf.mxu0
    %v1986 = vadd.f32 %v1937, %v1985
    %1987 = vmatmul.bf16.gmra.mxu0 %v1319
    %v1988 = vpop.f32.mrf.mxu0
    %v1989 = vadd.f32 %v1940, %v1988
    %v1990 = vpop.f32.mrf.mxu0
    %v1991 = vadd.f32 %v1942, %v1990
    %1992 = vmatmul.bf16.gmra.mxu0 %v1322
    %v1993 = vpop.f32.mrf.mxu0
    %v1994 = vadd.f32 %v1945, %v1993
    %v1995 = vpop.f32.mrf.mxu0
    %v1996 = vadd.f32 %v1947, %v1995
    %1997 = vmatmul.bf16.gmra.mxu0 %v1325
    %v1998 = vpop.f32.mrf.mxu0
    %v1999 = vadd.f32 %v1950, %v1998
    %v2000 = vpop.f32.mrf.mxu0
    %v2001 = vadd.f32 %v1952, %v2000
    %2002 = vmatmul.bf16.gmra.mxu0 %v1328
    %v2003 = vpop.f32.mrf.mxu0
    %v2004 = vadd.f32 %v1955, %v2003
    %v2005 = vpop.f32.mrf.mxu0
    %v2006 = vadd.f32 %v1957, %v2005
    %2007 = vmatmul.bf16.gmra.mxu0 %v1331
    %v2008 = vpop.f32.mrf.mxu0
    %v2009 = vadd.f32 %v1960, %v2008
    %v2010 = vpop.f32.mrf.mxu0
    %v2011 = vadd.f32 %v1962, %v2010
    %2012 = vmatmul.bf16.gmra.mxu0 %v1334
    %v2013 = vpop.f32.mrf.mxu0
    %v2014 = vadd.f32 %v1965, %v2013
    %v2015 = vpop.f32.mrf.mxu0
    %v2016 = vadd.f32 %v1967, %v2015
    %2017 = vmatmul.bf16.gmra.mxu0 %v1337
    %v2018 = vpop.f32.mrf.mxu0
    %v2019 = vadd.f32 %v1970, %v2018
    %v2020 = vpop.f32.mrf.mxu0
    %v2021 = vadd.f32 %v1972, %v2020
    %2022 = vdwg.mxu0
    %2023 = vmatpush.bf16.msra.mxu0 %v1608
    %2024 = vmatpush.bf16.msra.mxu0 %v1605
    %2025 = vmatpush.bf16.msra.mxu0 %v1602
    %2026 = vmatpush.bf16.msra.mxu0 %v1599
    %2027 = vmatpush.bf16.msra.mxu0 %v1596
    %2028 = vmatpush.bf16.msra.mxu0 %v1593
    %2029 = vmatpush.bf16.msra.mxu0 %v1590
    %2030 = vmatpush.bf16.msra.mxu0 %v1587
    %2031 = vmatmul.bf16.gmra.mxu0 %v1314
    %v2032 = vpop.f32.mrf.mxu0
    %v2033 = vadd.f32 %v1341, %v2032
    %v2034 = vpop.f32.mrf.mxu0
    %v2035 = vadd.f32 %v1341, %v2034
    %2036 = vmatmul.bf16.gmra.mxu0 %v1317
    %v2037 = vpop.f32.mrf.mxu0
    %v2038 = vadd.f32 %v1341, %v2037
    %v2039 = vpop.f32.mrf.mxu0
    %v2040 = vadd.f32 %v1341, %v2039
    %2041 = vmatmul.bf16.gmra.mxu0 %v1320
    %v2042 = vpop.f32.mrf.mxu0
    %v2043 = vadd.f32 %v1341, %v2042
    %v2044 = vpop.f32.mrf.mxu0
    %v2045 = vadd.f32 %v1341, %v2044
    %2046 = vmatmul.bf16.gmra.mxu0 %v1323
    %v2047 = vpop.f32.mrf.mxu0
    %v2048 = vadd.f32 %v1341, %v2047
    %v2049 = vpop.f32.mrf.mxu0
    %v2050 = vadd.f32 %v1341, %v2049
    %2051 = vmatmul.bf16.gmra.mxu0 %v1326
    %v2052 = vpop.f32.mrf.mxu0
    %v2053 = vadd.f32 %v1341, %v2052
    %v2054 = vpop.f32.mrf.mxu0
    %v2055 = vadd.f32 %v1341, %v2054
    %2056 = vmatmul.bf16.gmra.mxu0 %v1329
    %v2057 = vpop.f32.mrf.mxu0
    %v2058 = vadd.f32 %v1341, %v2057
    %v2059 = vpop.f32.mrf.mxu0
    %v2060 = vadd.f32 %v1341, %v2059
    %2061 = vmatmul.bf16.gmra.mxu0 %v1332
    %v2062 = vpop.f32.mrf.mxu0
    %v2063 = vadd.f32 %v1341, %v2062
    %v2064 = vpop.f32.mrf.mxu0
    %v2065 = vadd.f32 %v1341, %v2064
    %2066 = vmatmul.bf16.gmra.mxu0 %v1335
    %v2067 = vpop.f32.mrf.mxu0
    %v2068 = vadd.f32 %v1341, %v2067
    %v2069 = vpop.f32.mrf.mxu0
    %v2070 = vadd.f32 %v1341, %v2069
    %2071 = vdwg.mxu0
    %2072 = vmatpush.bf16.msra.mxu0 %v1632
    %2073 = vmatpush.bf16.msra.mxu0 %v1629
    %2074 = vmatpush.bf16.msra.mxu0 %v1626
    %2075 = vmatpush.bf16.msra.mxu0 %v1623
    %2076 = vmatpush.bf16.msra.mxu0 %v1620
    %2077 = vmatpush.bf16.msra.mxu0 %v1617
    %2078 = vmatpush.bf16.msra.mxu0 %v1614
    %2079 = vmatpush.bf16.msra.mxu0 %v1611
    %2080 = vmatmul.bf16.gmra.mxu0 %v1315
    %v2081 = vpop.f32.mrf.mxu0
    %v2082 = vadd.f32 %v2033, %v2081
    %v2083 = vpop.f32.mrf.mxu0
    %v2084 = vadd.f32 %v2035, %v2083
    %2085 = vmatmul.bf16.gmra.mxu0 %v1318
    %v2086 = vpop.f32.mrf.mxu0
    %v2087 = vadd.f32 %v2038, %v2086
    %v2088 = vpop.f32.mrf.mxu0
    %v2089 = vadd.f32 %v2040, %v2088
    %2090 = vmatmul.bf16.gmra.mxu0 %v1321
    %v2091 = vpop.f32.mrf.mxu0
    %v2092 = vadd.f32 %v2043, %v2091
    %v2093 = vpop.f32.mrf.mxu0
    %v2094 = vadd.f32 %v2045, %v2093
    %2095 = vmatmul.bf16.gmra.mxu0 %v1324
    %v2096 = vpop.f32.mrf.mxu0
    %v2097 = vadd.f32 %v2048, %v2096
    %v2098 = vpop.f32.mrf.mxu0
    %v2099 = vadd.f32 %v2050, %v2098
    %2100 = vmatmul.bf16.gmra.mxu0 %v1327
    %v2101 = vpop.f32.mrf.mxu0
    %v2102 = vadd.f32 %v2053, %v2101
    %v2103 = vpop.f32.mrf.mxu0
    %v2104 = vadd.f32 %v2055, %v2103
    %2105 = vmatmul.bf16.gmra.mxu0 %v1330
    %v2106 = vpop.f32.mrf.mxu0
    %v2107 = vadd.f32 %v2058, %v2106
    %v2108 = vpop.f32.mrf.mxu0
    %v2109 = vadd.f32 %v2060, %v2108
    %2110 = vmatmul.bf16.gmra.mxu0 %v1333
    %v2111 = vpop.f32.mrf.mxu0
    %v2112 = vadd.f32 %v2063, %v2111
    %v2113 = vpop.f32.mrf.mxu0
    %v2114 = vadd.f32 %v2065, %v2113
    %2115 = vmatmul.bf16.gmra.mxu0 %v1336
    %v2116 = vpop.f32.mrf.mxu0
    %v2117 = vadd.f32 %v2068, %v2116
    %v2118 = vpop.f32.mrf.mxu0
    %v2119 = vadd.f32 %v2070, %v2118
    %2120 = vdwg.mxu0
    %2121 = vmatpush.bf16.msra.mxu0 %v1656
    %2122 = vmatpush.bf16.msra.mxu0 %v1653
    %2123 = vmatpush.bf16.msra.mxu0 %v1650
    %2124 = vmatpush.bf16.msra.mxu0 %v1647
    %2125 = vmatpush.bf16.msra.mxu0 %v1644
    %2126 = vmatpush.bf16.msra.mxu0 %v1641
    %2127 = vmatpush.bf16.msra.mxu0 %v1638
    %2128 = vmatpush.bf16.msra.mxu0 %v1635
    %2129 = vmatmul.bf16.gmra.mxu0 %v1316
    %v2130 = vpop.f32.mrf.mxu0
    %v2131 = vadd.f32 %v2082, %v2130
    %v2132 = vpop.f32.mrf.mxu0
    %v2133 = vadd.f32 %v2084, %v2132
    %2134 = vmatmul.bf16.gmra.mxu0 %v1319
    %v2135 = vpop.f32.mrf.mxu0
    %v2136 = vadd.f32 %v2087, %v2135
    %v2137 = vpop.f32.mrf.mxu0
    %v2138 = vadd.f32 %v2089, %v2137
    %2139 = vmatmul.bf16.gmra.mxu0 %v1322
    %v2140 = vpop.f32.mrf.mxu0
    %v2141 = vadd.f32 %v2092, %v2140
    %v2142 = vpop.f32.mrf.mxu0
    %v2143 = vadd.f32 %v2094, %v2142
    %2144 = vmatmul.bf16.gmra.mxu0 %v1325
    %v2145 = vpop.f32.mrf.mxu0
    %v2146 = vadd.f32 %v2097, %v2145
    %v2147 = vpop.f32.mrf.mxu0
    %v2148 = vadd.f32 %v2099, %v2147
    %2149 = vmatmul.bf16.gmra.mxu0 %v1328
    %v2150 = vpop.f32.mrf.mxu0
    %v2151 = vadd.f32 %v2102, %v2150
    %v2152 = vpop.f32.mrf.mxu0
    %v2153 = vadd.f32 %v2104, %v2152
    %2154 = vmatmul.bf16.gmra.mxu0 %v1331
    %v2155 = vpop.f32.mrf.mxu0
    %v2156 = vadd.f32 %v2107, %v2155
    %v2157 = vpop.f32.mrf.mxu0
    %v2158 = vadd.f32 %v2109, %v2157
    %2159 = vmatmul.bf16.gmra.mxu0 %v1334
    %v2160 = vpop.f32.mrf.mxu0
    %v2161 = vadd.f32 %v2112, %v2160
    %v2162 = vpop.f32.mrf.mxu0
    %v2163 = vadd.f32 %v2114, %v2162
    %2164 = vmatmul.bf16.gmra.mxu0 %v1337
    %v2165 = vpop.f32.mrf.mxu0
    %v2166 = vadd.f32 %v2117, %v2165
    %v2167 = vpop.f32.mrf.mxu0
    %v2168 = vadd.f32 %v2119, %v2167
    %2169 = vdwg.mxu0
    %v2170 = vadd.f32 %v32, %v1837
    %v2171 = vadd.f32 %v33, %v1984
    %v2172 = vadd.f32 %v34, %v2131
    %v2173 = vadd.f32 %v35, %v1839
    %v2174 = vadd.f32 %v36, %v1986
    %v2175 = vadd.f32 %v37, %v2133
    %v2176 = vadd.f32 %v38, %v1842
    %v2177 = vadd.f32 %v39, %v1989
    %v2178 = vadd.f32 %v40, %v2136
    %v2179 = vadd.f32 %v41, %v1844
    %v2180 = vadd.f32 %v42, %v1991
    %v2181 = vadd.f32 %v43, %v2138
    %v2182 = vadd.f32 %v44, %v1847
    %v2183 = vadd.f32 %v45, %v1994
    %v2184 = vadd.f32 %v46, %v2141
    %v2185 = vadd.f32 %v47, %v1849
    %v2186 = vadd.f32 %v48, %v1996
    %v2187 = vadd.f32 %v49, %v2143
    %v2188 = vadd.f32 %v50, %v1852
    %v2189 = vadd.f32 %v51, %v1999
    %v2190 = vadd.f32 %v52, %v2146
    %v2191 = vadd.f32 %v53, %v1854
    %v2192 = vadd.f32 %v54, %v2001
    %v2193 = vadd.f32 %v55, %v2148
    %v2194 = vadd.f32 %v56, %v1857
    %v2195 = vadd.f32 %v57, %v2004
    %v2196 = vadd.f32 %v58, %v2151
    %v2197 = vadd.f32 %v59, %v1859
    %v2198 = vadd.f32 %v60, %v2006
    %v2199 = vadd.f32 %v61, %v2153
    %v2200 = vadd.f32 %v62, %v1862
    %v2201 = vadd.f32 %v63, %v2009
    %v2202 = vadd.f32 %v64, %v2156
    %v2203 = vadd.f32 %v65, %v1864
    %v2204 = vadd.f32 %v66, %v2011
    %v2205 = vadd.f32 %v67, %v2158
    %v2206 = vadd.f32 %v68, %v1867
    %v2207 = vadd.f32 %v69, %v2014
    %v2208 = vadd.f32 %v70, %v2161
    %v2209 = vadd.f32 %v71, %v1869
    %v2210 = vadd.f32 %v72, %v2016
    %v2211 = vadd.f32 %v73, %v2163
    %v2212 = vadd.f32 %v74, %v1872
    %v2213 = vadd.f32 %v75, %v2019
    %v2214 = vadd.f32 %v76, %v2166
    %v2215 = vadd.f32 %v77, %v1874
    %v2216 = vadd.f32 %v78, %v2021
    %v2217 = vadd.f32 %v79, %v2168
    %2218 = vst [vmem:[#allocation2] sm:$0xff] %v2170
    %2219 = vst [vmem:[#allocation2 + $0x8] sm:$0xff] %v2171
    %2220 = vst [vmem:[#allocation2 + $0x10] sm:$0xff] %v2172
    %2221 = vst [vmem:[#allocation2 + $0x18] sm:$0xff] %v2173
    %2222 = vst [vmem:[#allocation2 + $0x20] sm:$0xff] %v2174
    %2223 = vst [vmem:[#allocation2 + $0x28] sm:$0xff] %v2175
    %2224 = vst [vmem:[#allocation2 + $0x30] sm:$0xff] %v2176
    %2225 = vst [vmem:[#allocation2 + $0x38] sm:$0xff] %v2177
    %2226 = vst [vmem:[#allocation2 + $0x40] sm:$0xff] %v2178
    %2227 = vst [vmem:[#allocation2 + $0x48] sm:$0xff] %v2179
    %2228 = vst [vmem:[#allocation2 + $0x50] sm:$0xff] %v2180
    %2229 = vst [vmem:[#allocation2 + $0x58] sm:$0xff] %v2181
    %2230 = vst [vmem:[#allocation2 + $0x60] sm:$0xff] %v2182
    %2231 = vst [vmem:[#allocation2 + $0x68] sm:$0xff] %v2183
    %2232 = vst [vmem:[#allocation2 + $0x70] sm:$0xff] %v2184
    %2233 = vst [vmem:[#allocation2 + $0x78] sm:$0xff] %v2185
    %2234 = vst [vmem:[#allocation2 + $0x80] sm:$0xff] %v2186
    %2235 = vst [vmem:[#allocation2 + $0x88] sm:$0xff] %v2187
    %2236 = vst [vmem:[#allocation2 + $0x90] sm:$0xff] %v2188
    %2237 = vst [vmem:[#allocation2 + $0x98] sm:$0xff] %v2189
    %2238 = vst [vmem:[#allocation2 + $0xa0] sm:$0xff] %v2190
    %2239 = vst [vmem:[#allocation2 + $0xa8] sm:$0xff] %v2191
    %2240 = vst [vmem:[#allocation2 + $0xb0] sm:$0xff] %v2192
    %2241 = vst [vmem:[#allocation2 + $0xb8] sm:$0xff] %v2193
    %2242 = vst [vmem:[#allocation2 + $0xc0] sm:$0xff] %v2194
    %2243 = vst [vmem:[#allocation2 + $0xc8] sm:$0xff] %v2195
    %2244 = vst [vmem:[#allocation2 + $0xd0] sm:$0xff] %v2196
    %2245 = vst [vmem:[#allocation2 + $0xd8] sm:$0xff] %v2197
    %2246 = vst [vmem:[#allocation2 + $0xe0] sm:$0xff] %v2198
    %2247 = vst [vmem:[#allocation2 + $0xe8] sm:$0xff] %v2199
    %2248 = vst [vmem:[#allocation2 + $0xf0] sm:$0xff] %v2200
    %2249 = vst [vmem:[#allocation2 + $0xf8] sm:$0xff] %v2201
    %2250 = vst [vmem:[#allocation2 + $0x100] sm:$0xff] %v2202
    %2251 = vst [vmem:[#allocation2 + $0x108] sm:$0xff] %v2203
    %2252 = vst [vmem:[#allocation2 + $0x110] sm:$0xff] %v2204
    %2253 = vst [vmem:[#allocation2 + $0x118] sm:$0xff] %v2205
    %2254 = vst [vmem:[#allocation2 + $0x120] sm:$0xff] %v2206
    %2255 = vst [vmem:[#allocation2 + $0x128] sm:$0xff] %v2207
    %2256 = vst [vmem:[#allocation2 + $0x130] sm:$0xff] %v2208
    %2257 = vst [vmem:[#allocation2 + $0x138] sm:$0xff] %v2209
    %2258 = vst [vmem:[#allocation2 + $0x140] sm:$0xff] %v2210
    %2259 = vst [vmem:[#allocation2 + $0x148] sm:$0xff] %v2211
    %2260 = vst [vmem:[#allocation2 + $0x150] sm:$0xff] %v2212
    %2261 = vst [vmem:[#allocation2 + $0x158] sm:$0xff] %v2213
    %2262 = vst [vmem:[#allocation2 + $0x160] sm:$0xff] %v2214
    %2263 = vst [vmem:[#allocation2 + $0x168] sm:$0xff] %v2215
    %2264 = vst [vmem:[#allocation2 + $0x170] sm:$0xff] %v2216
    %2265 = vst [vmem:[#allocation2 + $0x178] sm:$0xff] %v2217
    %v2266 = vmax.f32 %v2170, 0.0
    %v2267 = vmax.f32 %v2171, 0.0
    %v2268 = vmax.f32 %v2172, 0.0
    %v2269 = vmax.f32 %v2173, 0.0
    %v2270 = vmax.f32 %v2174, 0.0
    %v2271 = vmax.f32 %v2175, 0.0
    %v2272 = vmax.f32 %v2176, 0.0
    %v2273 = vmax.f32 %v2177, 0.0
    %v2274 = vmax.f32 %v2178, 0.0
    %v2275 = vmax.f32 %v2179, 0.0
    %v2276 = vmax.f32 %v2180, 0.0
    %v2277 = vmax.f32 %v2181, 0.0
    %v2278 = vmax.f32 %v2182, 0.0
    %v2279 = vmax.f32 %v2183, 0.0
    %v2280 = vmax.f32 %v2184, 0.0
    %v2281 = vmax.f32 %v2185, 0.0
    %v2282 = vmax.f32 %v2186, 0.0
    %v2283 = vmax.f32 %v2187, 0.0
    %v2284 = vmax.f32 %v2188, 0.0
    %v2285 = vmax.f32 %v2189, 0.0
    %v2286 = vmax.f32 %v2190, 0.0
    %v2287 = vmax.f32 %v2191, 0.0
    %v2288 = vmax.f32 %v2192, 0.0
    %v2289 = vmax.f32 %v2193, 0.0
    %v2290 = vmax.f32 %v2194, 0.0
    %v2291 = vmax.f32 %v2195, 0.0
    %v2292 = vmax.f32 %v2196, 0.0
    %v2293 = vmax.f32 %v2197, 0.0
    %v2294 = vmax.f32 %v2198, 0.0
    %v2295 = vmax.f32 %v2199, 0.0
    %v2296 = vmax.f32 %v2200, 0.0
    %v2297 = vmax.f32 %v2201, 0.0
    %v2298 = vmax.f32 %v2202, 0.0
    %v2299 = vmax.f32 %v2203, 0.0
    %v2300 = vmax.f32 %v2204, 0.0
    %v2301 = vmax.f32 %v2205, 0.0
    %v2302 = vmax.f32 %v2206, 0.0
    %v2303 = vmax.f32 %v2207, 0.0
    %v2304 = vmax.f32 %v2208, 0.0
    %v2305 = vmax.f32 %v2209, 0.0
    %v2306 = vmax.f32 %v2210, 0.0
    %v2307 = vmax.f32 %v2211, 0.0
    %v2308 = vmax.f32 %v2212, 0.0
    %v2309 = vmax.f32 %v2213, 0.0
    %v2310 = vmax.f32 %v2214, 0.0
    %v2311 = vmax.f32 %v2215, 0.0
    %v2312 = vmax.f32 %v2216, 0.0
    %v2313 = vmax.f32 %v2217, 0.0
    %v2314 = vpack.c.bf16 %v2269, %v2266
    %v2315 = vpack.c.bf16 %v2270, %v2267
    %v2316 = vpack.c.bf16 %v2271, %v2268
    %v2317 = vpack.c.bf16 %v2275, %v2272
    %v2318 = vpack.c.bf16 %v2276, %v2273
    %v2319 = vpack.c.bf16 %v2277, %v2274
    %v2320 = vpack.c.bf16 %v2281, %v2278
    %v2321 = vpack.c.bf16 %v2282, %v2279
    %v2322 = vpack.c.bf16 %v2283, %v2280
    %v2323 = vpack.c.bf16 %v2287, %v2284
    %v2324 = vpack.c.bf16 %v2288, %v2285
    %v2325 = vpack.c.bf16 %v2289, %v2286
    %v2326 = vpack.c.bf16 %v2293, %v2290
    %v2327 = vpack.c.bf16 %v2294, %v2291
    %v2328 = vpack.c.bf16 %v2295, %v2292
    %v2329 = vpack.c.bf16 %v2299, %v2296
    %v2330 = vpack.c.bf16 %v2300, %v2297
    %v2331 = vpack.c.bf16 %v2301, %v2298
    %v2332 = vpack.c.bf16 %v2305, %v2302
    %v2333 = vpack.c.bf16 %v2306, %v2303
    %v2334 = vpack.c.bf16 %v2307, %v2304
    %v2335 = vpack.c.bf16 %v2311, %v2308
    %v2336 = vpack.c.bf16 %v2312, %v2309
    %v2337 = vpack.c.bf16 %v2313, %v2310
    %v2338 = vld [vmem:[%s6] sm:$0xf]
    %v2339 = vld [vmem:[%s6 + $0x4] sm:$0xf]
    %v2340 = vld [vmem:[%s6 + $0x8] sm:$0xf]
    %v2341 = vld [vmem:[%s6 + $0xc] sm:$0xf]
    %v2342 = vld [vmem:[%s6 + $0x10] sm:$0xf]
    %v2343 = vld [vmem:[%s6 + $0x14] sm:$0xf]
    %v2344 = vld [vmem:[%s6 + $0x18] sm:$0xf]
    %v2345 = vld [vmem:[%s6 + $0x1c] sm:$0xf]
    %v2346 = vld [vmem:[%s6 + $0x20] sm:$0xf]
    %v2347 = vld [vmem:[%s6 + $0x24] sm:$0xf]
    %v2348 = vld [vmem:[%s6 + $0x28] sm:$0xf]
    %v2349 = vld [vmem:[%s6 + $0x2c] sm:$0xf]
    %v2350 = vld [vmem:[%s6 + $0x30] sm:$0xf]
    %v2351 = vld [vmem:[%s6 + $0x34] sm:$0xf]
    %v2352 = vld [vmem:[%s6 + $0x38] sm:$0xf]
    %v2353 = vld [vmem:[%s6 + $0x3c] sm:$0xf]
    %v2354 = vld [vmem:[%s6 + $0x40] sm:$0xf]
    %v2355 = vld [vmem:[%s6 + $0x44] sm:$0xf]
    %v2356 = vld [vmem:[%s6 + $0x48] sm:$0xf]
    %v2357 = vld [vmem:[%s6 + $0x4c] sm:$0xf]
    %v2358 = vld [vmem:[%s6 + $0x50] sm:$0xf]
    %v2359 = vld [vmem:[%s6 + $0x54] sm:$0xf]
    %v2360 = vld [vmem:[%s6 + $0x58] sm:$0xf]
    %v2361 = vld [vmem:[%s6 + $0x5c] sm:$0xf]
    %v2362 = vld [vmem:[%s6 + $0x60] sm:$0xf]
    %v2363 = vld [vmem:[%s6 + $0x64] sm:$0xf]
    %v2364 = vld [vmem:[%s6 + $0x68] sm:$0xf]
    %v2365 = vld [vmem:[%s6 + $0x6c] sm:$0xf]
    %v2366 = vld [vmem:[%s6 + $0x70] sm:$0xf]
    %v2367 = vld [vmem:[%s6 + $0x74] sm:$0xf]
    %v2368 = vld [vmem:[%s6 + $0x78] sm:$0xf]
    %v2369 = vld [vmem:[%s6 + $0x7c] sm:$0xf]
    %v2370 = vld [vmem:[%s6 + $0x80] sm:$0xf]
    %v2371 = vld [vmem:[%s6 + $0x84] sm:$0xf]
    %v2372 = vld [vmem:[%s6 + $0x88] sm:$0xf]
    %v2373 = vld [vmem:[%s6 + $0x8c] sm:$0xf]
    %v2374 = vld [vmem:[%s6 + $0x90] sm:$0xf]
    %v2375 = vld [vmem:[%s6 + $0x94] sm:$0xf]
    %v2376 = vld [vmem:[%s6 + $0x98] sm:$0xf]
    %v2377 = vld [vmem:[%s6 + $0x9c] sm:$0xf]
    %v2378 = vld [vmem:[%s6 + $0xa0] sm:$0xf]
    %v2379 = vld [vmem:[%s6 + $0xa4] sm:$0xf]
    %v2380 = vld [vmem:[%s6 + $0xa8] sm:$0xf]
    %v2381 = vld [vmem:[%s6 + $0xac] sm:$0xf]
    %v2382 = vld [vmem:[%s6 + $0xb0] sm:$0xf]
    %v2383 = vld [vmem:[%s6 + $0xb4] sm:$0xf]
    %v2384 = vld [vmem:[%s6 + $0xb8] sm:$0xf]
    %v2385 = vld [vmem:[%s6 + $0xbc] sm:$0xf]
    %v2386 = vld [vmem:[%s7] sm:$0x1]
    %v2388 = vperm.slane %v2386, 0
    %v2438 = vunpack.c.l.b16 %v2338
    %v2439 = vunpack.c.l.b16 %v2339
    %v2440 = vunpack.c.l.b16 %v2340
    %v2441 = vunpack.c.l.b16 %v2341
    %v2442 = vunpack.c.l.b16 %v2342
    %v2443 = vunpack.c.l.b16 %v2343
    %v2444 = vunpack.c.l.b16 %v2344
    %v2445 = vunpack.c.l.b16 %v2345
    %v2446 = vunpack.c.l.b16 %v2346
    %v2447 = vunpack.c.l.b16 %v2347
    %v2448 = vunpack.c.l.b16 %v2348
    %v2449 = vunpack.c.l.b16 %v2349
    %v2450 = vunpack.c.l.b16 %v2350
    %v2451 = vunpack.c.l.b16 %v2351
    %v2452 = vunpack.c.l.b16 %v2352
    %v2453 = vunpack.c.l.b16 %v2353
    %v2454 = vunpack.c.l.b16 %v2354
    %v2455 = vunpack.c.l.b16 %v2355
    %v2456 = vunpack.c.l.b16 %v2356
    %v2457 = vunpack.c.l.b16 %v2357
    %v2458 = vunpack.c.l.b16 %v2358
    %v2459 = vunpack.c.l.b16 %v2359
    %v2460 = vunpack.c.l.b16 %v2360
    %v2461 = vunpack.c.l.b16 %v2361
    %v2462 = vunpack.c.l.b16 %v2362
    %v2463 = vunpack.c.l.b16 %v2363
    %v2464 = vunpack.c.l.b16 %v2364
    %v2465 = vunpack.c.l.b16 %v2365
    %v2466 = vunpack.c.l.b16 %v2366
    %v2467 = vunpack.c.l.b16 %v2367
    %v2468 = vunpack.c.l.b16 %v2368
    %v2469 = vunpack.c.l.b16 %v2369
    %v2470 = vunpack.c.l.b16 %v2370
    %v2471 = vunpack.c.l.b16 %v2371
    %v2472 = vunpack.c.l.b16 %v2372
    %v2473 = vunpack.c.l.b16 %v2373
    %v2474 = vunpack.c.l.b16 %v2374
    %v2475 = vunpack.c.l.b16 %v2375
    %v2476 = vunpack.c.l.b16 %v2376
    %v2477 = vunpack.c.l.b16 %v2377
    %v2478 = vunpack.c.l.b16 %v2378
    %v2479 = vunpack.c.l.b16 %v2379
    %v2480 = vunpack.c.l.b16 %v2380
    %v2481 = vunpack.c.l.b16 %v2381
    %v2482 = vunpack.c.l.b16 %v2382
    %v2483 = vunpack.c.l.b16 %v2383
    %v2484 = vunpack.c.l.b16 %v2384
    %v2485 = vunpack.c.l.b16 %v2385
    %v2486 = vpack.c.b16 %v2439, %v2438
    %v2487 = vpack.c.b16 %v2441, %v2440
    %v2488 = vpack.c.b16 %v2443, %v2442
    %v2489 = vpack.c.b16 %v2445, %v2444
    %v2490 = vpack.c.b16 %v2447, %v2446
    %v2491 = vpack.c.b16 %v2449, %v2448
    %v2492 = vpack.c.b16 %v2451, %v2450
    %v2493 = vpack.c.b16 %v2453, %v2452
    %v2494 = vpack.c.b16 %v2455, %v2454
    %v2495 = vpack.c.b16 %v2457, %v2456
    %v2496 = vpack.c.b16 %v2459, %v2458
    %v2497 = vpack.c.b16 %v2461, %v2460
    %v2498 = vpack.c.b16 %v2463, %v2462
    %v2499 = vpack.c.b16 %v2465, %v2464
    %v2500 = vpack.c.b16 %v2467, %v2466
    %v2501 = vpack.c.b16 %v2469, %v2468
    %v2502 = vpack.c.b16 %v2471, %v2470
    %v2503 = vpack.c.b16 %v2473, %v2472
    %v2504 = vpack.c.b16 %v2475, %v2474
    %v2505 = vpack.c.b16 %v2477, %v2476
    %v2506 = vpack.c.b16 %v2479, %v2478
    %v2507 = vpack.c.b16 %v2481, %v2480
    %v2508 = vpack.c.b16 %v2483, %v2482
    %v2509 = vpack.c.b16 %v2485, %v2484
    %2534 = vmatpush.bf16.msra.mxu0 %v2493
    %2535 = vmatpush.bf16.msra.mxu0 %v2492
    %2536 = vmatpush.bf16.msra.mxu0 %v2491
    %2537 = vmatpush.bf16.msra.mxu0 %v2490
    %2538 = vmatpush.bf16.msra.mxu0 %v2489
    %2539 = vmatpush.bf16.msra.mxu0 %v2488
    %2540 = vmatpush.bf16.msra.mxu0 %v2487
    %2541 = vmatpush.bf16.msra.mxu0 %v2486
    %2542 = vmatmul.bf16.gmra.mxu0 %v2314
    %v2543 = vpop.f32.mrf.mxu0
    %v2544 = vadd.f32 %v2388, %v2543
    %v2545 = vpop.f32.mrf.mxu0
    %v2546 = vadd.f32 %v2388, %v2545
    %2547 = vmatmul.bf16.gmra.mxu0 %v2317
    %v2548 = vpop.f32.mrf.mxu0
    %v2549 = vadd.f32 %v2388, %v2548
    %v2550 = vpop.f32.mrf.mxu0
    %v2551 = vadd.f32 %v2388, %v2550
    %2552 = vmatmul.bf16.gmra.mxu0 %v2320
    %v2553 = vpop.f32.mrf.mxu0
    %v2554 = vadd.f32 %v2388, %v2553
    %v2555 = vpop.f32.mrf.mxu0
    %v2556 = vadd.f32 %v2388, %v2555
    %2557 = vmatmul.bf16.gmra.mxu0 %v2323
    %v2558 = vpop.f32.mrf.mxu0
    %v2559 = vadd.f32 %v2388, %v2558
    %v2560 = vpop.f32.mrf.mxu0
    %v2561 = vadd.f32 %v2388, %v2560
    %2562 = vmatmul.bf16.gmra.mxu0 %v2326
    %v2563 = vpop.f32.mrf.mxu0
    %v2564 = vadd.f32 %v2388, %v2563
    %v2565 = vpop.f32.mrf.mxu0
    %v2566 = vadd.f32 %v2388, %v2565
    %2567 = vmatmul.bf16.gmra.mxu0 %v2329
    %v2568 = vpop.f32.mrf.mxu0
    %v2569 = vadd.f32 %v2388, %v2568
    %v2570 = vpop.f32.mrf.mxu0
    %v2571 = vadd.f32 %v2388, %v2570
    %2572 = vmatmul.bf16.gmra.mxu0 %v2332
    %v2573 = vpop.f32.mrf.mxu0
    %v2574 = vadd.f32 %v2388, %v2573
    %v2575 = vpop.f32.mrf.mxu0
    %v2576 = vadd.f32 %v2388, %v2575
    %2577 = vmatmul.bf16.gmra.mxu0 %v2335
    %v2578 = vpop.f32.mrf.mxu0
    %v2579 = vadd.f32 %v2388, %v2578
    %v2580 = vpop.f32.mrf.mxu0
    %v2581 = vadd.f32 %v2388, %v2580
    %2582 = vdwg.mxu0
    %2583 = vmatpush.bf16.msra.mxu0 %v2501
    %2584 = vmatpush.bf16.msra.mxu0 %v2500
    %2585 = vmatpush.bf16.msra.mxu0 %v2499
    %2586 = vmatpush.bf16.msra.mxu0 %v2498
    %2587 = vmatpush.bf16.msra.mxu0 %v2497
    %2588 = vmatpush.bf16.msra.mxu0 %v2496
    %2589 = vmatpush.bf16.msra.mxu0 %v2495
    %2590 = vmatpush.bf16.msra.mxu0 %v2494
    %2591 = vmatmul.bf16.gmra.mxu0 %v2315
    %v2592 = vpop.f32.mrf.mxu0
    %v2593 = vadd.f32 %v2544, %v2592
    %v2594 = vpop.f32.mrf.mxu0
    %v2595 = vadd.f32 %v2546, %v2594
    %2596 = vmatmul.bf16.gmra.mxu0 %v2318
    %v2597 = vpop.f32.mrf.mxu0
    %v2598 = vadd.f32 %v2549, %v2597
    %v2599 = vpop.f32.mrf.mxu0
    %v2600 = vadd.f32 %v2551, %v2599
    %2601 = vmatmul.bf16.gmra.mxu0 %v2321
    %v2602 = vpop.f32.mrf.mxu0
    %v2603 = vadd.f32 %v2554, %v2602
    %v2604 = vpop.f32.mrf.mxu0
    %v2605 = vadd.f32 %v2556, %v2604
    %2606 = vmatmul.bf16.gmra.mxu0 %v2324
    %v2607 = vpop.f32.mrf.mxu0
    %v2608 = vadd.f32 %v2559, %v2607
    %v2609 = vpop.f32.mrf.mxu0
    %v2610 = vadd.f32 %v2561, %v2609
    %2611 = vmatmul.bf16.gmra.mxu0 %v2327
    %v2612 = vpop.f32.mrf.mxu0
    %v2613 = vadd.f32 %v2564, %v2612
    %v2614 = vpop.f32.mrf.mxu0
    %v2615 = vadd.f32 %v2566, %v2614
    %2616 = vmatmul.bf16.gmra.mxu0 %v2330
    %v2617 = vpop.f32.mrf.mxu0
    %v2618 = vadd.f32 %v2569, %v2617
    %v2619 = vpop.f32.mrf.mxu0
    %v2620 = vadd.f32 %v2571, %v2619
    %2621 = vmatmul.bf16.gmra.mxu0 %v2333
    %v2622 = vpop.f32.mrf.mxu0
    %v2623 = vadd.f32 %v2574, %v2622
    %v2624 = vpop.f32.mrf.mxu0
    %v2625 = vadd.f32 %v2576, %v2624
    %2626 = vmatmul.bf16.gmra.mxu0 %v2336
    %v2627 = vpop.f32.mrf.mxu0
    %v2628 = vadd.f32 %v2579, %v2627
    %v2629 = vpop.f32.mrf.mxu0
    %v2630 = vadd.f32 %v2581, %v2629
    %2631 = vdwg.mxu0
    %2632 = vmatpush.bf16.msra.mxu0 %v2509
    %2633 = vmatpush.bf16.msra.mxu0 %v2508
    %2634 = vmatpush.bf16.msra.mxu0 %v2507
    %2635 = vmatpush.bf16.msra.mxu0 %v2506
    %2636 = vmatpush.bf16.msra.mxu0 %v2505
    %2637 = vmatpush.bf16.msra.mxu0 %v2504
    %2638 = vmatpush.bf16.msra.mxu0 %v2503
    %2639 = vmatpush.bf16.msra.mxu0 %v2502
    %2640 = vmatmul.bf16.gmra.mxu0 %v2316
    %v2641 = vpop.f32.mrf.mxu0
    %v2642 = vadd.f32 %v2593, %v2641
    %v2643 = vpop.f32.mrf.mxu0
    %v2644 = vadd.f32 %v2595, %v2643
    %2645 = vmatmul.bf16.gmra.mxu0 %v2319
    %v2646 = vpop.f32.mrf.mxu0
    %v2647 = vadd.f32 %v2598, %v2646
    %v2648 = vpop.f32.mrf.mxu0
    %v2649 = vadd.f32 %v2600, %v2648
    %2650 = vmatmul.bf16.gmra.mxu0 %v2322
    %v2651 = vpop.f32.mrf.mxu0
    %v2652 = vadd.f32 %v2603, %v2651
    %v2653 = vpop.f32.mrf.mxu0
    %v2654 = vadd.f32 %v2605, %v2653
    %2655 = vmatmul.bf16.gmra.mxu0 %v2325
    %v2656 = vpop.f32.mrf.mxu0
    %v2657 = vadd.f32 %v2608, %v2656
    %v2658 = vpop.f32.mrf.mxu0
    %v2659 = vadd.f32 %v2610, %v2658
    %2660 = vmatmul.bf16.gmra.mxu0 %v2328
    %v2661 = vpop.f32.mrf.mxu0
    %v2662 = vadd.f32 %v2613, %v2661
    %v2663 = vpop.f32.mrf.mxu0
    %v2664 = vadd.f32 %v2615, %v2663
    %2665 = vmatmul.bf16.gmra.mxu0 %v2331
    %v2666 = vpop.f32.mrf.mxu0
    %v2667 = vadd.f32 %v2618, %v2666
    %v2668 = vpop.f32.mrf.mxu0
    %v2669 = vadd.f32 %v2620, %v2668
    %2670 = vmatmul.bf16.gmra.mxu0 %v2334
    %v2671 = vpop.f32.mrf.mxu0
    %v2672 = vadd.f32 %v2623, %v2671
    %v2673 = vpop.f32.mrf.mxu0
    %v2674 = vadd.f32 %v2625, %v2673
    %2675 = vmatmul.bf16.gmra.mxu0 %v2337
    %v2676 = vpop.f32.mrf.mxu0
    %v2677 = vadd.f32 %v2628, %v2676
    %v2678 = vpop.f32.mrf.mxu0
    %v2679 = vadd.f32 %v2630, %v2678
    %2680 = vdwg.mxu0
    %v2681 = vlaneseq
    %v2682 = vand.u32 %v2681, 127
    %vm2683 = vcmp.lt.s32.totalorder %v2682, 2
    %v2684 = vxor.u32 %v2642, 2147483648
    %v2685 = vxor.u32 %v2644, 2147483648
    %v2686 = vxor.u32 %v2647, 2147483648
    %v2687 = vxor.u32 %v2649, 2147483648
    %v2688 = vxor.u32 %v2652, 2147483648
    %v2689 = vxor.u32 %v2654, 2147483648
    %v2690 = vxor.u32 %v2657, 2147483648
    %v2691 = vxor.u32 %v2659, 2147483648
    %v2692 = vxor.u32 %v2662, 2147483648
    %v2693 = vxor.u32 %v2664, 2147483648
    %v2694 = vxor.u32 %v2667, 2147483648
    %v2695 = vxor.u32 %v2669, 2147483648
    %v2696 = vxor.u32 %v2672, 2147483648
    %v2697 = vxor.u32 %v2674, 2147483648
    %v2698 = vxor.u32 %v2677, 2147483648
    %v2699 = vxor.u32 %v2679, 2147483648
    %v2700 = vmul.f32 %v2684, 1.442695
    %v2701 = vpow.pop %v2700
    %v2702 = vmul.f32 %v2685, 1.442695
    %v2703 = vpow.pop %v2702
    %v2704 = vmul.f32 %v2686, 1.442695
    %v2705 = vpow.pop %v2704
    %v2706 = vmul.f32 %v2687, 1.442695
    %v2707 = vpow.pop %v2706
    %v2708 = vmul.f32 %v2688, 1.442695
    %v2709 = vpow.pop %v2708
    %v2710 = vmul.f32 %v2689, 1.442695
    %v2711 = vpow.pop %v2710
    %v2712 = vmul.f32 %v2690, 1.442695
    %v2713 = vpow.pop %v2712
    %v2714 = vmul.f32 %v2691, 1.442695
    %v2715 = vpow.pop %v2714
    %v2716 = vmul.f32 %v2692, 1.442695
    %v2717 = vpow.pop %v2716
    %v2718 = vmul.f32 %v2693, 1.442695
    %v2719 = vpow.pop %v2718
    %v2720 = vmul.f32 %v2694, 1.442695
    %v2721 = vpow.pop %v2720
    %v2722 = vmul.f32 %v2695, 1.442695
    %v2723 = vpow.pop %v2722
    %v2724 = vmul.f32 %v2696, 1.442695
    %v2725 = vpow.pop %v2724
    %v2726 = vmul.f32 %v2697, 1.442695
    %v2727 = vpow.pop %v2726
    %v2728 = vmul.f32 %v2698, 1.442695
    %v2729 = vpow.pop %v2728
    %v2730 = vmul.f32 %v2699, 1.442695
    %v2731 = vpow.pop %v2730
    %v2732 = vadd.f32 %v2701, 1.0
    %v2733 = vadd.f32 %v2703, 1.0
    %v2734 = vadd.f32 %v2705, 1.0
    %v2735 = vadd.f32 %v2707, 1.0
    %v2736 = vadd.f32 %v2709, 1.0
    %v2737 = vadd.f32 %v2711, 1.0
    %v2738 = vadd.f32 %v2713, 1.0
    %v2739 = vadd.f32 %v2715, 1.0
    %v2740 = vadd.f32 %v2717, 1.0
    %v2741 = vadd.f32 %v2719, 1.0
    %v2742 = vadd.f32 %v2721, 1.0
    %v2743 = vadd.f32 %v2723, 1.0
    %v2744 = vadd.f32 %v2725, 1.0
    %v2745 = vadd.f32 %v2727, 1.0
    %v2746 = vadd.f32 %v2729, 1.0
    %v2747 = vadd.f32 %v2731, 1.0
    %v2748 = vrcp.pop %v2732
    %v2749 = vmul.f32 %v2732, %v2748
    %v2750 = vsub.f32 1.0, %v2749
    %v2751 = vmul.f32 %v2748, %v2750
    %v2752 = vadd.f32 %v2748, %v2751
    %vm2753 = vweird.f32 %v2732
    %vm2754 = vweird.f32 %v2748
    %vm2755 = vmor %vm2753, %vm2754
    %v2756 = vsel %vm2755, %v2748, %v2752
    %v2757 = vand.u32 2147483647, %v2732
    %vm2758 = vcmp.eq.f32.partialorder %v2757, 8.507059e+37
    %v2759 = vand.u32 %v2732, 2147483648
    %v2760 = vor.u32 1.1754944e-38, %v2759
    %v2761 = vsel %vm2758, %v2760, %v2756
    %v2762 = vmul.f32 1.0, %v2761
    %v2763 = vrcp.pop %v2733
    %v2764 = vmul.f32 %v2733, %v2763
    %v2765 = vsub.f32 1.0, %v2764
    %v2766 = vmul.f32 %v2763, %v2765
    %v2767 = vadd.f32 %v2763, %v2766
    %vm2768 = vweird.f32 %v2733
    %vm2769 = vweird.f32 %v2763
    %vm2770 = vmor %vm2768, %vm2769
    %v2771 = vsel %vm2770, %v2763, %v2767
    %v2772 = vand.u32 2147483647, %v2733
    %vm2773 = vcmp.eq.f32.partialorder %v2772, 8.507059e+37
    %v2774 = vand.u32 %v2733, 2147483648
    %v2775 = vor.u32 1.1754944e-38, %v2774
    %v2776 = vsel %vm2773, %v2775, %v2771
    %v2777 = vmul.f32 1.0, %v2776
    %v2778 = vrcp.pop %v2734
    %v2779 = vmul.f32 %v2734, %v2778
    %v2780 = vsub.f32 1.0, %v2779
    %v2781 = vmul.f32 %v2778, %v2780
    %v2782 = vadd.f32 %v2778, %v2781
    %vm2783 = vweird.f32 %v2734
    %vm2784 = vweird.f32 %v2778
    %vm2785 = vmor %vm2783, %vm2784
    %v2786 = vsel %vm2785, %v2778, %v2782
    %v2787 = vand.u32 2147483647, %v2734
    %vm2788 = vcmp.eq.f32.partialorder %v2787, 8.507059e+37
    %v2789 = vand.u32 %v2734, 2147483648
    %v2790 = vor.u32 1.1754944e-38, %v2789
    %v2791 = vsel %vm2788, %v2790, %v2786
    %v2792 = vmul.f32 1.0, %v2791
    %v2793 = vrcp.pop %v2735
    %v2794 = vmul.f32 %v2735, %v2793
    %v2795 = vsub.f32 1.0, %v2794
    %v2796 = vmul.f32 %v2793, %v2795
    %v2797 = vadd.f32 %v2793, %v2796
    %vm2798 = vweird.f32 %v2735
    %vm2799 = vweird.f32 %v2793
    %vm2800 = vmor %vm2798, %vm2799
    %v2801 = vsel %vm2800, %v2793, %v2797
    %v2802 = vand.u32 2147483647, %v2735
    %vm2803 = vcmp.eq.f32.partialorder %v2802, 8.507059e+37
    %v2804 = vand.u32 %v2735, 2147483648
    %v2805 = vor.u32 1.1754944e-38, %v2804
    %v2806 = vsel %vm2803, %v2805, %v2801
    %v2807 = vmul.f32 1.0, %v2806
    %v2808 = vrcp.pop %v2736
    %v2809 = vmul.f32 %v2736, %v2808
    %v2810 = vsub.f32 1.0, %v2809
    %v2811 = vmul.f32 %v2808, %v2810
    %v2812 = vadd.f32 %v2808, %v2811
    %vm2813 = vweird.f32 %v2736
    %vm2814 = vweird.f32 %v2808
    %vm2815 = vmor %vm2813, %vm2814
    %v2816 = vsel %vm2815, %v2808, %v2812
    %v2817 = vand.u32 2147483647, %v2736
    %vm2818 = vcmp.eq.f32.partialorder %v2817, 8.507059e+37
    %v2819 = vand.u32 %v2736, 2147483648
    %v2820 = vor.u32 1.1754944e-38, %v2819
    %v2821 = vsel %vm2818, %v2820, %v2816
    %v2822 = vmul.f32 1.0, %v2821
    %v2823 = vrcp.pop %v2737
    %v2824 = vmul.f32 %v2737, %v2823
    %v2825 = vsub.f32 1.0, %v2824
    %v2826 = vmul.f32 %v2823, %v2825
    %v2827 = vadd.f32 %v2823, %v2826
    %vm2828 = vweird.f32 %v2737
    %vm2829 = vweird.f32 %v2823
    %vm2830 = vmor %vm2828, %vm2829
    %v2831 = vsel %vm2830, %v2823, %v2827
    %v2832 = vand.u32 2147483647, %v2737
    %vm2833 = vcmp.eq.f32.partialorder %v2832, 8.507059e+37
    %v2834 = vand.u32 %v2737, 2147483648
    %v2835 = vor.u32 1.1754944e-38, %v2834
    %v2836 = vsel %vm2833, %v2835, %v2831
    %v2837 = vmul.f32 1.0, %v2836
    %v2838 = vrcp.pop %v2738
    %v2839 = vmul.f32 %v2738, %v2838
    %v2840 = vsub.f32 1.0, %v2839
    %v2841 = vmul.f32 %v2838, %v2840
    %v2842 = vadd.f32 %v2838, %v2841
    %vm2843 = vweird.f32 %v2738
    %vm2844 = vweird.f32 %v2838
    %vm2845 = vmor %vm2843, %vm2844
    %v2846 = vsel %vm2845, %v2838, %v2842
    %v2847 = vand.u32 2147483647, %v2738
    %vm2848 = vcmp.eq.f32.partialorder %v2847, 8.507059e+37
    %v2849 = vand.u32 %v2738, 2147483648
    %v2850 = vor.u32 1.1754944e-38, %v2849
    %v2851 = vsel %vm2848, %v2850, %v2846
    %v2852 = vmul.f32 1.0, %v2851
    %v2853 = vrcp.pop %v2739
    %v2854 = vmul.f32 %v2739, %v2853
    %v2855 = vsub.f32 1.0, %v2854
    %v2856 = vmul.f32 %v2853, %v2855
    %v2857 = vadd.f32 %v2853, %v2856
    %vm2858 = vweird.f32 %v2739
    %vm2859 = vweird.f32 %v2853
    %vm2860 = vmor %vm2858, %vm2859
    %v2861 = vsel %vm2860, %v2853, %v2857
    %v2862 = vand.u32 2147483647, %v2739
    %vm2863 = vcmp.eq.f32.partialorder %v2862, 8.507059e+37
    %v2864 = vand.u32 %v2739, 2147483648
    %v2865 = vor.u32 1.1754944e-38, %v2864
    %v2866 = vsel %vm2863, %v2865, %v2861
    %v2867 = vmul.f32 1.0, %v2866
    %v2868 = vrcp.pop %v2740
    %v2869 = vmul.f32 %v2740, %v2868
    %v2870 = vsub.f32 1.0, %v2869
    %v2871 = vmul.f32 %v2868, %v2870
    %v2872 = vadd.f32 %v2868, %v2871
    %vm2873 = vweird.f32 %v2740
    %vm2874 = vweird.f32 %v2868
    %vm2875 = vmor %vm2873, %vm2874
    %v2876 = vsel %vm2875, %v2868, %v2872
    %v2877 = vand.u32 2147483647, %v2740
    %vm2878 = vcmp.eq.f32.partialorder %v2877, 8.507059e+37
    %v2879 = vand.u32 %v2740, 2147483648
    %v2880 = vor.u32 1.1754944e-38, %v2879
    %v2881 = vsel %vm2878, %v2880, %v2876
    %v2882 = vmul.f32 1.0, %v2881
    %v2883 = vrcp.pop %v2741
    %v2884 = vmul.f32 %v2741, %v2883
    %v2885 = vsub.f32 1.0, %v2884
    %v2886 = vmul.f32 %v2883, %v2885
    %v2887 = vadd.f32 %v2883, %v2886
    %vm2888 = vweird.f32 %v2741
    %vm2889 = vweird.f32 %v2883
    %vm2890 = vmor %vm2888, %vm2889
    %v2891 = vsel %vm2890, %v2883, %v2887
    %v2892 = vand.u32 2147483647, %v2741
    %vm2893 = vcmp.eq.f32.partialorder %v2892, 8.507059e+37
    %v2894 = vand.u32 %v2741, 2147483648
    %v2895 = vor.u32 1.1754944e-38, %v2894
    %v2896 = vsel %vm2893, %v2895, %v2891
    %v2897 = vmul.f32 1.0, %v2896
    %v2898 = vrcp.pop %v2742
    %v2899 = vmul.f32 %v2742, %v2898
    %v2900 = vsub.f32 1.0, %v2899
    %v2901 = vmul.f32 %v2898, %v2900
    %v2902 = vadd.f32 %v2898, %v2901
    %vm2903 = vweird.f32 %v2742
    %vm2904 = vweird.f32 %v2898
    %vm2905 = vmor %vm2903, %vm2904
    %v2906 = vsel %vm2905, %v2898, %v2902
    %v2907 = vand.u32 2147483647, %v2742
    %vm2908 = vcmp.eq.f32.partialorder %v2907, 8.507059e+37
    %v2909 = vand.u32 %v2742, 2147483648
    %v2910 = vor.u32 1.1754944e-38, %v2909
    %v2911 = vsel %vm2908, %v2910, %v2906
    %v2912 = vmul.f32 1.0, %v2911
    %v2913 = vrcp.pop %v2743
    %v2914 = vmul.f32 %v2743, %v2913
    %v2915 = vsub.f32 1.0, %v2914
    %v2916 = vmul.f32 %v2913, %v2915
    %v2917 = vadd.f32 %v2913, %v2916
    %vm2918 = vweird.f32 %v2743
    %vm2919 = vweird.f32 %v2913
    %vm2920 = vmor %vm2918, %vm2919
    %v2921 = vsel %vm2920, %v2913, %v2917
    %v2922 = vand.u32 2147483647, %v2743
    %vm2923 = vcmp.eq.f32.partialorder %v2922, 8.507059e+37
    %v2924 = vand.u32 %v2743, 2147483648
    %v2925 = vor.u32 1.1754944e-38, %v2924
    %v2926 = vsel %vm2923, %v2925, %v2921
    %v2927 = vmul.f32 1.0, %v2926
    %v2928 = vrcp.pop %v2744
    %v2929 = vmul.f32 %v2744, %v2928
    %v2930 = vsub.f32 1.0, %v2929
    %v2931 = vmul.f32 %v2928, %v2930
    %v2932 = vadd.f32 %v2928, %v2931
    %vm2933 = vweird.f32 %v2744
    %vm2934 = vweird.f32 %v2928
    %vm2935 = vmor %vm2933, %vm2934
    %v2936 = vsel %vm2935, %v2928, %v2932
    %v2937 = vand.u32 2147483647, %v2744
    %vm2938 = vcmp.eq.f32.partialorder %v2937, 8.507059e+37
    %v2939 = vand.u32 %v2744, 2147483648
    %v2940 = vor.u32 1.1754944e-38, %v2939
    %v2941 = vsel %vm2938, %v2940, %v2936
    %v2942 = vmul.f32 1.0, %v2941
    %v2943 = vrcp.pop %v2745
    %v2944 = vmul.f32 %v2745, %v2943
    %v2945 = vsub.f32 1.0, %v2944
    %v2946 = vmul.f32 %v2943, %v2945
    %v2947 = vadd.f32 %v2943, %v2946
    %vm2948 = vweird.f32 %v2745
    %vm2949 = vweird.f32 %v2943
    %vm2950 = vmor %vm2948, %vm2949
    %v2951 = vsel %vm2950, %v2943, %v2947
    %v2952 = vand.u32 2147483647, %v2745
    %vm2953 = vcmp.eq.f32.partialorder %v2952, 8.507059e+37
    %v2954 = vand.u32 %v2745, 2147483648
    %v2955 = vor.u32 1.1754944e-38, %v2954
    %v2956 = vsel %vm2953, %v2955, %v2951
    %v2957 = vmul.f32 1.0, %v2956
    %v2958 = vrcp.pop %v2746
    %v2959 = vmul.f32 %v2746, %v2958
    %v2960 = vsub.f32 1.0, %v2959
    %v2961 = vmul.f32 %v2958, %v2960
    %v2962 = vadd.f32 %v2958, %v2961
    %vm2963 = vweird.f32 %v2746
    %vm2964 = vweird.f32 %v2958
    %vm2965 = vmor %vm2963, %vm2964
    %v2966 = vsel %vm2965, %v2958, %v2962
    %v2967 = vand.u32 2147483647, %v2746
    %vm2968 = vcmp.eq.f32.partialorder %v2967, 8.507059e+37
    %v2969 = vand.u32 %v2746, 2147483648
    %v2970 = vor.u32 1.1754944e-38, %v2969
    %v2971 = vsel %vm2968, %v2970, %v2966
    %v2972 = vmul.f32 1.0, %v2971
    %v2973 = vrcp.pop %v2747
    %v2974 = vmul.f32 %v2747, %v2973
    %v2975 = vsub.f32 1.0, %v2974
    %v2976 = vmul.f32 %v2973, %v2975
    %v2977 = vadd.f32 %v2973, %v2976
    %vm2978 = vweird.f32 %v2747
    %vm2979 = vweird.f32 %v2973
    %vm2980 = vmor %vm2978, %vm2979
    %v2981 = vsel %vm2980, %v2973, %v2977
    %v2982 = vand.u32 2147483647, %v2747
    %vm2983 = vcmp.eq.f32.partialorder %v2982, 8.507059e+37
    %v2984 = vand.u32 %v2747, 2147483648
    %v2985 = vor.u32 1.1754944e-38, %v2984
    %v2986 = vsel %vm2983, %v2985, %v2981
    %v2987 = vmul.f32 1.0, %v2986
    %v2988 = vsel %vm2683, %v2642, %v2762
    %v2989 = vsel %vm2683, %v2644, %v2777
    %v2990 = vsel %vm2683, %v2647, %v2792
    %v2991 = vsel %vm2683, %v2649, %v2807
    %v2992 = vsel %vm2683, %v2652, %v2822
    %v2993 = vsel %vm2683, %v2654, %v2837
    %v2994 = vsel %vm2683, %v2657, %v2852
    %v2995 = vsel %vm2683, %v2659, %v2867
    %v2996 = vsel %vm2683, %v2662, %v2882
    %v2997 = vsel %vm2683, %v2664, %v2897
    %v2998 = vsel %vm2683, %v2667, %v2912
    %v2999 = vsel %vm2683, %v2669, %v2927
    %v3000 = vsel %vm2683, %v2672, %v2942
    %v3001 = vsel %vm2683, %v2674, %v2957
    %v3002 = vsel %vm2683, %v2677, %v2972
    %v3003 = vsel %vm2683, %v2679, %v2987
    %3004 = vst [vmem:[%s9] sm:$0xff] %v2988
    %3005 = vst [vmem:[%s9 + $0x8] sm:$0xff] %v2989
    %3006 = vst [vmem:[%s9 + $0x10] sm:$0xff] %v2990
    %3007 = vst [vmem:[%s9 + $0x18] sm:$0xff] %v2991
    %3008 = vst [vmem:[%s9 + $0x20] sm:$0xff] %v2992
    %3009 = vst [vmem:[%s9 + $0x28] sm:$0xff] %v2993
    %3010 = vst [vmem:[%s9 + $0x30] sm:$0xff] %v2994
    %3011 = vst [vmem:[%s9 + $0x38] sm:$0xff] %v2995
    %3012 = vst [vmem:[%s9 + $0x40] sm:$0xff] %v2996
    %3013 = vst [vmem:[%s9 + $0x48] sm:$0xff] %v2997
    %3014 = vst [vmem:[%s9 + $0x50] sm:$0xff] %v2998
    %3015 = vst [vmem:[%s9 + $0x58] sm:$0xff] %v2999
    %3016 = vst [vmem:[%s9 + $0x60] sm:$0xff] %v3000
    %3017 = vst [vmem:[%s9 + $0x68] sm:$0xff] %v3001
    %3018 = vst [vmem:[%s9 + $0x70] sm:$0xff] %v3002
    %3019 = vst [vmem:[%s9 + $0x78] sm:$0xff] %v3003
    // Predicated region
    $region34: #{update_forward.5} parent=1 // pred_check
      _
    $region35: #{update_forward.5} parent=1 // pred_check_branch
      %3021 = sbr.rel (0) target = $region37
    $region36: #{update_forward.5} parent=1 // pred_region
      %3023 = vsyncadd [#allocation3], 0
      %s3024 = sshll.u32 [#allocation2], 4
      %s3025 = int_to_ptr.vmem [resolvable:$true] %s3024
      %s3026 = sshll.u32 %s8, 4
      %s3027 = int_to_ptr.hbm [resolvable:$true] %s3026
      %3032 = dma.vmem_to_hbm [thread:$0]  %s3025, 6144, %s3027, [#allocation3], 384, 384, 24
    $region37: #{update_forward.5} parent=1 // pred_fallthru
      _
    // Predicated region
    $region38: #{update_forward.5} parent=1 // pred_check
      _
    $region39: #{update_forward.5} parent=1 // pred_check_branch
      %3034 = sbr.rel (0) target = $region41
    $region40: #{update_forward.5} parent=1 // pred_region
      _
    $region41: #{update_forward.5} parent=1 // pred_fallthru
      _
    // Predicated region
    $region42: #{update_forward.5} parent=1 // pred_check
      _
    $region43: #{update_forward.5} parent=1 // pred_check_branch
      %3036 = sbr.rel (0) target = $region45
    $region44: #{update_forward.5} parent=1 // pred_region
      %3038 = dma.done [#allocation3], 6144
    $region45: #{update_forward.5} parent=1 // pred_fallthru
      _
    // Predicated region
    $region46: #{update_forward.5} parent=1 // pred_check
      _
    $region47: #{update_forward.5} parent=1 // pred_check_branch
      %3040 = sbr.rel (0) target = $region49
    $region48: #{update_forward.5} parent=1 // pred_region
      _
    $region49: #{update_forward.5} parent=1 // pred_fallthru
      _
    %3041 = vsyncpa [#allocation3], 1

// kernel: update_forward.3
$region0: #{update_forward.3}
  #allocation0 [shape = 'u32[]', space=smem, size = 0x4, offset = 0x4, fixed_abs, tag = 'smem constant byte address 0x4 - core index']
  #allocation1 [shape = 'u32[72,128]{1,0:T(1,128)}', space=vmem, size = 0x9000, scoped, tag = 'internal scratch']
  %s0 = inlined_call_operand.vmem [shape: f32[128,384], index: 0, kind: input, shape index: {}]
  %s1 = inlined_call_operand.vmem [shape: f32[128,384], index: 1, kind: input, shape index: {}]
  %s2 = inlined_call_operand.vmem [shape: bf16[128,882], index: 2, kind: input, shape index: {}]
  %s3 = inlined_call_operand.vmem [shape: bf16[882,384], index: 3, kind: input, shape index: {}]
  %s4 = inlined_call_operand.vmem [shape: f32[1,384], index: 4, kind: input, shape index: {}]
  %s5 = inlined_call_operand.vmem [shape: bf16[384,384], index: 5, kind: input, shape index: {}]
  %s6 = inlined_call_operand.vmem [shape: f32[1,384], index: 6, kind: input, shape index: {}]
  %s7 = inlined_call_operand.vmem [shape: f32[1,384], index: 7, kind: input, shape index: {}]
  %s8 = inlined_call_operand.vmem [shape: f32[1,384], index: 8, kind: input, shape index: {}]
  %s9 = inlined_call_operand.vmem [shape: bf16[384,384], index: 9, kind: input, shape index: {}]
  %s10 = inlined_call_operand.vmem [shape: f32[1,384], index: 10, kind: input, shape index: {}]
  %s11 = inlined_call_operand.vmem [shape: f32[1,384], index: 11, kind: input, shape index: {}]
  %s12 = inlined_call_operand.vmem [shape: f32[1,384], index: 12, kind: input, shape index: {}]
  %s13 = inlined_call_operand.vmem [shape: f32[128,384], index: 13, kind: output, shape index: {}]
  %s14 = sld [smem:[#allocation0]]
  $region62: #{update_forward.3} parent=0
    _
  %s16 = ssub.s32 1, %s14
  %s17 = scalar_select 0, %s16, %s14
  // Predicated region
  $region2: #{update_forward.3} parent=0 // pred_check
    _
  $region3: #{update_forward.3} parent=0 // pred_check_branch
    %19 = sbr.rel (0) target = $region5
  $region4: #{update_forward.3} parent=0 // pred_region
    _
  $region5: #{update_forward.3} parent=0 // pred_fallthru
    _
  // Predicated region
  $region6: #{update_forward.3} parent=0 // pred_check
    _
  $region7: #{update_forward.3} parent=0 // pred_check_branch
    %21 = sbr.rel (0) target = $region9
  $region8: #{update_forward.3} parent=0 // pred_region
    _
  $region9: #{update_forward.3} parent=0 // pred_fallthru
    _
  // Predicated region
  $region10: #{update_forward.3} parent=0 // pred_check
    _
  $region11: #{update_forward.3} parent=0 // pred_check_branch
    %23 = sbr.rel (0) target = $region13
  $region12: #{update_forward.3} parent=0 // pred_region
    _
  $region13: #{update_forward.3} parent=0 // pred_fallthru
    _
  // Predicated region
  $region14: #{update_forward.3} parent=0 // pred_check
    _
  $region15: #{update_forward.3} parent=0 // pred_check_branch
    %25 = sbr.rel (0) target = $region17
  $region16: #{update_forward.3} parent=0 // pred_region
    _
  $region17: #{update_forward.3} parent=0 // pred_fallthru
    _
  // Predicated region
  $region18: #{update_forward.3} parent=0 // pred_check
    _
  $region19: #{update_forward.3} parent=0 // pred_check_branch
    %27 = sbr.rel (0) target = $region21
  $region20: #{update_forward.3} parent=0 // pred_region
    _
  $region21: #{update_forward.3} parent=0 // pred_fallthru
    _
  // Predicated region
  $region22: #{update_forward.3} parent=0 // pred_check
    _
  $region23: #{update_forward.3} parent=0 // pred_check_branch
    %29 = sbr.rel (0) target = $region25
  $region24: #{update_forward.3} parent=0 // pred_region
    _
  $region25: #{update_forward.3} parent=0 // pred_fallthru
    _
  // Predicated region
  $region26: #{update_forward.3} parent=0 // pred_check
    _
  $region27: #{update_forward.3} parent=0 // pred_check_branch
    %31 = sbr.rel (0) target = $region29
  $region28: #{update_forward.3} parent=0 // pred_region
    _
  $region29: #{update_forward.3} parent=0 // pred_fallthru
    _
  // Predicated region
  $region30: #{update_forward.3} parent=0 // pred_check
    _
  $region31: #{update_forward.3} parent=0 // pred_check_branch
    %33 = sbr.rel (0) target = $region33
  $region32: #{update_forward.3} parent=0 // pred_region
    _
  $region33: #{update_forward.3} parent=0 // pred_fallthru
    _
  // Predicated region
  $region34: #{update_forward.3} parent=0 // pred_check
    _
  $region35: #{update_forward.3} parent=0 // pred_check_branch
    %35 = sbr.rel (0) target = $region37
  $region36: #{update_forward.3} parent=0 // pred_region
    _
  $region37: #{update_forward.3} parent=0 // pred_fallthru
    _
  // Predicated region
  $region38: #{update_forward.3} parent=0 // pred_check
    _
  $region39: #{update_forward.3} parent=0 // pred_check_branch
    %37 = sbr.rel (0) target = $region41
  $region40: #{update_forward.3} parent=0 // pred_region
    _
  $region41: #{update_forward.3} parent=0 // pred_fallthru
    _
  // Predicated region
  $region42: #{update_forward.3} parent=0 // pred_check
    _
  $region43: #{update_forward.3} parent=0 // pred_check_branch
    %39 = sbr.rel (0) target = $region45
  $region44: #{update_forward.3} parent=0 // pred_region
    _
  $region45: #{update_forward.3} parent=0 // pred_fallthru
    _
  // Predicated region
  $region46: #{update_forward.3} parent=0 // pred_check
    _
  $region47: #{update_forward.3} parent=0 // pred_check_branch
    %41 = sbr.rel (0) target = $region49
  $region48: #{update_forward.3} parent=0 // pred_region
    _
  $region49: #{update_forward.3} parent=0 // pred_fallthru
    _
  // Predicated region
  $region50: #{update_forward.3} parent=0 // pred_check
    _
  $region51: #{update_forward.3} parent=0 // pred_check_branch
    %43 = sbr.rel (0) target = $region53
  $region52: #{update_forward.3} parent=0 // pred_region
    _
  $region53: #{update_forward.3} parent=0 // pred_fallthru
    _
  %v44 = vld [vmem:[%s2] sm:$0xff]
  %v45 = vld [vmem:[%s2 + $0x8] sm:$0xff]
  %v46 = vld [vmem:[%s2 + $0x10] sm:$0xff]
  %v47 = vld [vmem:[%s2 + $0x18] sm:$0xf]
  %v48 = vld [vmem:[%s2 + $0x1c] sm:$0xff]
  %v49 = vld [vmem:[%s2 + $0x24] sm:$0xff]
  %v50 = vld [vmem:[%s2 + $0x2c] sm:$0xff]
  %v51 = vld [vmem:[%s2 + $0x34] sm:$0xf]
  %v52 = vld [vmem:[%s2 + $0x38] sm:$0xff]
  %v53 = vld [vmem:[%s2 + $0x40] sm:$0xff]
  %v54 = vld [vmem:[%s2 + $0x48] sm:$0xff]
  %v55 = vld [vmem:[%s2 + $0x50] sm:$0xf]
  %v56 = vld [vmem:[%s2 + $0x54] sm:$0xff]
  %v57 = vld [vmem:[%s2 + $0x5c] sm:$0xff]
  %v58 = vld [vmem:[%s2 + $0x64] sm:$0xff]
  %v59 = vld [vmem:[%s2 + $0x6c] sm:$0xf]
  %v60 = vld [vmem:[%s2 + $0x70] sm:$0xff]
  %v61 = vld [vmem:[%s2 + $0x78] sm:$0xff]
  %v62 = vld [vmem:[%s2 + $0x80] sm:$0xff]
  %v63 = vld [vmem:[%s2 + $0x88] sm:$0xf]
  %v64 = vld [vmem:[%s2 + $0x8c] sm:$0xff]
  %v65 = vld [vmem:[%s2 + $0x94] sm:$0xff]
  %v66 = vld [vmem:[%s2 + $0x9c] sm:$0xff]
  %v67 = vld [vmem:[%s2 + $0xa4] sm:$0xf]
  %v68 = vld [vmem:[%s2 + $0xa8] sm:$0xff]
  %v69 = vld [vmem:[%s2 + $0xb0] sm:$0xff]
  %v70 = vld [vmem:[%s2 + $0xb8] sm:$0xff]
  %v71 = vld [vmem:[%s2 + $0xc0] sm:$0xf]
  %v72 = vld [vmem:[%s2 + $0xc4] sm:$0xff]
  %v73 = vld [vmem:[%s2 + $0xcc] sm:$0xff]
  %v74 = vld [vmem:[%s2 + $0xd4] sm:$0xff]
  %v75 = vld [vmem:[%s2 + $0xdc] sm:$0xf]
  %v76 = vld [vmem:[%s2 + $0xe0] sm:$0xff]
  %v77 = vld [vmem:[%s2 + $0xe8] sm:$0xff]
  %v78 = vld [vmem:[%s2 + $0xf0] sm:$0xff]
  %v79 = vld [vmem:[%s2 + $0xf8] sm:$0xf]
  %v80 = vld [vmem:[%s2 + $0xfc] sm:$0xff]
  %v81 = vld [vmem:[%s2 + $0x104] sm:$0xff]
  %v82 = vld [vmem:[%s2 + $0x10c] sm:$0xff]
  %v83 = vld [vmem:[%s2 + $0x114] sm:$0xf]
  %v84 = vld [vmem:[%s2 + $0x118] sm:$0xff]
  %v85 = vld [vmem:[%s2 + $0x120] sm:$0xff]
  %v86 = vld [vmem:[%s2 + $0x128] sm:$0xff]
  %v87 = vld [vmem:[%s2 + $0x130] sm:$0xf]
  %v88 = vld [vmem:[%s2 + $0x134] sm:$0xff]
  %v89 = vld [vmem:[%s2 + $0x13c] sm:$0xff]
  %v90 = vld [vmem:[%s2 + $0x144] sm:$0xff]
  %v91 = vld [vmem:[%s2 + $0x14c] sm:$0xf]
  %v92 = vld [vmem:[%s2 + $0x150] sm:$0xff]
  %v93 = vld [vmem:[%s2 + $0x158] sm:$0xff]
  %v94 = vld [vmem:[%s2 + $0x160] sm:$0xff]
  %v95 = vld [vmem:[%s2 + $0x168] sm:$0xf]
  %v96 = vld [vmem:[%s2 + $0x16c] sm:$0xff]
  %v97 = vld [vmem:[%s2 + $0x174] sm:$0xff]
  %v98 = vld [vmem:[%s2 + $0x17c] sm:$0xff]
  %v99 = vld [vmem:[%s2 + $0x184] sm:$0xf]
  %v100 = vld [vmem:[%s2 + $0x188] sm:$0xff]
  %v101 = vld [vmem:[%s2 + $0x190] sm:$0xff]
  %v102 = vld [vmem:[%s2 + $0x198] sm:$0xff]
  %v103 = vld [vmem:[%s2 + $0x1a0] sm:$0xf]
  %v104 = vld [vmem:[%s2 + $0x1a4] sm:$0xff]
  %v105 = vld [vmem:[%s2 + $0x1ac] sm:$0xff]
  %v106 = vld [vmem:[%s2 + $0x1b4] sm:$0xff]
  %v107 = vld [vmem:[%s2 + $0x1bc] sm:$0xf]
  %v108 = vld [vmem:[%s3] sm:$0xff]
  %v109 = vld [vmem:[%s3 + $0x8] sm:$0xf]
  %v110 = vld [vmem:[%s3 + $0xc] sm:$0xff]
  %v111 = vld [vmem:[%s3 + $0x14] sm:$0xf]
  %v112 = vld [vmem:[%s3 + $0x18] sm:$0xff]
  %v113 = vld [vmem:[%s3 + $0x20] sm:$0xf]
  %v114 = vld [vmem:[%s3 + $0x24] sm:$0xff]
  %v115 = vld [vmem:[%s3 + $0x2c] sm:$0xf]
  %v116 = vld [vmem:[%s3 + $0x30] sm:$0xff]
  %v117 = vld [vmem:[%s3 + $0x38] sm:$0xf]
  %v118 = vld [vmem:[%s3 + $0x3c] sm:$0xff]
  %v119 = vld [vmem:[%s3 + $0x44] sm:$0xf]
  %v120 = vld [vmem:[%s3 + $0x48] sm:$0xff]
  %v121 = vld [vmem:[%s3 + $0x50] sm:$0xf]
  %v122 = vld [vmem:[%s3 + $0x54] sm:$0xff]
  %v123 = vld [vmem:[%s3 + $0x5c] sm:$0xf]
  %v124 = vld [vmem:[%s3 + $0x60] sm:$0xff]
  %v125 = vld [vmem:[%s3 + $0x68] sm:$0xf]
  %v126 = vld [vmem:[%s3 + $0x6c] sm:$0xff]
  %v127 = vld [vmem:[%s3 + $0x74] sm:$0xf]
  %v128 = vld [vmem:[%s3 + $0x78] sm:$0xff]
  %v129 = vld [vmem:[%s3 + $0x80] sm:$0xf]
  %v130 = vld [vmem:[%s3 + $0x84] sm:$0xff]
  %v131 = vld [vmem:[%s3 + $0x8c] sm:$0xf]
  %v132 = vld [vmem:[%s3 + $0x90] sm:$0xff]
  %v133 = vld [vmem:[%s3 + $0x98] sm:$0xf]
  %v134 = vld [vmem:[%s3 + $0x9c] sm:$0xff]
  %v135 = vld [vmem:[%s3 + $0xa4] sm:$0xf]
  %v136 = vld [vmem:[%s3 + $0xa8] sm:$0xff]
  %v137 = vld [vmem:[%s3 + $0xb0] sm:$0xf]
  %v138 = vld [vmem:[%s3 + $0xb4] sm:$0xff]
  %v139 = vld [vmem:[%s3 + $0xbc] sm:$0xf]
  %v140 = vld [vmem:[%s3 + $0xc0] sm:$0xff]
  %v141 = vld [vmem:[%s3 + $0xc8] sm:$0xf]
  %v142 = vld [vmem:[%s3 + $0xcc] sm:$0xff]
  %v143 = vld [vmem:[%s3 + $0xd4] sm:$0xf]
  %v144 = vld [vmem:[%s3 + $0xd8] sm:$0xff]
  %v145 = vld [vmem:[%s3 + $0xe0] sm:$0xf]
  %v146 = vld [vmem:[%s3 + $0xe4] sm:$0xff]
  %v147 = vld [vmem:[%s3 + $0xec] sm:$0xf]
  %v148 = vld [vmem:[%s3 + $0xf0] sm:$0xff]
  %v149 = vld [vmem:[%s3 + $0xf8] sm:$0xf]
  %v150 = vld [vmem:[%s3 + $0xfc] sm:$0xff]
  %v151 = vld [vmem:[%s3 + $0x104] sm:$0xf]
  %v152 = vld [vmem:[%s3 + $0x108] sm:$0xff]
  %v153 = vld [vmem:[%s3 + $0x110] sm:$0xf]
  %v154 = vld [vmem:[%s3 + $0x114] sm:$0xff]
  %v155 = vld [vmem:[%s3 + $0x11c] sm:$0xf]
  %v156 = vld [vmem:[%s3 + $0x120] sm:$0xff]
  %v157 = vld [vmem:[%s3 + $0x128] sm:$0xf]
  %v158 = vld [vmem:[%s3 + $0x12c] sm:$0xff]
  %v159 = vld [vmem:[%s3 + $0x134] sm:$0xf]
  %v160 = vld [vmem:[%s3 + $0x138] sm:$0xff]
  %v161 = vld [vmem:[%s3 + $0x140] sm:$0xf]
  %v162 = vld [vmem:[%s3 + $0x144] sm:$0xff]
  %v163 = vld [vmem:[%s3 + $0x14c] sm:$0xf]
  %v164 = vld [vmem:[%s3 + $0x150] sm:$0xff]
  %v165 = vld [vmem:[%s3 + $0x158] sm:$0xf]
  %v166 = vld [vmem:[%s3 + $0x15c] sm:$0xff]
  %v167 = vld [vmem:[%s3 + $0x164] sm:$0xf]
  %v168 = vld [vmem:[%s3 + $0x168] sm:$0xff]
  %v169 = vld [vmem:[%s3 + $0x170] sm:$0xf]
  %v170 = vld [vmem:[%s3 + $0x174] sm:$0xff]
  %v171 = vld [vmem:[%s3 + $0x17c] sm:$0xf]
  %v172 = vld [vmem:[%s3 + $0x180] sm:$0xff]
  %v173 = vld [vmem:[%s3 + $0x188] sm:$0xf]
  %v174 = vld [vmem:[%s3 + $0x18c] sm:$0xff]
  %v175 = vld [vmem:[%s3 + $0x194] sm:$0xf]
  %v176 = vld [vmem:[%s3 + $0x198] sm:$0xff]
  %v177 = vld [vmem:[%s3 + $0x1a0] sm:$0xf]
  %v178 = vld [vmem:[%s3 + $0x1a4] sm:$0xff]
  %v179 = vld [vmem:[%s3 + $0x1ac] sm:$0xf]
  %v180 = vld [vmem:[%s3 + $0x1b0] sm:$0xff]
  %v181 = vld [vmem:[%s3 + $0x1b8] sm:$0xf]
  %v182 = vld [vmem:[%s3 + $0x1bc] sm:$0xff]
  %v183 = vld [vmem:[%s3 + $0x1c4] sm:$0xf]
  %v184 = vld [vmem:[%s3 + $0x1c8] sm:$0xff]
  %v185 = vld [vmem:[%s3 + $0x1d0] sm:$0xf]
  %v186 = vld [vmem:[%s3 + $0x1d4] sm:$0xff]
  %v187 = vld [vmem:[%s3 + $0x1dc] sm:$0xf]
  %v188 = vld [vmem:[%s3 + $0x1e0] sm:$0xff]
  %v189 = vld [vmem:[%s3 + $0x1e8] sm:$0xf]
  %v190 = vld [vmem:[%s3 + $0x1ec] sm:$0xff]
  %v191 = vld [vmem:[%s3 + $0x1f4] sm:$0xf]
  %v192 = vld [vmem:[%s3 + $0x1f8] sm:$0xff]
  %v193 = vld [vmem:[%s3 + $0x200] sm:$0xf]
  %v194 = vld [vmem:[%s3 + $0x204] sm:$0xff]
  %v195 = vld [vmem:[%s3 + $0x20c] sm:$0xf]
  %v196 = vld [vmem:[%s3 + $0x210] sm:$0xff]
  %v197 = vld [vmem:[%s3 + $0x218] sm:$0xf]
  %v198 = vld [vmem:[%s3 + $0x21c] sm:$0xff]
  %v199 = vld [vmem:[%s3 + $0x224] sm:$0xf]
  %v200 = vld [vmem:[%s3 + $0x228] sm:$0xff]
  %v201 = vld [vmem:[%s3 + $0x230] sm:$0xf]
  %v202 = vld [vmem:[%s3 + $0x234] sm:$0xff]
  %v203 = vld [vmem:[%s3 + $0x23c] sm:$0xf]
  %v204 = vld [vmem:[%s3 + $0x240] sm:$0xff]
  %v205 = vld [vmem:[%s3 + $0x248] sm:$0xf]
  %v206 = vld [vmem:[%s3 + $0x24c] sm:$0xff]
  %v207 = vld [vmem:[%s3 + $0x254] sm:$0xf]
  %v208 = vld [vmem:[%s3 + $0x258] sm:$0xff]
  %v209 = vld [vmem:[%s3 + $0x260] sm:$0xf]
  %v210 = vld [vmem:[%s3 + $0x264] sm:$0xff]
  %v211 = vld [vmem:[%s3 + $0x26c] sm:$0xf]
  %v212 = vld [vmem:[%s3 + $0x270] sm:$0xff]
  %v213 = vld [vmem:[%s3 + $0x278] sm:$0xf]
  %v214 = vld [vmem:[%s3 + $0x27c] sm:$0xff]
  %v215 = vld [vmem:[%s3 + $0x284] sm:$0xf]
  %v216 = vld [vmem:[%s3 + $0x288] sm:$0xff]
  %v217 = vld [vmem:[%s3 + $0x290] sm:$0xf]
  %v218 = vld [vmem:[%s3 + $0x294] sm:$0xff]
  %v219 = vld [vmem:[%s3 + $0x29c] sm:$0xf]
  %v220 = vld [vmem:[%s3 + $0x2a0] sm:$0xff]
  %v221 = vld [vmem:[%s3 + $0x2a8] sm:$0xf]
  %v222 = vld [vmem:[%s3 + $0x2ac] sm:$0xff]
  %v223 = vld [vmem:[%s3 + $0x2b4] sm:$0xf]
  %v224 = vld [vmem:[%s3 + $0x2b8] sm:$0xff]
  %v225 = vld [vmem:[%s3 + $0x2c0] sm:$0xf]
  %v226 = vld [vmem:[%s3 + $0x2c4] sm:$0xff]
  %v227 = vld [vmem:[%s3 + $0x2cc] sm:$0xf]
  %v228 = vld [vmem:[%s3 + $0x2d0] sm:$0xff]
  %v229 = vld [vmem:[%s3 + $0x2d8] sm:$0xf]
  %v230 = vld [vmem:[%s3 + $0x2dc] sm:$0xff]
  %v231 = vld [vmem:[%s3 + $0x2e4] sm:$0xf]
  %v232 = vld [vmem:[%s3 + $0x2e8] sm:$0xff]
  %v233 = vld [vmem:[%s3 + $0x2f0] sm:$0xf]
  %v234 = vld [vmem:[%s3 + $0x2f4] sm:$0xff]
  %v235 = vld [vmem:[%s3 + $0x2fc] sm:$0xf]
  %v236 = vld [vmem:[%s3 + $0x300] sm:$0xff]
  %v237 = vld [vmem:[%s3 + $0x308] sm:$0xf]
  %v238 = vld [vmem:[%s3 + $0x30c] sm:$0xff]
  %v239 = vld [vmem:[%s3 + $0x314] sm:$0xf]
  %v240 = vld [vmem:[%s3 + $0x318] sm:$0xff]
  %v241 = vld [vmem:[%s3 + $0x320] sm:$0xf]
  %v242 = vld [vmem:[%s3 + $0x324] sm:$0xff]
  %v243 = vld [vmem:[%s3 + $0x32c] sm:$0xf]
  %v244 = vld [vmem:[%s3 + $0x330] sm:$0xff]
  %v245 = vld [vmem:[%s3 + $0x338] sm:$0xf]
  %v246 = vld [vmem:[%s3 + $0x33c] sm:$0xff]
  %v247 = vld [vmem:[%s3 + $0x344] sm:$0xf]
  %v248 = vld [vmem:[%s3 + $0x348] sm:$0xff]
  %v249 = vld [vmem:[%s3 + $0x350] sm:$0xf]
  %v250 = vld [vmem:[%s3 + $0x354] sm:$0xff]
  %v251 = vld [vmem:[%s3 + $0x35c] sm:$0xf]
  %v252 = vld [vmem:[%s3 + $0x360] sm:$0xff]
  %v253 = vld [vmem:[%s3 + $0x368] sm:$0xf]
  %v254 = vld [vmem:[%s3 + $0x36c] sm:$0xff]
  %v255 = vld [vmem:[%s3 + $0x374] sm:$0xf]
  %v256 = vld [vmem:[%s3 + $0x378] sm:$0xff]
  %v257 = vld [vmem:[%s3 + $0x380] sm:$0xf]
  %v258 = vld [vmem:[%s3 + $0x384] sm:$0xff]
  %v259 = vld [vmem:[%s3 + $0x38c] sm:$0xf]
  %v260 = vld [vmem:[%s3 + $0x390] sm:$0xff]
  %v261 = vld [vmem:[%s3 + $0x398] sm:$0xf]
  %v262 = vld [vmem:[%s3 + $0x39c] sm:$0xff]
  %v263 = vld [vmem:[%s3 + $0x3a4] sm:$0xf]
  %v264 = vld [vmem:[%s3 + $0x3a8] sm:$0xff]
  %v265 = vld [vmem:[%s3 + $0x3b0] sm:$0xf]
  %v266 = vld [vmem:[%s3 + $0x3b4] sm:$0xff]
  %v267 = vld [vmem:[%s3 + $0x3bc] sm:$0xf]
  %v268 = vld [vmem:[%s3 + $0x3c0] sm:$0xff]
  %v269 = vld [vmem:[%s3 + $0x3c8] sm:$0xf]
  %v270 = vld [vmem:[%s3 + $0x3cc] sm:$0xff]
  %v271 = vld [vmem:[%s3 + $0x3d4] sm:$0xf]
  %v272 = vld [vmem:[%s3 + $0x3d8] sm:$0xff]
  %v273 = vld [vmem:[%s3 + $0x3e0] sm:$0xf]
  %v274 = vld [vmem:[%s3 + $0x3e4] sm:$0xff]
  %v275 = vld [vmem:[%s3 + $0x3ec] sm:$0xf]
  %v276 = vld [vmem:[%s3 + $0x3f0] sm:$0xff]
  %v277 = vld [vmem:[%s3 + $0x3f8] sm:$0xf]
  %v278 = vld [vmem:[%s3 + $0x3fc] sm:$0xff]
  %v279 = vld [vmem:[%s3 + $0x404] sm:$0xf]
  %v280 = vld [vmem:[%s3 + $0x408] sm:$0xff]
  %v281 = vld [vmem:[%s3 + $0x410] sm:$0xf]
  %v282 = vld [vmem:[%s3 + $0x414] sm:$0xff]
  %v283 = vld [vmem:[%s3 + $0x41c] sm:$0xf]
  %v284 = vld [vmem:[%s3 + $0x420] sm:$0xff]
  %v285 = vld [vmem:[%s3 + $0x428] sm:$0xf]
  %v286 = vld [vmem:[%s3 + $0x42c] sm:$0xff]
  %v287 = vld [vmem:[%s3 + $0x434] sm:$0xf]
  %v288 = vld [vmem:[%s3 + $0x438] sm:$0xff]
  %v289 = vld [vmem:[%s3 + $0x440] sm:$0xf]
  %v290 = vld [vmem:[%s3 + $0x444] sm:$0xff]
  %v291 = vld [vmem:[%s3 + $0x44c] sm:$0xf]
  %v292 = vld [vmem:[%s3 + $0x450] sm:$0xff]
  %v293 = vld [vmem:[%s3 + $0x458] sm:$0xf]
  %v294 = vld [vmem:[%s3 + $0x45c] sm:$0xff]
  %v295 = vld [vmem:[%s3 + $0x464] sm:$0xf]
  %v296 = vld [vmem:[%s3 + $0x468] sm:$0xff]
  %v297 = vld [vmem:[%s3 + $0x470] sm:$0xf]
  %v298 = vld [vmem:[%s3 + $0x474] sm:$0xff]
  %v299 = vld [vmem:[%s3 + $0x47c] sm:$0xf]
  %v300 = vld [vmem:[%s3 + $0x480] sm:$0xff]
  %v301 = vld [vmem:[%s3 + $0x488] sm:$0xf]
  %v302 = vld [vmem:[%s3 + $0x48c] sm:$0xff]
  %v303 = vld [vmem:[%s3 + $0x494] sm:$0xf]
  %v304 = vld [vmem:[%s3 + $0x498] sm:$0xff]
  %v305 = vld [vmem:[%s3 + $0x4a0] sm:$0xf]
  %v306 = vld [vmem:[%s3 + $0x4a4] sm:$0xff]
  %v307 = vld [vmem:[%s3 + $0x4ac] sm:$0xf]
  %v308 = vld [vmem:[%s3 + $0x4b0] sm:$0xff]
  %v309 = vld [vmem:[%s3 + $0x4b8] sm:$0xf]
  %v310 = vld [vmem:[%s3 + $0x4bc] sm:$0xff]
  %v311 = vld [vmem:[%s3 + $0x4c4] sm:$0xf]
  %v312 = vld [vmem:[%s3 + $0x4c8] sm:$0xff]
  %v313 = vld [vmem:[%s3 + $0x4d0] sm:$0xf]
  %v314 = vld [vmem:[%s3 + $0x4d4] sm:$0xff]
  %v315 = vld [vmem:[%s3 + $0x4dc] sm:$0xf]
  %v316 = vld [vmem:[%s3 + $0x4e0] sm:$0xff]
  %v317 = vld [vmem:[%s3 + $0x4e8] sm:$0xf]
  %v318 = vld [vmem:[%s3 + $0x4ec] sm:$0xff]
  %v319 = vld [vmem:[%s3 + $0x4f4] sm:$0xf]
  %v320 = vld [vmem:[%s3 + $0x4f8] sm:$0xff]
  %v321 = vld [vmem:[%s3 + $0x500] sm:$0xf]
  %v322 = vld [vmem:[%s3 + $0x504] sm:$0xff]
  %v323 = vld [vmem:[%s3 + $0x50c] sm:$0xf]
  %v324 = vld [vmem:[%s3 + $0x510] sm:$0xff]
  %v325 = vld [vmem:[%s3 + $0x518] sm:$0xf]
  %v326 = vld [vmem:[%s3 + $0x51c] sm:$0xff]
  %v327 = vld [vmem:[%s3 + $0x524] sm:$0xf]
  %v328 = vld [vmem:[%s3 + $0x528] sm:$0x11]
  %v329 = vld [vmem:[%s3 + $0x530] sm:$0x1]
  %v330 = vld [vmem:[%s4] sm:$0x7]
  %v332 = vperm.slane %v330, 0
  %v333 = vperm.slane %v330, 1
  %v334 = vperm.slane %v330, 2
  %v402 = vunpack.c.l.b16 %v44
  %v403 = vunpack.c.h.b16 %v44
  %v404 = vunpack.c.l.b16 %v45
  %v405 = vunpack.c.h.b16 %v45
  %v406 = vunpack.c.l.b16 %v46
  %v407 = vunpack.c.h.b16 %v46
  %v408 = vunpack.c.l.b16 %v47
  %v409 = vunpack.c.l.b16 %v48
  %v410 = vunpack.c.h.b16 %v48
  %v411 = vunpack.c.l.b16 %v49
  %v412 = vunpack.c.h.b16 %v49
  %v413 = vunpack.c.l.b16 %v50
  %v414 = vunpack.c.h.b16 %v50
  %v415 = vunpack.c.l.b16 %v51
  %v416 = vunpack.c.l.b16 %v52
  %v417 = vunpack.c.h.b16 %v52
  %v418 = vunpack.c.l.b16 %v53
  %v419 = vunpack.c.h.b16 %v53
  %v420 = vunpack.c.l.b16 %v54
  %v421 = vunpack.c.h.b16 %v54
  %v422 = vunpack.c.l.b16 %v55
  %v423 = vunpack.c.l.b16 %v56
  %v424 = vunpack.c.h.b16 %v56
  %v425 = vunpack.c.l.b16 %v57
  %v426 = vunpack.c.h.b16 %v57
  %v427 = vunpack.c.l.b16 %v58
  %v428 = vunpack.c.h.b16 %v58
  %v429 = vunpack.c.l.b16 %v59
  %v430 = vunpack.c.l.b16 %v60
  %v431 = vunpack.c.h.b16 %v60
  %v432 = vunpack.c.l.b16 %v61
  %v433 = vunpack.c.h.b16 %v61
  %v434 = vunpack.c.l.b16 %v62
  %v435 = vunpack.c.h.b16 %v62
  %v436 = vunpack.c.l.b16 %v63
  %v437 = vunpack.c.l.b16 %v64
  %v438 = vunpack.c.h.b16 %v64
  %v439 = vunpack.c.l.b16 %v65
  %v440 = vunpack.c.h.b16 %v65
  %v441 = vunpack.c.l.b16 %v66
  %v442 = vunpack.c.h.b16 %v66
  %v443 = vunpack.c.l.b16 %v67
  %v444 = vunpack.c.l.b16 %v68
  %v445 = vunpack.c.h.b16 %v68
  %v446 = vunpack.c.l.b16 %v69
  %v447 = vunpack.c.h.b16 %v69
  %v448 = vunpack.c.l.b16 %v70
  %v449 = vunpack.c.h.b16 %v70
  %v450 = vunpack.c.l.b16 %v71
  %v451 = vunpack.c.l.b16 %v72
  %v452 = vunpack.c.h.b16 %v72
  %v453 = vunpack.c.l.b16 %v73
  %v454 = vunpack.c.h.b16 %v73
  %v455 = vunpack.c.l.b16 %v74
  %v456 = vunpack.c.h.b16 %v74
  %v457 = vunpack.c.l.b16 %v75
  %v458 = vunpack.c.l.b16 %v76
  %v459 = vunpack.c.h.b16 %v76
  %v460 = vunpack.c.l.b16 %v77
  %v461 = vunpack.c.h.b16 %v77
  %v462 = vunpack.c.l.b16 %v78
  %v463 = vunpack.c.h.b16 %v78
  %v464 = vunpack.c.l.b16 %v79
  %v465 = vunpack.c.l.b16 %v80
  %v466 = vunpack.c.h.b16 %v80
  %v467 = vunpack.c.l.b16 %v81
  %v468 = vunpack.c.h.b16 %v81
  %v469 = vunpack.c.l.b16 %v82
  %v470 = vunpack.c.h.b16 %v82
  %v471 = vunpack.c.l.b16 %v83
  %v472 = vunpack.c.l.b16 %v84
  %v473 = vunpack.c.h.b16 %v84
  %v474 = vunpack.c.l.b16 %v85
  %v475 = vunpack.c.h.b16 %v85
  %v476 = vunpack.c.l.b16 %v86
  %v477 = vunpack.c.h.b16 %v86
  %v478 = vunpack.c.l.b16 %v87
  %v479 = vunpack.c.l.b16 %v88
  %v480 = vunpack.c.h.b16 %v88
  %v481 = vunpack.c.l.b16 %v89
  %v482 = vunpack.c.h.b16 %v89
  %v483 = vunpack.c.l.b16 %v90
  %v484 = vunpack.c.h.b16 %v90
  %v485 = vunpack.c.l.b16 %v91
  %v486 = vunpack.c.l.b16 %v92
  %v487 = vunpack.c.h.b16 %v92
  %v488 = vunpack.c.l.b16 %v93
  %v489 = vunpack.c.h.b16 %v93
  %v490 = vunpack.c.l.b16 %v94
  %v491 = vunpack.c.h.b16 %v94
  %v492 = vunpack.c.l.b16 %v95
  %v493 = vunpack.c.l.b16 %v96
  %v494 = vunpack.c.h.b16 %v96
  %v495 = vunpack.c.l.b16 %v97
  %v496 = vunpack.c.h.b16 %v97
  %v497 = vunpack.c.l.b16 %v98
  %v498 = vunpack.c.h.b16 %v98
  %v499 = vunpack.c.l.b16 %v99
  %v500 = vunpack.c.l.b16 %v100
  %v501 = vunpack.c.h.b16 %v100
  %v502 = vunpack.c.l.b16 %v101
  %v503 = vunpack.c.h.b16 %v101
  %v504 = vunpack.c.l.b16 %v102
  %v505 = vunpack.c.h.b16 %v102
  %v506 = vunpack.c.l.b16 %v103
  %v507 = vunpack.c.l.b16 %v104
  %v508 = vunpack.c.h.b16 %v104
  %v509 = vunpack.c.l.b16 %v105
  %v510 = vunpack.c.h.b16 %v105
  %v511 = vunpack.c.l.b16 %v106
  %v512 = vunpack.c.h.b16 %v106
  %v513 = vunpack.c.l.b16 %v107
  %v514 = vpack.c.b16 %v409, %v402
  %v515 = vpack.c.b16 %v410, %v403
  %v516 = vpack.c.b16 %v411, %v404
  %v517 = vpack.c.b16 %v412, %v405
  %v518 = vpack.c.b16 %v413, %v406
  %v519 = vpack.c.b16 %v414, %v407
  %v520 = vpack.c.b16 %v415, %v408
  %v521 = vpack.c.b16 %v423, %v416
  %v522 = vpack.c.b16 %v424, %v417
  %v523 = vpack.c.b16 %v425, %v418
  %v524 = vpack.c.b16 %v426, %v419
  %v525 = vpack.c.b16 %v427, %v420
  %v526 = vpack.c.b16 %v428, %v421
  %v527 = vpack.c.b16 %v429, %v422
  %v528 = vpack.c.b16 %v437, %v430
  %v529 = vpack.c.b16 %v438, %v431
  %v530 = vpack.c.b16 %v439, %v432
  %v531 = vpack.c.b16 %v440, %v433
  %v532 = vpack.c.b16 %v441, %v434
  %v533 = vpack.c.b16 %v442, %v435
  %v534 = vpack.c.b16 %v443, %v436
  %v535 = vpack.c.b16 %v451, %v444
  %v536 = vpack.c.b16 %v452, %v445
  %v537 = vpack.c.b16 %v453, %v446
  %v538 = vpack.c.b16 %v454, %v447
  %v539 = vpack.c.b16 %v455, %v448
  %v540 = vpack.c.b16 %v456, %v449
  %v541 = vpack.c.b16 %v457, %v450
  %v542 = vpack.c.b16 %v465, %v458
  %v543 = vpack.c.b16 %v466, %v459
  %v544 = vpack.c.b16 %v467, %v460
  %v545 = vpack.c.b16 %v468, %v461
  %v546 = vpack.c.b16 %v469, %v462
  %v547 = vpack.c.b16 %v470, %v463
  %v548 = vpack.c.b16 %v471, %v464
  %v549 = vpack.c.b16 %v479, %v472
  %v550 = vpack.c.b16 %v480, %v473
  %v551 = vpack.c.b16 %v481, %v474
  %v552 = vpack.c.b16 %v482, %v475
  %v553 = vpack.c.b16 %v483, %v476
  %v554 = vpack.c.b16 %v484, %v477
  %v555 = vpack.c.b16 %v485, %v478
  %v556 = vpack.c.b16 %v493, %v486
  %v557 = vpack.c.b16 %v494, %v487
  %v558 = vpack.c.b16 %v495, %v488
  %v559 = vpack.c.b16 %v496, %v489
  %v560 = vpack.c.b16 %v497, %v490
  %v561 = vpack.c.b16 %v498, %v491
  %v562 = vpack.c.b16 %v499, %v492
  %v563 = vpack.c.b16 %v507, %v500
  %v564 = vpack.c.b16 %v508, %v501
  %v565 = vpack.c.b16 %v509, %v502
  %v566 = vpack.c.b16 %v510, %v503
  %v567 = vpack.c.b16 %v511, %v504
  %v568 = vpack.c.b16 %v512, %v505
  %v569 = vpack.c.b16 %v513, %v506
  %v840 = vunpack.c.l.b16 %v108
  %v841 = vunpack.c.h.b16 %v108
  %v842 = vunpack.c.l.b16 %v109
  %v843 = vunpack.c.l.b16 %v110
  %v844 = vunpack.c.h.b16 %v110
  %v845 = vunpack.c.l.b16 %v111
  %v846 = vunpack.c.l.b16 %v112
  %v847 = vunpack.c.h.b16 %v112
  %v848 = vunpack.c.l.b16 %v113
  %v849 = vunpack.c.l.b16 %v114
  %v850 = vunpack.c.h.b16 %v114
  %v851 = vunpack.c.l.b16 %v115
  %v852 = vunpack.c.l.b16 %v116
  %v853 = vunpack.c.h.b16 %v116
  %v854 = vunpack.c.l.b16 %v117
  %v855 = vunpack.c.l.b16 %v118
  %v856 = vunpack.c.h.b16 %v118
  %v857 = vunpack.c.l.b16 %v119
  %v858 = vunpack.c.l.b16 %v120
  %v859 = vunpack.c.h.b16 %v120
  %v860 = vunpack.c.l.b16 %v121
  %v861 = vunpack.c.l.b16 %v122
  %v862 = vunpack.c.h.b16 %v122
  %v863 = vunpack.c.l.b16 %v123
  %v864 = vunpack.c.l.b16 %v124
  %v865 = vunpack.c.h.b16 %v124
  %v866 = vunpack.c.l.b16 %v125
  %v867 = vunpack.c.l.b16 %v126
  %v868 = vunpack.c.h.b16 %v126
  %v869 = vunpack.c.l.b16 %v127
  %v870 = vunpack.c.l.b16 %v128
  %v871 = vunpack.c.h.b16 %v128
  %v872 = vunpack.c.l.b16 %v129
  %v873 = vunpack.c.l.b16 %v130
  %v874 = vunpack.c.h.b16 %v130
  %v875 = vunpack.c.l.b16 %v131
  %v876 = vunpack.c.l.b16 %v132
  %v877 = vunpack.c.h.b16 %v132
  %v878 = vunpack.c.l.b16 %v133
  %v879 = vunpack.c.l.b16 %v134
  %v880 = vunpack.c.h.b16 %v134
  %v881 = vunpack.c.l.b16 %v135
  %v882 = vunpack.c.l.b16 %v136
  %v883 = vunpack.c.h.b16 %v136
  %v884 = vunpack.c.l.b16 %v137
  %v885 = vunpack.c.l.b16 %v138
  %v886 = vunpack.c.h.b16 %v138
  %v887 = vunpack.c.l.b16 %v139
  %v888 = vunpack.c.l.b16 %v140
  %v889 = vunpack.c.h.b16 %v140
  %v890 = vunpack.c.l.b16 %v141
  %v891 = vunpack.c.l.b16 %v142
  %v892 = vunpack.c.h.b16 %v142
  %v893 = vunpack.c.l.b16 %v143
  %v894 = vunpack.c.l.b16 %v144
  %v895 = vunpack.c.h.b16 %v144
  %v896 = vunpack.c.l.b16 %v145
  %v897 = vunpack.c.l.b16 %v146
  %v898 = vunpack.c.h.b16 %v146
  %v899 = vunpack.c.l.b16 %v147
  %v900 = vunpack.c.l.b16 %v148
  %v901 = vunpack.c.h.b16 %v148
  %v902 = vunpack.c.l.b16 %v149
  %v903 = vunpack.c.l.b16 %v150
  %v904 = vunpack.c.h.b16 %v150
  %v905 = vunpack.c.l.b16 %v151
  %v906 = vunpack.c.l.b16 %v152
  %v907 = vunpack.c.h.b16 %v152
  %v908 = vunpack.c.l.b16 %v153
  %v909 = vunpack.c.l.b16 %v154
  %v910 = vunpack.c.h.b16 %v154
  %v911 = vunpack.c.l.b16 %v155
  %v912 = vunpack.c.l.b16 %v156
  %v913 = vunpack.c.h.b16 %v156
  %v914 = vunpack.c.l.b16 %v157
  %v915 = vunpack.c.l.b16 %v158
  %v916 = vunpack.c.h.b16 %v158
  %v917 = vunpack.c.l.b16 %v159
  %v918 = vunpack.c.l.b16 %v160
  %v919 = vunpack.c.h.b16 %v160
  %v920 = vunpack.c.l.b16 %v161
  %v921 = vunpack.c.l.b16 %v162
  %v922 = vunpack.c.h.b16 %v162
  %v923 = vunpack.c.l.b16 %v163
  %v924 = vunpack.c.l.b16 %v164
  %v925 = vunpack.c.h.b16 %v164
  %v926 = vunpack.c.l.b16 %v165
  %v927 = vunpack.c.l.b16 %v166
  %v928 = vunpack.c.h.b16 %v166
  %v929 = vunpack.c.l.b16 %v167
  %v930 = vunpack.c.l.b16 %v168
  %v931 = vunpack.c.h.b16 %v168
  %v932 = vunpack.c.l.b16 %v169
  %v933 = vunpack.c.l.b16 %v170
  %v934 = vunpack.c.h.b16 %v170
  %v935 = vunpack.c.l.b16 %v171
  %v936 = vunpack.c.l.b16 %v172
  %v937 = vunpack.c.h.b16 %v172
  %v938 = vunpack.c.l.b16 %v173
  %v939 = vunpack.c.l.b16 %v174
  %v940 = vunpack.c.h.b16 %v174
  %v941 = vunpack.c.l.b16 %v175
  %v942 = vunpack.c.l.b16 %v176
  %v943 = vunpack.c.h.b16 %v176
  %v944 = vunpack.c.l.b16 %v177
  %v945 = vunpack.c.l.b16 %v178
  %v946 = vunpack.c.h.b16 %v178
  %v947 = vunpack.c.l.b16 %v179
  %v948 = vunpack.c.l.b16 %v180
  %v949 = vunpack.c.h.b16 %v180
  %v950 = vunpack.c.l.b16 %v181
  %v951 = vunpack.c.l.b16 %v182
  %v952 = vunpack.c.h.b16 %v182
  %v953 = vunpack.c.l.b16 %v183
  %v954 = vunpack.c.l.b16 %v184
  %v955 = vunpack.c.h.b16 %v184
  %v956 = vunpack.c.l.b16 %v185
  %v957 = vunpack.c.l.b16 %v186
  %v958 = vunpack.c.h.b16 %v186
  %v959 = vunpack.c.l.b16 %v187
  %v960 = vunpack.c.l.b16 %v188
  %v961 = vunpack.c.h.b16 %v188
  %v962 = vunpack.c.l.b16 %v189
  %v963 = vunpack.c.l.b16 %v190
  %v964 = vunpack.c.h.b16 %v190
  %v965 = vunpack.c.l.b16 %v191
  %v966 = vunpack.c.l.b16 %v192
  %v967 = vunpack.c.h.b16 %v192
  %v968 = vunpack.c.l.b16 %v193
  %v969 = vunpack.c.l.b16 %v194
  %v970 = vunpack.c.h.b16 %v194
  %v971 = vunpack.c.l.b16 %v195
  %v972 = vunpack.c.l.b16 %v196
  %v973 = vunpack.c.h.b16 %v196
  %v974 = vunpack.c.l.b16 %v197
  %v975 = vunpack.c.l.b16 %v198
  %v976 = vunpack.c.h.b16 %v198
  %v977 = vunpack.c.l.b16 %v199
  %v978 = vunpack.c.l.b16 %v200
  %v979 = vunpack.c.h.b16 %v200
  %v980 = vunpack.c.l.b16 %v201
  %v981 = vunpack.c.l.b16 %v202
  %v982 = vunpack.c.h.b16 %v202
  %v983 = vunpack.c.l.b16 %v203
  %v984 = vunpack.c.l.b16 %v204
  %v985 = vunpack.c.h.b16 %v204
  %v986 = vunpack.c.l.b16 %v205
  %v987 = vunpack.c.l.b16 %v206
  %v988 = vunpack.c.h.b16 %v206
  %v989 = vunpack.c.l.b16 %v207
  %v990 = vunpack.c.l.b16 %v208
  %v991 = vunpack.c.h.b16 %v208
  %v992 = vunpack.c.l.b16 %v209
  %v993 = vunpack.c.l.b16 %v210
  %v994 = vunpack.c.h.b16 %v210
  %v995 = vunpack.c.l.b16 %v211
  %v996 = vunpack.c.l.b16 %v212
  %v997 = vunpack.c.h.b16 %v212
  %v998 = vunpack.c.l.b16 %v213
  %v999 = vunpack.c.l.b16 %v214
  %v1000 = vunpack.c.h.b16 %v214
  %v1001 = vunpack.c.l.b16 %v215
  %v1002 = vunpack.c.l.b16 %v216
  %v1003 = vunpack.c.h.b16 %v216
  %v1004 = vunpack.c.l.b16 %v217
  %v1005 = vunpack.c.l.b16 %v218
  %v1006 = vunpack.c.h.b16 %v218
  %v1007 = vunpack.c.l.b16 %v219
  %v1008 = vunpack.c.l.b16 %v220
  %v1009 = vunpack.c.h.b16 %v220
  %v1010 = vunpack.c.l.b16 %v221
  %v1011 = vunpack.c.l.b16 %v222
  %v1012 = vunpack.c.h.b16 %v222
  %v1013 = vunpack.c.l.b16 %v223
  %v1014 = vunpack.c.l.b16 %v224
  %v1015 = vunpack.c.h.b16 %v224
  %v1016 = vunpack.c.l.b16 %v225
  %v1017 = vunpack.c.l.b16 %v226
  %v1018 = vunpack.c.h.b16 %v226
  %v1019 = vunpack.c.l.b16 %v227
  %v1020 = vunpack.c.l.b16 %v228
  %v1021 = vunpack.c.h.b16 %v228
  %v1022 = vunpack.c.l.b16 %v229
  %v1023 = vunpack.c.l.b16 %v230
  %v1024 = vunpack.c.h.b16 %v230
  %v1025 = vunpack.c.l.b16 %v231
  %v1026 = vunpack.c.l.b16 %v232
  %v1027 = vunpack.c.h.b16 %v232
  %v1028 = vunpack.c.l.b16 %v233
  %v1029 = vunpack.c.l.b16 %v234
  %v1030 = vunpack.c.h.b16 %v234
  %v1031 = vunpack.c.l.b16 %v235
  %v1032 = vunpack.c.l.b16 %v236
  %v1033 = vunpack.c.h.b16 %v236
  %v1034 = vunpack.c.l.b16 %v237
  %v1035 = vunpack.c.l.b16 %v238
  %v1036 = vunpack.c.h.b16 %v238
  %v1037 = vunpack.c.l.b16 %v239
  %v1038 = vunpack.c.l.b16 %v240
  %v1039 = vunpack.c.h.b16 %v240
  %v1040 = vunpack.c.l.b16 %v241
  %v1041 = vunpack.c.l.b16 %v242
  %v1042 = vunpack.c.h.b16 %v242
  %v1043 = vunpack.c.l.b16 %v243
  %v1044 = vunpack.c.l.b16 %v244
  %v1045 = vunpack.c.h.b16 %v244
  %v1046 = vunpack.c.l.b16 %v245
  %v1047 = vunpack.c.l.b16 %v246
  %v1048 = vunpack.c.h.b16 %v246
  %v1049 = vunpack.c.l.b16 %v247
  %v1050 = vunpack.c.l.b16 %v248
  %v1051 = vunpack.c.h.b16 %v248
  %v1052 = vunpack.c.l.b16 %v249
  %v1053 = vunpack.c.l.b16 %v250
  %v1054 = vunpack.c.h.b16 %v250
  %v1055 = vunpack.c.l.b16 %v251
  %v1056 = vunpack.c.l.b16 %v252
  %v1057 = vunpack.c.h.b16 %v252
  %v1058 = vunpack.c.l.b16 %v253
  %v1059 = vunpack.c.l.b16 %v254
  %v1060 = vunpack.c.h.b16 %v254
  %v1061 = vunpack.c.l.b16 %v255
  %v1062 = vunpack.c.l.b16 %v256
  %v1063 = vunpack.c.h.b16 %v256
  %v1064 = vunpack.c.l.b16 %v257
  %v1065 = vunpack.c.l.b16 %v258
  %v1066 = vunpack.c.h.b16 %v258
  %v1067 = vunpack.c.l.b16 %v259
  %v1068 = vunpack.c.l.b16 %v260
  %v1069 = vunpack.c.h.b16 %v260
  %v1070 = vunpack.c.l.b16 %v261
  %v1071 = vunpack.c.l.b16 %v262
  %v1072 = vunpack.c.h.b16 %v262
  %v1073 = vunpack.c.l.b16 %v263
  %v1074 = vunpack.c.l.b16 %v264
  %v1075 = vunpack.c.h.b16 %v264
  %v1076 = vunpack.c.l.b16 %v265
  %v1077 = vunpack.c.l.b16 %v266
  %v1078 = vunpack.c.h.b16 %v266
  %v1079 = vunpack.c.l.b16 %v267
  %v1080 = vunpack.c.l.b16 %v268
  %v1081 = vunpack.c.h.b16 %v268
  %v1082 = vunpack.c.l.b16 %v269
  %v1083 = vunpack.c.l.b16 %v270
  %v1084 = vunpack.c.h.b16 %v270
  %v1085 = vunpack.c.l.b16 %v271
  %v1086 = vunpack.c.l.b16 %v272
  %v1087 = vunpack.c.h.b16 %v272
  %v1088 = vunpack.c.l.b16 %v273
  %v1089 = vunpack.c.l.b16 %v274
  %v1090 = vunpack.c.h.b16 %v274
  %v1091 = vunpack.c.l.b16 %v275
  %v1092 = vunpack.c.l.b16 %v276
  %v1093 = vunpack.c.h.b16 %v276
  %v1094 = vunpack.c.l.b16 %v277
  %v1095 = vunpack.c.l.b16 %v278
  %v1096 = vunpack.c.h.b16 %v278
  %v1097 = vunpack.c.l.b16 %v279
  %v1098 = vunpack.c.l.b16 %v280
  %v1099 = vunpack.c.h.b16 %v280
  %v1100 = vunpack.c.l.b16 %v281
  %v1101 = vunpack.c.l.b16 %v282
  %v1102 = vunpack.c.h.b16 %v282
  %v1103 = vunpack.c.l.b16 %v283
  %v1104 = vunpack.c.l.b16 %v284
  %v1105 = vunpack.c.h.b16 %v284
  %v1106 = vunpack.c.l.b16 %v285
  %v1107 = vunpack.c.l.b16 %v286
  %v1108 = vunpack.c.h.b16 %v286
  %v1109 = vunpack.c.l.b16 %v287
  %v1110 = vunpack.c.l.b16 %v288
  %v1111 = vunpack.c.h.b16 %v288
  %v1112 = vunpack.c.l.b16 %v289
  %v1113 = vunpack.c.l.b16 %v290
  %v1114 = vunpack.c.h.b16 %v290
  %v1115 = vunpack.c.l.b16 %v291
  %v1116 = vunpack.c.l.b16 %v292
  %v1117 = vunpack.c.h.b16 %v292
  %v1118 = vunpack.c.l.b16 %v293
  %v1119 = vunpack.c.l.b16 %v294
  %v1120 = vunpack.c.h.b16 %v294
  %v1121 = vunpack.c.l.b16 %v295
  %v1122 = vunpack.c.l.b16 %v296
  %v1123 = vunpack.c.h.b16 %v296
  %v1124 = vunpack.c.l.b16 %v297
  %v1125 = vunpack.c.l.b16 %v298
  %v1126 = vunpack.c.h.b16 %v298
  %v1127 = vunpack.c.l.b16 %v299
  %v1128 = vunpack.c.l.b16 %v300
  %v1129 = vunpack.c.h.b16 %v300
  %v1130 = vunpack.c.l.b16 %v301
  %v1131 = vunpack.c.l.b16 %v302
  %v1132 = vunpack.c.h.b16 %v302
  %v1133 = vunpack.c.l.b16 %v303
  %v1134 = vunpack.c.l.b16 %v304
  %v1135 = vunpack.c.h.b16 %v304
  %v1136 = vunpack.c.l.b16 %v305
  %v1137 = vunpack.c.l.b16 %v306
  %v1138 = vunpack.c.h.b16 %v306
  %v1139 = vunpack.c.l.b16 %v307
  %v1140 = vunpack.c.l.b16 %v308
  %v1141 = vunpack.c.h.b16 %v308
  %v1142 = vunpack.c.l.b16 %v309
  %v1143 = vunpack.c.l.b16 %v310
  %v1144 = vunpack.c.h.b16 %v310
  %v1145 = vunpack.c.l.b16 %v311
  %v1146 = vunpack.c.l.b16 %v312
  %v1147 = vunpack.c.h.b16 %v312
  %v1148 = vunpack.c.l.b16 %v313
  %v1149 = vunpack.c.l.b16 %v314
  %v1150 = vunpack.c.h.b16 %v314
  %v1151 = vunpack.c.l.b16 %v315
  %v1152 = vunpack.c.l.b16 %v316
  %v1153 = vunpack.c.h.b16 %v316
  %v1154 = vunpack.c.l.b16 %v317
  %v1155 = vunpack.c.l.b16 %v318
  %v1156 = vunpack.c.h.b16 %v318
  %v1157 = vunpack.c.l.b16 %v319
  %v1158 = vunpack.c.l.b16 %v320
  %v1159 = vunpack.c.h.b16 %v320
  %v1160 = vunpack.c.l.b16 %v321
  %v1161 = vunpack.c.l.b16 %v322
  %v1162 = vunpack.c.h.b16 %v322
  %v1163 = vunpack.c.l.b16 %v323
  %v1164 = vunpack.c.l.b16 %v324
  %v1165 = vunpack.c.h.b16 %v324
  %v1166 = vunpack.c.l.b16 %v325
  %v1167 = vunpack.c.l.b16 %v326
  %v1168 = vunpack.c.h.b16 %v326
  %v1169 = vunpack.c.l.b16 %v327
  %v1170 = vunpack.c.l.b16 %v328
  %v1171 = vunpack.c.h.b16 %v328
  %v1172 = vunpack.c.l.b16 %v329
  %v1173 = vpack.c.b16 %v843, %v840
  %v1174 = vpack.c.b16 %v844, %v841
  %v1175 = vpack.c.b16 %v845, %v842
  %v1176 = vpack.c.b16 %v849, %v846
  %v1177 = vpack.c.b16 %v850, %v847
  %v1178 = vpack.c.b16 %v851, %v848
  %v1179 = vpack.c.b16 %v855, %v852
  %v1180 = vpack.c.b16 %v856, %v853
  %v1181 = vpack.c.b16 %v857, %v854
  %v1182 = vpack.c.b16 %v861, %v858
  %v1183 = vpack.c.b16 %v862, %v859
  %v1184 = vpack.c.b16 %v863, %v860
  %v1185 = vpack.c.b16 %v867, %v864
  %v1186 = vpack.c.b16 %v868, %v865
  %v1187 = vpack.c.b16 %v869, %v866
  %v1188 = vpack.c.b16 %v873, %v870
  %v1189 = vpack.c.b16 %v874, %v871
  %v1190 = vpack.c.b16 %v875, %v872
  %v1191 = vpack.c.b16 %v879, %v876
  %v1192 = vpack.c.b16 %v880, %v877
  %v1193 = vpack.c.b16 %v881, %v878
  %v1194 = vpack.c.b16 %v885, %v882
  %v1195 = vpack.c.b16 %v886, %v883
  %v1196 = vpack.c.b16 %v887, %v884
  %v1197 = vpack.c.b16 %v891, %v888
  %v1198 = vpack.c.b16 %v892, %v889
  %v1199 = vpack.c.b16 %v893, %v890
  %v1200 = vpack.c.b16 %v897, %v894
  %v1201 = vpack.c.b16 %v898, %v895
  %v1202 = vpack.c.b16 %v899, %v896
  %v1203 = vpack.c.b16 %v903, %v900
  %v1204 = vpack.c.b16 %v904, %v901
  %v1205 = vpack.c.b16 %v905, %v902
  %v1206 = vpack.c.b16 %v909, %v906
  %v1207 = vpack.c.b16 %v910, %v907
  %v1208 = vpack.c.b16 %v911, %v908
  %v1209 = vpack.c.b16 %v915, %v912
  %v1210 = vpack.c.b16 %v916, %v913
  %v1211 = vpack.c.b16 %v917, %v914
  %v1212 = vpack.c.b16 %v921, %v918
  %v1213 = vpack.c.b16 %v922, %v919
  %v1214 = vpack.c.b16 %v923, %v920
  %v1215 = vpack.c.b16 %v927, %v924
  %v1216 = vpack.c.b16 %v928, %v925
  %v1217 = vpack.c.b16 %v929, %v926
  %v1218 = vpack.c.b16 %v933, %v930
  %v1219 = vpack.c.b16 %v934, %v931
  %v1220 = vpack.c.b16 %v935, %v932
  %v1221 = vpack.c.b16 %v939, %v936
  %v1222 = vpack.c.b16 %v940, %v937
  %v1223 = vpack.c.b16 %v941, %v938
  %v1224 = vpack.c.b16 %v945, %v942
  %v1225 = vpack.c.b16 %v946, %v943
  %v1226 = vpack.c.b16 %v947, %v944
  %v1227 = vpack.c.b16 %v951, %v948
  %v1228 = vpack.c.b16 %v952, %v949
  %v1229 = vpack.c.b16 %v953, %v950
  %v1230 = vpack.c.b16 %v957, %v954
  %v1231 = vpack.c.b16 %v958, %v955
  %v1232 = vpack.c.b16 %v959, %v956
  %v1233 = vpack.c.b16 %v963, %v960
  %v1234 = vpack.c.b16 %v964, %v961
  %v1235 = vpack.c.b16 %v965, %v962
  %v1236 = vpack.c.b16 %v969, %v966
  %v1237 = vpack.c.b16 %v970, %v967
  %v1238 = vpack.c.b16 %v971, %v968
  %v1239 = vpack.c.b16 %v975, %v972
  %v1240 = vpack.c.b16 %v976, %v973
  %v1241 = vpack.c.b16 %v977, %v974
  %v1242 = vpack.c.b16 %v981, %v978
  %v1243 = vpack.c.b16 %v982, %v979
  %v1244 = vpack.c.b16 %v983, %v980
  %v1245 = vpack.c.b16 %v987, %v984
  %v1246 = vpack.c.b16 %v988, %v985
  %v1247 = vpack.c.b16 %v989, %v986
  %v1248 = vpack.c.b16 %v993, %v990
  %v1249 = vpack.c.b16 %v994, %v991
  %v1250 = vpack.c.b16 %v995, %v992
  %v1251 = vpack.c.b16 %v999, %v996
  %v1252 = vpack.c.b16 %v1000, %v997
  %v1253 = vpack.c.b16 %v1001, %v998
  %v1254 = vpack.c.b16 %v1005, %v1002
  %v1255 = vpack.c.b16 %v1006, %v1003
  %v1256 = vpack.c.b16 %v1007, %v1004
  %v1257 = vpack.c.b16 %v1011, %v1008
  %v1258 = vpack.c.b16 %v1012, %v1009
  %v1259 = vpack.c.b16 %v1013, %v1010
  %v1260 = vpack.c.b16 %v1017, %v1014
  %v1261 = vpack.c.b16 %v1018, %v1015
  %v1262 = vpack.c.b16 %v1019, %v1016
  %v1263 = vpack.c.b16 %v1023, %v1020
  %v1264 = vpack.c.b16 %v1024, %v1021
  %v1265 = vpack.c.b16 %v1025, %v1022
  %v1266 = vpack.c.b16 %v1029, %v1026
  %v1267 = vpack.c.b16 %v1030, %v1027
  %v1268 = vpack.c.b16 %v1031, %v1028
  %v1269 = vpack.c.b16 %v1035, %v1032
  %v1270 = vpack.c.b16 %v1036, %v1033
  %v1271 = vpack.c.b16 %v1037, %v1034
  %v1272 = vpack.c.b16 %v1041, %v1038
  %v1273 = vpack.c.b16 %v1042, %v1039
  %v1274 = vpack.c.b16 %v1043, %v1040
  %v1275 = vpack.c.b16 %v1047, %v1044
  %v1276 = vpack.c.b16 %v1048, %v1045
  %v1277 = vpack.c.b16 %v1049, %v1046
  %v1278 = vpack.c.b16 %v1053, %v1050
  %v1279 = vpack.c.b16 %v1054, %v1051
  %v1280 = vpack.c.b16 %v1055, %v1052
  %v1281 = vpack.c.b16 %v1059, %v1056
  %v1282 = vpack.c.b16 %v1060, %v1057
  %v1283 = vpack.c.b16 %v1061, %v1058
  %v1284 = vpack.c.b16 %v1065, %v1062
  %v1285 = vpack.c.b16 %v1066, %v1063
  %v1286 = vpack.c.b16 %v1067, %v1064
  %v1287 = vpack.c.b16 %v1071, %v1068
  %v1288 = vpack.c.b16 %v1072, %v1069
  %v1289 = vpack.c.b16 %v1073, %v1070
  %v1290 = vpack.c.b16 %v1077, %v1074
  %v1291 = vpack.c.b16 %v1078, %v1075
  %v1292 = vpack.c.b16 %v1079, %v1076
  %v1293 = vpack.c.b16 %v1083, %v1080
  %v1294 = vpack.c.b16 %v1084, %v1081
  %v1295 = vpack.c.b16 %v1085, %v1082
  %v1296 = vpack.c.b16 %v1089, %v1086
  %v1297 = vpack.c.b16 %v1090, %v1087
  %v1298 = vpack.c.b16 %v1091, %v1088
  %v1299 = vpack.c.b16 %v1095, %v1092
  %v1300 = vpack.c.b16 %v1096, %v1093
  %v1301 = vpack.c.b16 %v1097, %v1094
  %v1302 = vpack.c.b16 %v1101, %v1098
  %v1303 = vpack.c.b16 %v1102, %v1099
  %v1304 = vpack.c.b16 %v1103, %v1100
  %v1305 = vpack.c.b16 %v1107, %v1104
  %v1306 = vpack.c.b16 %v1108, %v1105
  %v1307 = vpack.c.b16 %v1109, %v1106
  %v1308 = vpack.c.b16 %v1113, %v1110
  %v1309 = vpack.c.b16 %v1114, %v1111
  %v1310 = vpack.c.b16 %v1115, %v1112
  %v1311 = vpack.c.b16 %v1119, %v1116
  %v1312 = vpack.c.b16 %v1120, %v1117
  %v1313 = vpack.c.b16 %v1121, %v1118
  %v1314 = vpack.c.b16 %v1125, %v1122
  %v1315 = vpack.c.b16 %v1126, %v1123
  %v1316 = vpack.c.b16 %v1127, %v1124
  %v1317 = vpack.c.b16 %v1131, %v1128
  %v1318 = vpack.c.b16 %v1132, %v1129
  %v1319 = vpack.c.b16 %v1133, %v1130
  %v1320 = vpack.c.b16 %v1137, %v1134
  %v1321 = vpack.c.b16 %v1138, %v1135
  %v1322 = vpack.c.b16 %v1139, %v1136
  %v1323 = vpack.c.b16 %v1143, %v1140
  %v1324 = vpack.c.b16 %v1144, %v1141
  %v1325 = vpack.c.b16 %v1145, %v1142
  %v1326 = vpack.c.b16 %v1149, %v1146
  %v1327 = vpack.c.b16 %v1150, %v1147
  %v1328 = vpack.c.b16 %v1151, %v1148
  %v1329 = vpack.c.b16 %v1155, %v1152
  %v1330 = vpack.c.b16 %v1156, %v1153
  %v1331 = vpack.c.b16 %v1157, %v1154
  %v1332 = vpack.c.b16 %v1161, %v1158
  %v1333 = vpack.c.b16 %v1162, %v1159
  %v1334 = vpack.c.b16 %v1163, %v1160
  %v1335 = vpack.c.b16 %v1167, %v1164
  %v1336 = vpack.c.b16 %v1168, %v1165
  %v1337 = vpack.c.b16 %v1169, %v1166
  %v1338 = vpack.c.b16 %v1170, %v1170
  %v1339 = vpack.c.b16 %v1171, %v1171
  %v1340 = vpack.c.b16 %v1172, %v1172
  %vm1506 = vcmask 932864
  %v1508 = vsel %vm1506, %v520, 0
  %v1511 = vsel %vm1506, %v527, 0
  %v1514 = vsel %vm1506, %v534, 0
  %v1517 = vsel %vm1506, %v541, 0
  %v1520 = vsel %vm1506, %v548, 0
  %v1523 = vsel %vm1506, %v555, 0
  %v1526 = vsel %vm1506, %v562, 0
  %v1529 = vsel %vm1506, %v569, 0
  %vm1531 = vcmask 1040384
  %v1533 = vsel %vm1531, %v1338, 0
  %v1536 = vsel %vm1531, %v1339, 0
  %v1539 = vsel %vm1531, %v1340, 0
  %1541 = vmatpush.bf16.msra.mxu0 %v1194
  %1542 = vmatpush.bf16.msra.mxu0 %v1191
  %1543 = vmatpush.bf16.msra.mxu0 %v1188
  %1544 = vmatpush.bf16.msra.mxu0 %v1185
  %1545 = vmatpush.bf16.msra.mxu0 %v1182
  %1546 = vmatpush.bf16.msra.mxu0 %v1179
  %1547 = vmatpush.bf16.msra.mxu0 %v1176
  %1548 = vmatpush.bf16.msra.mxu0 %v1173
  %1549 = vmatmul.bf16.gmra.mxu0 %v514
  %v1550 = vpop.f32.mrf.mxu0
  %v1551 = vadd.f32 %v332, %v1550
  %v1552 = vpop.f32.mrf.mxu0
  %v1553 = vadd.f32 %v332, %v1552
  %1554 = vmatmul.bf16.gmra.mxu0 %v521
  %v1555 = vpop.f32.mrf.mxu0
  %v1556 = vadd.f32 %v332, %v1555
  %v1557 = vpop.f32.mrf.mxu0
  %v1558 = vadd.f32 %v332, %v1557
  %1559 = vmatmul.bf16.gmra.mxu0 %v528
  %v1560 = vpop.f32.mrf.mxu0
  %v1561 = vadd.f32 %v332, %v1560
  %v1562 = vpop.f32.mrf.mxu0
  %v1563 = vadd.f32 %v332, %v1562
  %1564 = vmatmul.bf16.gmra.mxu0 %v535
  %v1565 = vpop.f32.mrf.mxu0
  %v1566 = vadd.f32 %v332, %v1565
  %v1567 = vpop.f32.mrf.mxu0
  %v1568 = vadd.f32 %v332, %v1567
  %1569 = vmatmul.bf16.gmra.mxu0 %v542
  %v1570 = vpop.f32.mrf.mxu0
  %v1571 = vadd.f32 %v332, %v1570
  %v1572 = vpop.f32.mrf.mxu0
  %v1573 = vadd.f32 %v332, %v1572
  %1574 = vmatmul.bf16.gmra.mxu0 %v549
  %v1575 = vpop.f32.mrf.mxu0
  %v1576 = vadd.f32 %v332, %v1575
  %v1577 = vpop.f32.mrf.mxu0
  %v1578 = vadd.f32 %v332, %v1577
  %1579 = vmatmul.bf16.gmra.mxu0 %v556
  %v1580 = vpop.f32.mrf.mxu0
  %v1581 = vadd.f32 %v332, %v1580
  %v1582 = vpop.f32.mrf.mxu0
  %v1583 = vadd.f32 %v332, %v1582
  %1584 = vmatmul.bf16.gmra.mxu0 %v563
  %v1585 = vpop.f32.mrf.mxu0
  %v1586 = vadd.f32 %v332, %v1585
  %v1587 = vpop.f32.mrf.mxu0
  %v1588 = vadd.f32 %v332, %v1587
  %1589 = vdwg.mxu0
  %1590 = vmatpush.bf16.msra.mxu0 %v1218
  %1591 = vmatpush.bf16.msra.mxu0 %v1215
  %1592 = vmatpush.bf16.msra.mxu0 %v1212
  %1593 = vmatpush.bf16.msra.mxu0 %v1209
  %1594 = vmatpush.bf16.msra.mxu0 %v1206
  %1595 = vmatpush.bf16.msra.mxu0 %v1203
  %1596 = vmatpush.bf16.msra.mxu0 %v1200
  %1597 = vmatpush.bf16.msra.mxu0 %v1197
  %1598 = vmatmul.bf16.gmra.mxu0 %v515
  %v1599 = vpop.f32.mrf.mxu0
  %v1600 = vadd.f32 %v1551, %v1599
  %v1601 = vpop.f32.mrf.mxu0
  %v1602 = vadd.f32 %v1553, %v1601
  %1603 = vmatmul.bf16.gmra.mxu0 %v522
  %v1604 = vpop.f32.mrf.mxu0
  %v1605 = vadd.f32 %v1556, %v1604
  %v1606 = vpop.f32.mrf.mxu0
  %v1607 = vadd.f32 %v1558, %v1606
  %1608 = vmatmul.bf16.gmra.mxu0 %v529
  %v1609 = vpop.f32.mrf.mxu0
  %v1610 = vadd.f32 %v1561, %v1609
  %v1611 = vpop.f32.mrf.mxu0
  %v1612 = vadd.f32 %v1563, %v1611
  %1613 = vmatmul.bf16.gmra.mxu0 %v536
  %v1614 = vpop.f32.mrf.mxu0
  %v1615 = vadd.f32 %v1566, %v1614
  %v1616 = vpop.f32.mrf.mxu0
  %v1617 = vadd.f32 %v1568, %v1616
  %1618 = vmatmul.bf16.gmra.mxu0 %v543
  %v1619 = vpop.f32.mrf.mxu0
  %v1620 = vadd.f32 %v1571, %v1619
  %v1621 = vpop.f32.mrf.mxu0
  %v1622 = vadd.f32 %v1573, %v1621
  %1623 = vmatmul.bf16.gmra.mxu0 %v550
  %v1624 = vpop.f32.mrf.mxu0
  %v1625 = vadd.f32 %v1576, %v1624
  %v1626 = vpop.f32.mrf.mxu0
  %v1627 = vadd.f32 %v1578, %v1626
  %1628 = vmatmul.bf16.gmra.mxu0 %v557
  %v1629 = vpop.f32.mrf.mxu0
  %v1630 = vadd.f32 %v1581, %v1629
  %v1631 = vpop.f32.mrf.mxu0
  %v1632 = vadd.f32 %v1583, %v1631
  %1633 = vmatmul.bf16.gmra.mxu0 %v564
  %v1634 = vpop.f32.mrf.mxu0
  %v1635 = vadd.f32 %v1586, %v1634
  %v1636 = vpop.f32.mrf.mxu0
  %v1637 = vadd.f32 %v1588, %v1636
  %1638 = vdwg.mxu0
  %1639 = vmatpush.bf16.msra.mxu0 %v1242
  %1640 = vmatpush.bf16.msra.mxu0 %v1239
  %1641 = vmatpush.bf16.msra.mxu0 %v1236
  %1642 = vmatpush.bf16.msra.mxu0 %v1233
  %1643 = vmatpush.bf16.msra.mxu0 %v1230
  %1644 = vmatpush.bf16.msra.mxu0 %v1227
  %1645 = vmatpush.bf16.msra.mxu0 %v1224
  %1646 = vmatpush.bf16.msra.mxu0 %v1221
  %1647 = vmatmul.bf16.gmra.mxu0 %v516
  %v1648 = vpop.f32.mrf.mxu0
  %v1649 = vadd.f32 %v1600, %v1648
  %v1650 = vpop.f32.mrf.mxu0
  %v1651 = vadd.f32 %v1602, %v1650
  %1652 = vmatmul.bf16.gmra.mxu0 %v523
  %v1653 = vpop.f32.mrf.mxu0
  %v1654 = vadd.f32 %v1605, %v1653
  %v1655 = vpop.f32.mrf.mxu0
  %v1656 = vadd.f32 %v1607, %v1655
  %1657 = vmatmul.bf16.gmra.mxu0 %v530
  %v1658 = vpop.f32.mrf.mxu0
  %v1659 = vadd.f32 %v1610, %v1658
  %v1660 = vpop.f32.mrf.mxu0
  %v1661 = vadd.f32 %v1612, %v1660
  %1662 = vmatmul.bf16.gmra.mxu0 %v537
  %v1663 = vpop.f32.mrf.mxu0
  %v1664 = vadd.f32 %v1615, %v1663
  %v1665 = vpop.f32.mrf.mxu0
  %v1666 = vadd.f32 %v1617, %v1665
  %1667 = vmatmul.bf16.gmra.mxu0 %v544
  %v1668 = vpop.f32.mrf.mxu0
  %v1669 = vadd.f32 %v1620, %v1668
  %v1670 = vpop.f32.mrf.mxu0
  %v1671 = vadd.f32 %v1622, %v1670
  %1672 = vmatmul.bf16.gmra.mxu0 %v551
  %v1673 = vpop.f32.mrf.mxu0
  %v1674 = vadd.f32 %v1625, %v1673
  %v1675 = vpop.f32.mrf.mxu0
  %v1676 = vadd.f32 %v1627, %v1675
  %1677 = vmatmul.bf16.gmra.mxu0 %v558
  %v1678 = vpop.f32.mrf.mxu0
  %v1679 = vadd.f32 %v1630, %v1678
  %v1680 = vpop.f32.mrf.mxu0
  %v1681 = vadd.f32 %v1632, %v1680
  %1682 = vmatmul.bf16.gmra.mxu0 %v565
  %v1683 = vpop.f32.mrf.mxu0
  %v1684 = vadd.f32 %v1635, %v1683
  %v1685 = vpop.f32.mrf.mxu0
  %v1686 = vadd.f32 %v1637, %v1685
  %1687 = vdwg.mxu0
  %1688 = vmatpush.bf16.msra.mxu0 %v1266
  %1689 = vmatpush.bf16.msra.mxu0 %v1263
  %1690 = vmatpush.bf16.msra.mxu0 %v1260
  %1691 = vmatpush.bf16.msra.mxu0 %v1257
  %1692 = vmatpush.bf16.msra.mxu0 %v1254
  %1693 = vmatpush.bf16.msra.mxu0 %v1251
  %1694 = vmatpush.bf16.msra.mxu0 %v1248
  %1695 = vmatpush.bf16.msra.mxu0 %v1245
  %1696 = vmatmul.bf16.gmra.mxu0 %v517
  %v1697 = vpop.f32.mrf.mxu0
  %v1698 = vadd.f32 %v1649, %v1697
  %v1699 = vpop.f32.mrf.mxu0
  %v1700 = vadd.f32 %v1651, %v1699
  %1701 = vmatmul.bf16.gmra.mxu0 %v524
  %v1702 = vpop.f32.mrf.mxu0
  %v1703 = vadd.f32 %v1654, %v1702
  %v1704 = vpop.f32.mrf.mxu0
  %v1705 = vadd.f32 %v1656, %v1704
  %1706 = vmatmul.bf16.gmra.mxu0 %v531
  %v1707 = vpop.f32.mrf.mxu0
  %v1708 = vadd.f32 %v1659, %v1707
  %v1709 = vpop.f32.mrf.mxu0
  %v1710 = vadd.f32 %v1661, %v1709
  %1711 = vmatmul.bf16.gmra.mxu0 %v538
  %v1712 = vpop.f32.mrf.mxu0
  %v1713 = vadd.f32 %v1664, %v1712
  %v1714 = vpop.f32.mrf.mxu0
  %v1715 = vadd.f32 %v1666, %v1714
  %1716 = vmatmul.bf16.gmra.mxu0 %v545
  %v1717 = vpop.f32.mrf.mxu0
  %v1718 = vadd.f32 %v1669, %v1717
  %v1719 = vpop.f32.mrf.mxu0
  %v1720 = vadd.f32 %v1671, %v1719
  %1721 = vmatmul.bf16.gmra.mxu0 %v552
  %v1722 = vpop.f32.mrf.mxu0
  %v1723 = vadd.f32 %v1674, %v1722
  %v1724 = vpop.f32.mrf.mxu0
  %v1725 = vadd.f32 %v1676, %v1724
  %1726 = vmatmul.bf16.gmra.mxu0 %v559
  %v1727 = vpop.f32.mrf.mxu0
  %v1728 = vadd.f32 %v1679, %v1727
  %v1729 = vpop.f32.mrf.mxu0
  %v1730 = vadd.f32 %v1681, %v1729
  %1731 = vmatmul.bf16.gmra.mxu0 %v566
  %v1732 = vpop.f32.mrf.mxu0
  %v1733 = vadd.f32 %v1684, %v1732
  %v1734 = vpop.f32.mrf.mxu0
  %v1735 = vadd.f32 %v1686, %v1734
  %1736 = vdwg.mxu0
  %1737 = vmatpush.bf16.msra.mxu0 %v1290
  %1738 = vmatpush.bf16.msra.mxu0 %v1287
  %1739 = vmatpush.bf16.msra.mxu0 %v1284
  %1740 = vmatpush.bf16.msra.mxu0 %v1281
  %1741 = vmatpush.bf16.msra.mxu0 %v1278
  %1742 = vmatpush.bf16.msra.mxu0 %v1275
  %1743 = vmatpush.bf16.msra.mxu0 %v1272
  %1744 = vmatpush.bf16.msra.mxu0 %v1269
  %1745 = vmatmul.bf16.gmra.mxu0 %v518
  %v1746 = vpop.f32.mrf.mxu0
  %v1747 = vadd.f32 %v1698, %v1746
  %v1748 = vpop.f32.mrf.mxu0
  %v1749 = vadd.f32 %v1700, %v1748
  %1750 = vmatmul.bf16.gmra.mxu0 %v525
  %v1751 = vpop.f32.mrf.mxu0
  %v1752 = vadd.f32 %v1703, %v1751
  %v1753 = vpop.f32.mrf.mxu0
  %v1754 = vadd.f32 %v1705, %v1753
  %1755 = vmatmul.bf16.gmra.mxu0 %v532
  %v1756 = vpop.f32.mrf.mxu0
  %v1757 = vadd.f32 %v1708, %v1756
  %v1758 = vpop.f32.mrf.mxu0
  %v1759 = vadd.f32 %v1710, %v1758
  %1760 = vmatmul.bf16.gmra.mxu0 %v539
  %v1761 = vpop.f32.mrf.mxu0
  %v1762 = vadd.f32 %v1713, %v1761
  %v1763 = vpop.f32.mrf.mxu0
  %v1764 = vadd.f32 %v1715, %v1763
  %1765 = vmatmul.bf16.gmra.mxu0 %v546
  %v1766 = vpop.f32.mrf.mxu0
  %v1767 = vadd.f32 %v1718, %v1766
  %v1768 = vpop.f32.mrf.mxu0
  %v1769 = vadd.f32 %v1720, %v1768
  %1770 = vmatmul.bf16.gmra.mxu0 %v553
  %v1771 = vpop.f32.mrf.mxu0
  %v1772 = vadd.f32 %v1723, %v1771
  %v1773 = vpop.f32.mrf.mxu0
  %v1774 = vadd.f32 %v1725, %v1773
  %1775 = vmatmul.bf16.gmra.mxu0 %v560
  %v1776 = vpop.f32.mrf.mxu0
  %v1777 = vadd.f32 %v1728, %v1776
  %v1778 = vpop.f32.mrf.mxu0
  %v1779 = vadd.f32 %v1730, %v1778
  %1780 = vmatmul.bf16.gmra.mxu0 %v567
  %v1781 = vpop.f32.mrf.mxu0
  %v1782 = vadd.f32 %v1733, %v1781
  %v1783 = vpop.f32.mrf.mxu0
  %v1784 = vadd.f32 %v1735, %v1783
  %1785 = vdwg.mxu0
  %1786 = vmatpush.bf16.msra.mxu0 %v1314
  %1787 = vmatpush.bf16.msra.mxu0 %v1311
  %1788 = vmatpush.bf16.msra.mxu0 %v1308
  %1789 = vmatpush.bf16.msra.mxu0 %v1305
  %1790 = vmatpush.bf16.msra.mxu0 %v1302
  %1791 = vmatpush.bf16.msra.mxu0 %v1299
  %1792 = vmatpush.bf16.msra.mxu0 %v1296
  %1793 = vmatpush.bf16.msra.mxu0 %v1293
  %1794 = vmatmul.bf16.gmra.mxu0 %v519
  %v1795 = vpop.f32.mrf.mxu0
  %v1796 = vadd.f32 %v1747, %v1795
  %v1797 = vpop.f32.mrf.mxu0
  %v1798 = vadd.f32 %v1749, %v1797
  %1799 = vmatmul.bf16.gmra.mxu0 %v526
  %v1800 = vpop.f32.mrf.mxu0
  %v1801 = vadd.f32 %v1752, %v1800
  %v1802 = vpop.f32.mrf.mxu0
  %v1803 = vadd.f32 %v1754, %v1802
  %1804 = vmatmul.bf16.gmra.mxu0 %v533
  %v1805 = vpop.f32.mrf.mxu0
  %v1806 = vadd.f32 %v1757, %v1805
  %v1807 = vpop.f32.mrf.mxu0
  %v1808 = vadd.f32 %v1759, %v1807
  %1809 = vmatmul.bf16.gmra.mxu0 %v540
  %v1810 = vpop.f32.mrf.mxu0
  %v1811 = vadd.f32 %v1762, %v1810
  %v1812 = vpop.f32.mrf.mxu0
  %v1813 = vadd.f32 %v1764, %v1812
  %1814 = vmatmul.bf16.gmra.mxu0 %v547
  %v1815 = vpop.f32.mrf.mxu0
  %v1816 = vadd.f32 %v1767, %v1815
  %v1817 = vpop.f32.mrf.mxu0
  %v1818 = vadd.f32 %v1769, %v1817
  %1819 = vmatmul.bf16.gmra.mxu0 %v554
  %v1820 = vpop.f32.mrf.mxu0
  %v1821 = vadd.f32 %v1772, %v1820
  %v1822 = vpop.f32.mrf.mxu0
  %v1823 = vadd.f32 %v1774, %v1822
  %1824 = vmatmul.bf16.gmra.mxu0 %v561
  %v1825 = vpop.f32.mrf.mxu0
  %v1826 = vadd.f32 %v1777, %v1825
  %v1827 = vpop.f32.mrf.mxu0
  %v1828 = vadd.f32 %v1779, %v1827
  %1829 = vmatmul.bf16.gmra.mxu0 %v568
  %v1830 = vpop.f32.mrf.mxu0
  %v1831 = vadd.f32 %v1782, %v1830
  %v1832 = vpop.f32.mrf.mxu0
  %v1833 = vadd.f32 %v1784, %v1832
  %1834 = vdwg.mxu0
  %1835 = vmatpush.bf16.msra.mxu0 %v1533
  %1836 = vmatpush.bf16.msra.mxu0 %v1335
  %1837 = vmatpush.bf16.msra.mxu0 %v1332
  %1838 = vmatpush.bf16.msra.mxu0 %v1329
  %1839 = vmatpush.bf16.msra.mxu0 %v1326
  %1840 = vmatpush.bf16.msra.mxu0 %v1323
  %1841 = vmatpush.bf16.msra.mxu0 %v1320
  %1842 = vmatpush.bf16.msra.mxu0 %v1317
  %1843 = vmatmul.bf16.gmra.mxu0 %v1508
  %v1844 = vpop.f32.mrf.mxu0
  %v1845 = vadd.f32 %v1796, %v1844
  %v1846 = vpop.f32.mrf.mxu0
  %v1847 = vadd.f32 %v1798, %v1846
  %1848 = vmatmul.bf16.gmra.mxu0 %v1511
  %v1849 = vpop.f32.mrf.mxu0
  %v1850 = vadd.f32 %v1801, %v1849
  %v1851 = vpop.f32.mrf.mxu0
  %v1852 = vadd.f32 %v1803, %v1851
  %1853 = vmatmul.bf16.gmra.mxu0 %v1514
  %v1854 = vpop.f32.mrf.mxu0
  %v1855 = vadd.f32 %v1806, %v1854
  %v1856 = vpop.f32.mrf.mxu0
  %v1857 = vadd.f32 %v1808, %v1856
  %1858 = vmatmul.bf16.gmra.mxu0 %v1517
  %v1859 = vpop.f32.mrf.mxu0
  %v1860 = vadd.f32 %v1811, %v1859
  %v1861 = vpop.f32.mrf.mxu0
  %v1862 = vadd.f32 %v1813, %v1861
  %1863 = vmatmul.bf16.gmra.mxu0 %v1520
  %v1864 = vpop.f32.mrf.mxu0
  %v1865 = vadd.f32 %v1816, %v1864
  %v1866 = vpop.f32.mrf.mxu0
  %v1867 = vadd.f32 %v1818, %v1866
  %1868 = vmatmul.bf16.gmra.mxu0 %v1523
  %v1869 = vpop.f32.mrf.mxu0
  %v1870 = vadd.f32 %v1821, %v1869
  %v1871 = vpop.f32.mrf.mxu0
  %v1872 = vadd.f32 %v1823, %v1871
  %1873 = vmatmul.bf16.gmra.mxu0 %v1526
  %v1874 = vpop.f32.mrf.mxu0
  %v1875 = vadd.f32 %v1826, %v1874
  %v1876 = vpop.f32.mrf.mxu0
  %v1877 = vadd.f32 %v1828, %v1876
  %1878 = vmatmul.bf16.gmra.mxu0 %v1529
  %v1879 = vpop.f32.mrf.mxu0
  %v1880 = vadd.f32 %v1831, %v1879
  %v1881 = vpop.f32.mrf.mxu0
  %v1882 = vadd.f32 %v1833, %v1881
  %1883 = vdwg.mxu0
  %1884 = vmatpush.bf16.msra.mxu0 %v1195
  %1885 = vmatpush.bf16.msra.mxu0 %v1192
  %1886 = vmatpush.bf16.msra.mxu0 %v1189
  %1887 = vmatpush.bf16.msra.mxu0 %v1186
  %1888 = vmatpush.bf16.msra.mxu0 %v1183
  %1889 = vmatpush.bf16.msra.mxu0 %v1180
  %1890 = vmatpush.bf16.msra.mxu0 %v1177
  %1891 = vmatpush.bf16.msra.mxu0 %v1174
  %1892 = vmatmul.bf16.gmra.mxu0 %v514
  %v1893 = vpop.f32.mrf.mxu0
  %v1894 = vadd.f32 %v333, %v1893
  %v1895 = vpop.f32.mrf.mxu0
  %v1896 = vadd.f32 %v333, %v1895
  %1897 = vmatmul.bf16.gmra.mxu0 %v521
  %v1898 = vpop.f32.mrf.mxu0
  %v1899 = vadd.f32 %v333, %v1898
  %v1900 = vpop.f32.mrf.mxu0
  %v1901 = vadd.f32 %v333, %v1900
  %1902 = vmatmul.bf16.gmra.mxu0 %v528
  %v1903 = vpop.f32.mrf.mxu0
  %v1904 = vadd.f32 %v333, %v1903
  %v1905 = vpop.f32.mrf.mxu0
  %v1906 = vadd.f32 %v333, %v1905
  %1907 = vmatmul.bf16.gmra.mxu0 %v535
  %v1908 = vpop.f32.mrf.mxu0
  %v1909 = vadd.f32 %v333, %v1908
  %v1910 = vpop.f32.mrf.mxu0
  %v1911 = vadd.f32 %v333, %v1910
  %1912 = vmatmul.bf16.gmra.mxu0 %v542
  %v1913 = vpop.f32.mrf.mxu0
  %v1914 = vadd.f32 %v333, %v1913
  %v1915 = vpop.f32.mrf.mxu0
  %v1916 = vadd.f32 %v333, %v1915
  %1917 = vmatmul.bf16.gmra.mxu0 %v549
  %v1918 = vpop.f32.mrf.mxu0
  %v1919 = vadd.f32 %v333, %v1918
  %v1920 = vpop.f32.mrf.mxu0
  %v1921 = vadd.f32 %v333, %v1920
  %1922 = vmatmul.bf16.gmra.mxu0 %v556
  %v1923 = vpop.f32.mrf.mxu0
  %v1924 = vadd.f32 %v333, %v1923
  %v1925 = vpop.f32.mrf.mxu0
  %v1926 = vadd.f32 %v333, %v1925
  %1927 = vmatmul.bf16.gmra.mxu0 %v563
  %v1928 = vpop.f32.mrf.mxu0
  %v1929 = vadd.f32 %v333, %v1928
  %v1930 = vpop.f32.mrf.mxu0
  %v1931 = vadd.f32 %v333, %v1930
  %1932 = vdwg.mxu0
  %1933 = vmatpush.bf16.msra.mxu0 %v1219
  %1934 = vmatpush.bf16.msra.mxu0 %v1216
  %1935 = vmatpush.bf16.msra.mxu0 %v1213
  %1936 = vmatpush.bf16.msra.mxu0 %v1210
  %1937 = vmatpush.bf16.msra.mxu0 %v1207
  %1938 = vmatpush.bf16.msra.mxu0 %v1204
  %1939 = vmatpush.bf16.msra.mxu0 %v1201
  %1940 = vmatpush.bf16.msra.mxu0 %v1198
  %1941 = vmatmul.bf16.gmra.mxu0 %v515
  %v1942 = vpop.f32.mrf.mxu0
  %v1943 = vadd.f32 %v1894, %v1942
  %v1944 = vpop.f32.mrf.mxu0
  %v1945 = vadd.f32 %v1896, %v1944
  %1946 = vmatmul.bf16.gmra.mxu0 %v522
  %v1947 = vpop.f32.mrf.mxu0
  %v1948 = vadd.f32 %v1899, %v1947
  %v1949 = vpop.f32.mrf.mxu0
  %v1950 = vadd.f32 %v1901, %v1949
  %1951 = vmatmul.bf16.gmra.mxu0 %v529
  %v1952 = vpop.f32.mrf.mxu0
  %v1953 = vadd.f32 %v1904, %v1952
  %v1954 = vpop.f32.mrf.mxu0
  %v1955 = vadd.f32 %v1906, %v1954
  %1956 = vmatmul.bf16.gmra.mxu0 %v536
  %v1957 = vpop.f32.mrf.mxu0
  %v1958 = vadd.f32 %v1909, %v1957
  %v1959 = vpop.f32.mrf.mxu0
  %v1960 = vadd.f32 %v1911, %v1959
  %1961 = vmatmul.bf16.gmra.mxu0 %v543
  %v1962 = vpop.f32.mrf.mxu0
  %v1963 = vadd.f32 %v1914, %v1962
  %v1964 = vpop.f32.mrf.mxu0
  %v1965 = vadd.f32 %v1916, %v1964
  %1966 = vmatmul.bf16.gmra.mxu0 %v550
  %v1967 = vpop.f32.mrf.mxu0
  %v1968 = vadd.f32 %v1919, %v1967
  %v1969 = vpop.f32.mrf.mxu0
  %v1970 = vadd.f32 %v1921, %v1969
  %1971 = vmatmul.bf16.gmra.mxu0 %v557
  %v1972 = vpop.f32.mrf.mxu0
  %v1973 = vadd.f32 %v1924, %v1972
  %v1974 = vpop.f32.mrf.mxu0
  %v1975 = vadd.f32 %v1926, %v1974
  %1976 = vmatmul.bf16.gmra.mxu0 %v564
  %v1977 = vpop.f32.mrf.mxu0
  %v1978 = vadd.f32 %v1929, %v1977
  %v1979 = vpop.f32.mrf.mxu0
  %v1980 = vadd.f32 %v1931, %v1979
  %1981 = vdwg.mxu0
  %1982 = vmatpush.bf16.msra.mxu0 %v1243
  %1983 = vmatpush.bf16.msra.mxu0 %v1240
  %1984 = vmatpush.bf16.msra.mxu0 %v1237
  %1985 = vmatpush.bf16.msra.mxu0 %v1234
  %1986 = vmatpush.bf16.msra.mxu0 %v1231
  %1987 = vmatpush.bf16.msra.mxu0 %v1228
  %1988 = vmatpush.bf16.msra.mxu0 %v1225
  %1989 = vmatpush.bf16.msra.mxu0 %v1222
  %1990 = vmatmul.bf16.gmra.mxu0 %v516
  %v1991 = vpop.f32.mrf.mxu0
  %v1992 = vadd.f32 %v1943, %v1991
  %v1993 = vpop.f32.mrf.mxu0
  %v1994 = vadd.f32 %v1945, %v1993
  %1995 = vmatmul.bf16.gmra.mxu0 %v523
  %v1996 = vpop.f32.mrf.mxu0
  %v1997 = vadd.f32 %v1948, %v1996
  %v1998 = vpop.f32.mrf.mxu0
  %v1999 = vadd.f32 %v1950, %v1998
  %2000 = vmatmul.bf16.gmra.mxu0 %v530
  %v2001 = vpop.f32.mrf.mxu0
  %v2002 = vadd.f32 %v1953, %v2001
  %v2003 = vpop.f32.mrf.mxu0
  %v2004 = vadd.f32 %v1955, %v2003
  %2005 = vmatmul.bf16.gmra.mxu0 %v537
  %v2006 = vpop.f32.mrf.mxu0
  %v2007 = vadd.f32 %v1958, %v2006
  %v2008 = vpop.f32.mrf.mxu0
  %v2009 = vadd.f32 %v1960, %v2008
  %2010 = vmatmul.bf16.gmra.mxu0 %v544
  %v2011 = vpop.f32.mrf.mxu0
  %v2012 = vadd.f32 %v1963, %v2011
  %v2013 = vpop.f32.mrf.mxu0
  %v2014 = vadd.f32 %v1965, %v2013
  %2015 = vmatmul.bf16.gmra.mxu0 %v551
  %v2016 = vpop.f32.mrf.mxu0
  %v2017 = vadd.f32 %v1968, %v2016
  %v2018 = vpop.f32.mrf.mxu0
  %v2019 = vadd.f32 %v1970, %v2018
  %2020 = vmatmul.bf16.gmra.mxu0 %v558
  %v2021 = vpop.f32.mrf.mxu0
  %v2022 = vadd.f32 %v1973, %v2021
  %v2023 = vpop.f32.mrf.mxu0
  %v2024 = vadd.f32 %v1975, %v2023
  %2025 = vmatmul.bf16.gmra.mxu0 %v565
  %v2026 = vpop.f32.mrf.mxu0
  %v2027 = vadd.f32 %v1978, %v2026
  %v2028 = vpop.f32.mrf.mxu0
  %v2029 = vadd.f32 %v1980, %v2028
  %2030 = vdwg.mxu0
  %2031 = vmatpush.bf16.msra.mxu0 %v1267
  %2032 = vmatpush.bf16.msra.mxu0 %v1264
  %2033 = vmatpush.bf16.msra.mxu0 %v1261
  %2034 = vmatpush.bf16.msra.mxu0 %v1258
  %2035 = vmatpush.bf16.msra.mxu0 %v1255
  %2036 = vmatpush.bf16.msra.mxu0 %v1252
  %2037 = vmatpush.bf16.msra.mxu0 %v1249
  %2038 = vmatpush.bf16.msra.mxu0 %v1246
  %2039 = vmatmul.bf16.gmra.mxu0 %v517
  %v2040 = vpop.f32.mrf.mxu0
  %v2041 = vadd.f32 %v1992, %v2040
  %v2042 = vpop.f32.mrf.mxu0
  %v2043 = vadd.f32 %v1994, %v2042
  %2044 = vmatmul.bf16.gmra.mxu0 %v524
  %v2045 = vpop.f32.mrf.mxu0
  %v2046 = vadd.f32 %v1997, %v2045
  %v2047 = vpop.f32.mrf.mxu0
  %v2048 = vadd.f32 %v1999, %v2047
  %2049 = vmatmul.bf16.gmra.mxu0 %v531
  %v2050 = vpop.f32.mrf.mxu0
  %v2051 = vadd.f32 %v2002, %v2050
  %v2052 = vpop.f32.mrf.mxu0
  %v2053 = vadd.f32 %v2004, %v2052
  %2054 = vmatmul.bf16.gmra.mxu0 %v538
  %v2055 = vpop.f32.mrf.mxu0
  %v2056 = vadd.f32 %v2007, %v2055
  %v2057 = vpop.f32.mrf.mxu0
  %v2058 = vadd.f32 %v2009, %v2057
  %2059 = vmatmul.bf16.gmra.mxu0 %v545
  %v2060 = vpop.f32.mrf.mxu0
  %v2061 = vadd.f32 %v2012, %v2060
  %v2062 = vpop.f32.mrf.mxu0
  %v2063 = vadd.f32 %v2014, %v2062
  %2064 = vmatmul.bf16.gmra.mxu0 %v552
  %v2065 = vpop.f32.mrf.mxu0
  %v2066 = vadd.f32 %v2017, %v2065
  %v2067 = vpop.f32.mrf.mxu0
  %v2068 = vadd.f32 %v2019, %v2067
  %2069 = vmatmul.bf16.gmra.mxu0 %v559
  %v2070 = vpop.f32.mrf.mxu0
  %v2071 = vadd.f32 %v2022, %v2070
  %v2072 = vpop.f32.mrf.mxu0
  %v2073 = vadd.f32 %v2024, %v2072
  %2074 = vmatmul.bf16.gmra.mxu0 %v566
  %v2075 = vpop.f32.mrf.mxu0
  %v2076 = vadd.f32 %v2027, %v2075
  %v2077 = vpop.f32.mrf.mxu0
  %v2078 = vadd.f32 %v2029, %v2077
  %2079 = vdwg.mxu0
  %2080 = vmatpush.bf16.msra.mxu0 %v1291
  %2081 = vmatpush.bf16.msra.mxu0 %v1288
  %2082 = vmatpush.bf16.msra.mxu0 %v1285
  %2083 = vmatpush.bf16.msra.mxu0 %v1282
  %2084 = vmatpush.bf16.msra.mxu0 %v1279
  %2085 = vmatpush.bf16.msra.mxu0 %v1276
  %2086 = vmatpush.bf16.msra.mxu0 %v1273
  %2087 = vmatpush.bf16.msra.mxu0 %v1270
  %2088 = vmatmul.bf16.gmra.mxu0 %v518
  %v2089 = vpop.f32.mrf.mxu0
  %v2090 = vadd.f32 %v2041, %v2089
  %v2091 = vpop.f32.mrf.mxu0
  %v2092 = vadd.f32 %v2043, %v2091
  %2093 = vmatmul.bf16.gmra.mxu0 %v525
  %v2094 = vpop.f32.mrf.mxu0
  %v2095 = vadd.f32 %v2046, %v2094
  %v2096 = vpop.f32.mrf.mxu0
  %v2097 = vadd.f32 %v2048, %v2096
  %2098 = vmatmul.bf16.gmra.mxu0 %v532
  %v2099 = vpop.f32.mrf.mxu0
  %v2100 = vadd.f32 %v2051, %v2099
  %v2101 = vpop.f32.mrf.mxu0
  %v2102 = vadd.f32 %v2053, %v2101
  %2103 = vmatmul.bf16.gmra.mxu0 %v539
  %v2104 = vpop.f32.mrf.mxu0
  %v2105 = vadd.f32 %v2056, %v2104
  %v2106 = vpop.f32.mrf.mxu0
  %v2107 = vadd.f32 %v2058, %v2106
  %2108 = vmatmul.bf16.gmra.mxu0 %v546
  %v2109 = vpop.f32.mrf.mxu0
  %v2110 = vadd.f32 %v2061, %v2109
  %v2111 = vpop.f32.mrf.mxu0
  %v2112 = vadd.f32 %v2063, %v2111
  %2113 = vmatmul.bf16.gmra.mxu0 %v553
  %v2114 = vpop.f32.mrf.mxu0
  %v2115 = vadd.f32 %v2066, %v2114
  %v2116 = vpop.f32.mrf.mxu0
  %v2117 = vadd.f32 %v2068, %v2116
  %2118 = vmatmul.bf16.gmra.mxu0 %v560
  %v2119 = vpop.f32.mrf.mxu0
  %v2120 = vadd.f32 %v2071, %v2119
  %v2121 = vpop.f32.mrf.mxu0
  %v2122 = vadd.f32 %v2073, %v2121
  %2123 = vmatmul.bf16.gmra.mxu0 %v567
  %v2124 = vpop.f32.mrf.mxu0
  %v2125 = vadd.f32 %v2076, %v2124
  %v2126 = vpop.f32.mrf.mxu0
  %v2127 = vadd.f32 %v2078, %v2126
  %2128 = vdwg.mxu0
  %2129 = vmatpush.bf16.msra.mxu0 %v1315
  %2130 = vmatpush.bf16.msra.mxu0 %v1312
  %2131 = vmatpush.bf16.msra.mxu0 %v1309
  %2132 = vmatpush.bf16.msra.mxu0 %v1306
  %2133 = vmatpush.bf16.msra.mxu0 %v1303
  %2134 = vmatpush.bf16.msra.mxu0 %v1300
  %2135 = vmatpush.bf16.msra.mxu0 %v1297
  %2136 = vmatpush.bf16.msra.mxu0 %v1294
  %2137 = vmatmul.bf16.gmra.mxu0 %v519
  %v2138 = vpop.f32.mrf.mxu0
  %v2139 = vadd.f32 %v2090, %v2138
  %v2140 = vpop.f32.mrf.mxu0
  %v2141 = vadd.f32 %v2092, %v2140
  %2142 = vmatmul.bf16.gmra.mxu0 %v526
  %v2143 = vpop.f32.mrf.mxu0
  %v2144 = vadd.f32 %v2095, %v2143
  %v2145 = vpop.f32.mrf.mxu0
  %v2146 = vadd.f32 %v2097, %v2145
  %2147 = vmatmul.bf16.gmra.mxu0 %v533
  %v2148 = vpop.f32.mrf.mxu0
  %v2149 = vadd.f32 %v2100, %v2148
  %v2150 = vpop.f32.mrf.mxu0
  %v2151 = vadd.f32 %v2102, %v2150
  %2152 = vmatmul.bf16.gmra.mxu0 %v540
  %v2153 = vpop.f32.mrf.mxu0
  %v2154 = vadd.f32 %v2105, %v2153
  %v2155 = vpop.f32.mrf.mxu0
  %v2156 = vadd.f32 %v2107, %v2155
  %2157 = vmatmul.bf16.gmra.mxu0 %v547
  %v2158 = vpop.f32.mrf.mxu0
  %v2159 = vadd.f32 %v2110, %v2158
  %v2160 = vpop.f32.mrf.mxu0
  %v2161 = vadd.f32 %v2112, %v2160
  %2162 = vmatmul.bf16.gmra.mxu0 %v554
  %v2163 = vpop.f32.mrf.mxu0
  %v2164 = vadd.f32 %v2115, %v2163
  %v2165 = vpop.f32.mrf.mxu0
  %v2166 = vadd.f32 %v2117, %v2165
  %2167 = vmatmul.bf16.gmra.mxu0 %v561
  %v2168 = vpop.f32.mrf.mxu0
  %v2169 = vadd.f32 %v2120, %v2168
  %v2170 = vpop.f32.mrf.mxu0
  %v2171 = vadd.f32 %v2122, %v2170
  %2172 = vmatmul.bf16.gmra.mxu0 %v568
  %v2173 = vpop.f32.mrf.mxu0
  %v2174 = vadd.f32 %v2125, %v2173
  %v2175 = vpop.f32.mrf.mxu0
  %v2176 = vadd.f32 %v2127, %v2175
  %2177 = vdwg.mxu0
  %2178 = vmatpush.bf16.msra.mxu0 %v1536
  %2179 = vmatpush.bf16.msra.mxu0 %v1336
  %2180 = vmatpush.bf16.msra.mxu0 %v1333
  %2181 = vmatpush.bf16.msra.mxu0 %v1330
  %2182 = vmatpush.bf16.msra.mxu0 %v1327
  %2183 = vmatpush.bf16.msra.mxu0 %v1324
  %2184 = vmatpush.bf16.msra.mxu0 %v1321
  %2185 = vmatpush.bf16.msra.mxu0 %v1318
  %2186 = vmatmul.bf16.gmra.mxu0 %v1508
  %v2187 = vpop.f32.mrf.mxu0
  %v2188 = vadd.f32 %v2139, %v2187
  %v2189 = vpop.f32.mrf.mxu0
  %v2190 = vadd.f32 %v2141, %v2189
  %2191 = vmatmul.bf16.gmra.mxu0 %v1511
  %v2192 = vpop.f32.mrf.mxu0
  %v2193 = vadd.f32 %v2144, %v2192
  %v2194 = vpop.f32.mrf.mxu0
  %v2195 = vadd.f32 %v2146, %v2194
  %2196 = vmatmul.bf16.gmra.mxu0 %v1514
  %v2197 = vpop.f32.mrf.mxu0
  %v2198 = vadd.f32 %v2149, %v2197
  %v2199 = vpop.f32.mrf.mxu0
  %v2200 = vadd.f32 %v2151, %v2199
  %2201 = vmatmul.bf16.gmra.mxu0 %v1517
  %v2202 = vpop.f32.mrf.mxu0
  %v2203 = vadd.f32 %v2154, %v2202
  %v2204 = vpop.f32.mrf.mxu0
  %v2205 = vadd.f32 %v2156, %v2204
  %2206 = vmatmul.bf16.gmra.mxu0 %v1520
  %v2207 = vpop.f32.mrf.mxu0
  %v2208 = vadd.f32 %v2159, %v2207
  %v2209 = vpop.f32.mrf.mxu0
  %v2210 = vadd.f32 %v2161, %v2209
  %2211 = vmatmul.bf16.gmra.mxu0 %v1523
  %v2212 = vpop.f32.mrf.mxu0
  %v2213 = vadd.f32 %v2164, %v2212
  %v2214 = vpop.f32.mrf.mxu0
  %v2215 = vadd.f32 %v2166, %v2214
  %2216 = vmatmul.bf16.gmra.mxu0 %v1526
  %v2217 = vpop.f32.mrf.mxu0
  %v2218 = vadd.f32 %v2169, %v2217
  %v2219 = vpop.f32.mrf.mxu0
  %v2220 = vadd.f32 %v2171, %v2219
  %2221 = vmatmul.bf16.gmra.mxu0 %v1529
  %v2222 = vpop.f32.mrf.mxu0
  %v2223 = vadd.f32 %v2174, %v2222
  %v2224 = vpop.f32.mrf.mxu0
  %v2225 = vadd.f32 %v2176, %v2224
  %2226 = vdwg.mxu0
  %2227 = vmatpush.bf16.msra.mxu0 %v1196
  %2228 = vmatpush.bf16.msra.mxu0 %v1193
  %2229 = vmatpush.bf16.msra.mxu0 %v1190
  %2230 = vmatpush.bf16.msra.mxu0 %v1187
  %2231 = vmatpush.bf16.msra.mxu0 %v1184
  %2232 = vmatpush.bf16.msra.mxu0 %v1181
  %2233 = vmatpush.bf16.msra.mxu0 %v1178
  %2234 = vmatpush.bf16.msra.mxu0 %v1175
  %2235 = vmatmul.bf16.gmra.mxu0 %v514
  %v2236 = vpop.f32.mrf.mxu0
  %v2237 = vadd.f32 %v334, %v2236
  %v2238 = vpop.f32.mrf.mxu0
  %v2239 = vadd.f32 %v334, %v2238
  %2240 = vmatmul.bf16.gmra.mxu0 %v521
  %v2241 = vpop.f32.mrf.mxu0
  %v2242 = vadd.f32 %v334, %v2241
  %v2243 = vpop.f32.mrf.mxu0
  %v2244 = vadd.f32 %v334, %v2243
  %2245 = vmatmul.bf16.gmra.mxu0 %v528
  %v2246 = vpop.f32.mrf.mxu0
  %v2247 = vadd.f32 %v334, %v2246
  %v2248 = vpop.f32.mrf.mxu0
  %v2249 = vadd.f32 %v334, %v2248
  %2250 = vmatmul.bf16.gmra.mxu0 %v535
  %v2251 = vpop.f32.mrf.mxu0
  %v2252 = vadd.f32 %v334, %v2251
  %v2253 = vpop.f32.mrf.mxu0
  %v2254 = vadd.f32 %v334, %v2253
  %2255 = vmatmul.bf16.gmra.mxu0 %v542
  %v2256 = vpop.f32.mrf.mxu0
  %v2257 = vadd.f32 %v334, %v2256
  %v2258 = vpop.f32.mrf.mxu0
  %v2259 = vadd.f32 %v334, %v2258
  %2260 = vmatmul.bf16.gmra.mxu0 %v549
  %v2261 = vpop.f32.mrf.mxu0
  %v2262 = vadd.f32 %v334, %v2261
  %v2263 = vpop.f32.mrf.mxu0
  %v2264 = vadd.f32 %v334, %v2263
  %2265 = vmatmul.bf16.gmra.mxu0 %v556
  %v2266 = vpop.f32.mrf.mxu0
  %v2267 = vadd.f32 %v334, %v2266
  %v2268 = vpop.f32.mrf.mxu0
  %v2269 = vadd.f32 %v334, %v2268
  %2270 = vmatmul.bf16.gmra.mxu0 %v563
  %v2271 = vpop.f32.mrf.mxu0
  %v2272 = vadd.f32 %v334, %v2271
  %v2273 = vpop.f32.mrf.mxu0
  %v2274 = vadd.f32 %v334, %v2273
  %2275 = vdwg.mxu0
  %2276 = vmatpush.bf16.msra.mxu0 %v1220
  %2277 = vmatpush.bf16.msra.mxu0 %v1217
  %2278 = vmatpush.bf16.msra.mxu0 %v1214
  %2279 = vmatpush.bf16.msra.mxu0 %v1211
  %2280 = vmatpush.bf16.msra.mxu0 %v1208
  %2281 = vmatpush.bf16.msra.mxu0 %v1205
  %2282 = vmatpush.bf16.msra.mxu0 %v1202
  %2283 = vmatpush.bf16.msra.mxu0 %v1199
  %2284 = vmatmul.bf16.gmra.mxu0 %v515
  %v2285 = vpop.f32.mrf.mxu0
  %v2286 = vadd.f32 %v2237, %v2285
  %v2287 = vpop.f32.mrf.mxu0
  %v2288 = vadd.f32 %v2239, %v2287
  %2289 = vmatmul.bf16.gmra.mxu0 %v522
  %v2290 = vpop.f32.mrf.mxu0
  %v2291 = vadd.f32 %v2242, %v2290
  %v2292 = vpop.f32.mrf.mxu0
  %v2293 = vadd.f32 %v2244, %v2292
  %2294 = vmatmul.bf16.gmra.mxu0 %v529
  %v2295 = vpop.f32.mrf.mxu0
  %v2296 = vadd.f32 %v2247, %v2295
  %v2297 = vpop.f32.mrf.mxu0
  %v2298 = vadd.f32 %v2249, %v2297
  %2299 = vmatmul.bf16.gmra.mxu0 %v536
  %v2300 = vpop.f32.mrf.mxu0
  %v2301 = vadd.f32 %v2252, %v2300
  %v2302 = vpop.f32.mrf.mxu0
  %v2303 = vadd.f32 %v2254, %v2302
  %2304 = vmatmul.bf16.gmra.mxu0 %v543
  %v2305 = vpop.f32.mrf.mxu0
  %v2306 = vadd.f32 %v2257, %v2305
  %v2307 = vpop.f32.mrf.mxu0
  %v2308 = vadd.f32 %v2259, %v2307
  %2309 = vmatmul.bf16.gmra.mxu0 %v550
  %v2310 = vpop.f32.mrf.mxu0
  %v2311 = vadd.f32 %v2262, %v2310
  %v2312 = vpop.f32.mrf.mxu0
  %v2313 = vadd.f32 %v2264, %v2312
  %2314 = vmatmul.bf16.gmra.mxu0 %v557
  %v2315 = vpop.f32.mrf.mxu0
  %v2316 = vadd.f32 %v2267, %v2315
  %v2317 = vpop.f32.mrf.mxu0
  %v2318 = vadd.f32 %v2269, %v2317
  %2319 = vmatmul.bf16.gmra.mxu0 %v564
  %v2320 = vpop.f32.mrf.mxu0
  %v2321 = vadd.f32 %v2272, %v2320
  %v2322 = vpop.f32.mrf.mxu0
  %v2323 = vadd.f32 %v2274, %v2322
  %2324 = vdwg.mxu0
  %2325 = vmatpush.bf16.msra.mxu0 %v1244
  %2326 = vmatpush.bf16.msra.mxu0 %v1241
  %2327 = vmatpush.bf16.msra.mxu0 %v1238
  %2328 = vmatpush.bf16.msra.mxu0 %v1235
  %2329 = vmatpush.bf16.msra.mxu0 %v1232
  %2330 = vmatpush.bf16.msra.mxu0 %v1229
  %2331 = vmatpush.bf16.msra.mxu0 %v1226
  %2332 = vmatpush.bf16.msra.mxu0 %v1223
  %2333 = vmatmul.bf16.gmra.mxu0 %v516
  %v2334 = vpop.f32.mrf.mxu0
  %v2335 = vadd.f32 %v2286, %v2334
  %v2336 = vpop.f32.mrf.mxu0
  %v2337 = vadd.f32 %v2288, %v2336
  %2338 = vmatmul.bf16.gmra.mxu0 %v523
  %v2339 = vpop.f32.mrf.mxu0
  %v2340 = vadd.f32 %v2291, %v2339
  %v2341 = vpop.f32.mrf.mxu0
  %v2342 = vadd.f32 %v2293, %v2341
  %2343 = vmatmul.bf16.gmra.mxu0 %v530
  %v2344 = vpop.f32.mrf.mxu0
  %v2345 = vadd.f32 %v2296, %v2344
  %v2346 = vpop.f32.mrf.mxu0
  %v2347 = vadd.f32 %v2298, %v2346
  %2348 = vmatmul.bf16.gmra.mxu0 %v537
  %v2349 = vpop.f32.mrf.mxu0
  %v2350 = vadd.f32 %v2301, %v2349
  %v2351 = vpop.f32.mrf.mxu0
  %v2352 = vadd.f32 %v2303, %v2351
  %2353 = vmatmul.bf16.gmra.mxu0 %v544
  %v2354 = vpop.f32.mrf.mxu0
  %v2355 = vadd.f32 %v2306, %v2354
  %v2356 = vpop.f32.mrf.mxu0
  %v2357 = vadd.f32 %v2308, %v2356
  %2358 = vmatmul.bf16.gmra.mxu0 %v551
  %v2359 = vpop.f32.mrf.mxu0
  %v2360 = vadd.f32 %v2311, %v2359
  %v2361 = vpop.f32.mrf.mxu0
  %v2362 = vadd.f32 %v2313, %v2361
  %2363 = vmatmul.bf16.gmra.mxu0 %v558
  %v2364 = vpop.f32.mrf.mxu0
  %v2365 = vadd.f32 %v2316, %v2364
  %v2366 = vpop.f32.mrf.mxu0
  %v2367 = vadd.f32 %v2318, %v2366
  %2368 = vmatmul.bf16.gmra.mxu0 %v565
  %v2369 = vpop.f32.mrf.mxu0
  %v2370 = vadd.f32 %v2321, %v2369
  %v2371 = vpop.f32.mrf.mxu0
  %v2372 = vadd.f32 %v2323, %v2371
  %2373 = vdwg.mxu0
  %2374 = vmatpush.bf16.msra.mxu0 %v1268
  %2375 = vmatpush.bf16.msra.mxu0 %v1265
  %2376 = vmatpush.bf16.msra.mxu0 %v1262
  %2377 = vmatpush.bf16.msra.mxu0 %v1259
  %2378 = vmatpush.bf16.msra.mxu0 %v1256
  %2379 = vmatpush.bf16.msra.mxu0 %v1253
  %2380 = vmatpush.bf16.msra.mxu0 %v1250
  %2381 = vmatpush.bf16.msra.mxu0 %v1247
  %2382 = vmatmul.bf16.gmra.mxu0 %v517
  %v2383 = vpop.f32.mrf.mxu0
  %v2384 = vadd.f32 %v2335, %v2383
  %v2385 = vpop.f32.mrf.mxu0
  %v2386 = vadd.f32 %v2337, %v2385
  %2387 = vmatmul.bf16.gmra.mxu0 %v524
  %v2388 = vpop.f32.mrf.mxu0
  %v2389 = vadd.f32 %v2340, %v2388
  %v2390 = vpop.f32.mrf.mxu0
  %v2391 = vadd.f32 %v2342, %v2390
  %2392 = vmatmul.bf16.gmra.mxu0 %v531
  %v2393 = vpop.f32.mrf.mxu0
  %v2394 = vadd.f32 %v2345, %v2393
  %v2395 = vpop.f32.mrf.mxu0
  %v2396 = vadd.f32 %v2347, %v2395
  %2397 = vmatmul.bf16.gmra.mxu0 %v538
  %v2398 = vpop.f32.mrf.mxu0
  %v2399 = vadd.f32 %v2350, %v2398
  %v2400 = vpop.f32.mrf.mxu0
  %v2401 = vadd.f32 %v2352, %v2400
  %2402 = vmatmul.bf16.gmra.mxu0 %v545
  %v2403 = vpop.f32.mrf.mxu0
  %v2404 = vadd.f32 %v2355, %v2403
  %v2405 = vpop.f32.mrf.mxu0
  %v2406 = vadd.f32 %v2357, %v2405
  %2407 = vmatmul.bf16.gmra.mxu0 %v552
  %v2408 = vpop.f32.mrf.mxu0
  %v2409 = vadd.f32 %v2360, %v2408
  %v2410 = vpop.f32.mrf.mxu0
  %v2411 = vadd.f32 %v2362, %v2410
  %2412 = vmatmul.bf16.gmra.mxu0 %v559
  %v2413 = vpop.f32.mrf.mxu0
  %v2414 = vadd.f32 %v2365, %v2413
  %v2415 = vpop.f32.mrf.mxu0
  %v2416 = vadd.f32 %v2367, %v2415
  %2417 = vmatmul.bf16.gmra.mxu0 %v566
  %v2418 = vpop.f32.mrf.mxu0
  %v2419 = vadd.f32 %v2370, %v2418
  %v2420 = vpop.f32.mrf.mxu0
  %v2421 = vadd.f32 %v2372, %v2420
  %2422 = vdwg.mxu0
  %2423 = vmatpush.bf16.msra.mxu0 %v1292
  %2424 = vmatpush.bf16.msra.mxu0 %v1289
  %2425 = vmatpush.bf16.msra.mxu0 %v1286
  %2426 = vmatpush.bf16.msra.mxu0 %v1283
  %2427 = vmatpush.bf16.msra.mxu0 %v1280
  %2428 = vmatpush.bf16.msra.mxu0 %v1277
  %2429 = vmatpush.bf16.msra.mxu0 %v1274
  %2430 = vmatpush.bf16.msra.mxu0 %v1271
  %2431 = vmatmul.bf16.gmra.mxu0 %v518
  %v2432 = vpop.f32.mrf.mxu0
  %v2433 = vadd.f32 %v2384, %v2432
  %v2434 = vpop.f32.mrf.mxu0
  %v2435 = vadd.f32 %v2386, %v2434
  %2436 = vmatmul.bf16.gmra.mxu0 %v525
  %v2437 = vpop.f32.mrf.mxu0
  %v2438 = vadd.f32 %v2389, %v2437
  %v2439 = vpop.f32.mrf.mxu0
  %v2440 = vadd.f32 %v2391, %v2439
  %2441 = vmatmul.bf16.gmra.mxu0 %v532
  %v2442 = vpop.f32.mrf.mxu0
  %v2443 = vadd.f32 %v2394, %v2442
  %v2444 = vpop.f32.mrf.mxu0
  %v2445 = vadd.f32 %v2396, %v2444
  %2446 = vmatmul.bf16.gmra.mxu0 %v539
  %v2447 = vpop.f32.mrf.mxu0
  %v2448 = vadd.f32 %v2399, %v2447
  %v2449 = vpop.f32.mrf.mxu0
  %v2450 = vadd.f32 %v2401, %v2449
  %2451 = vmatmul.bf16.gmra.mxu0 %v546
  %v2452 = vpop.f32.mrf.mxu0
  %v2453 = vadd.f32 %v2404, %v2452
  %v2454 = vpop.f32.mrf.mxu0
  %v2455 = vadd.f32 %v2406, %v2454
  %2456 = vmatmul.bf16.gmra.mxu0 %v553
  %v2457 = vpop.f32.mrf.mxu0
  %v2458 = vadd.f32 %v2409, %v2457
  %v2459 = vpop.f32.mrf.mxu0
  %v2460 = vadd.f32 %v2411, %v2459
  %2461 = vmatmul.bf16.gmra.mxu0 %v560
  %v2462 = vpop.f32.mrf.mxu0
  %v2463 = vadd.f32 %v2414, %v2462
  %v2464 = vpop.f32.mrf.mxu0
  %v2465 = vadd.f32 %v2416, %v2464
  %2466 = vmatmul.bf16.gmra.mxu0 %v567
  %v2467 = vpop.f32.mrf.mxu0
  %v2468 = vadd.f32 %v2419, %v2467
  %v2469 = vpop.f32.mrf.mxu0
  %v2470 = vadd.f32 %v2421, %v2469
  %2471 = vdwg.mxu0
  %2472 = vmatpush.bf16.msra.mxu0 %v1316
  %2473 = vmatpush.bf16.msra.mxu0 %v1313
  %2474 = vmatpush.bf16.msra.mxu0 %v1310
  %2475 = vmatpush.bf16.msra.mxu0 %v1307
  %2476 = vmatpush.bf16.msra.mxu0 %v1304
  %2477 = vmatpush.bf16.msra.mxu0 %v1301
  %2478 = vmatpush.bf16.msra.mxu0 %v1298
  %2479 = vmatpush.bf16.msra.mxu0 %v1295
  %2480 = vmatmul.bf16.gmra.mxu0 %v519
  %v2481 = vpop.f32.mrf.mxu0
  %v2482 = vadd.f32 %v2433, %v2481
  %v2483 = vpop.f32.mrf.mxu0
  %v2484 = vadd.f32 %v2435, %v2483
  %2485 = vmatmul.bf16.gmra.mxu0 %v526
  %v2486 = vpop.f32.mrf.mxu0
  %v2487 = vadd.f32 %v2438, %v2486
  %v2488 = vpop.f32.mrf.mxu0
  %v2489 = vadd.f32 %v2440, %v2488
  %2490 = vmatmul.bf16.gmra.mxu0 %v533
  %v2491 = vpop.f32.mrf.mxu0
  %v2492 = vadd.f32 %v2443, %v2491
  %v2493 = vpop.f32.mrf.mxu0
  %v2494 = vadd.f32 %v2445, %v2493
  %2495 = vmatmul.bf16.gmra.mxu0 %v540
  %v2496 = vpop.f32.mrf.mxu0
  %v2497 = vadd.f32 %v2448, %v2496
  %v2498 = vpop.f32.mrf.mxu0
  %v2499 = vadd.f32 %v2450, %v2498
  %2500 = vmatmul.bf16.gmra.mxu0 %v547
  %v2501 = vpop.f32.mrf.mxu0
  %v2502 = vadd.f32 %v2453, %v2501
  %v2503 = vpop.f32.mrf.mxu0
  %v2504 = vadd.f32 %v2455, %v2503
  %2505 = vmatmul.bf16.gmra.mxu0 %v554
  %v2506 = vpop.f32.mrf.mxu0
  %v2507 = vadd.f32 %v2458, %v2506
  %v2508 = vpop.f32.mrf.mxu0
  %v2509 = vadd.f32 %v2460, %v2508
  %2510 = vmatmul.bf16.gmra.mxu0 %v561
  %v2511 = vpop.f32.mrf.mxu0
  %v2512 = vadd.f32 %v2463, %v2511
  %v2513 = vpop.f32.mrf.mxu0
  %v2514 = vadd.f32 %v2465, %v2513
  %2515 = vmatmul.bf16.gmra.mxu0 %v568
  %v2516 = vpop.f32.mrf.mxu0
  %v2517 = vadd.f32 %v2468, %v2516
  %v2518 = vpop.f32.mrf.mxu0
  %v2519 = vadd.f32 %v2470, %v2518
  %2520 = vdwg.mxu0
  %2521 = vmatpush.bf16.msra.mxu0 %v1539
  %2522 = vmatpush.bf16.msra.mxu0 %v1337
  %2523 = vmatpush.bf16.msra.mxu0 %v1334
  %2524 = vmatpush.bf16.msra.mxu0 %v1331
  %2525 = vmatpush.bf16.msra.mxu0 %v1328
  %2526 = vmatpush.bf16.msra.mxu0 %v1325
  %2527 = vmatpush.bf16.msra.mxu0 %v1322
  %2528 = vmatpush.bf16.msra.mxu0 %v1319
  %2529 = vmatmul.bf16.gmra.mxu0 %v1508
  %v2530 = vpop.f32.mrf.mxu0
  %v2531 = vadd.f32 %v2482, %v2530
  %v2532 = vpop.f32.mrf.mxu0
  %v2533 = vadd.f32 %v2484, %v2532
  %2534 = vmatmul.bf16.gmra.mxu0 %v1511
  %v2535 = vpop.f32.mrf.mxu0
  %v2536 = vadd.f32 %v2487, %v2535
  %v2537 = vpop.f32.mrf.mxu0
  %v2538 = vadd.f32 %v2489, %v2537
  %2539 = vmatmul.bf16.gmra.mxu0 %v1514
  %v2540 = vpop.f32.mrf.mxu0
  %v2541 = vadd.f32 %v2492, %v2540
  %v2542 = vpop.f32.mrf.mxu0
  %v2543 = vadd.f32 %v2494, %v2542
  %2544 = vmatmul.bf16.gmra.mxu0 %v1517
  %v2545 = vpop.f32.mrf.mxu0
  %v2546 = vadd.f32 %v2497, %v2545
  %v2547 = vpop.f32.mrf.mxu0
  %v2548 = vadd.f32 %v2499, %v2547
  %2549 = vmatmul.bf16.gmra.mxu0 %v1520
  %v2550 = vpop.f32.mrf.mxu0
  %v2551 = vadd.f32 %v2502, %v2550
  %v2552 = vpop.f32.mrf.mxu0
  %v2553 = vadd.f32 %v2504, %v2552
  %2554 = vmatmul.bf16.gmra.mxu0 %v1523
  %v2555 = vpop.f32.mrf.mxu0
  %v2556 = vadd.f32 %v2507, %v2555
  %v2557 = vpop.f32.mrf.mxu0
  %v2558 = vadd.f32 %v2509, %v2557
  %2559 = vmatmul.bf16.gmra.mxu0 %v1526
  %v2560 = vpop.f32.mrf.mxu0
  %v2561 = vadd.f32 %v2512, %v2560
  %v2562 = vpop.f32.mrf.mxu0
  %v2563 = vadd.f32 %v2514, %v2562
  %2564 = vmatmul.bf16.gmra.mxu0 %v1529
  %v2565 = vpop.f32.mrf.mxu0
  %v2566 = vadd.f32 %v2517, %v2565
  %v2567 = vpop.f32.mrf.mxu0
  %v2568 = vadd.f32 %v2519, %v2567
  %2569 = vdwg.mxu0
  %v2570 = vmax.f32 %v1845, 0.0
  %v2571 = vmax.f32 %v2188, 0.0
  %v2572 = vmax.f32 %v2531, 0.0
  %v2573 = vmax.f32 %v1847, 0.0
  %v2574 = vmax.f32 %v2190, 0.0
  %v2575 = vmax.f32 %v2533, 0.0
  %v2576 = vmax.f32 %v1850, 0.0
  %v2577 = vmax.f32 %v2193, 0.0
  %v2578 = vmax.f32 %v2536, 0.0
  %v2579 = vmax.f32 %v1852, 0.0
  %v2580 = vmax.f32 %v2195, 0.0
  %v2581 = vmax.f32 %v2538, 0.0
  %v2582 = vmax.f32 %v1855, 0.0
  %v2583 = vmax.f32 %v2198, 0.0
  %v2584 = vmax.f32 %v2541, 0.0
  %v2585 = vmax.f32 %v1857, 0.0
  %v2586 = vmax.f32 %v2200, 0.0
  %v2587 = vmax.f32 %v2543, 0.0
  %v2588 = vmax.f32 %v1860, 0.0
  %v2589 = vmax.f32 %v2203, 0.0
  %v2590 = vmax.f32 %v2546, 0.0
  %v2591 = vmax.f32 %v1862, 0.0
  %v2592 = vmax.f32 %v2205, 0.0
  %v2593 = vmax.f32 %v2548, 0.0
  %v2594 = vmax.f32 %v1865, 0.0
  %v2595 = vmax.f32 %v2208, 0.0
  %v2596 = vmax.f32 %v2551, 0.0
  %v2597 = vmax.f32 %v1867, 0.0
  %v2598 = vmax.f32 %v2210, 0.0
  %v2599 = vmax.f32 %v2553, 0.0
  %v2600 = vmax.f32 %v1870, 0.0
  %v2601 = vmax.f32 %v2213, 0.0
  %v2602 = vmax.f32 %v2556, 0.0
  %v2603 = vmax.f32 %v1872, 0.0
  %v2604 = vmax.f32 %v2215, 0.0
  %v2605 = vmax.f32 %v2558, 0.0
  %v2606 = vmax.f32 %v1875, 0.0
  %v2607 = vmax.f32 %v2218, 0.0
  %v2608 = vmax.f32 %v2561, 0.0
  %v2609 = vmax.f32 %v1877, 0.0
  %v2610 = vmax.f32 %v2220, 0.0
  %v2611 = vmax.f32 %v2563, 0.0
  %v2612 = vmax.f32 %v1880, 0.0
  %v2613 = vmax.f32 %v2223, 0.0
  %v2614 = vmax.f32 %v2566, 0.0
  %v2615 = vmax.f32 %v1882, 0.0
  %v2616 = vmax.f32 %v2225, 0.0
  %v2617 = vmax.f32 %v2568, 0.0
  %v2618 = vpack.c.bf16 %v2573, %v2570
  %v2619 = vpack.c.bf16 %v2574, %v2571
  %v2620 = vpack.c.bf16 %v2575, %v2572
  %v2621 = vpack.c.bf16 %v2579, %v2576
  %v2622 = vpack.c.bf16 %v2580, %v2577
  %v2623 = vpack.c.bf16 %v2581, %v2578
  %v2624 = vpack.c.bf16 %v2585, %v2582
  %v2625 = vpack.c.bf16 %v2586, %v2583
  %v2626 = vpack.c.bf16 %v2587, %v2584
  %v2627 = vpack.c.bf16 %v2591, %v2588
  %v2628 = vpack.c.bf16 %v2592, %v2589
  %v2629 = vpack.c.bf16 %v2593, %v2590
  %v2630 = vpack.c.bf16 %v2597, %v2594
  %v2631 = vpack.c.bf16 %v2598, %v2595
  %v2632 = vpack.c.bf16 %v2599, %v2596
  %v2633 = vpack.c.bf16 %v2603, %v2600
  %v2634 = vpack.c.bf16 %v2604, %v2601
  %v2635 = vpack.c.bf16 %v2605, %v2602
  %v2636 = vpack.c.bf16 %v2609, %v2606
  %v2637 = vpack.c.bf16 %v2610, %v2607
  %v2638 = vpack.c.bf16 %v2611, %v2608
  %v2639 = vpack.c.bf16 %v2615, %v2612
  %v2640 = vpack.c.bf16 %v2616, %v2613
  %v2641 = vpack.c.bf16 %v2617, %v2614
  %v2642 = vld [vmem:[%s5] sm:$0xff]
  %v2643 = vld [vmem:[%s5 + $0x8] sm:$0xf]
  %v2644 = vld [vmem:[%s5 + $0xc] sm:$0xff]
  %v2645 = vld [vmem:[%s5 + $0x14] sm:$0xf]
  %v2646 = vld [vmem:[%s5 + $0x18] sm:$0xff]
  %v2647 = vld [vmem:[%s5 + $0x20] sm:$0xf]
  %v2648 = vld [vmem:[%s5 + $0x24] sm:$0xff]
  %v2649 = vld [vmem:[%s5 + $0x2c] sm:$0xf]
  %v2650 = vld [vmem:[%s5 + $0x30] sm:$0xff]
  %v2651 = vld [vmem:[%s5 + $0x38] sm:$0xf]
  %v2652 = vld [vmem:[%s5 + $0x3c] sm:$0xff]
  %v2653 = vld [vmem:[%s5 + $0x44] sm:$0xf]
  %v2654 = vld [vmem:[%s5 + $0x48] sm:$0xff]
  %v2655 = vld [vmem:[%s5 + $0x50] sm:$0xf]
  %v2656 = vld [vmem:[%s5 + $0x54] sm:$0xff]
  %v2657 = vld [vmem:[%s5 + $0x5c] sm:$0xf]
  %v2658 = vld [vmem:[%s5 + $0x60] sm:$0xff]
  %v2659 = vld [vmem:[%s5 + $0x68] sm:$0xf]
  %v2660 = vld [vmem:[%s5 + $0x6c] sm:$0xff]
  %v2661 = vld [vmem:[%s5 + $0x74] sm:$0xf]
  %v2662 = vld [vmem:[%s5 + $0x78] sm:$0xff]
  %v2663 = vld [vmem:[%s5 + $0x80] sm:$0xf]
  %v2664 = vld [vmem:[%s5 + $0x84] sm:$0xff]
  %v2665 = vld [vmem:[%s5 + $0x8c] sm:$0xf]
  %v2666 = vld [vmem:[%s5 + $0x90] sm:$0xff]
  %v2667 = vld [vmem:[%s5 + $0x98] sm:$0xf]
  %v2668 = vld [vmem:[%s5 + $0x9c] sm:$0xff]
  %v2669 = vld [vmem:[%s5 + $0xa4] sm:$0xf]
  %v2670 = vld [vmem:[%s5 + $0xa8] sm:$0xff]
  %v2671 = vld [vmem:[%s5 + $0xb0] sm:$0xf]
  %v2672 = vld [vmem:[%s5 + $0xb4] sm:$0xff]
  %v2673 = vld [vmem:[%s5 + $0xbc] sm:$0xf]
  %v2674 = vld [vmem:[%s5 + $0xc0] sm:$0xff]
  %v2675 = vld [vmem:[%s5 + $0xc8] sm:$0xf]
  %v2676 = vld [vmem:[%s5 + $0xcc] sm:$0xff]
  %v2677 = vld [vmem:[%s5 + $0xd4] sm:$0xf]
  %v2678 = vld [vmem:[%s5 + $0xd8] sm:$0xff]
  %v2679 = vld [vmem:[%s5 + $0xe0] sm:$0xf]
  %v2680 = vld [vmem:[%s5 + $0xe4] sm:$0xff]
  %v2681 = vld [vmem:[%s5 + $0xec] sm:$0xf]
  %v2682 = vld [vmem:[%s5 + $0xf0] sm:$0xff]
  %v2683 = vld [vmem:[%s5 + $0xf8] sm:$0xf]
  %v2684 = vld [vmem:[%s5 + $0xfc] sm:$0xff]
  %v2685 = vld [vmem:[%s5 + $0x104] sm:$0xf]
  %v2686 = vld [vmem:[%s5 + $0x108] sm:$0xff]
  %v2687 = vld [vmem:[%s5 + $0x110] sm:$0xf]
  %v2688 = vld [vmem:[%s5 + $0x114] sm:$0xff]
  %v2689 = vld [vmem:[%s5 + $0x11c] sm:$0xf]
  %v2690 = vld [vmem:[%s5 + $0x120] sm:$0xff]
  %v2691 = vld [vmem:[%s5 + $0x128] sm:$0xf]
  %v2692 = vld [vmem:[%s5 + $0x12c] sm:$0xff]
  %v2693 = vld [vmem:[%s5 + $0x134] sm:$0xf]
  %v2694 = vld [vmem:[%s5 + $0x138] sm:$0xff]
  %v2695 = vld [vmem:[%s5 + $0x140] sm:$0xf]
  %v2696 = vld [vmem:[%s5 + $0x144] sm:$0xff]
  %v2697 = vld [vmem:[%s5 + $0x14c] sm:$0xf]
  %v2698 = vld [vmem:[%s5 + $0x150] sm:$0xff]
  %v2699 = vld [vmem:[%s5 + $0x158] sm:$0xf]
  %v2700 = vld [vmem:[%s5 + $0x15c] sm:$0xff]
  %v2701 = vld [vmem:[%s5 + $0x164] sm:$0xf]
  %v2702 = vld [vmem:[%s5 + $0x168] sm:$0xff]
  %v2703 = vld [vmem:[%s5 + $0x170] sm:$0xf]
  %v2704 = vld [vmem:[%s5 + $0x174] sm:$0xff]
  %v2705 = vld [vmem:[%s5 + $0x17c] sm:$0xf]
  %v2706 = vld [vmem:[%s5 + $0x180] sm:$0xff]
  %v2707 = vld [vmem:[%s5 + $0x188] sm:$0xf]
  %v2708 = vld [vmem:[%s5 + $0x18c] sm:$0xff]
  %v2709 = vld [vmem:[%s5 + $0x194] sm:$0xf]
  %v2710 = vld [vmem:[%s5 + $0x198] sm:$0xff]
  %v2711 = vld [vmem:[%s5 + $0x1a0] sm:$0xf]
  %v2712 = vld [vmem:[%s5 + $0x1a4] sm:$0xff]
  %v2713 = vld [vmem:[%s5 + $0x1ac] sm:$0xf]
  %v2714 = vld [vmem:[%s5 + $0x1b0] sm:$0xff]
  %v2715 = vld [vmem:[%s5 + $0x1b8] sm:$0xf]
  %v2716 = vld [vmem:[%s5 + $0x1bc] sm:$0xff]
  %v2717 = vld [vmem:[%s5 + $0x1c4] sm:$0xf]
  %v2718 = vld [vmem:[%s5 + $0x1c8] sm:$0xff]
  %v2719 = vld [vmem:[%s5 + $0x1d0] sm:$0xf]
  %v2720 = vld [vmem:[%s5 + $0x1d4] sm:$0xff]
  %v2721 = vld [vmem:[%s5 + $0x1dc] sm:$0xf]
  %v2722 = vld [vmem:[%s5 + $0x1e0] sm:$0xff]
  %v2723 = vld [vmem:[%s5 + $0x1e8] sm:$0xf]
  %v2724 = vld [vmem:[%s5 + $0x1ec] sm:$0xff]
  %v2725 = vld [vmem:[%s5 + $0x1f4] sm:$0xf]
  %v2726 = vld [vmem:[%s5 + $0x1f8] sm:$0xff]
  %v2727 = vld [vmem:[%s5 + $0x200] sm:$0xf]
  %v2728 = vld [vmem:[%s5 + $0x204] sm:$0xff]
  %v2729 = vld [vmem:[%s5 + $0x20c] sm:$0xf]
  %v2730 = vld [vmem:[%s5 + $0x210] sm:$0xff]
  %v2731 = vld [vmem:[%s5 + $0x218] sm:$0xf]
  %v2732 = vld [vmem:[%s5 + $0x21c] sm:$0xff]
  %v2733 = vld [vmem:[%s5 + $0x224] sm:$0xf]
  %v2734 = vld [vmem:[%s5 + $0x228] sm:$0xff]
  %v2735 = vld [vmem:[%s5 + $0x230] sm:$0xf]
  %v2736 = vld [vmem:[%s5 + $0x234] sm:$0xff]
  %v2737 = vld [vmem:[%s5 + $0x23c] sm:$0xf]
  %v2738 = vld [vmem:[%s6] sm:$0x7]
  %v2740 = vperm.slane %v2738, 0
  %v2741 = vperm.slane %v2738, 1
  %v2742 = vperm.slane %v2738, 2
  %v2842 = vunpack.c.l.b16 %v2642
  %v2843 = vunpack.c.h.b16 %v2642
  %v2844 = vunpack.c.l.b16 %v2643
  %v2845 = vunpack.c.l.b16 %v2644
  %v2846 = vunpack.c.h.b16 %v2644
  %v2847 = vunpack.c.l.b16 %v2645
  %v2848 = vunpack.c.l.b16 %v2646
  %v2849 = vunpack.c.h.b16 %v2646
  %v2850 = vunpack.c.l.b16 %v2647
  %v2851 = vunpack.c.l.b16 %v2648
  %v2852 = vunpack.c.h.b16 %v2648
  %v2853 = vunpack.c.l.b16 %v2649
  %v2854 = vunpack.c.l.b16 %v2650
  %v2855 = vunpack.c.h.b16 %v2650
  %v2856 = vunpack.c.l.b16 %v2651
  %v2857 = vunpack.c.l.b16 %v2652
  %v2858 = vunpack.c.h.b16 %v2652
  %v2859 = vunpack.c.l.b16 %v2653
  %v2860 = vunpack.c.l.b16 %v2654
  %v2861 = vunpack.c.h.b16 %v2654
  %v2862 = vunpack.c.l.b16 %v2655
  %v2863 = vunpack.c.l.b16 %v2656
  %v2864 = vunpack.c.h.b16 %v2656
  %v2865 = vunpack.c.l.b16 %v2657
  %v2866 = vunpack.c.l.b16 %v2658
  %v2867 = vunpack.c.h.b16 %v2658
  %v2868 = vunpack.c.l.b16 %v2659
  %v2869 = vunpack.c.l.b16 %v2660
  %v2870 = vunpack.c.h.b16 %v2660
  %v2871 = vunpack.c.l.b16 %v2661
  %v2872 = vunpack.c.l.b16 %v2662
  %v2873 = vunpack.c.h.b16 %v2662
  %v2874 = vunpack.c.l.b16 %v2663
  %v2875 = vunpack.c.l.b16 %v2664
  %v2876 = vunpack.c.h.b16 %v2664
  %v2877 = vunpack.c.l.b16 %v2665
  %v2878 = vunpack.c.l.b16 %v2666
  %v2879 = vunpack.c.h.b16 %v2666
  %v2880 = vunpack.c.l.b16 %v2667
  %v2881 = vunpack.c.l.b16 %v2668
  %v2882 = vunpack.c.h.b16 %v2668
  %v2883 = vunpack.c.l.b16 %v2669
  %v2884 = vunpack.c.l.b16 %v2670
  %v2885 = vunpack.c.h.b16 %v2670
  %v2886 = vunpack.c.l.b16 %v2671
  %v2887 = vunpack.c.l.b16 %v2672
  %v2888 = vunpack.c.h.b16 %v2672
  %v2889 = vunpack.c.l.b16 %v2673
  %v2890 = vunpack.c.l.b16 %v2674
  %v2891 = vunpack.c.h.b16 %v2674
  %v2892 = vunpack.c.l.b16 %v2675
  %v2893 = vunpack.c.l.b16 %v2676
  %v2894 = vunpack.c.h.b16 %v2676
  %v2895 = vunpack.c.l.b16 %v2677
  %v2896 = vunpack.c.l.b16 %v2678
  %v2897 = vunpack.c.h.b16 %v2678
  %v2898 = vunpack.c.l.b16 %v2679
  %v2899 = vunpack.c.l.b16 %v2680
  %v2900 = vunpack.c.h.b16 %v2680
  %v2901 = vunpack.c.l.b16 %v2681
  %v2902 = vunpack.c.l.b16 %v2682
  %v2903 = vunpack.c.h.b16 %v2682
  %v2904 = vunpack.c.l.b16 %v2683
  %v2905 = vunpack.c.l.b16 %v2684
  %v2906 = vunpack.c.h.b16 %v2684
  %v2907 = vunpack.c.l.b16 %v2685
  %v2908 = vunpack.c.l.b16 %v2686
  %v2909 = vunpack.c.h.b16 %v2686
  %v2910 = vunpack.c.l.b16 %v2687
  %v2911 = vunpack.c.l.b16 %v2688
  %v2912 = vunpack.c.h.b16 %v2688
  %v2913 = vunpack.c.l.b16 %v2689
  %v2914 = vunpack.c.l.b16 %v2690
  %v2915 = vunpack.c.h.b16 %v2690
  %v2916 = vunpack.c.l.b16 %v2691
  %v2917 = vunpack.c.l.b16 %v2692
  %v2918 = vunpack.c.h.b16 %v2692
  %v2919 = vunpack.c.l.b16 %v2693
  %v2920 = vunpack.c.l.b16 %v2694
  %v2921 = vunpack.c.h.b16 %v2694
  %v2922 = vunpack.c.l.b16 %v2695
  %v2923 = vunpack.c.l.b16 %v2696
  %v2924 = vunpack.c.h.b16 %v2696
  %v2925 = vunpack.c.l.b16 %v2697
  %v2926 = vunpack.c.l.b16 %v2698
  %v2927 = vunpack.c.h.b16 %v2698
  %v2928 = vunpack.c.l.b16 %v2699
  %v2929 = vunpack.c.l.b16 %v2700
  %v2930 = vunpack.c.h.b16 %v2700
  %v2931 = vunpack.c.l.b16 %v2701
  %v2932 = vunpack.c.l.b16 %v2702
  %v2933 = vunpack.c.h.b16 %v2702
  %v2934 = vunpack.c.l.b16 %v2703
  %v2935 = vunpack.c.l.b16 %v2704
  %v2936 = vunpack.c.h.b16 %v2704
  %v2937 = vunpack.c.l.b16 %v2705
  %v2938 = vunpack.c.l.b16 %v2706
  %v2939 = vunpack.c.h.b16 %v2706
  %v2940 = vunpack.c.l.b16 %v2707
  %v2941 = vunpack.c.l.b16 %v2708
  %v2942 = vunpack.c.h.b16 %v2708
  %v2943 = vunpack.c.l.b16 %v2709
  %v2944 = vunpack.c.l.b16 %v2710
  %v2945 = vunpack.c.h.b16 %v2710
  %v2946 = vunpack.c.l.b16 %v2711
  %v2947 = vunpack.c.l.b16 %v2712
  %v2948 = vunpack.c.h.b16 %v2712
  %v2949 = vunpack.c.l.b16 %v2713
  %v2950 = vunpack.c.l.b16 %v2714
  %v2951 = vunpack.c.h.b16 %v2714
  %v2952 = vunpack.c.l.b16 %v2715
  %v2953 = vunpack.c.l.b16 %v2716
  %v2954 = vunpack.c.h.b16 %v2716
  %v2955 = vunpack.c.l.b16 %v2717
  %v2956 = vunpack.c.l.b16 %v2718
  %v2957 = vunpack.c.h.b16 %v2718
  %v2958 = vunpack.c.l.b16 %v2719
  %v2959 = vunpack.c.l.b16 %v2720
  %v2960 = vunpack.c.h.b16 %v2720
  %v2961 = vunpack.c.l.b16 %v2721
  %v2962 = vunpack.c.l.b16 %v2722
  %v2963 = vunpack.c.h.b16 %v2722
  %v2964 = vunpack.c.l.b16 %v2723
  %v2965 = vunpack.c.l.b16 %v2724
  %v2966 = vunpack.c.h.b16 %v2724
  %v2967 = vunpack.c.l.b16 %v2725
  %v2968 = vunpack.c.l.b16 %v2726
  %v2969 = vunpack.c.h.b16 %v2726
  %v2970 = vunpack.c.l.b16 %v2727
  %v2971 = vunpack.c.l.b16 %v2728
  %v2972 = vunpack.c.h.b16 %v2728
  %v2973 = vunpack.c.l.b16 %v2729
  %v2974 = vunpack.c.l.b16 %v2730
  %v2975 = vunpack.c.h.b16 %v2730
  %v2976 = vunpack.c.l.b16 %v2731
  %v2977 = vunpack.c.l.b16 %v2732
  %v2978 = vunpack.c.h.b16 %v2732
  %v2979 = vunpack.c.l.b16 %v2733
  %v2980 = vunpack.c.l.b16 %v2734
  %v2981 = vunpack.c.h.b16 %v2734
  %v2982 = vunpack.c.l.b16 %v2735
  %v2983 = vunpack.c.l.b16 %v2736
  %v2984 = vunpack.c.h.b16 %v2736
  %v2985 = vunpack.c.l.b16 %v2737
  %v2986 = vpack.c.b16 %v2845, %v2842
  %v2987 = vpack.c.b16 %v2846, %v2843
  %v2988 = vpack.c.b16 %v2847, %v2844
  %v2989 = vpack.c.b16 %v2851, %v2848
  %v2990 = vpack.c.b16 %v2852, %v2849
  %v2991 = vpack.c.b16 %v2853, %v2850
  %v2992 = vpack.c.b16 %v2857, %v2854
  %v2993 = vpack.c.b16 %v2858, %v2855
  %v2994 = vpack.c.b16 %v2859, %v2856
  %v2995 = vpack.c.b16 %v2863, %v2860
  %v2996 = vpack.c.b16 %v2864, %v2861
  %v2997 = vpack.c.b16 %v2865, %v2862
  %v2998 = vpack.c.b16 %v2869, %v2866
  %v2999 = vpack.c.b16 %v2870, %v2867
  %v3000 = vpack.c.b16 %v2871, %v2868
  %v3001 = vpack.c.b16 %v2875, %v2872
  %v3002 = vpack.c.b16 %v2876, %v2873
  %v3003 = vpack.c.b16 %v2877, %v2874
  %v3004 = vpack.c.b16 %v2881, %v2878
  %v3005 = vpack.c.b16 %v2882, %v2879
  %v3006 = vpack.c.b16 %v2883, %v2880
  %v3007 = vpack.c.b16 %v2887, %v2884
  %v3008 = vpack.c.b16 %v2888, %v2885
  %v3009 = vpack.c.b16 %v2889, %v2886
  %v3010 = vpack.c.b16 %v2893, %v2890
  %v3011 = vpack.c.b16 %v2894, %v2891
  %v3012 = vpack.c.b16 %v2895, %v2892
  %v3013 = vpack.c.b16 %v2899, %v2896
  %v3014 = vpack.c.b16 %v2900, %v2897
  %v3015 = vpack.c.b16 %v2901, %v2898
  %v3016 = vpack.c.b16 %v2905, %v2902
  %v3017 = vpack.c.b16 %v2906, %v2903
  %v3018 = vpack.c.b16 %v2907, %v2904
  %v3019 = vpack.c.b16 %v2911, %v2908
  %v3020 = vpack.c.b16 %v2912, %v2909
  %v3021 = vpack.c.b16 %v2913, %v2910
  %v3022 = vpack.c.b16 %v2917, %v2914
  %v3023 = vpack.c.b16 %v2918, %v2915
  %v3024 = vpack.c.b16 %v2919, %v2916
  %v3025 = vpack.c.b16 %v2923, %v2920
  %v3026 = vpack.c.b16 %v2924, %v2921
  %v3027 = vpack.c.b16 %v2925, %v2922
  %v3028 = vpack.c.b16 %v2929, %v2926
  %v3029 = vpack.c.b16 %v2930, %v2927
  %v3030 = vpack.c.b16 %v2931, %v2928
  %v3031 = vpack.c.b16 %v2935, %v2932
  %v3032 = vpack.c.b16 %v2936, %v2933
  %v3033 = vpack.c.b16 %v2937, %v2934
  %v3034 = vpack.c.b16 %v2941, %v2938
  %v3035 = vpack.c.b16 %v2942, %v2939
  %v3036 = vpack.c.b16 %v2943, %v2940
  %v3037 = vpack.c.b16 %v2947, %v2944
  %v3038 = vpack.c.b16 %v2948, %v2945
  %v3039 = vpack.c.b16 %v2949, %v2946
  %v3040 = vpack.c.b16 %v2953, %v2950
  %v3041 = vpack.c.b16 %v2954, %v2951
  %v3042 = vpack.c.b16 %v2955, %v2952
  %v3043 = vpack.c.b16 %v2959, %v2956
  %v3044 = vpack.c.b16 %v2960, %v2957
  %v3045 = vpack.c.b16 %v2961, %v2958
  %v3046 = vpack.c.b16 %v2965, %v2962
  %v3047 = vpack.c.b16 %v2966, %v2963
  %v3048 = vpack.c.b16 %v2967, %v2964
  %v3049 = vpack.c.b16 %v2971, %v2968
  %v3050 = vpack.c.b16 %v2972, %v2969
  %v3051 = vpack.c.b16 %v2973, %v2970
  %v3052 = vpack.c.b16 %v2977, %v2974
  %v3053 = vpack.c.b16 %v2978, %v2975
  %v3054 = vpack.c.b16 %v2979, %v2976
  %v3055 = vpack.c.b16 %v2983, %v2980
  %v3056 = vpack.c.b16 %v2984, %v2981
  %v3057 = vpack.c.b16 %v2985, %v2982
  %3130 = vmatpush.bf16.msra.mxu0 %v3007
  %3131 = vmatpush.bf16.msra.mxu0 %v3004
  %3132 = vmatpush.bf16.msra.mxu0 %v3001
  %3133 = vmatpush.bf16.msra.mxu0 %v2998
  %3134 = vmatpush.bf16.msra.mxu0 %v2995
  %3135 = vmatpush.bf16.msra.mxu0 %v2992
  %3136 = vmatpush.bf16.msra.mxu0 %v2989
  %3137 = vmatpush.bf16.msra.mxu0 %v2986
  %3138 = vmatmul.bf16.gmra.mxu0 %v2618
  %v3139 = vpop.f32.mrf.mxu0
  %v3140 = vadd.f32 %v2740, %v3139
  %v3141 = vpop.f32.mrf.mxu0
  %v3142 = vadd.f32 %v2740, %v3141
  %3143 = vmatmul.bf16.gmra.mxu0 %v2621
  %v3144 = vpop.f32.mrf.mxu0
  %v3145 = vadd.f32 %v2740, %v3144
  %v3146 = vpop.f32.mrf.mxu0
  %v3147 = vadd.f32 %v2740, %v3146
  %3148 = vmatmul.bf16.gmra.mxu0 %v2624
  %v3149 = vpop.f32.mrf.mxu0
  %v3150 = vadd.f32 %v2740, %v3149
  %v3151 = vpop.f32.mrf.mxu0
  %v3152 = vadd.f32 %v2740, %v3151
  %3153 = vmatmul.bf16.gmra.mxu0 %v2627
  %v3154 = vpop.f32.mrf.mxu0
  %v3155 = vadd.f32 %v2740, %v3154
  %v3156 = vpop.f32.mrf.mxu0
  %v3157 = vadd.f32 %v2740, %v3156
  %3158 = vmatmul.bf16.gmra.mxu0 %v2630
  %v3159 = vpop.f32.mrf.mxu0
  %v3160 = vadd.f32 %v2740, %v3159
  %v3161 = vpop.f32.mrf.mxu0
  %v3162 = vadd.f32 %v2740, %v3161
  %3163 = vmatmul.bf16.gmra.mxu0 %v2633
  %v3164 = vpop.f32.mrf.mxu0
  %v3165 = vadd.f32 %v2740, %v3164
  %v3166 = vpop.f32.mrf.mxu0
  %v3167 = vadd.f32 %v2740, %v3166
  %3168 = vmatmul.bf16.gmra.mxu0 %v2636
  %v3169 = vpop.f32.mrf.mxu0
  %v3170 = vadd.f32 %v2740, %v3169
  %v3171 = vpop.f32.mrf.mxu0
  %v3172 = vadd.f32 %v2740, %v3171
  %3173 = vmatmul.bf16.gmra.mxu0 %v2639
  %v3174 = vpop.f32.mrf.mxu0
  %v3175 = vadd.f32 %v2740, %v3174
  %v3176 = vpop.f32.mrf.mxu0
  %v3177 = vadd.f32 %v2740, %v3176
  %3178 = vdwg.mxu0
  %3179 = vmatpush.bf16.msra.mxu0 %v3031
  %3180 = vmatpush.bf16.msra.mxu0 %v3028
  %3181 = vmatpush.bf16.msra.mxu0 %v3025
  %3182 = vmatpush.bf16.msra.mxu0 %v3022
  %3183 = vmatpush.bf16.msra.mxu0 %v3019
  %3184 = vmatpush.bf16.msra.mxu0 %v3016
  %3185 = vmatpush.bf16.msra.mxu0 %v3013
  %3186 = vmatpush.bf16.msra.mxu0 %v3010
  %3187 = vmatmul.bf16.gmra.mxu0 %v2619
  %v3188 = vpop.f32.mrf.mxu0
  %v3189 = vadd.f32 %v3140, %v3188
  %v3190 = vpop.f32.mrf.mxu0
  %v3191 = vadd.f32 %v3142, %v3190
  %3192 = vmatmul.bf16.gmra.mxu0 %v2622
  %v3193 = vpop.f32.mrf.mxu0
  %v3194 = vadd.f32 %v3145, %v3193
  %v3195 = vpop.f32.mrf.mxu0
  %v3196 = vadd.f32 %v3147, %v3195
  %3197 = vmatmul.bf16.gmra.mxu0 %v2625
  %v3198 = vpop.f32.mrf.mxu0
  %v3199 = vadd.f32 %v3150, %v3198
  %v3200 = vpop.f32.mrf.mxu0
  %v3201 = vadd.f32 %v3152, %v3200
  %3202 = vmatmul.bf16.gmra.mxu0 %v2628
  %v3203 = vpop.f32.mrf.mxu0
  %v3204 = vadd.f32 %v3155, %v3203
  %v3205 = vpop.f32.mrf.mxu0
  %v3206 = vadd.f32 %v3157, %v3205
  %3207 = vmatmul.bf16.gmra.mxu0 %v2631
  %v3208 = vpop.f32.mrf.mxu0
  %v3209 = vadd.f32 %v3160, %v3208
  %v3210 = vpop.f32.mrf.mxu0
  %v3211 = vadd.f32 %v3162, %v3210
  %3212 = vmatmul.bf16.gmra.mxu0 %v2634
  %v3213 = vpop.f32.mrf.mxu0
  %v3214 = vadd.f32 %v3165, %v3213
  %v3215 = vpop.f32.mrf.mxu0
  %v3216 = vadd.f32 %v3167, %v3215
  %3217 = vmatmul.bf16.gmra.mxu0 %v2637
  %v3218 = vpop.f32.mrf.mxu0
  %v3219 = vadd.f32 %v3170, %v3218
  %v3220 = vpop.f32.mrf.mxu0
  %v3221 = vadd.f32 %v3172, %v3220
  %3222 = vmatmul.bf16.gmra.mxu0 %v2640
  %v3223 = vpop.f32.mrf.mxu0
  %v3224 = vadd.f32 %v3175, %v3223
  %v3225 = vpop.f32.mrf.mxu0
  %v3226 = vadd.f32 %v3177, %v3225
  %3227 = vdwg.mxu0
  %3228 = vmatpush.bf16.msra.mxu0 %v3055
  %3229 = vmatpush.bf16.msra.mxu0 %v3052
  %3230 = vmatpush.bf16.msra.mxu0 %v3049
  %3231 = vmatpush.bf16.msra.mxu0 %v3046
  %3232 = vmatpush.bf16.msra.mxu0 %v3043
  %3233 = vmatpush.bf16.msra.mxu0 %v3040
  %3234 = vmatpush.bf16.msra.mxu0 %v3037
  %3235 = vmatpush.bf16.msra.mxu0 %v3034
  %3236 = vmatmul.bf16.gmra.mxu0 %v2620
  %v3237 = vpop.f32.mrf.mxu0
  %v3238 = vadd.f32 %v3189, %v3237
  %v3239 = vpop.f32.mrf.mxu0
  %v3240 = vadd.f32 %v3191, %v3239
  %3241 = vmatmul.bf16.gmra.mxu0 %v2623
  %v3242 = vpop.f32.mrf.mxu0
  %v3243 = vadd.f32 %v3194, %v3242
  %v3244 = vpop.f32.mrf.mxu0
  %v3245 = vadd.f32 %v3196, %v3244
  %3246 = vmatmul.bf16.gmra.mxu0 %v2626
  %v3247 = vpop.f32.mrf.mxu0
  %v3248 = vadd.f32 %v3199, %v3247
  %v3249 = vpop.f32.mrf.mxu0
  %v3250 = vadd.f32 %v3201, %v3249
  %3251 = vmatmul.bf16.gmra.mxu0 %v2629
  %v3252 = vpop.f32.mrf.mxu0
  %v3253 = vadd.f32 %v3204, %v3252
  %v3254 = vpop.f32.mrf.mxu0
  %v3255 = vadd.f32 %v3206, %v3254
  %3256 = vmatmul.bf16.gmra.mxu0 %v2632
  %v3257 = vpop.f32.mrf.mxu0
  %v3258 = vadd.f32 %v3209, %v3257
  %v3259 = vpop.f32.mrf.mxu0
  %v3260 = vadd.f32 %v3211, %v3259
  %3261 = vmatmul.bf16.gmra.mxu0 %v2635
  %v3262 = vpop.f32.mrf.mxu0
  %v3263 = vadd.f32 %v3214, %v3262
  %v3264 = vpop.f32.mrf.mxu0
  %v3265 = vadd.f32 %v3216, %v3264
  %3266 = vmatmul.bf16.gmra.mxu0 %v2638
  %v3267 = vpop.f32.mrf.mxu0
  %v3268 = vadd.f32 %v3219, %v3267
  %v3269 = vpop.f32.mrf.mxu0
  %v3270 = vadd.f32 %v3221, %v3269
  %3271 = vmatmul.bf16.gmra.mxu0 %v2641
  %v3272 = vpop.f32.mrf.mxu0
  %v3273 = vadd.f32 %v3224, %v3272
  %v3274 = vpop.f32.mrf.mxu0
  %v3275 = vadd.f32 %v3226, %v3274
  %3276 = vdwg.mxu0
  %3277 = vmatpush.bf16.msra.mxu0 %v3008
  %3278 = vmatpush.bf16.msra.mxu0 %v3005
  %3279 = vmatpush.bf16.msra.mxu0 %v3002
  %3280 = vmatpush.bf16.msra.mxu0 %v2999
  %3281 = vmatpush.bf16.msra.mxu0 %v2996
  %3282 = vmatpush.bf16.msra.mxu0 %v2993
  %3283 = vmatpush.bf16.msra.mxu0 %v2990
  %3284 = vmatpush.bf16.msra.mxu0 %v2987
  %3285 = vmatmul.bf16.gmra.mxu0 %v2618
  %v3286 = vpop.f32.mrf.mxu0
  %v3287 = vadd.f32 %v2741, %v3286
  %v3288 = vpop.f32.mrf.mxu0
  %v3289 = vadd.f32 %v2741, %v3288
  %3290 = vmatmul.bf16.gmra.mxu0 %v2621
  %v3291 = vpop.f32.mrf.mxu0
  %v3292 = vadd.f32 %v2741, %v3291
  %v3293 = vpop.f32.mrf.mxu0
  %v3294 = vadd.f32 %v2741, %v3293
  %3295 = vmatmul.bf16.gmra.mxu0 %v2624
  %v3296 = vpop.f32.mrf.mxu0
  %v3297 = vadd.f32 %v2741, %v3296
  %v3298 = vpop.f32.mrf.mxu0
  %v3299 = vadd.f32 %v2741, %v3298
  %3300 = vmatmul.bf16.gmra.mxu0 %v2627
  %v3301 = vpop.f32.mrf.mxu0
  %v3302 = vadd.f32 %v2741, %v3301
  %v3303 = vpop.f32.mrf.mxu0
  %v3304 = vadd.f32 %v2741, %v3303
  %3305 = vmatmul.bf16.gmra.mxu0 %v2630
  %v3306 = vpop.f32.mrf.mxu0
  %v3307 = vadd.f32 %v2741, %v3306
  %v3308 = vpop.f32.mrf.mxu0
  %v3309 = vadd.f32 %v2741, %v3308
  %3310 = vmatmul.bf16.gmra.mxu0 %v2633
  %v3311 = vpop.f32.mrf.mxu0
  %v3312 = vadd.f32 %v2741, %v3311
  %v3313 = vpop.f32.mrf.mxu0
  %v3314 = vadd.f32 %v2741, %v3313
  %3315 = vmatmul.bf16.gmra.mxu0 %v2636
  %v3316 = vpop.f32.mrf.mxu0
  %v3317 = vadd.f32 %v2741, %v3316
  %v3318 = vpop.f32.mrf.mxu0
  %v3319 = vadd.f32 %v2741, %v3318
  %3320 = vmatmul.bf16.gmra.mxu0 %v2639
  %v3321 = vpop.f32.mrf.mxu0
  %v3322 = vadd.f32 %v2741, %v3321
  %v3323 = vpop.f32.mrf.mxu0
  %v3324 = vadd.f32 %v2741, %v3323
  %3325 = vdwg.mxu0
  %3326 = vmatpush.bf16.msra.mxu0 %v3032
  %3327 = vmatpush.bf16.msra.mxu0 %v3029
  %3328 = vmatpush.bf16.msra.mxu0 %v3026
  %3329 = vmatpush.bf16.msra.mxu0 %v3023
  %3330 = vmatpush.bf16.msra.mxu0 %v3020
  %3331 = vmatpush.bf16.msra.mxu0 %v3017
  %3332 = vmatpush.bf16.msra.mxu0 %v3014
  %3333 = vmatpush.bf16.msra.mxu0 %v3011
  %3334 = vmatmul.bf16.gmra.mxu0 %v2619
  %v3335 = vpop.f32.mrf.mxu0
  %v3336 = vadd.f32 %v3287, %v3335
  %v3337 = vpop.f32.mrf.mxu0
  %v3338 = vadd.f32 %v3289, %v3337
  %3339 = vmatmul.bf16.gmra.mxu0 %v2622
  %v3340 = vpop.f32.mrf.mxu0
  %v3341 = vadd.f32 %v3292, %v3340
  %v3342 = vpop.f32.mrf.mxu0
  %v3343 = vadd.f32 %v3294, %v3342
  %3344 = vmatmul.bf16.gmra.mxu0 %v2625
  %v3345 = vpop.f32.mrf.mxu0
  %v3346 = vadd.f32 %v3297, %v3345
  %v3347 = vpop.f32.mrf.mxu0
  %v3348 = vadd.f32 %v3299, %v3347
  %3349 = vmatmul.bf16.gmra.mxu0 %v2628
  %v3350 = vpop.f32.mrf.mxu0
  %v3351 = vadd.f32 %v3302, %v3350
  %v3352 = vpop.f32.mrf.mxu0
  %v3353 = vadd.f32 %v3304, %v3352
  %3354 = vmatmul.bf16.gmra.mxu0 %v2631
  %v3355 = vpop.f32.mrf.mxu0
  %v3356 = vadd.f32 %v3307, %v3355
  %v3357 = vpop.f32.mrf.mxu0
  %v3358 = vadd.f32 %v3309, %v3357
  %3359 = vmatmul.bf16.gmra.mxu0 %v2634
  %v3360 = vpop.f32.mrf.mxu0
  %v3361 = vadd.f32 %v3312, %v3360
  %v3362 = vpop.f32.mrf.mxu0
  %v3363 = vadd.f32 %v3314, %v3362
  %3364 = vmatmul.bf16.gmra.mxu0 %v2637
  %v3365 = vpop.f32.mrf.mxu0
  %v3366 = vadd.f32 %v3317, %v3365
  %v3367 = vpop.f32.mrf.mxu0
  %v3368 = vadd.f32 %v3319, %v3367
  %3369 = vmatmul.bf16.gmra.mxu0 %v2640
  %v3370 = vpop.f32.mrf.mxu0
  %v3371 = vadd.f32 %v3322, %v3370
  %v3372 = vpop.f32.mrf.mxu0
  %v3373 = vadd.f32 %v3324, %v3372
  %3374 = vdwg.mxu0
  %3375 = vmatpush.bf16.msra.mxu0 %v3056
  %3376 = vmatpush.bf16.msra.mxu0 %v3053
  %3377 = vmatpush.bf16.msra.mxu0 %v3050
  %3378 = vmatpush.bf16.msra.mxu0 %v3047
  %3379 = vmatpush.bf16.msra.mxu0 %v3044
  %3380 = vmatpush.bf16.msra.mxu0 %v3041
  %3381 = vmatpush.bf16.msra.mxu0 %v3038
  %3382 = vmatpush.bf16.msra.mxu0 %v3035
  %3383 = vmatmul.bf16.gmra.mxu0 %v2620
  %v3384 = vpop.f32.mrf.mxu0
  %v3385 = vadd.f32 %v3336, %v3384
  %v3386 = vpop.f32.mrf.mxu0
  %v3387 = vadd.f32 %v3338, %v3386
  %3388 = vmatmul.bf16.gmra.mxu0 %v2623
  %v3389 = vpop.f32.mrf.mxu0
  %v3390 = vadd.f32 %v3341, %v3389
  %v3391 = vpop.f32.mrf.mxu0
  %v3392 = vadd.f32 %v3343, %v3391
  %3393 = vmatmul.bf16.gmra.mxu0 %v2626
  %v3394 = vpop.f32.mrf.mxu0
  %v3395 = vadd.f32 %v3346, %v3394
  %v3396 = vpop.f32.mrf.mxu0
  %v3397 = vadd.f32 %v3348, %v3396
  %3398 = vmatmul.bf16.gmra.mxu0 %v2629
  %v3399 = vpop.f32.mrf.mxu0
  %v3400 = vadd.f32 %v3351, %v3399
  %v3401 = vpop.f32.mrf.mxu0
  %v3402 = vadd.f32 %v3353, %v3401
  %3403 = vmatmul.bf16.gmra.mxu0 %v2632
  %v3404 = vpop.f32.mrf.mxu0
  %v3405 = vadd.f32 %v3356, %v3404
  %v3406 = vpop.f32.mrf.mxu0
  %v3407 = vadd.f32 %v3358, %v3406
  %3408 = vmatmul.bf16.gmra.mxu0 %v2635
  %v3409 = vpop.f32.mrf.mxu0
  %v3410 = vadd.f32 %v3361, %v3409
  %v3411 = vpop.f32.mrf.mxu0
  %v3412 = vadd.f32 %v3363, %v3411
  %3413 = vmatmul.bf16.gmra.mxu0 %v2638
  %v3414 = vpop.f32.mrf.mxu0
  %v3415 = vadd.f32 %v3366, %v3414
  %v3416 = vpop.f32.mrf.mxu0
  %v3417 = vadd.f32 %v3368, %v3416
  %3418 = vmatmul.bf16.gmra.mxu0 %v2641
  %v3419 = vpop.f32.mrf.mxu0
  %v3420 = vadd.f32 %v3371, %v3419
  %v3421 = vpop.f32.mrf.mxu0
  %v3422 = vadd.f32 %v3373, %v3421
  %3423 = vdwg.mxu0
  %3424 = vmatpush.bf16.msra.mxu0 %v3009
  %3425 = vmatpush.bf16.msra.mxu0 %v3006
  %3426 = vmatpush.bf16.msra.mxu0 %v3003
  %3427 = vmatpush.bf16.msra.mxu0 %v3000
  %3428 = vmatpush.bf16.msra.mxu0 %v2997
  %3429 = vmatpush.bf16.msra.mxu0 %v2994
  %3430 = vmatpush.bf16.msra.mxu0 %v2991
  %3431 = vmatpush.bf16.msra.mxu0 %v2988
  %3432 = vmatmul.bf16.gmra.mxu0 %v2618
  %v3433 = vpop.f32.mrf.mxu0
  %v3434 = vadd.f32 %v2742, %v3433
  %v3435 = vpop.f32.mrf.mxu0
  %v3436 = vadd.f32 %v2742, %v3435
  %3437 = vmatmul.bf16.gmra.mxu0 %v2621
  %v3438 = vpop.f32.mrf.mxu0
  %v3439 = vadd.f32 %v2742, %v3438
  %v3440 = vpop.f32.mrf.mxu0
  %v3441 = vadd.f32 %v2742, %v3440
  %3442 = vmatmul.bf16.gmra.mxu0 %v2624
  %v3443 = vpop.f32.mrf.mxu0
  %v3444 = vadd.f32 %v2742, %v3443
  %v3445 = vpop.f32.mrf.mxu0
  %v3446 = vadd.f32 %v2742, %v3445
  %3447 = vmatmul.bf16.gmra.mxu0 %v2627
  %v3448 = vpop.f32.mrf.mxu0
  %v3449 = vadd.f32 %v2742, %v3448
  %v3450 = vpop.f32.mrf.mxu0
  %v3451 = vadd.f32 %v2742, %v3450
  %3452 = vmatmul.bf16.gmra.mxu0 %v2630
  %v3453 = vpop.f32.mrf.mxu0
  %v3454 = vadd.f32 %v2742, %v3453
  %v3455 = vpop.f32.mrf.mxu0
  %v3456 = vadd.f32 %v2742, %v3455
  %3457 = vmatmul.bf16.gmra.mxu0 %v2633
  %v3458 = vpop.f32.mrf.mxu0
  %v3459 = vadd.f32 %v2742, %v3458
  %v3460 = vpop.f32.mrf.mxu0
  %v3461 = vadd.f32 %v2742, %v3460
  %3462 = vmatmul.bf16.gmra.mxu0 %v2636
  %v3463 = vpop.f32.mrf.mxu0
  %v3464 = vadd.f32 %v2742, %v3463
  %v3465 = vpop.f32.mrf.mxu0
  %v3466 = vadd.f32 %v2742, %v3465
  %3467 = vmatmul.bf16.gmra.mxu0 %v2639
  %v3468 = vpop.f32.mrf.mxu0
  %v3469 = vadd.f32 %v2742, %v3468
  %v3470 = vpop.f32.mrf.mxu0
  %v3471 = vadd.f32 %v2742, %v3470
  %3472 = vdwg.mxu0
  %3473 = vmatpush.bf16.msra.mxu0 %v3033
  %3474 = vmatpush.bf16.msra.mxu0 %v3030
  %3475 = vmatpush.bf16.msra.mxu0 %v3027
  %3476 = vmatpush.bf16.msra.mxu0 %v3024
  %3477 = vmatpush.bf16.msra.mxu0 %v3021
  %3478 = vmatpush.bf16.msra.mxu0 %v3018
  %3479 = vmatpush.bf16.msra.mxu0 %v3015
  %3480 = vmatpush.bf16.msra.mxu0 %v3012
  %3481 = vmatmul.bf16.gmra.mxu0 %v2619
  %v3482 = vpop.f32.mrf.mxu0
  %v3483 = vadd.f32 %v3434, %v3482
  %v3484 = vpop.f32.mrf.mxu0
  %v3485 = vadd.f32 %v3436, %v3484
  %3486 = vmatmul.bf16.gmra.mxu0 %v2622
  %v3487 = vpop.f32.mrf.mxu0
  %v3488 = vadd.f32 %v3439, %v3487
  %v3489 = vpop.f32.mrf.mxu0
  %v3490 = vadd.f32 %v3441, %v3489
  %3491 = vmatmul.bf16.gmra.mxu0 %v2625
  %v3492 = vpop.f32.mrf.mxu0
  %v3493 = vadd.f32 %v3444, %v3492
  %v3494 = vpop.f32.mrf.mxu0
  %v3495 = vadd.f32 %v3446, %v3494
  %3496 = vmatmul.bf16.gmra.mxu0 %v2628
  %v3497 = vpop.f32.mrf.mxu0
  %v3498 = vadd.f32 %v3449, %v3497
  %v3499 = vpop.f32.mrf.mxu0
  %v3500 = vadd.f32 %v3451, %v3499
  %3501 = vmatmul.bf16.gmra.mxu0 %v2631
  %v3502 = vpop.f32.mrf.mxu0
  %v3503 = vadd.f32 %v3454, %v3502
  %v3504 = vpop.f32.mrf.mxu0
  %v3505 = vadd.f32 %v3456, %v3504
  %3506 = vmatmul.bf16.gmra.mxu0 %v2634
  %v3507 = vpop.f32.mrf.mxu0
  %v3508 = vadd.f32 %v3459, %v3507
  %v3509 = vpop.f32.mrf.mxu0
  %v3510 = vadd.f32 %v3461, %v3509
  %3511 = vmatmul.bf16.gmra.mxu0 %v2637
  %v3512 = vpop.f32.mrf.mxu0
  %v3513 = vadd.f32 %v3464, %v3512
  %v3514 = vpop.f32.mrf.mxu0
  %v3515 = vadd.f32 %v3466, %v3514
  %3516 = vmatmul.bf16.gmra.mxu0 %v2640
  %v3517 = vpop.f32.mrf.mxu0
  %v3518 = vadd.f32 %v3469, %v3517
  %v3519 = vpop.f32.mrf.mxu0
  %v3520 = vadd.f32 %v3471, %v3519
  %3521 = vdwg.mxu0
  %3522 = vmatpush.bf16.msra.mxu0 %v3057
  %3523 = vmatpush.bf16.msra.mxu0 %v3054
  %3524 = vmatpush.bf16.msra.mxu0 %v3051
  %3525 = vmatpush.bf16.msra.mxu0 %v3048
  %3526 = vmatpush.bf16.msra.mxu0 %v3045
  %3527 = vmatpush.bf16.msra.mxu0 %v3042
  %3528 = vmatpush.bf16.msra.mxu0 %v3039
  %3529 = vmatpush.bf16.msra.mxu0 %v3036
  %3530 = vmatmul.bf16.gmra.mxu0 %v2620
  %v3531 = vpop.f32.mrf.mxu0
  %v3532 = vadd.f32 %v3483, %v3531
  %v3533 = vpop.f32.mrf.mxu0
  %v3534 = vadd.f32 %v3485, %v3533
  %3535 = vmatmul.bf16.gmra.mxu0 %v2623
  %v3536 = vpop.f32.mrf.mxu0
  %v3537 = vadd.f32 %v3488, %v3536
  %v3538 = vpop.f32.mrf.mxu0
  %v3539 = vadd.f32 %v3490, %v3538
  %3540 = vmatmul.bf16.gmra.mxu0 %v2626
  %v3541 = vpop.f32.mrf.mxu0
  %v3542 = vadd.f32 %v3493, %v3541
  %v3543 = vpop.f32.mrf.mxu0
  %v3544 = vadd.f32 %v3495, %v3543
  %3545 = vmatmul.bf16.gmra.mxu0 %v2629
  %v3546 = vpop.f32.mrf.mxu0
  %v3547 = vadd.f32 %v3498, %v3546
  %v3548 = vpop.f32.mrf.mxu0
  %v3549 = vadd.f32 %v3500, %v3548
  %3550 = vmatmul.bf16.gmra.mxu0 %v2632
  %v3551 = vpop.f32.mrf.mxu0
  %v3552 = vadd.f32 %v3503, %v3551
  %v3553 = vpop.f32.mrf.mxu0
  %v3554 = vadd.f32 %v3505, %v3553
  %3555 = vmatmul.bf16.gmra.mxu0 %v2635
  %v3556 = vpop.f32.mrf.mxu0
  %v3557 = vadd.f32 %v3508, %v3556
  %v3558 = vpop.f32.mrf.mxu0
  %v3559 = vadd.f32 %v3510, %v3558
  %3560 = vmatmul.bf16.gmra.mxu0 %v2638
  %v3561 = vpop.f32.mrf.mxu0
  %v3562 = vadd.f32 %v3513, %v3561
  %v3563 = vpop.f32.mrf.mxu0
  %v3564 = vadd.f32 %v3515, %v3563
  %3565 = vmatmul.bf16.gmra.mxu0 %v2641
  %v3566 = vpop.f32.mrf.mxu0
  %v3567 = vadd.f32 %v3518, %v3566
  %v3568 = vpop.f32.mrf.mxu0
  %v3569 = vadd.f32 %v3520, %v3568
  %3570 = vdwg.mxu0
  %v3571 = vld [vmem:[%s7] sm:$0x7]
  %v3572 = vld [vmem:[%s8] sm:$0x7]
  %v3573 = vadd.f32 %v3238, %v3385
  %v3574 = vadd.f32 %v3573, %v3532
  %3575 = vadd.xlane.f32.xlu0 %v3574
  %v3576 = vpop.xlane.xlu0 %3575
  %v3577 = vadd.f32 %v3240, %v3387
  %v3578 = vadd.f32 %v3577, %v3534
  %3579 = vadd.xlane.f32.xlu0 %v3578
  %v3580 = vpop.xlane.xlu0 %3579
  %v3581 = vadd.f32 %v3243, %v3390
  %v3582 = vadd.f32 %v3581, %v3537
  %3583 = vadd.xlane.f32.xlu0 %v3582
  %v3584 = vpop.xlane.xlu0 %3583
  %v3585 = vadd.f32 %v3245, %v3392
  %v3586 = vadd.f32 %v3585, %v3539
  %3587 = vadd.xlane.f32.xlu0 %v3586
  %v3588 = vpop.xlane.xlu0 %3587
  %v3589 = vadd.f32 %v3248, %v3395
  %v3590 = vadd.f32 %v3589, %v3542
  %3591 = vadd.xlane.f32.xlu0 %v3590
  %v3592 = vpop.xlane.xlu0 %3591
  %v3593 = vadd.f32 %v3250, %v3397
  %v3594 = vadd.f32 %v3593, %v3544
  %3595 = vadd.xlane.f32.xlu0 %v3594
  %v3596 = vpop.xlane.xlu0 %3595
  %v3597 = vadd.f32 %v3253, %v3400
  %v3598 = vadd.f32 %v3597, %v3547
  %3599 = vadd.xlane.f32.xlu0 %v3598
  %v3600 = vpop.xlane.xlu0 %3599
  %v3601 = vadd.f32 %v3255, %v3402
  %v3602 = vadd.f32 %v3601, %v3549
  %3603 = vadd.xlane.f32.xlu0 %v3602
  %v3604 = vpop.xlane.xlu0 %3603
  %v3605 = vadd.f32 %v3258, %v3405
  %v3606 = vadd.f32 %v3605, %v3552
  %3607 = vadd.xlane.f32.xlu0 %v3606
  %v3608 = vpop.xlane.xlu0 %3607
  %v3609 = vadd.f32 %v3260, %v3407
  %v3610 = vadd.f32 %v3609, %v3554
  %3611 = vadd.xlane.f32.xlu0 %v3610
  %v3612 = vpop.xlane.xlu0 %3611
  %v3613 = vadd.f32 %v3263, %v3410
  %v3614 = vadd.f32 %v3613, %v3557
  %3615 = vadd.xlane.f32.xlu0 %v3614
  %v3616 = vpop.xlane.xlu0 %3615
  %v3617 = vadd.f32 %v3265, %v3412
  %v3618 = vadd.f32 %v3617, %v3559
  %3619 = vadd.xlane.f32.xlu0 %v3618
  %v3620 = vpop.xlane.xlu0 %3619
  %v3621 = vadd.f32 %v3268, %v3415
  %v3622 = vadd.f32 %v3621, %v3562
  %3623 = vadd.xlane.f32.xlu0 %v3622
  %v3624 = vpop.xlane.xlu0 %3623
  %v3625 = vadd.f32 %v3270, %v3417
  %v3626 = vadd.f32 %v3625, %v3564
  %3627 = vadd.xlane.f32.xlu0 %v3626
  %v3628 = vpop.xlane.xlu0 %3627
  %v3629 = vadd.f32 %v3273, %v3420
  %v3630 = vadd.f32 %v3629, %v3567
  %3631 = vadd.xlane.f32.xlu0 %v3630
  %v3632 = vpop.xlane.xlu0 %3631
  %v3633 = vadd.f32 %v3275, %v3422
  %v3634 = vadd.f32 %v3633, %v3569
  %3635 = vadd.xlane.f32.xlu0 %v3634
  %v3636 = vpop.xlane.xlu0 %3635
  %v3637 = vrcp.pop 384.0
  %v3638 = vmul.f32 384.0, %v3637
  %v3639 = vsub.f32 1.0, %v3638
  %v3640 = vmul.f32 %v3637, %v3639
  %v3641 = vadd.f32 %v3637, %v3640
  %vm3642 = vweird.f32 %v3637
  %v3643 = vsel %vm3642, %v3637, %v3641
  %v3644 = vmul.f32 %v3576, %v3643
  %v3645 = vmul.f32 %v3580, %v3643
  %v3646 = vmul.f32 %v3584, %v3643
  %v3647 = vmul.f32 %v3588, %v3643
  %v3648 = vmul.f32 %v3592, %v3643
  %v3649 = vmul.f32 %v3596, %v3643
  %v3650 = vmul.f32 %v3600, %v3643
  %v3651 = vmul.f32 %v3604, %v3643
  %v3652 = vmul.f32 %v3608, %v3643
  %v3653 = vmul.f32 %v3612, %v3643
  %v3654 = vmul.f32 %v3616, %v3643
  %v3655 = vmul.f32 %v3620, %v3643
  %v3656 = vmul.f32 %v3624, %v3643
  %v3657 = vmul.f32 %v3628, %v3643
  %v3658 = vmul.f32 %v3632, %v3643
  %v3659 = vmul.f32 %v3636, %v3643
  %v3660 = vsub.f32 %v3238, %v3644
  %v3661 = vsub.f32 %v3385, %v3644
  %v3662 = vsub.f32 %v3532, %v3644
  %v3663 = vsub.f32 %v3240, %v3645
  %v3664 = vsub.f32 %v3387, %v3645
  %v3665 = vsub.f32 %v3534, %v3645
  %v3666 = vsub.f32 %v3243, %v3646
  %v3667 = vsub.f32 %v3390, %v3646
  %v3668 = vsub.f32 %v3537, %v3646
  %v3669 = vsub.f32 %v3245, %v3647
  %v3670 = vsub.f32 %v3392, %v3647
  %v3671 = vsub.f32 %v3539, %v3647
  %v3672 = vsub.f32 %v3248, %v3648
  %v3673 = vsub.f32 %v3395, %v3648
  %v3674 = vsub.f32 %v3542, %v3648
  %v3675 = vsub.f32 %v3250, %v3649
  %v3676 = vsub.f32 %v3397, %v3649
  %v3677 = vsub.f32 %v3544, %v3649
  %v3678 = vsub.f32 %v3253, %v3650
  %v3679 = vsub.f32 %v3400, %v3650
  %v3680 = vsub.f32 %v3547, %v3650
  %v3681 = vsub.f32 %v3255, %v3651
  %v3682 = vsub.f32 %v3402, %v3651
  %v3683 = vsub.f32 %v3549, %v3651
  %v3684 = vsub.f32 %v3258, %v3652
  %v3685 = vsub.f32 %v3405, %v3652
  %v3686 = vsub.f32 %v3552, %v3652
  %v3687 = vsub.f32 %v3260, %v3653
  %v3688 = vsub.f32 %v3407, %v3653
  %v3689 = vsub.f32 %v3554, %v3653
  %v3690 = vsub.f32 %v3263, %v3654
  %v3691 = vsub.f32 %v3410, %v3654
  %v3692 = vsub.f32 %v3557, %v3654
  %v3693 = vsub.f32 %v3265, %v3655
  %v3694 = vsub.f32 %v3412, %v3655
  %v3695 = vsub.f32 %v3559, %v3655
  %v3696 = vsub.f32 %v3268, %v3656
  %v3697 = vsub.f32 %v3415, %v3656
  %v3698 = vsub.f32 %v3562, %v3656
  %v3699 = vsub.f32 %v3270, %v3657
  %v3700 = vsub.f32 %v3417, %v3657
  %v3701 = vsub.f32 %v3564, %v3657
  %v3702 = vsub.f32 %v3273, %v3658
  %v3703 = vsub.f32 %v3420, %v3658
  %v3704 = vsub.f32 %v3567, %v3658
  %v3705 = vsub.f32 %v3275, %v3659
  %v3706 = vsub.f32 %v3422, %v3659
  %v3707 = vsub.f32 %v3569, %v3659
  %v3708 = vmul.f32 %v3660, %v3660
  %v3709 = vmul.f32 %v3661, %v3661
  %v3710 = vmul.f32 %v3662, %v3662
  %v3711 = vmul.f32 %v3663, %v3663
  %v3712 = vmul.f32 %v3664, %v3664
  %v3713 = vmul.f32 %v3665, %v3665
  %v3714 = vmul.f32 %v3666, %v3666
  %v3715 = vmul.f32 %v3667, %v3667
  %v3716 = vmul.f32 %v3668, %v3668
  %v3717 = vmul.f32 %v3669, %v3669
  %v3718 = vmul.f32 %v3670, %v3670
  %v3719 = vmul.f32 %v3671, %v3671
  %v3720 = vmul.f32 %v3672, %v3672
  %v3721 = vmul.f32 %v3673, %v3673
  %v3722 = vmul.f32 %v3674, %v3674
  %v3723 = vmul.f32 %v3675, %v3675
  %v3724 = vmul.f32 %v3676, %v3676
  %v3725 = vmul.f32 %v3677, %v3677
  %v3726 = vmul.f32 %v3678, %v3678
  %v3727 = vmul.f32 %v3679, %v3679
  %v3728 = vmul.f32 %v3680, %v3680
  %v3729 = vmul.f32 %v3681, %v3681
  %v3730 = vmul.f32 %v3682, %v3682
  %v3731 = vmul.f32 %v3683, %v3683
  %v3732 = vmul.f32 %v3684, %v3684
  %v3733 = vmul.f32 %v3685, %v3685
  %v3734 = vmul.f32 %v3686, %v3686
  %v3735 = vmul.f32 %v3687, %v3687
  %v3736 = vmul.f32 %v3688, %v3688
  %v3737 = vmul.f32 %v3689, %v3689
  %v3738 = vmul.f32 %v3690, %v3690
  %v3739 = vmul.f32 %v3691, %v3691
  %v3740 = vmul.f32 %v3692, %v3692
  %v3741 = vmul.f32 %v3693, %v3693
  %v3742 = vmul.f32 %v3694, %v3694
  %v3743 = vmul.f32 %v3695, %v3695
  %v3744 = vmul.f32 %v3696, %v3696
  %v3745 = vmul.f32 %v3697, %v3697
  %v3746 = vmul.f32 %v3698, %v3698
  %v3747 = vmul.f32 %v3699, %v3699
  %v3748 = vmul.f32 %v3700, %v3700
  %v3749 = vmul.f32 %v3701, %v3701
  %v3750 = vmul.f32 %v3702, %v3702
  %v3751 = vmul.f32 %v3703, %v3703
  %v3752 = vmul.f32 %v3704, %v3704
  %v3753 = vmul.f32 %v3705, %v3705
  %v3754 = vmul.f32 %v3706, %v3706
  %v3755 = vmul.f32 %v3707, %v3707
  %v3756 = vadd.f32 %v3708, %v3709
  %v3757 = vadd.f32 %v3756, %v3710
  %3758 = vadd.xlane.f32.xlu0 %v3757
  %v3759 = vpop.xlane.xlu0 %3758
  %v3760 = vadd.f32 %v3711, %v3712
  %v3761 = vadd.f32 %v3760, %v3713
  %3762 = vadd.xlane.f32.xlu0 %v3761
  %v3763 = vpop.xlane.xlu0 %3762
  %v3764 = vadd.f32 %v3714, %v3715
  %v3765 = vadd.f32 %v3764, %v3716
  %3766 = vadd.xlane.f32.xlu0 %v3765
  %v3767 = vpop.xlane.xlu0 %3766
  %v3768 = vadd.f32 %v3717, %v3718
  %v3769 = vadd.f32 %v3768, %v3719
  %3770 = vadd.xlane.f32.xlu0 %v3769
  %v3771 = vpop.xlane.xlu0 %3770
  %v3772 = vadd.f32 %v3720, %v3721
  %v3773 = vadd.f32 %v3772, %v3722
  %3774 = vadd.xlane.f32.xlu0 %v3773
  %v3775 = vpop.xlane.xlu0 %3774
  %v3776 = vadd.f32 %v3723, %v3724
  %v3777 = vadd.f32 %v3776, %v3725
  %3778 = vadd.xlane.f32.xlu0 %v3777
  %v3779 = vpop.xlane.xlu0 %3778
  %v3780 = vadd.f32 %v3726, %v3727
  %v3781 = vadd.f32 %v3780, %v3728
  %3782 = vadd.xlane.f32.xlu0 %v3781
  %v3783 = vpop.xlane.xlu0 %3782
  %v3784 = vadd.f32 %v3729, %v3730
  %v3785 = vadd.f32 %v3784, %v3731
  %3786 = vadd.xlane.f32.xlu0 %v3785
  %v3787 = vpop.xlane.xlu0 %3786
  %v3788 = vadd.f32 %v3732, %v3733
  %v3789 = vadd.f32 %v3788, %v3734
  %3790 = vadd.xlane.f32.xlu0 %v3789
  %v3791 = vpop.xlane.xlu0 %3790
  %v3792 = vadd.f32 %v3735, %v3736
  %v3793 = vadd.f32 %v3792, %v3737
  %3794 = vadd.xlane.f32.xlu0 %v3793
  %v3795 = vpop.xlane.xlu0 %3794
  %v3796 = vadd.f32 %v3738, %v3739
  %v3797 = vadd.f32 %v3796, %v3740
  %3798 = vadd.xlane.f32.xlu0 %v3797
  %v3799 = vpop.xlane.xlu0 %3798
  %v3800 = vadd.f32 %v3741, %v3742
  %v3801 = vadd.f32 %v3800, %v3743
  %3802 = vadd.xlane.f32.xlu0 %v3801
  %v3803 = vpop.xlane.xlu0 %3802
  %v3804 = vadd.f32 %v3744, %v3745
  %v3805 = vadd.f32 %v3804, %v3746
  %3806 = vadd.xlane.f32.xlu0 %v3805
  %v3807 = vpop.xlane.xlu0 %3806
  %v3808 = vadd.f32 %v3747, %v3748
  %v3809 = vadd.f32 %v3808, %v3749
  %3810 = vadd.xlane.f32.xlu0 %v3809
  %v3811 = vpop.xlane.xlu0 %3810
  %v3812 = vadd.f32 %v3750, %v3751
  %v3813 = vadd.f32 %v3812, %v3752
  %3814 = vadd.xlane.f32.xlu0 %v3813
  %v3815 = vpop.xlane.xlu0 %3814
  %v3816 = vadd.f32 %v3753, %v3754
  %v3817 = vadd.f32 %v3816, %v3755
  %3818 = vadd.xlane.f32.xlu0 %v3817
  %v3819 = vpop.xlane.xlu0 %3818
  %v3820 = vmul.f32 %v3759, %v3643
  %v3821 = vmul.f32 %v3763, %v3643
  %v3822 = vmul.f32 %v3767, %v3643
  %v3823 = vmul.f32 %v3771, %v3643
  %v3824 = vmul.f32 %v3775, %v3643
  %v3825 = vmul.f32 %v3779, %v3643
  %v3826 = vmul.f32 %v3783, %v3643
  %v3827 = vmul.f32 %v3787, %v3643
  %v3828 = vmul.f32 %v3791, %v3643
  %v3829 = vmul.f32 %v3795, %v3643
  %v3830 = vmul.f32 %v3799, %v3643
  %v3831 = vmul.f32 %v3803, %v3643
  %v3832 = vmul.f32 %v3807, %v3643
  %v3833 = vmul.f32 %v3811, %v3643
  %v3834 = vmul.f32 %v3815, %v3643
  %v3835 = vmul.f32 %v3819, %v3643
  %v3836 = vadd.f32 %v3820, 0.001
  %v3837 = vadd.f32 %v3821, 0.001
  %v3838 = vadd.f32 %v3822, 0.001
  %v3839 = vadd.f32 %v3823, 0.001
  %v3840 = vadd.f32 %v3824, 0.001
  %v3841 = vadd.f32 %v3825, 0.001
  %v3842 = vadd.f32 %v3826, 0.001
  %v3843 = vadd.f32 %v3827, 0.001
  %v3844 = vadd.f32 %v3828, 0.001
  %v3845 = vadd.f32 %v3829, 0.001
  %v3846 = vadd.f32 %v3830, 0.001
  %v3847 = vadd.f32 %v3831, 0.001
  %v3848 = vadd.f32 %v3832, 0.001
  %v3849 = vadd.f32 %v3833, 0.001
  %v3850 = vadd.f32 %v3834, 0.001
  %v3851 = vadd.f32 %v3835, 0.001
  %v3852 = vrsqrt.pop %v3836
  %v3853 = vmul.f32 %v3852, %v3836
  %v3854 = vmul.f32 %v3853, %v3852
  %v3855 = vmul.f32 0.5, %v3854
  %v3856 = vsub.f32 1.5, %v3855
  %v3857 = vmul.f32 %v3852, %v3856
  %vm3858 = vweird.f32 %v3836
  %vm3859 = vweird.f32 %v3852
  %vm3860 = vmor %vm3858, %vm3859
  %v3861 = vsel %vm3860, %v3852, %v3857
  %v3862 = vrsqrt.pop %v3837
  %v3863 = vmul.f32 %v3862, %v3837
  %v3864 = vmul.f32 %v3863, %v3862
  %v3865 = vmul.f32 0.5, %v3864
  %v3866 = vsub.f32 1.5, %v3865
  %v3867 = vmul.f32 %v3862, %v3866
  %vm3868 = vweird.f32 %v3837
  %vm3869 = vweird.f32 %v3862
  %vm3870 = vmor %vm3868, %vm3869
  %v3871 = vsel %vm3870, %v3862, %v3867
  %v3872 = vrsqrt.pop %v3838
  %v3873 = vmul.f32 %v3872, %v3838
  %v3874 = vmul.f32 %v3873, %v3872
  %v3875 = vmul.f32 0.5, %v3874
  %v3876 = vsub.f32 1.5, %v3875
  %v3877 = vmul.f32 %v3872, %v3876
  %vm3878 = vweird.f32 %v3838
  %vm3879 = vweird.f32 %v3872
  %vm3880 = vmor %vm3878, %vm3879
  %v3881 = vsel %vm3880, %v3872, %v3877
  %v3882 = vrsqrt.pop %v3839
  %v3883 = vmul.f32 %v3882, %v3839
  %v3884 = vmul.f32 %v3883, %v3882
  %v3885 = vmul.f32 0.5, %v3884
  %v3886 = vsub.f32 1.5, %v3885
  %v3887 = vmul.f32 %v3882, %v3886
  %vm3888 = vweird.f32 %v3839
  %vm3889 = vweird.f32 %v3882
  %vm3890 = vmor %vm3888, %vm3889
  %v3891 = vsel %vm3890, %v3882, %v3887
  %v3892 = vrsqrt.pop %v3840
  %v3893 = vmul.f32 %v3892, %v3840
  %v3894 = vmul.f32 %v3893, %v3892
  %v3895 = vmul.f32 0.5, %v3894
  %v3896 = vsub.f32 1.5, %v3895
  %v3897 = vmul.f32 %v3892, %v3896
  %vm3898 = vweird.f32 %v3840
  %vm3899 = vweird.f32 %v3892
  %vm3900 = vmor %vm3898, %vm3899
  %v3901 = vsel %vm3900, %v3892, %v3897
  %v3902 = vrsqrt.pop %v3841
  %v3903 = vmul.f32 %v3902, %v3841
  %v3904 = vmul.f32 %v3903, %v3902
  %v3905 = vmul.f32 0.5, %v3904
  %v3906 = vsub.f32 1.5, %v3905
  %v3907 = vmul.f32 %v3902, %v3906
  %vm3908 = vweird.f32 %v3841
  %vm3909 = vweird.f32 %v3902
  %vm3910 = vmor %vm3908, %vm3909
  %v3911 = vsel %vm3910, %v3902, %v3907
  %v3912 = vrsqrt.pop %v3842
  %v3913 = vmul.f32 %v3912, %v3842
  %v3914 = vmul.f32 %v3913, %v3912
  %v3915 = vmul.f32 0.5, %v3914
  %v3916 = vsub.f32 1.5, %v3915
  %v3917 = vmul.f32 %v3912, %v3916
  %vm3918 = vweird.f32 %v3842
  %vm3919 = vweird.f32 %v3912
  %vm3920 = vmor %vm3918, %vm3919
  %v3921 = vsel %vm3920, %v3912, %v3917
  %v3922 = vrsqrt.pop %v3843
  %v3923 = vmul.f32 %v3922, %v3843
  %v3924 = vmul.f32 %v3923, %v3922
  %v3925 = vmul.f32 0.5, %v3924
  %v3926 = vsub.f32 1.5, %v3925
  %v3927 = vmul.f32 %v3922, %v3926
  %vm3928 = vweird.f32 %v3843
  %vm3929 = vweird.f32 %v3922
  %vm3930 = vmor %vm3928, %vm3929
  %v3931 = vsel %vm3930, %v3922, %v3927
  %v3932 = vrsqrt.pop %v3844
  %v3933 = vmul.f32 %v3932, %v3844
  %v3934 = vmul.f32 %v3933, %v3932
  %v3935 = vmul.f32 0.5, %v3934
  %v3936 = vsub.f32 1.5, %v3935
  %v3937 = vmul.f32 %v3932, %v3936
  %vm3938 = vweird.f32 %v3844
  %vm3939 = vweird.f32 %v3932
  %vm3940 = vmor %vm3938, %vm3939
  %v3941 = vsel %vm3940, %v3932, %v3937
  %v3942 = vrsqrt.pop %v3845
  %v3943 = vmul.f32 %v3942, %v3845
  %v3944 = vmul.f32 %v3943, %v3942
  %v3945 = vmul.f32 0.5, %v3944
  %v3946 = vsub.f32 1.5, %v3945
  %v3947 = vmul.f32 %v3942, %v3946
  %vm3948 = vweird.f32 %v3845
  %vm3949 = vweird.f32 %v3942
  %vm3950 = vmor %vm3948, %vm3949
  %v3951 = vsel %vm3950, %v3942, %v3947
  %v3952 = vrsqrt.pop %v3846
  %v3953 = vmul.f32 %v3952, %v3846
  %v3954 = vmul.f32 %v3953, %v3952
  %v3955 = vmul.f32 0.5, %v3954
  %v3956 = vsub.f32 1.5, %v3955
  %v3957 = vmul.f32 %v3952, %v3956
  %vm3958 = vweird.f32 %v3846
  %vm3959 = vweird.f32 %v3952
  %vm3960 = vmor %vm3958, %vm3959
  %v3961 = vsel %vm3960, %v3952, %v3957
  %v3962 = vrsqrt.pop %v3847
  %v3963 = vmul.f32 %v3962, %v3847
  %v3964 = vmul.f32 %v3963, %v3962
  %v3965 = vmul.f32 0.5, %v3964
  %v3966 = vsub.f32 1.5, %v3965
  %v3967 = vmul.f32 %v3962, %v3966
  %vm3968 = vweird.f32 %v3847
  %vm3969 = vweird.f32 %v3962
  %vm3970 = vmor %vm3968, %vm3969
  %v3971 = vsel %vm3970, %v3962, %v3967
  %v3972 = vrsqrt.pop %v3848
  %v3973 = vmul.f32 %v3972, %v3848
  %v3974 = vmul.f32 %v3973, %v3972
  %v3975 = vmul.f32 0.5, %v3974
  %v3976 = vsub.f32 1.5, %v3975
  %v3977 = vmul.f32 %v3972, %v3976
  %vm3978 = vweird.f32 %v3848
  %vm3979 = vweird.f32 %v3972
  %vm3980 = vmor %vm3978, %vm3979
  %v3981 = vsel %vm3980, %v3972, %v3977
  %v3982 = vrsqrt.pop %v3849
  %v3983 = vmul.f32 %v3982, %v3849
  %v3984 = vmul.f32 %v3983, %v3982
  %v3985 = vmul.f32 0.5, %v3984
  %v3986 = vsub.f32 1.5, %v3985
  %v3987 = vmul.f32 %v3982, %v3986
  %vm3988 = vweird.f32 %v3849
  %vm3989 = vweird.f32 %v3982
  %vm3990 = vmor %vm3988, %vm3989
  %v3991 = vsel %vm3990, %v3982, %v3987
  %v3992 = vrsqrt.pop %v3850
  %v3993 = vmul.f32 %v3992, %v3850
  %v3994 = vmul.f32 %v3993, %v3992
  %v3995 = vmul.f32 0.5, %v3994
  %v3996 = vsub.f32 1.5, %v3995
  %v3997 = vmul.f32 %v3992, %v3996
  %vm3998 = vweird.f32 %v3850
  %vm3999 = vweird.f32 %v3992
  %vm4000 = vmor %vm3998, %vm3999
  %v4001 = vsel %vm4000, %v3992, %v3997
  %v4002 = vrsqrt.pop %v3851
  %v4003 = vmul.f32 %v4002, %v3851
  %v4004 = vmul.f32 %v4003, %v4002
  %v4005 = vmul.f32 0.5, %v4004
  %v4006 = vsub.f32 1.5, %v4005
  %v4007 = vmul.f32 %v4002, %v4006
  %vm4008 = vweird.f32 %v3851
  %vm4009 = vweird.f32 %v4002
  %vm4010 = vmor %vm4008, %vm4009
  %v4011 = vsel %vm4010, %v4002, %v4007
  %v4012 = vmul.f32 %v3660, %v3861
  %v4013 = vmul.f32 %v3661, %v3861
  %v4014 = vmul.f32 %v3662, %v3861
  %v4015 = vmul.f32 %v3663, %v3871
  %v4016 = vmul.f32 %v3664, %v3871
  %v4017 = vmul.f32 %v3665, %v3871
  %v4018 = vmul.f32 %v3666, %v3881
  %v4019 = vmul.f32 %v3667, %v3881
  %v4020 = vmul.f32 %v3668, %v3881
  %v4021 = vmul.f32 %v3669, %v3891
  %v4022 = vmul.f32 %v3670, %v3891
  %v4023 = vmul.f32 %v3671, %v3891
  %v4024 = vmul.f32 %v3672, %v3901
  %v4025 = vmul.f32 %v3673, %v3901
  %v4026 = vmul.f32 %v3674, %v3901
  %v4027 = vmul.f32 %v3675, %v3911
  %v4028 = vmul.f32 %v3676, %v3911
  %v4029 = vmul.f32 %v3677, %v3911
  %v4030 = vmul.f32 %v3678, %v3921
  %v4031 = vmul.f32 %v3679, %v3921
  %v4032 = vmul.f32 %v3680, %v3921
  %v4033 = vmul.f32 %v3681, %v3931
  %v4034 = vmul.f32 %v3682, %v3931
  %v4035 = vmul.f32 %v3683, %v3931
  %v4036 = vmul.f32 %v3684, %v3941
  %v4037 = vmul.f32 %v3685, %v3941
  %v4038 = vmul.f32 %v3686, %v3941
  %v4039 = vmul.f32 %v3687, %v3951
  %v4040 = vmul.f32 %v3688, %v3951
  %v4041 = vmul.f32 %v3689, %v3951
  %v4042 = vmul.f32 %v3690, %v3961
  %v4043 = vmul.f32 %v3691, %v3961
  %v4044 = vmul.f32 %v3692, %v3961
  %v4045 = vmul.f32 %v3693, %v3971
  %v4046 = vmul.f32 %v3694, %v3971
  %v4047 = vmul.f32 %v3695, %v3971
  %v4048 = vmul.f32 %v3696, %v3981
  %v4049 = vmul.f32 %v3697, %v3981
  %v4050 = vmul.f32 %v3698, %v3981
  %v4051 = vmul.f32 %v3699, %v3991
  %v4052 = vmul.f32 %v3700, %v3991
  %v4053 = vmul.f32 %v3701, %v3991
  %v4054 = vmul.f32 %v3702, %v4001
  %v4055 = vmul.f32 %v3703, %v4001
  %v4056 = vmul.f32 %v3704, %v4001
  %v4057 = vmul.f32 %v3705, %v4011
  %v4058 = vmul.f32 %v3706, %v4011
  %v4059 = vmul.f32 %v3707, %v4011
  %v4061 = vperm.slane %v3571, 0
  %v4062 = vperm.slane %v3571, 1
  %v4063 = vperm.slane %v3571, 2
  %v4067 = vmul.f32 %v4012, %v4061
  %v4068 = vmul.f32 %v4013, %v4062
  %v4069 = vmul.f32 %v4014, %v4063
  %v4070 = vmul.f32 %v4015, %v4061
  %v4071 = vmul.f32 %v4016, %v4062
  %v4072 = vmul.f32 %v4017, %v4063
  %v4073 = vmul.f32 %v4018, %v4061
  %v4074 = vmul.f32 %v4019, %v4062
  %v4075 = vmul.f32 %v4020, %v4063
  %v4076 = vmul.f32 %v4021, %v4061
  %v4077 = vmul.f32 %v4022, %v4062
  %v4078 = vmul.f32 %v4023, %v4063
  %v4079 = vmul.f32 %v4024, %v4061
  %v4080 = vmul.f32 %v4025, %v4062
  %v4081 = vmul.f32 %v4026, %v4063
  %v4082 = vmul.f32 %v4027, %v4061
  %v4083 = vmul.f32 %v4028, %v4062
  %v4084 = vmul.f32 %v4029, %v4063
  %v4085 = vmul.f32 %v4030, %v4061
  %v4086 = vmul.f32 %v4031, %v4062
  %v4087 = vmul.f32 %v4032, %v4063
  %v4088 = vmul.f32 %v4033, %v4061
  %v4089 = vmul.f32 %v4034, %v4062
  %v4090 = vmul.f32 %v4035, %v4063
  %v4091 = vmul.f32 %v4036, %v4061
  %v4092 = vmul.f32 %v4037, %v4062
  %v4093 = vmul.f32 %v4038, %v4063
  %v4094 = vmul.f32 %v4039, %v4061
  %v4095 = vmul.f32 %v4040, %v4062
  %v4096 = vmul.f32 %v4041, %v4063
  %v4097 = vmul.f32 %v4042, %v4061
  %v4098 = vmul.f32 %v4043, %v4062
  %v4099 = vmul.f32 %v4044, %v4063
  %v4100 = vmul.f32 %v4045, %v4061
  %v4101 = vmul.f32 %v4046, %v4062
  %v4102 = vmul.f32 %v4047, %v4063
  %v4103 = vmul.f32 %v4048, %v4061
  %v4104 = vmul.f32 %v4049, %v4062
  %v4105 = vmul.f32 %v4050, %v4063
  %v4106 = vmul.f32 %v4051, %v4061
  %v4107 = vmul.f32 %v4052, %v4062
  %v4108 = vmul.f32 %v4053, %v4063
  %v4109 = vmul.f32 %v4054, %v4061
  %v4110 = vmul.f32 %v4055, %v4062
  %v4111 = vmul.f32 %v4056, %v4063
  %v4112 = vmul.f32 %v4057, %v4061
  %v4113 = vmul.f32 %v4058, %v4062
  %v4114 = vmul.f32 %v4059, %v4063
  %v4116 = vperm.slane %v3572, 0
  %v4117 = vperm.slane %v3572, 1
  %v4118 = vperm.slane %v3572, 2
  %v4122 = vadd.f32 %v4067, %v4116
  %v4123 = vadd.f32 %v4068, %v4117
  %v4124 = vadd.f32 %v4069, %v4118
  %v4125 = vadd.f32 %v4070, %v4116
  %v4126 = vadd.f32 %v4071, %v4117
  %v4127 = vadd.f32 %v4072, %v4118
  %v4128 = vadd.f32 %v4073, %v4116
  %v4129 = vadd.f32 %v4074, %v4117
  %v4130 = vadd.f32 %v4075, %v4118
  %v4131 = vadd.f32 %v4076, %v4116
  %v4132 = vadd.f32 %v4077, %v4117
  %v4133 = vadd.f32 %v4078, %v4118
  %v4134 = vadd.f32 %v4079, %v4116
  %v4135 = vadd.f32 %v4080, %v4117
  %v4136 = vadd.f32 %v4081, %v4118
  %v4137 = vadd.f32 %v4082, %v4116
  %v4138 = vadd.f32 %v4083, %v4117
  %v4139 = vadd.f32 %v4084, %v4118
  %v4140 = vadd.f32 %v4085, %v4116
  %v4141 = vadd.f32 %v4086, %v4117
  %v4142 = vadd.f32 %v4087, %v4118
  %v4143 = vadd.f32 %v4088, %v4116
  %v4144 = vadd.f32 %v4089, %v4117
  %v4145 = vadd.f32 %v4090, %v4118
  %v4146 = vadd.f32 %v4091, %v4116
  %v4147 = vadd.f32 %v4092, %v4117
  %v4148 = vadd.f32 %v4093, %v4118
  %v4149 = vadd.f32 %v4094, %v4116
  %v4150 = vadd.f32 %v4095, %v4117
  %v4151 = vadd.f32 %v4096, %v4118
  %v4152 = vadd.f32 %v4097, %v4116
  %v4153 = vadd.f32 %v4098, %v4117
  %v4154 = vadd.f32 %v4099, %v4118
  %v4155 = vadd.f32 %v4100, %v4116
  %v4156 = vadd.f32 %v4101, %v4117
  %v4157 = vadd.f32 %v4102, %v4118
  %v4158 = vadd.f32 %v4103, %v4116
  %v4159 = vadd.f32 %v4104, %v4117
  %v4160 = vadd.f32 %v4105, %v4118
  %v4161 = vadd.f32 %v4106, %v4116
  %v4162 = vadd.f32 %v4107, %v4117
  %v4163 = vadd.f32 %v4108, %v4118
  %v4164 = vadd.f32 %v4109, %v4116
  %v4165 = vadd.f32 %v4110, %v4117
  %v4166 = vadd.f32 %v4111, %v4118
  %v4167 = vadd.f32 %v4112, %v4116
  %v4168 = vadd.f32 %v4113, %v4117
  %v4169 = vadd.f32 %v4114, %v4118
  %v4170 = vmax.f32 %v4122, 0.0
  %v4171 = vmax.f32 %v4123, 0.0
  %v4172 = vmax.f32 %v4124, 0.0
  %v4173 = vmax.f32 %v4125, 0.0
  %v4174 = vmax.f32 %v4126, 0.0
  %v4175 = vmax.f32 %v4127, 0.0
  %v4176 = vmax.f32 %v4128, 0.0
  %v4177 = vmax.f32 %v4129, 0.0
  %v4178 = vmax.f32 %v4130, 0.0
  %v4179 = vmax.f32 %v4131, 0.0
  %v4180 = vmax.f32 %v4132, 0.0
  %v4181 = vmax.f32 %v4133, 0.0
  %v4182 = vmax.f32 %v4134, 0.0
  %v4183 = vmax.f32 %v4135, 0.0
  %v4184 = vmax.f32 %v4136, 0.0
  %v4185 = vmax.f32 %v4137, 0.0
  %v4186 = vmax.f32 %v4138, 0.0
  %v4187 = vmax.f32 %v4139, 0.0
  %v4188 = vmax.f32 %v4140, 0.0
  %v4189 = vmax.f32 %v4141, 0.0
  %v4190 = vmax.f32 %v4142, 0.0
  %v4191 = vmax.f32 %v4143, 0.0
  %v4192 = vmax.f32 %v4144, 0.0
  %v4193 = vmax.f32 %v4145, 0.0
  %v4194 = vmax.f32 %v4146, 0.0
  %v4195 = vmax.f32 %v4147, 0.0
  %v4196 = vmax.f32 %v4148, 0.0
  %v4197 = vmax.f32 %v4149, 0.0
  %v4198 = vmax.f32 %v4150, 0.0
  %v4199 = vmax.f32 %v4151, 0.0
  %v4200 = vmax.f32 %v4152, 0.0
  %v4201 = vmax.f32 %v4153, 0.0
  %v4202 = vmax.f32 %v4154, 0.0
  %v4203 = vmax.f32 %v4155, 0.0
  %v4204 = vmax.f32 %v4156, 0.0
  %v4205 = vmax.f32 %v4157, 0.0
  %v4206 = vmax.f32 %v4158, 0.0
  %v4207 = vmax.f32 %v4159, 0.0
  %v4208 = vmax.f32 %v4160, 0.0
  %v4209 = vmax.f32 %v4161, 0.0
  %v4210 = vmax.f32 %v4162, 0.0
  %v4211 = vmax.f32 %v4163, 0.0
  %v4212 = vmax.f32 %v4164, 0.0
  %v4213 = vmax.f32 %v4165, 0.0
  %v4214 = vmax.f32 %v4166, 0.0
  %v4215 = vmax.f32 %v4167, 0.0
  %v4216 = vmax.f32 %v4168, 0.0
  %v4217 = vmax.f32 %v4169, 0.0
  %v4218 = vpack.c.bf16 %v4173, %v4170
  %v4219 = vpack.c.bf16 %v4174, %v4171
  %v4220 = vpack.c.bf16 %v4175, %v4172
  %v4221 = vpack.c.bf16 %v4179, %v4176
  %v4222 = vpack.c.bf16 %v4180, %v4177
  %v4223 = vpack.c.bf16 %v4181, %v4178
  %v4224 = vpack.c.bf16 %v4185, %v4182
  %v4225 = vpack.c.bf16 %v4186, %v4183
  %v4226 = vpack.c.bf16 %v4187, %v4184
  %v4227 = vpack.c.bf16 %v4191, %v4188
  %v4228 = vpack.c.bf16 %v4192, %v4189
  %v4229 = vpack.c.bf16 %v4193, %v4190
  %v4230 = vpack.c.bf16 %v4197, %v4194
  %v4231 = vpack.c.bf16 %v4198, %v4195
  %v4232 = vpack.c.bf16 %v4199, %v4196
  %v4233 = vpack.c.bf16 %v4203, %v4200
  %v4234 = vpack.c.bf16 %v4204, %v4201
  %v4235 = vpack.c.bf16 %v4205, %v4202
  %v4236 = vpack.c.bf16 %v4209, %v4206
  %v4237 = vpack.c.bf16 %v4210, %v4207
  %v4238 = vpack.c.bf16 %v4211, %v4208
  %v4239 = vpack.c.bf16 %v4215, %v4212
  %v4240 = vpack.c.bf16 %v4216, %v4213
  %v4241 = vpack.c.bf16 %v4217, %v4214
  %v4242 = vld [vmem:[%s9] sm:$0xff]
  %v4243 = vld [vmem:[%s9 + $0x8] sm:$0xf]
  %v4244 = vld [vmem:[%s9 + $0xc] sm:$0xff]
  %v4245 = vld [vmem:[%s9 + $0x14] sm:$0xf]
  %v4246 = vld [vmem:[%s9 + $0x18] sm:$0xff]
  %v4247 = vld [vmem:[%s9 + $0x20] sm:$0xf]
  %v4248 = vld [vmem:[%s9 + $0x24] sm:$0xff]
  %v4249 = vld [vmem:[%s9 + $0x2c] sm:$0xf]
  %v4250 = vld [vmem:[%s9 + $0x30] sm:$0xff]
  %v4251 = vld [vmem:[%s9 + $0x38] sm:$0xf]
  %v4252 = vld [vmem:[%s9 + $0x3c] sm:$0xff]
  %v4253 = vld [vmem:[%s9 + $0x44] sm:$0xf]
  %v4254 = vld [vmem:[%s9 + $0x48] sm:$0xff]
  %v4255 = vld [vmem:[%s9 + $0x50] sm:$0xf]
  %v4256 = vld [vmem:[%s9 + $0x54] sm:$0xff]
  %v4257 = vld [vmem:[%s9 + $0x5c] sm:$0xf]
  %v4258 = vld [vmem:[%s9 + $0x60] sm:$0xff]
  %v4259 = vld [vmem:[%s9 + $0x68] sm:$0xf]
  %v4260 = vld [vmem:[%s9 + $0x6c] sm:$0xff]
  %v4261 = vld [vmem:[%s9 + $0x74] sm:$0xf]
  %v4262 = vld [vmem:[%s9 + $0x78] sm:$0xff]
  %v4263 = vld [vmem:[%s9 + $0x80] sm:$0xf]
  %v4264 = vld [vmem:[%s9 + $0x84] sm:$0xff]
  %v4265 = vld [vmem:[%s9 + $0x8c] sm:$0xf]
  %v4266 = vld [vmem:[%s9 + $0x90] sm:$0xff]
  %v4267 = vld [vmem:[%s9 + $0x98] sm:$0xf]
  %v4268 = vld [vmem:[%s9 + $0x9c] sm:$0xff]
  %v4269 = vld [vmem:[%s9 + $0xa4] sm:$0xf]
  %v4270 = vld [vmem:[%s9 + $0xa8] sm:$0xff]
  %v4271 = vld [vmem:[%s9 + $0xb0] sm:$0xf]
  %v4272 = vld [vmem:[%s9 + $0xb4] sm:$0xff]
  %v4273 = vld [vmem:[%s9 + $0xbc] sm:$0xf]
  %v4274 = vld [vmem:[%s9 + $0xc0] sm:$0xff]
  %v4275 = vld [vmem:[%s9 + $0xc8] sm:$0xf]
  %v4276 = vld [vmem:[%s9 + $0xcc] sm:$0xff]
  %v4277 = vld [vmem:[%s9 + $0xd4] sm:$0xf]
  %v4278 = vld [vmem:[%s9 + $0xd8] sm:$0xff]
  %v4279 = vld [vmem:[%s9 + $0xe0] sm:$0xf]
  %v4280 = vld [vmem:[%s9 + $0xe4] sm:$0xff]
  %v4281 = vld [vmem:[%s9 + $0xec] sm:$0xf]
  %v4282 = vld [vmem:[%s9 + $0xf0] sm:$0xff]
  %v4283 = vld [vmem:[%s9 + $0xf8] sm:$0xf]
  %v4284 = vld [vmem:[%s9 + $0xfc] sm:$0xff]
  %v4285 = vld [vmem:[%s9 + $0x104] sm:$0xf]
  %v4286 = vld [vmem:[%s9 + $0x108] sm:$0xff]
  %v4287 = vld [vmem:[%s9 + $0x110] sm:$0xf]
  %v4288 = vld [vmem:[%s9 + $0x114] sm:$0xff]
  %v4289 = vld [vmem:[%s9 + $0x11c] sm:$0xf]
  %v4290 = vld [vmem:[%s9 + $0x120] sm:$0xff]
  %v4291 = vld [vmem:[%s9 + $0x128] sm:$0xf]
  %v4292 = vld [vmem:[%s9 + $0x12c] sm:$0xff]
  %v4293 = vld [vmem:[%s9 + $0x134] sm:$0xf]
  %v4294 = vld [vmem:[%s9 + $0x138] sm:$0xff]
  %v4295 = vld [vmem:[%s9 + $0x140] sm:$0xf]
  %v4296 = vld [vmem:[%s9 + $0x144] sm:$0xff]
  %v4297 = vld [vmem:[%s9 + $0x14c] sm:$0xf]
  %v4298 = vld [vmem:[%s9 + $0x150] sm:$0xff]
  %v4299 = vld [vmem:[%s9 + $0x158] sm:$0xf]
  %v4300 = vld [vmem:[%s9 + $0x15c] sm:$0xff]
  %v4301 = vld [vmem:[%s9 + $0x164] sm:$0xf]
  %v4302 = vld [vmem:[%s9 + $0x168] sm:$0xff]
  %v4303 = vld [vmem:[%s9 + $0x170] sm:$0xf]
  %v4304 = vld [vmem:[%s9 + $0x174] sm:$0xff]
  %v4305 = vld [vmem:[%s9 + $0x17c] sm:$0xf]
  %v4306 = vld [vmem:[%s9 + $0x180] sm:$0xff]
  %v4307 = vld [vmem:[%s9 + $0x188] sm:$0xf]
  %v4308 = vld [vmem:[%s9 + $0x18c] sm:$0xff]
  %v4309 = vld [vmem:[%s9 + $0x194] sm:$0xf]
  %v4310 = vld [vmem:[%s9 + $0x198] sm:$0xff]
  %v4311 = vld [vmem:[%s9 + $0x1a0] sm:$0xf]
  %v4312 = vld [vmem:[%s9 + $0x1a4] sm:$0xff]
  %v4313 = vld [vmem:[%s9 + $0x1ac] sm:$0xf]
  %v4314 = vld [vmem:[%s9 + $0x1b0] sm:$0xff]
  %v4315 = vld [vmem:[%s9 + $0x1b8] sm:$0xf]
  %v4316 = vld [vmem:[%s9 + $0x1bc] sm:$0xff]
  %v4317 = vld [vmem:[%s9 + $0x1c4] sm:$0xf]
  %v4318 = vld [vmem:[%s9 + $0x1c8] sm:$0xff]
  %v4319 = vld [vmem:[%s9 + $0x1d0] sm:$0xf]
  %v4320 = vld [vmem:[%s9 + $0x1d4] sm:$0xff]
  %v4321 = vld [vmem:[%s9 + $0x1dc] sm:$0xf]
  %v4322 = vld [vmem:[%s9 + $0x1e0] sm:$0xff]
  %v4323 = vld [vmem:[%s9 + $0x1e8] sm:$0xf]
  %v4324 = vld [vmem:[%s9 + $0x1ec] sm:$0xff]
  %v4325 = vld [vmem:[%s9 + $0x1f4] sm:$0xf]
  %v4326 = vld [vmem:[%s9 + $0x1f8] sm:$0xff]
  %v4327 = vld [vmem:[%s9 + $0x200] sm:$0xf]
  %v4328 = vld [vmem:[%s9 + $0x204] sm:$0xff]
  %v4329 = vld [vmem:[%s9 + $0x20c] sm:$0xf]
  %v4330 = vld [vmem:[%s9 + $0x210] sm:$0xff]
  %v4331 = vld [vmem:[%s9 + $0x218] sm:$0xf]
  %v4332 = vld [vmem:[%s9 + $0x21c] sm:$0xff]
  %v4333 = vld [vmem:[%s9 + $0x224] sm:$0xf]
  %v4334 = vld [vmem:[%s9 + $0x228] sm:$0xff]
  %v4335 = vld [vmem:[%s9 + $0x230] sm:$0xf]
  %v4336 = vld [vmem:[%s9 + $0x234] sm:$0xff]
  %v4337 = vld [vmem:[%s9 + $0x23c] sm:$0xf]
  %v4338 = vld [vmem:[%s10] sm:$0x7]
  %v4340 = vperm.slane %v4338, 0
  %v4341 = vperm.slane %v4338, 1
  %v4342 = vperm.slane %v4338, 2
  %v4442 = vunpack.c.l.b16 %v4242
  %v4443 = vunpack.c.h.b16 %v4242
  %v4444 = vunpack.c.l.b16 %v4243
  %v4445 = vunpack.c.l.b16 %v4244
  %v4446 = vunpack.c.h.b16 %v4244
  %v4447 = vunpack.c.l.b16 %v4245
  %v4448 = vunpack.c.l.b16 %v4246
  %v4449 = vunpack.c.h.b16 %v4246
  %v4450 = vunpack.c.l.b16 %v4247
  %v4451 = vunpack.c.l.b16 %v4248
  %v4452 = vunpack.c.h.b16 %v4248
  %v4453 = vunpack.c.l.b16 %v4249
  %v4454 = vunpack.c.l.b16 %v4250
  %v4455 = vunpack.c.h.b16 %v4250
  %v4456 = vunpack.c.l.b16 %v4251
  %v4457 = vunpack.c.l.b16 %v4252
  %v4458 = vunpack.c.h.b16 %v4252
  %v4459 = vunpack.c.l.b16 %v4253
  %v4460 = vunpack.c.l.b16 %v4254
  %v4461 = vunpack.c.h.b16 %v4254
  %v4462 = vunpack.c.l.b16 %v4255
  %v4463 = vunpack.c.l.b16 %v4256
  %v4464 = vunpack.c.h.b16 %v4256
  %v4465 = vunpack.c.l.b16 %v4257
  %v4466 = vunpack.c.l.b16 %v4258
  %v4467 = vunpack.c.h.b16 %v4258
  %v4468 = vunpack.c.l.b16 %v4259
  %v4469 = vunpack.c.l.b16 %v4260
  %v4470 = vunpack.c.h.b16 %v4260
  %v4471 = vunpack.c.l.b16 %v4261
  %v4472 = vunpack.c.l.b16 %v4262
  %v4473 = vunpack.c.h.b16 %v4262
  %v4474 = vunpack.c.l.b16 %v4263
  %v4475 = vunpack.c.l.b16 %v4264
  %v4476 = vunpack.c.h.b16 %v4264
  %v4477 = vunpack.c.l.b16 %v4265
  %v4478 = vunpack.c.l.b16 %v4266
  %v4479 = vunpack.c.h.b16 %v4266
  %v4480 = vunpack.c.l.b16 %v4267
  %v4481 = vunpack.c.l.b16 %v4268
  %v4482 = vunpack.c.h.b16 %v4268
  %v4483 = vunpack.c.l.b16 %v4269
  %v4484 = vunpack.c.l.b16 %v4270
  %v4485 = vunpack.c.h.b16 %v4270
  %v4486 = vunpack.c.l.b16 %v4271
  %v4487 = vunpack.c.l.b16 %v4272
  %v4488 = vunpack.c.h.b16 %v4272
  %v4489 = vunpack.c.l.b16 %v4273
  %v4490 = vunpack.c.l.b16 %v4274
  %v4491 = vunpack.c.h.b16 %v4274
  %v4492 = vunpack.c.l.b16 %v4275
  %v4493 = vunpack.c.l.b16 %v4276
  %v4494 = vunpack.c.h.b16 %v4276
  %v4495 = vunpack.c.l.b16 %v4277
  %v4496 = vunpack.c.l.b16 %v4278
  %v4497 = vunpack.c.h.b16 %v4278
  %v4498 = vunpack.c.l.b16 %v4279
  %v4499 = vunpack.c.l.b16 %v4280
  %v4500 = vunpack.c.h.b16 %v4280
  %v4501 = vunpack.c.l.b16 %v4281
  %v4502 = vunpack.c.l.b16 %v4282
  %v4503 = vunpack.c.h.b16 %v4282
  %v4504 = vunpack.c.l.b16 %v4283
  %v4505 = vunpack.c.l.b16 %v4284
  %v4506 = vunpack.c.h.b16 %v4284
  %v4507 = vunpack.c.l.b16 %v4285
  %v4508 = vunpack.c.l.b16 %v4286
  %v4509 = vunpack.c.h.b16 %v4286
  %v4510 = vunpack.c.l.b16 %v4287
  %v4511 = vunpack.c.l.b16 %v4288
  %v4512 = vunpack.c.h.b16 %v4288
  %v4513 = vunpack.c.l.b16 %v4289
  %v4514 = vunpack.c.l.b16 %v4290
  %v4515 = vunpack.c.h.b16 %v4290
  %v4516 = vunpack.c.l.b16 %v4291
  %v4517 = vunpack.c.l.b16 %v4292
  %v4518 = vunpack.c.h.b16 %v4292
  %v4519 = vunpack.c.l.b16 %v4293
  %v4520 = vunpack.c.l.b16 %v4294
  %v4521 = vunpack.c.h.b16 %v4294
  %v4522 = vunpack.c.l.b16 %v4295
  %v4523 = vunpack.c.l.b16 %v4296
  %v4524 = vunpack.c.h.b16 %v4296
  %v4525 = vunpack.c.l.b16 %v4297
  %v4526 = vunpack.c.l.b16 %v4298
  %v4527 = vunpack.c.h.b16 %v4298
  %v4528 = vunpack.c.l.b16 %v4299
  %v4529 = vunpack.c.l.b16 %v4300
  %v4530 = vunpack.c.h.b16 %v4300
  %v4531 = vunpack.c.l.b16 %v4301
  %v4532 = vunpack.c.l.b16 %v4302
  %v4533 = vunpack.c.h.b16 %v4302
  %v4534 = vunpack.c.l.b16 %v4303
  %v4535 = vunpack.c.l.b16 %v4304
  %v4536 = vunpack.c.h.b16 %v4304
  %v4537 = vunpack.c.l.b16 %v4305
  %v4538 = vunpack.c.l.b16 %v4306
  %v4539 = vunpack.c.h.b16 %v4306
  %v4540 = vunpack.c.l.b16 %v4307
  %v4541 = vunpack.c.l.b16 %v4308
  %v4542 = vunpack.c.h.b16 %v4308
  %v4543 = vunpack.c.l.b16 %v4309
  %v4544 = vunpack.c.l.b16 %v4310
  %v4545 = vunpack.c.h.b16 %v4310
  %v4546 = vunpack.c.l.b16 %v4311
  %v4547 = vunpack.c.l.b16 %v4312
  %v4548 = vunpack.c.h.b16 %v4312
  %v4549 = vunpack.c.l.b16 %v4313
  %v4550 = vunpack.c.l.b16 %v4314
  %v4551 = vunpack.c.h.b16 %v4314
  %v4552 = vunpack.c.l.b16 %v4315
  %v4553 = vunpack.c.l.b16 %v4316
  %v4554 = vunpack.c.h.b16 %v4316
  %v4555 = vunpack.c.l.b16 %v4317
  %v4556 = vunpack.c.l.b16 %v4318
  %v4557 = vunpack.c.h.b16 %v4318
  %v4558 = vunpack.c.l.b16 %v4319
  %v4559 = vunpack.c.l.b16 %v4320
  %v4560 = vunpack.c.h.b16 %v4320
  %v4561 = vunpack.c.l.b16 %v4321
  %v4562 = vunpack.c.l.b16 %v4322
  %v4563 = vunpack.c.h.b16 %v4322
  %v4564 = vunpack.c.l.b16 %v4323
  %v4565 = vunpack.c.l.b16 %v4324
  %v4566 = vunpack.c.h.b16 %v4324
  %v4567 = vunpack.c.l.b16 %v4325
  %v4568 = vunpack.c.l.b16 %v4326
  %v4569 = vunpack.c.h.b16 %v4326
  %v4570 = vunpack.c.l.b16 %v4327
  %v4571 = vunpack.c.l.b16 %v4328
  %v4572 = vunpack.c.h.b16 %v4328
  %v4573 = vunpack.c.l.b16 %v4329
  %v4574 = vunpack.c.l.b16 %v4330
  %v4575 = vunpack.c.h.b16 %v4330
  %v4576 = vunpack.c.l.b16 %v4331
  %v4577 = vunpack.c.l.b16 %v4332
  %v4578 = vunpack.c.h.b16 %v4332
  %v4579 = vunpack.c.l.b16 %v4333
  %v4580 = vunpack.c.l.b16 %v4334
  %v4581 = vunpack.c.h.b16 %v4334
  %v4582 = vunpack.c.l.b16 %v4335
  %v4583 = vunpack.c.l.b16 %v4336
  %v4584 = vunpack.c.h.b16 %v4336
  %v4585 = vunpack.c.l.b16 %v4337
  %v4586 = vpack.c.b16 %v4445, %v4442
  %v4587 = vpack.c.b16 %v4446, %v4443
  %v4588 = vpack.c.b16 %v4447, %v4444
  %v4589 = vpack.c.b16 %v4451, %v4448
  %v4590 = vpack.c.b16 %v4452, %v4449
  %v4591 = vpack.c.b16 %v4453, %v4450
  %v4592 = vpack.c.b16 %v4457, %v4454
  %v4593 = vpack.c.b16 %v4458, %v4455
  %v4594 = vpack.c.b16 %v4459, %v4456
  %v4595 = vpack.c.b16 %v4463, %v4460
  %v4596 = vpack.c.b16 %v4464, %v4461
  %v4597 = vpack.c.b16 %v4465, %v4462
  %v4598 = vpack.c.b16 %v4469, %v4466
  %v4599 = vpack.c.b16 %v4470, %v4467
  %v4600 = vpack.c.b16 %v4471, %v4468
  %v4601 = vpack.c.b16 %v4475, %v4472
  %v4602 = vpack.c.b16 %v4476, %v4473
  %v4603 = vpack.c.b16 %v4477, %v4474
  %v4604 = vpack.c.b16 %v4481, %v4478
  %v4605 = vpack.c.b16 %v4482, %v4479
  %v4606 = vpack.c.b16 %v4483, %v4480
  %v4607 = vpack.c.b16 %v4487, %v4484
  %v4608 = vpack.c.b16 %v4488, %v4485
  %v4609 = vpack.c.b16 %v4489, %v4486
  %v4610 = vpack.c.b16 %v4493, %v4490
  %v4611 = vpack.c.b16 %v4494, %v4491
  %v4612 = vpack.c.b16 %v4495, %v4492
  %v4613 = vpack.c.b16 %v4499, %v4496
  %v4614 = vpack.c.b16 %v4500, %v4497
  %v4615 = vpack.c.b16 %v4501, %v4498
  %v4616 = vpack.c.b16 %v4505, %v4502
  %v4617 = vpack.c.b16 %v4506, %v4503
  %v4618 = vpack.c.b16 %v4507, %v4504
  %v4619 = vpack.c.b16 %v4511, %v4508
  %v4620 = vpack.c.b16 %v4512, %v4509
  %v4621 = vpack.c.b16 %v4513, %v4510
  %v4622 = vpack.c.b16 %v4517, %v4514
  %v4623 = vpack.c.b16 %v4518, %v4515
  %v4624 = vpack.c.b16 %v4519, %v4516
  %v4625 = vpack.c.b16 %v4523, %v4520
  %v4626 = vpack.c.b16 %v4524, %v4521
  %v4627 = vpack.c.b16 %v4525, %v4522
  %v4628 = vpack.c.b16 %v4529, %v4526
  %v4629 = vpack.c.b16 %v4530, %v4527
  %v4630 = vpack.c.b16 %v4531, %v4528
  %v4631 = vpack.c.b16 %v4535, %v4532
  %v4632 = vpack.c.b16 %v4536, %v4533
  %v4633 = vpack.c.b16 %v4537, %v4534
  %v4634 = vpack.c.b16 %v4541, %v4538
  %v4635 = vpack.c.b16 %v4542, %v4539
  %v4636 = vpack.c.b16 %v4543, %v4540
  %v4637 = vpack.c.b16 %v4547, %v4544
  %v4638 = vpack.c.b16 %v4548, %v4545
  %v4639 = vpack.c.b16 %v4549, %v4546
  %v4640 = vpack.c.b16 %v4553, %v4550
  %v4641 = vpack.c.b16 %v4554, %v4551
  %v4642 = vpack.c.b16 %v4555, %v4552
  %v4643 = vpack.c.b16 %v4559, %v4556
  %v4644 = vpack.c.b16 %v4560, %v4557
  %v4645 = vpack.c.b16 %v4561, %v4558
  %v4646 = vpack.c.b16 %v4565, %v4562
  %v4647 = vpack.c.b16 %v4566, %v4563
  %v4648 = vpack.c.b16 %v4567, %v4564
  %v4649 = vpack.c.b16 %v4571, %v4568
  %v4650 = vpack.c.b16 %v4572, %v4569
  %v4651 = vpack.c.b16 %v4573, %v4570
  %v4652 = vpack.c.b16 %v4577, %v4574
  %v4653 = vpack.c.b16 %v4578, %v4575
  %v4654 = vpack.c.b16 %v4579, %v4576
  %v4655 = vpack.c.b16 %v4583, %v4580
  %v4656 = vpack.c.b16 %v4584, %v4581
  %v4657 = vpack.c.b16 %v4585, %v4582
  %4730 = vmatpush.bf16.msra.mxu0 %v4607
  %4731 = vmatpush.bf16.msra.mxu0 %v4604
  %4732 = vmatpush.bf16.msra.mxu0 %v4601
  %4733 = vmatpush.bf16.msra.mxu0 %v4598
  %4734 = vmatpush.bf16.msra.mxu0 %v4595
  %4735 = vmatpush.bf16.msra.mxu0 %v4592
  %4736 = vmatpush.bf16.msra.mxu0 %v4589
  %4737 = vmatpush.bf16.msra.mxu0 %v4586
  %4738 = vmatmul.bf16.gmra.mxu0 %v4218
  %v4739 = vpop.f32.mrf.mxu0
  %v4740 = vadd.f32 %v4340, %v4739
  %v4741 = vpop.f32.mrf.mxu0
  %v4742 = vadd.f32 %v4340, %v4741
  %4743 = vmatmul.bf16.gmra.mxu0 %v4221
  %v4744 = vpop.f32.mrf.mxu0
  %v4745 = vadd.f32 %v4340, %v4744
  %v4746 = vpop.f32.mrf.mxu0
  %v4747 = vadd.f32 %v4340, %v4746
  %4748 = vmatmul.bf16.gmra.mxu0 %v4224
  %v4749 = vpop.f32.mrf.mxu0
  %v4750 = vadd.f32 %v4340, %v4749
  %v4751 = vpop.f32.mrf.mxu0
  %v4752 = vadd.f32 %v4340, %v4751
  %4753 = vmatmul.bf16.gmra.mxu0 %v4227
  %v4754 = vpop.f32.mrf.mxu0
  %v4755 = vadd.f32 %v4340, %v4754
  %v4756 = vpop.f32.mrf.mxu0
  %v4757 = vadd.f32 %v4340, %v4756
  %4758 = vmatmul.bf16.gmra.mxu0 %v4230
  %v4759 = vpop.f32.mrf.mxu0
  %v4760 = vadd.f32 %v4340, %v4759
  %v4761 = vpop.f32.mrf.mxu0
  %v4762 = vadd.f32 %v4340, %v4761
  %4763 = vmatmul.bf16.gmra.mxu0 %v4233
  %v4764 = vpop.f32.mrf.mxu0
  %v4765 = vadd.f32 %v4340, %v4764
  %v4766 = vpop.f32.mrf.mxu0
  %v4767 = vadd.f32 %v4340, %v4766
  %4768 = vmatmul.bf16.gmra.mxu0 %v4236
  %v4769 = vpop.f32.mrf.mxu0
  %v4770 = vadd.f32 %v4340, %v4769
  %v4771 = vpop.f32.mrf.mxu0
  %v4772 = vadd.f32 %v4340, %v4771
  %4773 = vmatmul.bf16.gmra.mxu0 %v4239
  %v4774 = vpop.f32.mrf.mxu0
  %v4775 = vadd.f32 %v4340, %v4774
  %v4776 = vpop.f32.mrf.mxu0
  %v4777 = vadd.f32 %v4340, %v4776
  %4778 = vdwg.mxu0
  %4779 = vmatpush.bf16.msra.mxu0 %v4631
  %4780 = vmatpush.bf16.msra.mxu0 %v4628
  %4781 = vmatpush.bf16.msra.mxu0 %v4625
  %4782 = vmatpush.bf16.msra.mxu0 %v4622
  %4783 = vmatpush.bf16.msra.mxu0 %v4619
  %4784 = vmatpush.bf16.msra.mxu0 %v4616
  %4785 = vmatpush.bf16.msra.mxu0 %v4613
  %4786 = vmatpush.bf16.msra.mxu0 %v4610
  %4787 = vmatmul.bf16.gmra.mxu0 %v4219
  %v4788 = vpop.f32.mrf.mxu0
  %v4789 = vadd.f32 %v4740, %v4788
  %v4790 = vpop.f32.mrf.mxu0
  %v4791 = vadd.f32 %v4742, %v4790
  %4792 = vmatmul.bf16.gmra.mxu0 %v4222
  %v4793 = vpop.f32.mrf.mxu0
  %v4794 = vadd.f32 %v4745, %v4793
  %v4795 = vpop.f32.mrf.mxu0
  %v4796 = vadd.f32 %v4747, %v4795
  %4797 = vmatmul.bf16.gmra.mxu0 %v4225
  %v4798 = vpop.f32.mrf.mxu0
  %v4799 = vadd.f32 %v4750, %v4798
  %v4800 = vpop.f32.mrf.mxu0
  %v4801 = vadd.f32 %v4752, %v4800
  %4802 = vmatmul.bf16.gmra.mxu0 %v4228
  %v4803 = vpop.f32.mrf.mxu0
  %v4804 = vadd.f32 %v4755, %v4803
  %v4805 = vpop.f32.mrf.mxu0
  %v4806 = vadd.f32 %v4757, %v4805
  %4807 = vmatmul.bf16.gmra.mxu0 %v4231
  %v4808 = vpop.f32.mrf.mxu0
  %v4809 = vadd.f32 %v4760, %v4808
  %v4810 = vpop.f32.mrf.mxu0
  %v4811 = vadd.f32 %v4762, %v4810
  %4812 = vmatmul.bf16.gmra.mxu0 %v4234
  %v4813 = vpop.f32.mrf.mxu0
  %v4814 = vadd.f32 %v4765, %v4813
  %v4815 = vpop.f32.mrf.mxu0
  %v4816 = vadd.f32 %v4767, %v4815
  %4817 = vmatmul.bf16.gmra.mxu0 %v4237
  %v4818 = vpop.f32.mrf.mxu0
  %v4819 = vadd.f32 %v4770, %v4818
  %v4820 = vpop.f32.mrf.mxu0
  %v4821 = vadd.f32 %v4772, %v4820
  %4822 = vmatmul.bf16.gmra.mxu0 %v4240
  %v4823 = vpop.f32.mrf.mxu0
  %v4824 = vadd.f32 %v4775, %v4823
  %v4825 = vpop.f32.mrf.mxu0
  %v4826 = vadd.f32 %v4777, %v4825
  %4827 = vdwg.mxu0
  %4828 = vmatpush.bf16.msra.mxu0 %v4655
  %4829 = vmatpush.bf16.msra.mxu0 %v4652
  %4830 = vmatpush.bf16.msra.mxu0 %v4649
  %4831 = vmatpush.bf16.msra.mxu0 %v4646
  %4832 = vmatpush.bf16.msra.mxu0 %v4643
  %4833 = vmatpush.bf16.msra.mxu0 %v4640
  %4834 = vmatpush.bf16.msra.mxu0 %v4637
  %4835 = vmatpush.bf16.msra.mxu0 %v4634
  %4836 = vmatmul.bf16.gmra.mxu0 %v4220
  %v4837 = vpop.f32.mrf.mxu0
  %v4838 = vadd.f32 %v4789, %v4837
  %v4839 = vpop.f32.mrf.mxu0
  %v4840 = vadd.f32 %v4791, %v4839
  %4841 = vmatmul.bf16.gmra.mxu0 %v4223
  %v4842 = vpop.f32.mrf.mxu0
  %v4843 = vadd.f32 %v4794, %v4842
  %v4844 = vpop.f32.mrf.mxu0
  %v4845 = vadd.f32 %v4796, %v4844
  %4846 = vmatmul.bf16.gmra.mxu0 %v4226
  %v4847 = vpop.f32.mrf.mxu0
  %v4848 = vadd.f32 %v4799, %v4847
  %v4849 = vpop.f32.mrf.mxu0
  %v4850 = vadd.f32 %v4801, %v4849
  %4851 = vmatmul.bf16.gmra.mxu0 %v4229
  %v4852 = vpop.f32.mrf.mxu0
  %v4853 = vadd.f32 %v4804, %v4852
  %v4854 = vpop.f32.mrf.mxu0
  %v4855 = vadd.f32 %v4806, %v4854
  %4856 = vmatmul.bf16.gmra.mxu0 %v4232
  %v4857 = vpop.f32.mrf.mxu0
  %v4858 = vadd.f32 %v4809, %v4857
  %v4859 = vpop.f32.mrf.mxu0
  %v4860 = vadd.f32 %v4811, %v4859
  %4861 = vmatmul.bf16.gmra.mxu0 %v4235
  %v4862 = vpop.f32.mrf.mxu0
  %v4863 = vadd.f32 %v4814, %v4862
  %v4864 = vpop.f32.mrf.mxu0
  %v4865 = vadd.f32 %v4816, %v4864
  %4866 = vmatmul.bf16.gmra.mxu0 %v4238
  %v4867 = vpop.f32.mrf.mxu0
  %v4868 = vadd.f32 %v4819, %v4867
  %v4869 = vpop.f32.mrf.mxu0
  %v4870 = vadd.f32 %v4821, %v4869
  %4871 = vmatmul.bf16.gmra.mxu0 %v4241
  %v4872 = vpop.f32.mrf.mxu0
  %v4873 = vadd.f32 %v4824, %v4872
  %v4874 = vpop.f32.mrf.mxu0
  %v4875 = vadd.f32 %v4826, %v4874
  %4876 = vdwg.mxu0
  %4877 = vmatpush.bf16.msra.mxu0 %v4608
  %4878 = vmatpush.bf16.msra.mxu0 %v4605
  %4879 = vmatpush.bf16.msra.mxu0 %v4602
  %4880 = vmatpush.bf16.msra.mxu0 %v4599
  %4881 = vmatpush.bf16.msra.mxu0 %v4596
  %4882 = vmatpush.bf16.msra.mxu0 %v4593
  %4883 = vmatpush.bf16.msra.mxu0 %v4590
  %4884 = vmatpush.bf16.msra.mxu0 %v4587
  %4885 = vmatmul.bf16.gmra.mxu0 %v4218
  %v4886 = vpop.f32.mrf.mxu0
  %v4887 = vadd.f32 %v4341, %v4886
  %v4888 = vpop.f32.mrf.mxu0
  %v4889 = vadd.f32 %v4341, %v4888
  %4890 = vmatmul.bf16.gmra.mxu0 %v4221
  %v4891 = vpop.f32.mrf.mxu0
  %v4892 = vadd.f32 %v4341, %v4891
  %v4893 = vpop.f32.mrf.mxu0
  %v4894 = vadd.f32 %v4341, %v4893
  %4895 = vmatmul.bf16.gmra.mxu0 %v4224
  %v4896 = vpop.f32.mrf.mxu0
  %v4897 = vadd.f32 %v4341, %v4896
  %v4898 = vpop.f32.mrf.mxu0
  %v4899 = vadd.f32 %v4341, %v4898
  %4900 = vmatmul.bf16.gmra.mxu0 %v4227
  %v4901 = vpop.f32.mrf.mxu0
  %v4902 = vadd.f32 %v4341, %v4901
  %v4903 = vpop.f32.mrf.mxu0
  %v4904 = vadd.f32 %v4341, %v4903
  %4905 = vmatmul.bf16.gmra.mxu0 %v4230
  %v4906 = vpop.f32.mrf.mxu0
  %v4907 = vadd.f32 %v4341, %v4906
  %v4908 = vpop.f32.mrf.mxu0
  %v4909 = vadd.f32 %v4341, %v4908
  %4910 = vmatmul.bf16.gmra.mxu0 %v4233
  %v4911 = vpop.f32.mrf.mxu0
  %v4912 = vadd.f32 %v4341, %v4911
  %v4913 = vpop.f32.mrf.mxu0
  %v4914 = vadd.f32 %v4341, %v4913
  %4915 = vmatmul.bf16.gmra.mxu0 %v4236
  %v4916 = vpop.f32.mrf.mxu0
  %v4917 = vadd.f32 %v4341, %v4916
  %v4918 = vpop.f32.mrf.mxu0
  %v4919 = vadd.f32 %v4341, %v4918
  %4920 = vmatmul.bf16.gmra.mxu0 %v4239
  %v4921 = vpop.f32.mrf.mxu0
  %v4922 = vadd.f32 %v4341, %v4921
  %v4923 = vpop.f32.mrf.mxu0
  %v4924 = vadd.f32 %v4341, %v4923
  %4925 = vdwg.mxu0
  %4926 = vmatpush.bf16.msra.mxu0 %v4632
  %4927 = vmatpush.bf16.msra.mxu0 %v4629
  %4928 = vmatpush.bf16.msra.mxu0 %v4626
  %4929 = vmatpush.bf16.msra.mxu0 %v4623
  %4930 = vmatpush.bf16.msra.mxu0 %v4620
  %4931 = vmatpush.bf16.msra.mxu0 %v4617
  %4932 = vmatpush.bf16.msra.mxu0 %v4614
  %4933 = vmatpush.bf16.msra.mxu0 %v4611
  %4934 = vmatmul.bf16.gmra.mxu0 %v4219
  %v4935 = vpop.f32.mrf.mxu0
  %v4936 = vadd.f32 %v4887, %v4935
  %v4937 = vpop.f32.mrf.mxu0
  %v4938 = vadd.f32 %v4889, %v4937
  %4939 = vmatmul.bf16.gmra.mxu0 %v4222
  %v4940 = vpop.f32.mrf.mxu0
  %v4941 = vadd.f32 %v4892, %v4940
  %v4942 = vpop.f32.mrf.mxu0
  %v4943 = vadd.f32 %v4894, %v4942
  %4944 = vmatmul.bf16.gmra.mxu0 %v4225
  %v4945 = vpop.f32.mrf.mxu0
  %v4946 = vadd.f32 %v4897, %v4945
  %v4947 = vpop.f32.mrf.mxu0
  %v4948 = vadd.f32 %v4899, %v4947
  %4949 = vmatmul.bf16.gmra.mxu0 %v4228
  %v4950 = vpop.f32.mrf.mxu0
  %v4951 = vadd.f32 %v4902, %v4950
  %v4952 = vpop.f32.mrf.mxu0
  %v4953 = vadd.f32 %v4904, %v4952
  %4954 = vmatmul.bf16.gmra.mxu0 %v4231
  %v4955 = vpop.f32.mrf.mxu0
  %v4956 = vadd.f32 %v4907, %v4955
  %v4957 = vpop.f32.mrf.mxu0
  %v4958 = vadd.f32 %v4909, %v4957
  %4959 = vmatmul.bf16.gmra.mxu0 %v4234
  %v4960 = vpop.f32.mrf.mxu0
  %v4961 = vadd.f32 %v4912, %v4960
  %v4962 = vpop.f32.mrf.mxu0
  %v4963 = vadd.f32 %v4914, %v4962
  %4964 = vmatmul.bf16.gmra.mxu0 %v4237
  %v4965 = vpop.f32.mrf.mxu0
  %v4966 = vadd.f32 %v4917, %v4965
  %v4967 = vpop.f32.mrf.mxu0
  %v4968 = vadd.f32 %v4919, %v4967
  %4969 = vmatmul.bf16.gmra.mxu0 %v4240
  %v4970 = vpop.f32.mrf.mxu0
  %v4971 = vadd.f32 %v4922, %v4970
  %v4972 = vpop.f32.mrf.mxu0
  %v4973 = vadd.f32 %v4924, %v4972
  %4974 = vdwg.mxu0
  %4975 = vmatpush.bf16.msra.mxu0 %v4656
  %4976 = vmatpush.bf16.msra.mxu0 %v4653
  %4977 = vmatpush.bf16.msra.mxu0 %v4650
  %4978 = vmatpush.bf16.msra.mxu0 %v4647
  %4979 = vmatpush.bf16.msra.mxu0 %v4644
  %4980 = vmatpush.bf16.msra.mxu0 %v4641
  %4981 = vmatpush.bf16.msra.mxu0 %v4638
  %4982 = vmatpush.bf16.msra.mxu0 %v4635
  %4983 = vmatmul.bf16.gmra.mxu0 %v4220
  %v4984 = vpop.f32.mrf.mxu0
  %v4985 = vadd.f32 %v4936, %v4984
  %v4986 = vpop.f32.mrf.mxu0
  %v4987 = vadd.f32 %v4938, %v4986
  %4988 = vmatmul.bf16.gmra.mxu0 %v4223
  %v4989 = vpop.f32.mrf.mxu0
  %v4990 = vadd.f32 %v4941, %v4989
  %v4991 = vpop.f32.mrf.mxu0
  %v4992 = vadd.f32 %v4943, %v4991
  %4993 = vmatmul.bf16.gmra.mxu0 %v4226
  %v4994 = vpop.f32.mrf.mxu0
  %v4995 = vadd.f32 %v4946, %v4994
  %v4996 = vpop.f32.mrf.mxu0
  %v4997 = vadd.f32 %v4948, %v4996
  %4998 = vmatmul.bf16.gmra.mxu0 %v4229
  %v4999 = vpop.f32.mrf.mxu0
  %v5000 = vadd.f32 %v4951, %v4999
  %v5001 = vpop.f32.mrf.mxu0
  %v5002 = vadd.f32 %v4953, %v5001
  %5003 = vmatmul.bf16.gmra.mxu0 %v4232
  %v5004 = vpop.f32.mrf.mxu0
  %v5005 = vadd.f32 %v4956, %v5004
  %v5006 = vpop.f32.mrf.mxu0
  %v5007 = vadd.f32 %v4958, %v5006
  %5008 = vmatmul.bf16.gmra.mxu0 %v4235
  %v5009 = vpop.f32.mrf.mxu0
  %v5010 = vadd.f32 %v4961, %v5009
  %v5011 = vpop.f32.mrf.mxu0
  %v5012 = vadd.f32 %v4963, %v5011
  %5013 = vmatmul.bf16.gmra.mxu0 %v4238
  %v5014 = vpop.f32.mrf.mxu0
  %v5015 = vadd.f32 %v4966, %v5014
  %v5016 = vpop.f32.mrf.mxu0
  %v5017 = vadd.f32 %v4968, %v5016
  %5018 = vmatmul.bf16.gmra.mxu0 %v4241
  %v5019 = vpop.f32.mrf.mxu0
  %v5020 = vadd.f32 %v4971, %v5019
  %v5021 = vpop.f32.mrf.mxu0
  %v5022 = vadd.f32 %v4973, %v5021
  %5023 = vdwg.mxu0
  %5024 = vmatpush.bf16.msra.mxu0 %v4609
  %5025 = vmatpush.bf16.msra.mxu0 %v4606
  %5026 = vmatpush.bf16.msra.mxu0 %v4603
  %5027 = vmatpush.bf16.msra.mxu0 %v4600
  %5028 = vmatpush.bf16.msra.mxu0 %v4597
  %5029 = vmatpush.bf16.msra.mxu0 %v4594
  %5030 = vmatpush.bf16.msra.mxu0 %v4591
  %5031 = vmatpush.bf16.msra.mxu0 %v4588
  %5032 = vmatmul.bf16.gmra.mxu0 %v4218
  %v5033 = vpop.f32.mrf.mxu0
  %v5034 = vadd.f32 %v4342, %v5033
  %v5035 = vpop.f32.mrf.mxu0
  %v5036 = vadd.f32 %v4342, %v5035
  %5037 = vmatmul.bf16.gmra.mxu0 %v4221
  %v5038 = vpop.f32.mrf.mxu0
  %v5039 = vadd.f32 %v4342, %v5038
  %v5040 = vpop.f32.mrf.mxu0
  %v5041 = vadd.f32 %v4342, %v5040
  %5042 = vmatmul.bf16.gmra.mxu0 %v4224
  %v5043 = vpop.f32.mrf.mxu0
  %v5044 = vadd.f32 %v4342, %v5043
  %v5045 = vpop.f32.mrf.mxu0
  %v5046 = vadd.f32 %v4342, %v5045
  %5047 = vmatmul.bf16.gmra.mxu0 %v4227
  %v5048 = vpop.f32.mrf.mxu0
  %v5049 = vadd.f32 %v4342, %v5048
  %v5050 = vpop.f32.mrf.mxu0
  %v5051 = vadd.f32 %v4342, %v5050
  %5052 = vmatmul.bf16.gmra.mxu0 %v4230
  %v5053 = vpop.f32.mrf.mxu0
  %v5054 = vadd.f32 %v4342, %v5053
  %v5055 = vpop.f32.mrf.mxu0
  %v5056 = vadd.f32 %v4342, %v5055
  %5057 = vmatmul.bf16.gmra.mxu0 %v4233
  %v5058 = vpop.f32.mrf.mxu0
  %v5059 = vadd.f32 %v4342, %v5058
  %v5060 = vpop.f32.mrf.mxu0
  %v5061 = vadd.f32 %v4342, %v5060
  %5062 = vmatmul.bf16.gmra.mxu0 %v4236
  %v5063 = vpop.f32.mrf.mxu0
  %v5064 = vadd.f32 %v4342, %v5063
  %v5065 = vpop.f32.mrf.mxu0
  %v5066 = vadd.f32 %v4342, %v5065
  %5067 = vmatmul.bf16.gmra.mxu0 %v4239
  %v5068 = vpop.f32.mrf.mxu0
  %v5069 = vadd.f32 %v4342, %v5068
  %v5070 = vpop.f32.mrf.mxu0
  %v5071 = vadd.f32 %v4342, %v5070
  %5072 = vdwg.mxu0
  %5073 = vmatpush.bf16.msra.mxu0 %v4633
  %5074 = vmatpush.bf16.msra.mxu0 %v4630
  %5075 = vmatpush.bf16.msra.mxu0 %v4627
  %5076 = vmatpush.bf16.msra.mxu0 %v4624
  %5077 = vmatpush.bf16.msra.mxu0 %v4621
  %5078 = vmatpush.bf16.msra.mxu0 %v4618
  %5079 = vmatpush.bf16.msra.mxu0 %v4615
  %5080 = vmatpush.bf16.msra.mxu0 %v4612
  %5081 = vmatmul.bf16.gmra.mxu0 %v4219
  %v5082 = vpop.f32.mrf.mxu0
  %v5083 = vadd.f32 %v5034, %v5082
  %v5084 = vpop.f32.mrf.mxu0
  %v5085 = vadd.f32 %v5036, %v5084
  %5086 = vmatmul.bf16.gmra.mxu0 %v4222
  %v5087 = vpop.f32.mrf.mxu0
  %v5088 = vadd.f32 %v5039, %v5087
  %v5089 = vpop.f32.mrf.mxu0
  %v5090 = vadd.f32 %v5041, %v5089
  %5091 = vmatmul.bf16.gmra.mxu0 %v4225
  %v5092 = vpop.f32.mrf.mxu0
  %v5093 = vadd.f32 %v5044, %v5092
  %v5094 = vpop.f32.mrf.mxu0
  %v5095 = vadd.f32 %v5046, %v5094
  %5096 = vmatmul.bf16.gmra.mxu0 %v4228
  %v5097 = vpop.f32.mrf.mxu0
  %v5098 = vadd.f32 %v5049, %v5097
  %v5099 = vpop.f32.mrf.mxu0
  %v5100 = vadd.f32 %v5051, %v5099
  %5101 = vmatmul.bf16.gmra.mxu0 %v4231
  %v5102 = vpop.f32.mrf.mxu0
  %v5103 = vadd.f32 %v5054, %v5102
  %v5104 = vpop.f32.mrf.mxu0
  %v5105 = vadd.f32 %v5056, %v5104
  %5106 = vmatmul.bf16.gmra.mxu0 %v4234
  %v5107 = vpop.f32.mrf.mxu0
  %v5108 = vadd.f32 %v5059, %v5107
  %v5109 = vpop.f32.mrf.mxu0
  %v5110 = vadd.f32 %v5061, %v5109
  %5111 = vmatmul.bf16.gmra.mxu0 %v4237
  %v5112 = vpop.f32.mrf.mxu0
  %v5113 = vadd.f32 %v5064, %v5112
  %v5114 = vpop.f32.mrf.mxu0
  %v5115 = vadd.f32 %v5066, %v5114
  %5116 = vmatmul.bf16.gmra.mxu0 %v4240
  %v5117 = vpop.f32.mrf.mxu0
  %v5118 = vadd.f32 %v5069, %v5117
  %v5119 = vpop.f32.mrf.mxu0
  %v5120 = vadd.f32 %v5071, %v5119
  %5121 = vdwg.mxu0
  %5122 = vmatpush.bf16.msra.mxu0 %v4657
  %5123 = vmatpush.bf16.msra.mxu0 %v4654
  %5124 = vmatpush.bf16.msra.mxu0 %v4651
  %5125 = vmatpush.bf16.msra.mxu0 %v4648
  %5126 = vmatpush.bf16.msra.mxu0 %v4645
  %5127 = vmatpush.bf16.msra.mxu0 %v4642
  %5128 = vmatpush.bf16.msra.mxu0 %v4639
  %5129 = vmatpush.bf16.msra.mxu0 %v4636
  %5130 = vmatmul.bf16.gmra.mxu0 %v4220
  %v5131 = vpop.f32.mrf.mxu0
  %v5132 = vadd.f32 %v5083, %v5131
  %v5133 = vpop.f32.mrf.mxu0
  %v5134 = vadd.f32 %v5085, %v5133
  %5135 = vmatmul.bf16.gmra.mxu0 %v4223
  %v5136 = vpop.f32.mrf.mxu0
  %v5137 = vadd.f32 %v5088, %v5136
  %v5138 = vpop.f32.mrf.mxu0
  %v5139 = vadd.f32 %v5090, %v5138
  %5140 = vmatmul.bf16.gmra.mxu0 %v4226
  %v5141 = vpop.f32.mrf.mxu0
  %v5142 = vadd.f32 %v5093, %v5141
  %v5143 = vpop.f32.mrf.mxu0
  %v5144 = vadd.f32 %v5095, %v5143
  %5145 = vmatmul.bf16.gmra.mxu0 %v4229
  %v5146 = vpop.f32.mrf.mxu0
  %v5147 = vadd.f32 %v5098, %v5146
  %v5148 = vpop.f32.mrf.mxu0
  %v5149 = vadd.f32 %v5100, %v5148
  %5150 = vmatmul.bf16.gmra.mxu0 %v4232
  %v5151 = vpop.f32.mrf.mxu0
  %v5152 = vadd.f32 %v5103, %v5151
  %v5153 = vpop.f32.mrf.mxu0
  %v5154 = vadd.f32 %v5105, %v5153
  %5155 = vmatmul.bf16.gmra.mxu0 %v4235
  %v5156 = vpop.f32.mrf.mxu0
  %v5157 = vadd.f32 %v5108, %v5156
  %v5158 = vpop.f32.mrf.mxu0
  %v5159 = vadd.f32 %v5110, %v5158
  %5160 = vmatmul.bf16.gmra.mxu0 %v4238
  %v5161 = vpop.f32.mrf.mxu0
  %v5162 = vadd.f32 %v5113, %v5161
  %v5163 = vpop.f32.mrf.mxu0
  %v5164 = vadd.f32 %v5115, %v5163
  %5165 = vmatmul.bf16.gmra.mxu0 %v4241
  %v5166 = vpop.f32.mrf.mxu0
  %v5167 = vadd.f32 %v5118, %v5166
  %v5168 = vpop.f32.mrf.mxu0
  %v5169 = vadd.f32 %v5120, %v5168
  %5170 = vdwg.mxu0
  %v5171 = vld [vmem:[%s0] sm:$0xff]
  %v5172 = vld [vmem:[%s0 + $0x8] sm:$0xff]
  %v5173 = vld [vmem:[%s0 + $0x10] sm:$0xff]
  %v5174 = vld [vmem:[%s0 + $0x18] sm:$0xff]
  %v5175 = vld [vmem:[%s0 + $0x20] sm:$0xff]
  %v5176 = vld [vmem:[%s0 + $0x28] sm:$0xff]
  %v5177 = vld [vmem:[%s0 + $0x30] sm:$0xff]
  %v5178 = vld [vmem:[%s0 + $0x38] sm:$0xff]
  %v5179 = vld [vmem:[%s0 + $0x40] sm:$0xff]
  %v5180 = vld [vmem:[%s0 + $0x48] sm:$0xff]
  %v5181 = vld [vmem:[%s0 + $0x50] sm:$0xff]
  %v5182 = vld [vmem:[%s0 + $0x58] sm:$0xff]
  %v5183 = vld [vmem:[%s0 + $0x60] sm:$0xff]
  %v5184 = vld [vmem:[%s0 + $0x68] sm:$0xff]
  %v5185 = vld [vmem:[%s0 + $0x70] sm:$0xff]
  %v5186 = vld [vmem:[%s0 + $0x78] sm:$0xff]
  %v5187 = vld [vmem:[%s0 + $0x80] sm:$0xff]
  %v5188 = vld [vmem:[%s0 + $0x88] sm:$0xff]
  %v5189 = vld [vmem:[%s0 + $0x90] sm:$0xff]
  %v5190 = vld [vmem:[%s0 + $0x98] sm:$0xff]
  %v5191 = vld [vmem:[%s0 + $0xa0] sm:$0xff]
  %v5192 = vld [vmem:[%s0 + $0xa8] sm:$0xff]
  %v5193 = vld [vmem:[%s0 + $0xb0] sm:$0xff]
  %v5194 = vld [vmem:[%s0 + $0xb8] sm:$0xff]
  %v5195 = vld [vmem:[%s0 + $0xc0] sm:$0xff]
  %v5196 = vld [vmem:[%s0 + $0xc8] sm:$0xff]
  %v5197 = vld [vmem:[%s0 + $0xd0] sm:$0xff]
  %v5198 = vld [vmem:[%s0 + $0xd8] sm:$0xff]
  %v5199 = vld [vmem:[%s0 + $0xe0] sm:$0xff]
  %v5200 = vld [vmem:[%s0 + $0xe8] sm:$0xff]
  %v5201 = vld [vmem:[%s0 + $0xf0] sm:$0xff]
  %v5202 = vld [vmem:[%s0 + $0xf8] sm:$0xff]
  %v5203 = vld [vmem:[%s0 + $0x100] sm:$0xff]
  %v5204 = vld [vmem:[%s0 + $0x108] sm:$0xff]
  %v5205 = vld [vmem:[%s0 + $0x110] sm:$0xff]
  %v5206 = vld [vmem:[%s0 + $0x118] sm:$0xff]
  %v5207 = vld [vmem:[%s0 + $0x120] sm:$0xff]
  %v5208 = vld [vmem:[%s0 + $0x128] sm:$0xff]
  %v5209 = vld [vmem:[%s0 + $0x130] sm:$0xff]
  %v5210 = vld [vmem:[%s0 + $0x138] sm:$0xff]
  %v5211 = vld [vmem:[%s0 + $0x140] sm:$0xff]
  %v5212 = vld [vmem:[%s0 + $0x148] sm:$0xff]
  %v5213 = vld [vmem:[%s0 + $0x150] sm:$0xff]
  %v5214 = vld [vmem:[%s0 + $0x158] sm:$0xff]
  %v5215 = vld [vmem:[%s0 + $0x160] sm:$0xff]
  %v5216 = vld [vmem:[%s0 + $0x168] sm:$0xff]
  %v5217 = vld [vmem:[%s0 + $0x170] sm:$0xff]
  %v5218 = vld [vmem:[%s0 + $0x178] sm:$0xff]
  %v5219 = vld [vmem:[%s1] sm:$0xff]
  %v5220 = vld [vmem:[%s1 + $0x8] sm:$0xff]
  %v5221 = vld [vmem:[%s1 + $0x10] sm:$0xff]
  %v5222 = vld [vmem:[%s1 + $0x18] sm:$0xff]
  %v5223 = vld [vmem:[%s1 + $0x20] sm:$0xff]
  %v5224 = vld [vmem:[%s1 + $0x28] sm:$0xff]
  %v5225 = vld [vmem:[%s1 + $0x30] sm:$0xff]
  %v5226 = vld [vmem:[%s1 + $0x38] sm:$0xff]
  %v5227 = vld [vmem:[%s1 + $0x40] sm:$0xff]
  %v5228 = vld [vmem:[%s1 + $0x48] sm:$0xff]
  %v5229 = vld [vmem:[%s1 + $0x50] sm:$0xff]
  %v5230 = vld [vmem:[%s1 + $0x58] sm:$0xff]
  %v5231 = vld [vmem:[%s1 + $0x60] sm:$0xff]
  %v5232 = vld [vmem:[%s1 + $0x68] sm:$0xff]
  %v5233 = vld [vmem:[%s1 + $0x70] sm:$0xff]
  %v5234 = vld [vmem:[%s1 + $0x78] sm:$0xff]
  %v5235 = vld [vmem:[%s1 + $0x80] sm:$0xff]
  %v5236 = vld [vmem:[%s1 + $0x88] sm:$0xff]
  %v5237 = vld [vmem:[%s1 + $0x90] sm:$0xff]
  %v5238 = vld [vmem:[%s1 + $0x98] sm:$0xff]
  %v5239 = vld [vmem:[%s1 + $0xa0] sm:$0xff]
  %v5240 = vld [vmem:[%s1 + $0xa8] sm:$0xff]
  %v5241 = vld [vmem:[%s1 + $0xb0] sm:$0xff]
  %v5242 = vld [vmem:[%s1 + $0xb8] sm:$0xff]
  %v5243 = vld [vmem:[%s1 + $0xc0] sm:$0xff]
  %v5244 = vld [vmem:[%s1 + $0xc8] sm:$0xff]
  %v5245 = vld [vmem:[%s1 + $0xd0] sm:$0xff]
  %v5246 = vld [vmem:[%s1 + $0xd8] sm:$0xff]
  %v5247 = vld [vmem:[%s1 + $0xe0] sm:$0xff]
  %v5248 = vld [vmem:[%s1 + $0xe8] sm:$0xff]
  %v5249 = vld [vmem:[%s1 + $0xf0] sm:$0xff]
  %v5250 = vld [vmem:[%s1 + $0xf8] sm:$0xff]
  %v5251 = vld [vmem:[%s1 + $0x100] sm:$0xff]
  %v5252 = vld [vmem:[%s1 + $0x108] sm:$0xff]
  %v5253 = vld [vmem:[%s1 + $0x110] sm:$0xff]
  %v5254 = vld [vmem:[%s1 + $0x118] sm:$0xff]
  %v5255 = vld [vmem:[%s1 + $0x120] sm:$0xff]
  %v5256 = vld [vmem:[%s1 + $0x128] sm:$0xff]
  %v5257 = vld [vmem:[%s1 + $0x130] sm:$0xff]
  %v5258 = vld [vmem:[%s1 + $0x138] sm:$0xff]
  %v5259 = vld [vmem:[%s1 + $0x140] sm:$0xff]
  %v5260 = vld [vmem:[%s1 + $0x148] sm:$0xff]
  %v5261 = vld [vmem:[%s1 + $0x150] sm:$0xff]
  %v5262 = vld [vmem:[%s1 + $0x158] sm:$0xff]
  %v5263 = vld [vmem:[%s1 + $0x160] sm:$0xff]
  %v5264 = vld [vmem:[%s1 + $0x168] sm:$0xff]
  %v5265 = vld [vmem:[%s1 + $0x170] sm:$0xff]
  %v5266 = vld [vmem:[%s1 + $0x178] sm:$0xff]
  %v5267 = vadd.f32 %v5171, %v5219
  %v5268 = vadd.f32 %v5172, %v5220
  %v5269 = vadd.f32 %v5173, %v5221
  %v5270 = vadd.f32 %v5174, %v5222
  %v5271 = vadd.f32 %v5175, %v5223
  %v5272 = vadd.f32 %v5176, %v5224
  %v5273 = vadd.f32 %v5177, %v5225
  %v5274 = vadd.f32 %v5178, %v5226
  %v5275 = vadd.f32 %v5179, %v5227
  %v5276 = vadd.f32 %v5180, %v5228
  %v5277 = vadd.f32 %v5181, %v5229
  %v5278 = vadd.f32 %v5182, %v5230
  %v5279 = vadd.f32 %v5183, %v5231
  %v5280 = vadd.f32 %v5184, %v5232
  %v5281 = vadd.f32 %v5185, %v5233
  %v5282 = vadd.f32 %v5186, %v5234
  %v5283 = vadd.f32 %v5187, %v5235
  %v5284 = vadd.f32 %v5188, %v5236
  %v5285 = vadd.f32 %v5189, %v5237
  %v5286 = vadd.f32 %v5190, %v5238
  %v5287 = vadd.f32 %v5191, %v5239
  %v5288 = vadd.f32 %v5192, %v5240
  %v5289 = vadd.f32 %v5193, %v5241
  %v5290 = vadd.f32 %v5194, %v5242
  %v5291 = vadd.f32 %v5195, %v5243
  %v5292 = vadd.f32 %v5196, %v5244
  %v5293 = vadd.f32 %v5197, %v5245
  %v5294 = vadd.f32 %v5198, %v5246
  %v5295 = vadd.f32 %v5199, %v5247
  %v5296 = vadd.f32 %v5200, %v5248
  %v5297 = vadd.f32 %v5201, %v5249
  %v5298 = vadd.f32 %v5202, %v5250
  %v5299 = vadd.f32 %v5203, %v5251
  %v5300 = vadd.f32 %v5204, %v5252
  %v5301 = vadd.f32 %v5205, %v5253
  %v5302 = vadd.f32 %v5206, %v5254
  %v5303 = vadd.f32 %v5207, %v5255
  %v5304 = vadd.f32 %v5208, %v5256
  %v5305 = vadd.f32 %v5209, %v5257
  %v5306 = vadd.f32 %v5210, %v5258
  %v5307 = vadd.f32 %v5211, %v5259
  %v5308 = vadd.f32 %v5212, %v5260
  %v5309 = vadd.f32 %v5213, %v5261
  %v5310 = vadd.f32 %v5214, %v5262
  %v5311 = vadd.f32 %v5215, %v5263
  %v5312 = vadd.f32 %v5216, %v5264
  %v5313 = vadd.f32 %v5217, %v5265
  %v5314 = vadd.f32 %v5218, %v5266
  %v5315 = vadd.f32 %v5267, %v4838
  %v5316 = vadd.f32 %v5268, %v4985
  %v5317 = vadd.f32 %v5269, %v5132
  %v5318 = vadd.f32 %v5270, %v4840
  %v5319 = vadd.f32 %v5271, %v4987
  %v5320 = vadd.f32 %v5272, %v5134
  %v5321 = vadd.f32 %v5273, %v4843
  %v5322 = vadd.f32 %v5274, %v4990
  %v5323 = vadd.f32 %v5275, %v5137
  %v5324 = vadd.f32 %v5276, %v4845
  %v5325 = vadd.f32 %v5277, %v4992
  %v5326 = vadd.f32 %v5278, %v5139
  %v5327 = vadd.f32 %v5279, %v4848
  %v5328 = vadd.f32 %v5280, %v4995
  %v5329 = vadd.f32 %v5281, %v5142
  %v5330 = vadd.f32 %v5282, %v4850
  %v5331 = vadd.f32 %v5283, %v4997
  %v5332 = vadd.f32 %v5284, %v5144
  %v5333 = vadd.f32 %v5285, %v4853
  %v5334 = vadd.f32 %v5286, %v5000
  %v5335 = vadd.f32 %v5287, %v5147
  %v5336 = vadd.f32 %v5288, %v4855
  %v5337 = vadd.f32 %v5289, %v5002
  %v5338 = vadd.f32 %v5290, %v5149
  %v5339 = vadd.f32 %v5291, %v4858
  %v5340 = vadd.f32 %v5292, %v5005
  %v5341 = vadd.f32 %v5293, %v5152
  %v5342 = vadd.f32 %v5294, %v4860
  %v5343 = vadd.f32 %v5295, %v5007
  %v5344 = vadd.f32 %v5296, %v5154
  %v5345 = vadd.f32 %v5297, %v4863
  %v5346 = vadd.f32 %v5298, %v5010
  %v5347 = vadd.f32 %v5299, %v5157
  %v5348 = vadd.f32 %v5300, %v4865
  %v5349 = vadd.f32 %v5301, %v5012
  %v5350 = vadd.f32 %v5302, %v5159
  %v5351 = vadd.f32 %v5303, %v4868
  %v5352 = vadd.f32 %v5304, %v5015
  %v5353 = vadd.f32 %v5305, %v5162
  %v5354 = vadd.f32 %v5306, %v4870
  %v5355 = vadd.f32 %v5307, %v5017
  %v5356 = vadd.f32 %v5308, %v5164
  %v5357 = vadd.f32 %v5309, %v4873
  %v5358 = vadd.f32 %v5310, %v5020
  %v5359 = vadd.f32 %v5311, %v5167
  %v5360 = vadd.f32 %v5312, %v4875
  %v5361 = vadd.f32 %v5313, %v5022
  %v5362 = vadd.f32 %v5314, %v5169
  %v5363 = vld [vmem:[%s11] sm:$0x7]
  %v5364 = vld [vmem:[%s12] sm:$0x7]
  %v5365 = vadd.f32 %v5315, %v5316
  %v5366 = vadd.f32 %v5365, %v5317
  %5367 = vadd.xlane.f32.xlu0 %v5366
  %v5368 = vpop.xlane.xlu0 %5367
  %v5369 = vadd.f32 %v5318, %v5319
  %v5370 = vadd.f32 %v5369, %v5320
  %5371 = vadd.xlane.f32.xlu0 %v5370
  %v5372 = vpop.xlane.xlu0 %5371
  %v5373 = vadd.f32 %v5321, %v5322
  %v5374 = vadd.f32 %v5373, %v5323
  %5375 = vadd.xlane.f32.xlu0 %v5374
  %v5376 = vpop.xlane.xlu0 %5375
  %v5377 = vadd.f32 %v5324, %v5325
  %v5378 = vadd.f32 %v5377, %v5326
  %5379 = vadd.xlane.f32.xlu0 %v5378
  %v5380 = vpop.xlane.xlu0 %5379
  %v5381 = vadd.f32 %v5327, %v5328
  %v5382 = vadd.f32 %v5381, %v5329
  %5383 = vadd.xlane.f32.xlu0 %v5382
  %v5384 = vpop.xlane.xlu0 %5383
  %v5385 = vadd.f32 %v5330, %v5331
  %v5386 = vadd.f32 %v5385, %v5332
  %5387 = vadd.xlane.f32.xlu0 %v5386
  %v5388 = vpop.xlane.xlu0 %5387
  %v5389 = vadd.f32 %v5333, %v5334
  %v5390 = vadd.f32 %v5389, %v5335
  %5391 = vadd.xlane.f32.xlu0 %v5390
  %v5392 = vpop.xlane.xlu0 %5391
  %v5393 = vadd.f32 %v5336, %v5337
  %v5394 = vadd.f32 %v5393, %v5338
  %5395 = vadd.xlane.f32.xlu0 %v5394
  %v5396 = vpop.xlane.xlu0 %5395
  %v5397 = vadd.f32 %v5339, %v5340
  %v5398 = vadd.f32 %v5397, %v5341
  %5399 = vadd.xlane.f32.xlu0 %v5398
  %v5400 = vpop.xlane.xlu0 %5399
  %v5401 = vadd.f32 %v5342, %v5343
  %v5402 = vadd.f32 %v5401, %v5344
  %5403 = vadd.xlane.f32.xlu0 %v5402
  %v5404 = vpop.xlane.xlu0 %5403
  %v5405 = vadd.f32 %v5345, %v5346
  %v5406 = vadd.f32 %v5405, %v5347
  %5407 = vadd.xlane.f32.xlu0 %v5406
  %v5408 = vpop.xlane.xlu0 %5407
  %v5409 = vadd.f32 %v5348, %v5349
  %v5410 = vadd.f32 %v5409, %v5350
  %5411 = vadd.xlane.f32.xlu0 %v5410
  %v5412 = vpop.xlane.xlu0 %5411
  %v5413 = vadd.f32 %v5351, %v5352
  %v5414 = vadd.f32 %v5413, %v5353
  %5415 = vadd.xlane.f32.xlu0 %v5414
  %v5416 = vpop.xlane.xlu0 %5415
  %v5417 = vadd.f32 %v5354, %v5355
  %v5418 = vadd.f32 %v5417, %v5356
  %5419 = vadd.xlane.f32.xlu0 %v5418
  %v5420 = vpop.xlane.xlu0 %5419
  %v5421 = vadd.f32 %v5357, %v5358
  %v5422 = vadd.f32 %v5421, %v5359
  %5423 = vadd.xlane.f32.xlu0 %v5422
  %v5424 = vpop.xlane.xlu0 %5423
  %v5425 = vadd.f32 %v5360, %v5361
  %v5426 = vadd.f32 %v5425, %v5362
  %5427 = vadd.xlane.f32.xlu0 %v5426
  %v5428 = vpop.xlane.xlu0 %5427
  %v5429 = vmul.f32 %v5368, %v3643
  %v5430 = vmul.f32 %v5372, %v3643
  %v5431 = vmul.f32 %v5376, %v3643
  %v5432 = vmul.f32 %v5380, %v3643
  %v5433 = vmul.f32 %v5384, %v3643
  %v5434 = vmul.f32 %v5388, %v3643
  %v5435 = vmul.f32 %v5392, %v3643
  %v5436 = vmul.f32 %v5396, %v3643
  %v5437 = vmul.f32 %v5400, %v3643
  %v5438 = vmul.f32 %v5404, %v3643
  %v5439 = vmul.f32 %v5408, %v3643
  %v5440 = vmul.f32 %v5412, %v3643
  %v5441 = vmul.f32 %v5416, %v3643
  %v5442 = vmul.f32 %v5420, %v3643
  %v5443 = vmul.f32 %v5424, %v3643
  %v5444 = vmul.f32 %v5428, %v3643
  %v5445 = vsub.f32 %v5315, %v5429
  %v5446 = vsub.f32 %v5316, %v5429
  %v5447 = vsub.f32 %v5317, %v5429
  %v5448 = vsub.f32 %v5318, %v5430
  %v5449 = vsub.f32 %v5319, %v5430
  %v5450 = vsub.f32 %v5320, %v5430
  %v5451 = vsub.f32 %v5321, %v5431
  %v5452 = vsub.f32 %v5322, %v5431
  %v5453 = vsub.f32 %v5323, %v5431
  %v5454 = vsub.f32 %v5324, %v5432
  %v5455 = vsub.f32 %v5325, %v5432
  %v5456 = vsub.f32 %v5326, %v5432
  %v5457 = vsub.f32 %v5327, %v5433
  %v5458 = vsub.f32 %v5328, %v5433
  %v5459 = vsub.f32 %v5329, %v5433
  %v5460 = vsub.f32 %v5330, %v5434
  %v5461 = vsub.f32 %v5331, %v5434
  %v5462 = vsub.f32 %v5332, %v5434
  %v5463 = vsub.f32 %v5333, %v5435
  %v5464 = vsub.f32 %v5334, %v5435
  %v5465 = vsub.f32 %v5335, %v5435
  %v5466 = vsub.f32 %v5336, %v5436
  %v5467 = vsub.f32 %v5337, %v5436
  %v5468 = vsub.f32 %v5338, %v5436
  %v5469 = vsub.f32 %v5339, %v5437
  %v5470 = vsub.f32 %v5340, %v5437
  %v5471 = vsub.f32 %v5341, %v5437
  %v5472 = vsub.f32 %v5342, %v5438
  %v5473 = vsub.f32 %v5343, %v5438
  %v5474 = vsub.f32 %v5344, %v5438
  %v5475 = vsub.f32 %v5345, %v5439
  %v5476 = vsub.f32 %v5346, %v5439
  %v5477 = vsub.f32 %v5347, %v5439
  %v5478 = vsub.f32 %v5348, %v5440
  %v5479 = vsub.f32 %v5349, %v5440
  %v5480 = vsub.f32 %v5350, %v5440
  %v5481 = vsub.f32 %v5351, %v5441
  %v5482 = vsub.f32 %v5352, %v5441
  %v5483 = vsub.f32 %v5353, %v5441
  %v5484 = vsub.f32 %v5354, %v5442
  %v5485 = vsub.f32 %v5355, %v5442
  %v5486 = vsub.f32 %v5356, %v5442
  %v5487 = vsub.f32 %v5357, %v5443
  %v5488 = vsub.f32 %v5358, %v5443
  %v5489 = vsub.f32 %v5359, %v5443
  %v5490 = vsub.f32 %v5360, %v5444
  %v5491 = vsub.f32 %v5361, %v5444
  %v5492 = vsub.f32 %v5362, %v5444
  %v5493 = vmul.f32 %v5445, %v5445
  %v5494 = vmul.f32 %v5446, %v5446
  %v5495 = vmul.f32 %v5447, %v5447
  %v5496 = vmul.f32 %v5448, %v5448
  %v5497 = vmul.f32 %v5449, %v5449
  %v5498 = vmul.f32 %v5450, %v5450
  %v5499 = vmul.f32 %v5451, %v5451
  %v5500 = vmul.f32 %v5452, %v5452
  %v5501 = vmul.f32 %v5453, %v5453
  %v5502 = vmul.f32 %v5454, %v5454
  %v5503 = vmul.f32 %v5455, %v5455
  %v5504 = vmul.f32 %v5456, %v5456
  %v5505 = vmul.f32 %v5457, %v5457
  %v5506 = vmul.f32 %v5458, %v5458
  %v5507 = vmul.f32 %v5459, %v5459
  %v5508 = vmul.f32 %v5460, %v5460
  %v5509 = vmul.f32 %v5461, %v5461
  %v5510 = vmul.f32 %v5462, %v5462
  %v5511 = vmul.f32 %v5463, %v5463
  %v5512 = vmul.f32 %v5464, %v5464
  %v5513 = vmul.f32 %v5465, %v5465
  %v5514 = vmul.f32 %v5466, %v5466
  %v5515 = vmul.f32 %v5467, %v5467
  %v5516 = vmul.f32 %v5468, %v5468
  %v5517 = vmul.f32 %v5469, %v5469
  %v5518 = vmul.f32 %v5470, %v5470
  %v5519 = vmul.f32 %v5471, %v5471
  %v5520 = vmul.f32 %v5472, %v5472
  %v5521 = vmul.f32 %v5473, %v5473
  %v5522 = vmul.f32 %v5474, %v5474
  %v5523 = vmul.f32 %v5475, %v5475
  %v5524 = vmul.f32 %v5476, %v5476
  %v5525 = vmul.f32 %v5477, %v5477
  %v5526 = vmul.f32 %v5478, %v5478
  %v5527 = vmul.f32 %v5479, %v5479
  %v5528 = vmul.f32 %v5480, %v5480
  %v5529 = vmul.f32 %v5481, %v5481
  %v5530 = vmul.f32 %v5482, %v5482
  %v5531 = vmul.f32 %v5483, %v5483
  %v5532 = vmul.f32 %v5484, %v5484
  %v5533 = vmul.f32 %v5485, %v5485
  %v5534 = vmul.f32 %v5486, %v5486
  %v5535 = vmul.f32 %v5487, %v5487
  %v5536 = vmul.f32 %v5488, %v5488
  %v5537 = vmul.f32 %v5489, %v5489
  %v5538 = vmul.f32 %v5490, %v5490
  %v5539 = vmul.f32 %v5491, %v5491
  %v5540 = vmul.f32 %v5492, %v5492
  %v5541 = vadd.f32 %v5493, %v5494
  %v5542 = vadd.f32 %v5541, %v5495
  %5543 = vadd.xlane.f32.xlu0 %v5542
  %v5544 = vpop.xlane.xlu0 %5543
  %v5545 = vadd.f32 %v5496, %v5497
  %v5546 = vadd.f32 %v5545, %v5498
  %5547 = vadd.xlane.f32.xlu0 %v5546
  %v5548 = vpop.xlane.xlu0 %5547
  %v5549 = vadd.f32 %v5499, %v5500
  %v5550 = vadd.f32 %v5549, %v5501
  %5551 = vadd.xlane.f32.xlu0 %v5550
  %v5552 = vpop.xlane.xlu0 %5551
  %v5553 = vadd.f32 %v5502, %v5503
  %v5554 = vadd.f32 %v5553, %v5504
  %5555 = vadd.xlane.f32.xlu0 %v5554
  %v5556 = vpop.xlane.xlu0 %5555
  %v5557 = vadd.f32 %v5505, %v5506
  %v5558 = vadd.f32 %v5557, %v5507
  %5559 = vadd.xlane.f32.xlu0 %v5558
  %v5560 = vpop.xlane.xlu0 %5559
  %v5561 = vadd.f32 %v5508, %v5509
  %v5562 = vadd.f32 %v5561, %v5510
  %5563 = vadd.xlane.f32.xlu0 %v5562
  %v5564 = vpop.xlane.xlu0 %5563
  %v5565 = vadd.f32 %v5511, %v5512
  %v5566 = vadd.f32 %v5565, %v5513
  %5567 = vadd.xlane.f32.xlu0 %v5566
  %v5568 = vpop.xlane.xlu0 %5567
  %v5569 = vadd.f32 %v5514, %v5515
  %v5570 = vadd.f32 %v5569, %v5516
  %5571 = vadd.xlane.f32.xlu0 %v5570
  %v5572 = vpop.xlane.xlu0 %5571
  %v5573 = vadd.f32 %v5517, %v5518
  %v5574 = vadd.f32 %v5573, %v5519
  %5575 = vadd.xlane.f32.xlu0 %v5574
  %v5576 = vpop.xlane.xlu0 %5575
  %v5577 = vadd.f32 %v5520, %v5521
  %v5578 = vadd.f32 %v5577, %v5522
  %5579 = vadd.xlane.f32.xlu0 %v5578
  %v5580 = vpop.xlane.xlu0 %5579
  %v5581 = vadd.f32 %v5523, %v5524
  %v5582 = vadd.f32 %v5581, %v5525
  %5583 = vadd.xlane.f32.xlu0 %v5582
  %v5584 = vpop.xlane.xlu0 %5583
  %v5585 = vadd.f32 %v5526, %v5527
  %v5586 = vadd.f32 %v5585, %v5528
  %5587 = vadd.xlane.f32.xlu0 %v5586
  %v5588 = vpop.xlane.xlu0 %5587
  %v5589 = vadd.f32 %v5529, %v5530
  %v5590 = vadd.f32 %v5589, %v5531
  %5591 = vadd.xlane.f32.xlu0 %v5590
  %v5592 = vpop.xlane.xlu0 %5591
  %v5593 = vadd.f32 %v5532, %v5533
  %v5594 = vadd.f32 %v5593, %v5534
  %5595 = vadd.xlane.f32.xlu0 %v5594
  %v5596 = vpop.xlane.xlu0 %5595
  %v5597 = vadd.f32 %v5535, %v5536
  %v5598 = vadd.f32 %v5597, %v5537
  %5599 = vadd.xlane.f32.xlu0 %v5598
  %v5600 = vpop.xlane.xlu0 %5599
  %v5601 = vadd.f32 %v5538, %v5539
  %v5602 = vadd.f32 %v5601, %v5540
  %5603 = vadd.xlane.f32.xlu0 %v5602
  %v5604 = vpop.xlane.xlu0 %5603
  %v5605 = vmul.f32 %v5544, %v3643
  %v5606 = vmul.f32 %v5548, %v3643
  %v5607 = vmul.f32 %v5552, %v3643
  %v5608 = vmul.f32 %v5556, %v3643
  %v5609 = vmul.f32 %v5560, %v3643
  %v5610 = vmul.f32 %v5564, %v3643
  %v5611 = vmul.f32 %v5568, %v3643
  %v5612 = vmul.f32 %v5572, %v3643
  %v5613 = vmul.f32 %v5576, %v3643
  %v5614 = vmul.f32 %v5580, %v3643
  %v5615 = vmul.f32 %v5584, %v3643
  %v5616 = vmul.f32 %v5588, %v3643
  %v5617 = vmul.f32 %v5592, %v3643
  %v5618 = vmul.f32 %v5596, %v3643
  %v5619 = vmul.f32 %v5600, %v3643
  %v5620 = vmul.f32 %v5604, %v3643
  %v5621 = vadd.f32 %v5605, 0.001
  %v5622 = vadd.f32 %v5606, 0.001
  %v5623 = vadd.f32 %v5607, 0.001
  %v5624 = vadd.f32 %v5608, 0.001
  %v5625 = vadd.f32 %v5609, 0.001
  %v5626 = vadd.f32 %v5610, 0.001
  %v5627 = vadd.f32 %v5611, 0.001
  %v5628 = vadd.f32 %v5612, 0.001
  %v5629 = vadd.f32 %v5613, 0.001
  %v5630 = vadd.f32 %v5614, 0.001
  %v5631 = vadd.f32 %v5615, 0.001
  %v5632 = vadd.f32 %v5616, 0.001
  %v5633 = vadd.f32 %v5617, 0.001
  %v5634 = vadd.f32 %v5618, 0.001
  %v5635 = vadd.f32 %v5619, 0.001
  %v5636 = vadd.f32 %v5620, 0.001
  %v5637 = vrsqrt.pop %v5621
  %v5638 = vmul.f32 %v5637, %v5621
  %v5639 = vmul.f32 %v5638, %v5637
  %v5640 = vmul.f32 0.5, %v5639
  %v5641 = vsub.f32 1.5, %v5640
  %v5642 = vmul.f32 %v5637, %v5641
  %vm5643 = vweird.f32 %v5621
  %vm5644 = vweird.f32 %v5637
  %vm5645 = vmor %vm5643, %vm5644
  %v5646 = vsel %vm5645, %v5637, %v5642
  %v5647 = vrsqrt.pop %v5622
  %v5648 = vmul.f32 %v5647, %v5622
  %v5649 = vmul.f32 %v5648, %v5647
  %v5650 = vmul.f32 0.5, %v5649
  %v5651 = vsub.f32 1.5, %v5650
  %v5652 = vmul.f32 %v5647, %v5651
  %vm5653 = vweird.f32 %v5622
  %vm5654 = vweird.f32 %v5647
  %vm5655 = vmor %vm5653, %vm5654
  %v5656 = vsel %vm5655, %v5647, %v5652
  %v5657 = vrsqrt.pop %v5623
  %v5658 = vmul.f32 %v5657, %v5623
  %v5659 = vmul.f32 %v5658, %v5657
  %v5660 = vmul.f32 0.5, %v5659
  %v5661 = vsub.f32 1.5, %v5660
  %v5662 = vmul.f32 %v5657, %v5661
  %vm5663 = vweird.f32 %v5623
  %vm5664 = vweird.f32 %v5657
  %vm5665 = vmor %vm5663, %vm5664
  %v5666 = vsel %vm5665, %v5657, %v5662
  %v5667 = vrsqrt.pop %v5624
  %v5668 = vmul.f32 %v5667, %v5624
  %v5669 = vmul.f32 %v5668, %v5667
  %v5670 = vmul.f32 0.5, %v5669
  %v5671 = vsub.f32 1.5, %v5670
  %v5672 = vmul.f32 %v5667, %v5671
  %vm5673 = vweird.f32 %v5624
  %vm5674 = vweird.f32 %v5667
  %vm5675 = vmor %vm5673, %vm5674
  %v5676 = vsel %vm5675, %v5667, %v5672
  %v5677 = vrsqrt.pop %v5625
  %v5678 = vmul.f32 %v5677, %v5625
  %v5679 = vmul.f32 %v5678, %v5677
  %v5680 = vmul.f32 0.5, %v5679
  %v5681 = vsub.f32 1.5, %v5680
  %v5682 = vmul.f32 %v5677, %v5681
  %vm5683 = vweird.f32 %v5625
  %vm5684 = vweird.f32 %v5677
  %vm5685 = vmor %vm5683, %vm5684
  %v5686 = vsel %vm5685, %v5677, %v5682
  %v5687 = vrsqrt.pop %v5626
  %v5688 = vmul.f32 %v5687, %v5626
  %v5689 = vmul.f32 %v5688, %v5687
  %v5690 = vmul.f32 0.5, %v5689
  %v5691 = vsub.f32 1.5, %v5690
  %v5692 = vmul.f32 %v5687, %v5691
  %vm5693 = vweird.f32 %v5626
  %vm5694 = vweird.f32 %v5687
  %vm5695 = vmor %vm5693, %vm5694
  %v5696 = vsel %vm5695, %v5687, %v5692
  %v5697 = vrsqrt.pop %v5627
  %v5698 = vmul.f32 %v5697, %v5627
  %v5699 = vmul.f32 %v5698, %v5697
  %v5700 = vmul.f32 0.5, %v5699
  %v5701 = vsub.f32 1.5, %v5700
  %v5702 = vmul.f32 %v5697, %v5701
  %vm5703 = vweird.f32 %v5627
  %vm5704 = vweird.f32 %v5697
  %vm5705 = vmor %vm5703, %vm5704
  %v5706 = vsel %vm5705, %v5697, %v5702
  %v5707 = vrsqrt.pop %v5628
  %v5708 = vmul.f32 %v5707, %v5628
  %v5709 = vmul.f32 %v5708, %v5707
  %v5710 = vmul.f32 0.5, %v5709
  %v5711 = vsub.f32 1.5, %v5710
  %v5712 = vmul.f32 %v5707, %v5711
  %vm5713 = vweird.f32 %v5628
  %vm5714 = vweird.f32 %v5707
  %vm5715 = vmor %vm5713, %vm5714
  %v5716 = vsel %vm5715, %v5707, %v5712
  %v5717 = vrsqrt.pop %v5629
  %v5718 = vmul.f32 %v5717, %v5629
  %v5719 = vmul.f32 %v5718, %v5717
  %v5720 = vmul.f32 0.5, %v5719
  %v5721 = vsub.f32 1.5, %v5720
  %v5722 = vmul.f32 %v5717, %v5721
  %vm5723 = vweird.f32 %v5629
  %vm5724 = vweird.f32 %v5717
  %vm5725 = vmor %vm5723, %vm5724
  %v5726 = vsel %vm5725, %v5717, %v5722
  %v5727 = vrsqrt.pop %v5630
  %v5728 = vmul.f32 %v5727, %v5630
  %v5729 = vmul.f32 %v5728, %v5727
  %v5730 = vmul.f32 0.5, %v5729
  %v5731 = vsub.f32 1.5, %v5730
  %v5732 = vmul.f32 %v5727, %v5731
  %vm5733 = vweird.f32 %v5630
  %vm5734 = vweird.f32 %v5727
  %vm5735 = vmor %vm5733, %vm5734
  %v5736 = vsel %vm5735, %v5727, %v5732
  %v5737 = vrsqrt.pop %v5631
  %v5738 = vmul.f32 %v5737, %v5631
  %v5739 = vmul.f32 %v5738, %v5737
  %v5740 = vmul.f32 0.5, %v5739
  %v5741 = vsub.f32 1.5, %v5740
  %v5742 = vmul.f32 %v5737, %v5741
  %vm5743 = vweird.f32 %v5631
  %vm5744 = vweird.f32 %v5737
  %vm5745 = vmor %vm5743, %vm5744
  %v5746 = vsel %vm5745, %v5737, %v5742
  %v5747 = vrsqrt.pop %v5632
  %v5748 = vmul.f32 %v5747, %v5632
  %v5749 = vmul.f32 %v5748, %v5747
  %v5750 = vmul.f32 0.5, %v5749
  %v5751 = vsub.f32 1.5, %v5750
  %v5752 = vmul.f32 %v5747, %v5751
  %vm5753 = vweird.f32 %v5632
  %vm5754 = vweird.f32 %v5747
  %vm5755 = vmor %vm5753, %vm5754
  %v5756 = vsel %vm5755, %v5747, %v5752
  %v5757 = vrsqrt.pop %v5633
  %v5758 = vmul.f32 %v5757, %v5633
  %v5759 = vmul.f32 %v5758, %v5757
  %v5760 = vmul.f32 0.5, %v5759
  %v5761 = vsub.f32 1.5, %v5760
  %v5762 = vmul.f32 %v5757, %v5761
  %vm5763 = vweird.f32 %v5633
  %vm5764 = vweird.f32 %v5757
  %vm5765 = vmor %vm5763, %vm5764
  %v5766 = vsel %vm5765, %v5757, %v5762
  %v5767 = vrsqrt.pop %v5634
  %v5768 = vmul.f32 %v5767, %v5634
  %v5769 = vmul.f32 %v5768, %v5767
  %v5770 = vmul.f32 0.5, %v5769
  %v5771 = vsub.f32 1.5, %v5770
  %v5772 = vmul.f32 %v5767, %v5771
  %vm5773 = vweird.f32 %v5634
  %vm5774 = vweird.f32 %v5767
  %vm5775 = vmor %vm5773, %vm5774
  %v5776 = vsel %vm5775, %v5767, %v5772
  %v5777 = vrsqrt.pop %v5635
  %v5778 = vmul.f32 %v5777, %v5635
  %v5779 = vmul.f32 %v5778, %v5777
  %v5780 = vmul.f32 0.5, %v5779
  %v5781 = vsub.f32 1.5, %v5780
  %v5782 = vmul.f32 %v5777, %v5781
  %vm5783 = vweird.f32 %v5635
  %vm5784 = vweird.f32 %v5777
  %vm5785 = vmor %vm5783, %vm5784
  %v5786 = vsel %vm5785, %v5777, %v5782
  %v5787 = vrsqrt.pop %v5636
  %v5788 = vmul.f32 %v5787, %v5636
  %v5789 = vmul.f32 %v5788, %v5787
  %v5790 = vmul.f32 0.5, %v5789
  %v5791 = vsub.f32 1.5, %v5790
  %v5792 = vmul.f32 %v5787, %v5791
  %vm5793 = vweird.f32 %v5636
  %vm5794 = vweird.f32 %v5787
  %vm5795 = vmor %vm5793, %vm5794
  %v5796 = vsel %vm5795, %v5787, %v5792
  %v5797 = vmul.f32 %v5445, %v5646
  %v5798 = vmul.f32 %v5446, %v5646
  %v5799 = vmul.f32 %v5447, %v5646
  %v5800 = vmul.f32 %v5448, %v5656
  %v5801 = vmul.f32 %v5449, %v5656
  %v5802 = vmul.f32 %v5450, %v5656
  %v5803 = vmul.f32 %v5451, %v5666
  %v5804 = vmul.f32 %v5452, %v5666
  %v5805 = vmul.f32 %v5453, %v5666
  %v5806 = vmul.f32 %v5454, %v5676
  %v5807 = vmul.f32 %v5455, %v5676
  %v5808 = vmul.f32 %v5456, %v5676
  %v5809 = vmul.f32 %v5457, %v5686
  %v5810 = vmul.f32 %v5458, %v5686
  %v5811 = vmul.f32 %v5459, %v5686
  %v5812 = vmul.f32 %v5460, %v5696
  %v5813 = vmul.f32 %v5461, %v5696
  %v5814 = vmul.f32 %v5462, %v5696
  %v5815 = vmul.f32 %v5463, %v5706
  %v5816 = vmul.f32 %v5464, %v5706
  %v5817 = vmul.f32 %v5465, %v5706
  %v5818 = vmul.f32 %v5466, %v5716
  %v5819 = vmul.f32 %v5467, %v5716
  %v5820 = vmul.f32 %v5468, %v5716
  %v5821 = vmul.f32 %v5469, %v5726
  %v5822 = vmul.f32 %v5470, %v5726
  %v5823 = vmul.f32 %v5471, %v5726
  %v5824 = vmul.f32 %v5472, %v5736
  %v5825 = vmul.f32 %v5473, %v5736
  %v5826 = vmul.f32 %v5474, %v5736
  %v5827 = vmul.f32 %v5475, %v5746
  %v5828 = vmul.f32 %v5476, %v5746
  %v5829 = vmul.f32 %v5477, %v5746
  %v5830 = vmul.f32 %v5478, %v5756
  %v5831 = vmul.f32 %v5479, %v5756
  %v5832 = vmul.f32 %v5480, %v5756
  %v5833 = vmul.f32 %v5481, %v5766
  %v5834 = vmul.f32 %v5482, %v5766
  %v5835 = vmul.f32 %v5483, %v5766
  %v5836 = vmul.f32 %v5484, %v5776
  %v5837 = vmul.f32 %v5485, %v5776
  %v5838 = vmul.f32 %v5486, %v5776
  %v5839 = vmul.f32 %v5487, %v5786
  %v5840 = vmul.f32 %v5488, %v5786
  %v5841 = vmul.f32 %v5489, %v5786
  %v5842 = vmul.f32 %v5490, %v5796
  %v5843 = vmul.f32 %v5491, %v5796
  %v5844 = vmul.f32 %v5492, %v5796
  %v5846 = vperm.slane %v5363, 0
  %v5847 = vperm.slane %v5363, 1
  %v5848 = vperm.slane %v5363, 2
  %v5852 = vmul.f32 %v5797, %v5846
  %v5853 = vmul.f32 %v5798, %v5847
  %v5854 = vmul.f32 %v5799, %v5848
  %v5855 = vmul.f32 %v5800, %v5846
  %v5856 = vmul.f32 %v5801, %v5847
  %v5857 = vmul.f32 %v5802, %v5848
  %v5858 = vmul.f32 %v5803, %v5846
  %v5859 = vmul.f32 %v5804, %v5847
  %v5860 = vmul.f32 %v5805, %v5848
  %v5861 = vmul.f32 %v5806, %v5846
  %v5862 = vmul.f32 %v5807, %v5847
  %v5863 = vmul.f32 %v5808, %v5848
  %v5864 = vmul.f32 %v5809, %v5846
  %v5865 = vmul.f32 %v5810, %v5847
  %v5866 = vmul.f32 %v5811, %v5848
  %v5867 = vmul.f32 %v5812, %v5846
  %v5868 = vmul.f32 %v5813, %v5847
  %v5869 = vmul.f32 %v5814, %v5848
  %v5870 = vmul.f32 %v5815, %v5846
  %v5871 = vmul.f32 %v5816, %v5847
  %v5872 = vmul.f32 %v5817, %v5848
  %v5873 = vmul.f32 %v5818, %v5846
  %v5874 = vmul.f32 %v5819, %v5847
  %v5875 = vmul.f32 %v5820, %v5848
  %v5876 = vmul.f32 %v5821, %v5846
  %v5877 = vmul.f32 %v5822, %v5847
  %v5878 = vmul.f32 %v5823, %v5848
  %v5879 = vmul.f32 %v5824, %v5846
  %v5880 = vmul.f32 %v5825, %v5847
  %v5881 = vmul.f32 %v5826, %v5848
  %v5882 = vmul.f32 %v5827, %v5846
  %v5883 = vmul.f32 %v5828, %v5847
  %v5884 = vmul.f32 %v5829, %v5848
  %v5885 = vmul.f32 %v5830, %v5846
  %v5886 = vmul.f32 %v5831, %v5847
  %v5887 = vmul.f32 %v5832, %v5848
  %v5888 = vmul.f32 %v5833, %v5846
  %v5889 = vmul.f32 %v5834, %v5847
  %v5890 = vmul.f32 %v5835, %v5848
  %v5891 = vmul.f32 %v5836, %v5846
  %v5892 = vmul.f32 %v5837, %v5847
  %v5893 = vmul.f32 %v5838, %v5848
  %v5894 = vmul.f32 %v5839, %v5846
  %v5895 = vmul.f32 %v5840, %v5847
  %v5896 = vmul.f32 %v5841, %v5848
  %v5897 = vmul.f32 %v5842, %v5846
  %v5898 = vmul.f32 %v5843, %v5847
  %v5899 = vmul.f32 %v5844, %v5848
  %v5901 = vperm.slane %v5364, 0
  %v5902 = vperm.slane %v5364, 1
  %v5903 = vperm.slane %v5364, 2
  %v5907 = vadd.f32 %v5852, %v5901
  %v5908 = vadd.f32 %v5853, %v5902
  %v5909 = vadd.f32 %v5854, %v5903
  %v5910 = vadd.f32 %v5855, %v5901
  %v5911 = vadd.f32 %v5856, %v5902
  %v5912 = vadd.f32 %v5857, %v5903
  %v5913 = vadd.f32 %v5858, %v5901
  %v5914 = vadd.f32 %v5859, %v5902
  %v5915 = vadd.f32 %v5860, %v5903
  %v5916 = vadd.f32 %v5861, %v5901
  %v5917 = vadd.f32 %v5862, %v5902
  %v5918 = vadd.f32 %v5863, %v5903
  %v5919 = vadd.f32 %v5864, %v5901
  %v5920 = vadd.f32 %v5865, %v5902
  %v5921 = vadd.f32 %v5866, %v5903
  %v5922 = vadd.f32 %v5867, %v5901
  %v5923 = vadd.f32 %v5868, %v5902
  %v5924 = vadd.f32 %v5869, %v5903
  %v5925 = vadd.f32 %v5870, %v5901
  %v5926 = vadd.f32 %v5871, %v5902
  %v5927 = vadd.f32 %v5872, %v5903
  %v5928 = vadd.f32 %v5873, %v5901
  %v5929 = vadd.f32 %v5874, %v5902
  %v5930 = vadd.f32 %v5875, %v5903
  %v5931 = vadd.f32 %v5876, %v5901
  %v5932 = vadd.f32 %v5877, %v5902
  %v5933 = vadd.f32 %v5878, %v5903
  %v5934 = vadd.f32 %v5879, %v5901
  %v5935 = vadd.f32 %v5880, %v5902
  %v5936 = vadd.f32 %v5881, %v5903
  %v5937 = vadd.f32 %v5882, %v5901
  %v5938 = vadd.f32 %v5883, %v5902
  %v5939 = vadd.f32 %v5884, %v5903
  %v5940 = vadd.f32 %v5885, %v5901
  %v5941 = vadd.f32 %v5886, %v5902
  %v5942 = vadd.f32 %v5887, %v5903
  %v5943 = vadd.f32 %v5888, %v5901
  %v5944 = vadd.f32 %v5889, %v5902
  %v5945 = vadd.f32 %v5890, %v5903
  %v5946 = vadd.f32 %v5891, %v5901
  %v5947 = vadd.f32 %v5892, %v5902
  %v5948 = vadd.f32 %v5893, %v5903
  %v5949 = vadd.f32 %v5894, %v5901
  %v5950 = vadd.f32 %v5895, %v5902
  %v5951 = vadd.f32 %v5896, %v5903
  %v5952 = vadd.f32 %v5897, %v5901
  %v5953 = vadd.f32 %v5898, %v5902
  %v5954 = vadd.f32 %v5899, %v5903
  %5955 = vst [vmem:[%s13] sm:$0xff] %v5907
  %5956 = vst [vmem:[%s13 + $0x8] sm:$0xff] %v5908
  %5957 = vst [vmem:[%s13 + $0x10] sm:$0xff] %v5909
  %5958 = vst [vmem:[%s13 + $0x18] sm:$0xff] %v5910
  %5959 = vst [vmem:[%s13 + $0x20] sm:$0xff] %v5911
  %5960 = vst [vmem:[%s13 + $0x28] sm:$0xff] %v5912
  %5961 = vst [vmem:[%s13 + $0x30] sm:$0xff] %v5913
  %5962 = vst [vmem:[%s13 + $0x38] sm:$0xff] %v5914
  %5963 = vst [vmem:[%s13 + $0x40] sm:$0xff] %v5915
  %5964 = vst [vmem:[%s13 + $0x48] sm:$0xff] %v5916
  %5965 = vst [vmem:[%s13 + $0x50] sm:$0xff] %v5917
  %5966 = vst [vmem:[%s13 + $0x58] sm:$0xff] %v5918
  %5967 = vst [vmem:[%s13 + $0x60] sm:$0xff] %v5919
  %5968 = vst [vmem:[%s13 + $0x68] sm:$0xff] %v5920
  %5969 = vst [vmem:[%s13 + $0x70] sm:$0xff] %v5921
  %5970 = vst [vmem:[%s13 + $0x78] sm:$0xff] %v5922
  %5971 = vst [vmem:[%s13 + $0x80] sm:$0xff] %v5923
  %5972 = vst [vmem:[%s13 + $0x88] sm:$0xff] %v5924
  %5973 = vst [vmem:[%s13 + $0x90] sm:$0xff] %v5925
  %5974 = vst [vmem:[%s13 + $0x98] sm:$0xff] %v5926
  %5975 = vst [vmem:[%s13 + $0xa0] sm:$0xff] %v5927
  %5976 = vst [vmem:[%s13 + $0xa8] sm:$0xff] %v5928
  %5977 = vst [vmem:[%s13 + $0xb0] sm:$0xff] %v5929
  %5978 = vst [vmem:[%s13 + $0xb8] sm:$0xff] %v5930
  %5979 = vst [vmem:[%s13 + $0xc0] sm:$0xff] %v5931
  %5980 = vst [vmem:[%s13 + $0xc8] sm:$0xff] %v5932
  %5981 = vst [vmem:[%s13 + $0xd0] sm:$0xff] %v5933
  %5982 = vst [vmem:[%s13 + $0xd8] sm:$0xff] %v5934
  %5983 = vst [vmem:[%s13 + $0xe0] sm:$0xff] %v5935
  %5984 = vst [vmem:[%s13 + $0xe8] sm:$0xff] %v5936
  %5985 = vst [vmem:[%s13 + $0xf0] sm:$0xff] %v5937
  %5986 = vst [vmem:[%s13 + $0xf8] sm:$0xff] %v5938
  %5987 = vst [vmem:[%s13 + $0x100] sm:$0xff] %v5939
  %5988 = vst [vmem:[%s13 + $0x108] sm:$0xff] %v5940
  %5989 = vst [vmem:[%s13 + $0x110] sm:$0xff] %v5941
  %5990 = vst [vmem:[%s13 + $0x118] sm:$0xff] %v5942
  %5991 = vst [vmem:[%s13 + $0x120] sm:$0xff] %v5943
  %5992 = vst [vmem:[%s13 + $0x128] sm:$0xff] %v5944
  %5993 = vst [vmem:[%s13 + $0x130] sm:$0xff] %v5945
  %5994 = vst [vmem:[%s13 + $0x138] sm:$0xff] %v5946
  %5995 = vst [vmem:[%s13 + $0x140] sm:$0xff] %v5947
  %5996 = vst [vmem:[%s13 + $0x148] sm:$0xff] %v5948
  %5997 = vst [vmem:[%s13 + $0x150] sm:$0xff] %v5949
  %5998 = vst [vmem:[%s13 + $0x158] sm:$0xff] %v5950
  %5999 = vst [vmem:[%s13 + $0x160] sm:$0xff] %v5951
  %6000 = vst [vmem:[%s13 + $0x168] sm:$0xff] %v5952
  %6001 = vst [vmem:[%s13 + $0x170] sm:$0xff] %v5953
  %6002 = vst [vmem:[%s13 + $0x178] sm:$0xff] %v5954
  // Predicated region
  $region54: #{update_forward.3} parent=0 // pred_check
    _
  $region55: #{update_forward.3} parent=0 // pred_check_branch
    %6004 = sbr.rel (0) target = $region57
  $region56: #{update_forward.3} parent=0 // pred_region
    _
  $region57: #{update_forward.3} parent=0 // pred_fallthru
    _
  // Predicated region
  $region58: #{update_forward.3} parent=0 // pred_check
    _
  $region59: #{update_forward.3} parent=0 // pred_check_branch
    %6006 = sbr.rel (0) target = $region61
  $region60: #{update_forward.3} parent=0 // pred_region
    _
  $region61: #{update_forward.3} parent=0 // pred_fallthru
    _

</llo_original>
